<compile_context>
chip_gen: v7x
topology: tpu7x:2x2x1
jax: 0.10.0
libtpu: 0.0.40
codegen_flags: <defaults>
</compile_context>

<pallas_src>
import functools

import jax
import jax.numpy as jnp
from jax import lax
from jax.experimental import pallas as pl
from jax.experimental.pallas import tpu as pltpu


# --------------------------------------------------------------------------
# Pallas kernel 1: fused matmul + bias (+ optional ReLU)  -> used for all convs
# --------------------------------------------------------------------------
def _mm_bias_kernel(a_ref, w_ref, b_ref, o_ref, *, relu):
    acc = jnp.dot(a_ref[...], w_ref[...], preferred_element_type=jnp.float32)
    acc = acc + b_ref[...]
    if relu:
        acc = jnp.maximum(acc, 0.0)
    o_ref[...] = acc.astype(o_ref.dtype)


def matmul_bias(a, w, b, relu):
    """out = relu?(a @ w + b); a:(M,K), w:(K,N), b:(N,). bf16 MXU inputs, f32 accumulation."""
    M, K = a.shape
    N = w.shape[1]
    a = a.astype(jnp.bfloat16)
    w = w.astype(jnp.bfloat16)

    # Single block if the working set fits a generous VMEM budget; otherwise large row tiles
    # (per-grid-step overhead ~0.35us, so few big steps beat many small ones).
    single_bytes = (M * K + K * N) * 2 + (M * N + N) * 4
    if single_bytes <= 16 * 1024 * 1024:
        tm = M
        Mp = M
    else:
        tm = 2048
        Mp = ((M + tm - 1) // tm) * tm
        if Mp != M:
            a = jnp.pad(a, ((0, Mp - M), (0, 0)))
    grid = (Mp // tm,)

    cost = pl.CostEstimate(
        flops=int(2 * Mp * K * N),
        transcendentals=0,
        bytes_accessed=int((Mp * K + K * N) * 2 + (Mp * N + N) * 4),
    )
    out = pl.pallas_call(
        functools.partial(_mm_bias_kernel, relu=relu),
        out_shape=jax.ShapeDtypeStruct((Mp, N), jnp.float32),
        grid_spec=pltpu.PrefetchScalarGridSpec(
            num_scalar_prefetch=0,
            grid=grid,
            in_specs=[
                pl.BlockSpec((tm, K), lambda i: (i, 0)),
                pl.BlockSpec((K, N), lambda i: (0, 0)),
                pl.BlockSpec((1, N), lambda i: (0, 0)),
            ],
            out_specs=pl.BlockSpec((tm, N), lambda i: (i, 0)),
        ),
        compiler_params=pltpu.CompilerParams(dimension_semantics=("parallel",)),
        cost_estimate=cost,
    )(a, w, b.reshape(1, N))
    return out[:M] if Mp != M else out


def conv3x3(x, w, b, relu=False):
    """'same' 3x3 conv on NHWC via bf16 im2col + fused Pallas matmul."""
    B, H, W, Cin = x.shape
    Cout = w.shape[-1]
    xb = x.astype(jnp.bfloat16)                       # cast BEFORE the 9x blowup
    xp = jnp.pad(xb, ((0, 0), (1, 1), (1, 1), (0, 0)))
    cols = [xp[:, ky:ky + H, kx:kx + W, :] for ky in range(3) for kx in range(3)]
    a = jnp.concatenate(cols, axis=-1).reshape(B * H * W, 9 * Cin)
    out = matmul_bias(a, w.reshape(9 * Cin, Cout), b, relu)
    return out.reshape(B, H, W, Cout)


# --------------------------------------------------------------------------
# Complex helper (inside kernels): complex matmul via 4 real bf16 MXU matmuls, f32 accumulation
# --------------------------------------------------------------------------
def _cmatmul_bf16(ar, ai, br, bi):
    ar = ar.astype(jnp.bfloat16)
    ai = ai.astype(jnp.bfloat16)
    br = br.astype(jnp.bfloat16)
    bi = bi.astype(jnp.bfloat16)
    rr = (jnp.dot(ar, br, preferred_element_type=jnp.float32)
          - jnp.dot(ai, bi, preferred_element_type=jnp.float32))
    ri = (jnp.dot(ar, bi, preferred_element_type=jnp.float32)
          + jnp.dot(ai, br, preferred_element_type=jnp.float32))
    return rr, ri


# --------------------------------------------------------------------------
# Pallas kernel 2: fused CG data-consistency solve of (E^H E + mu I) x = rhs
#   rhs = input_x + mu * denoised is formed in-kernel (mu from SMEM).
#   E x = mask * FFT2(sens_c * x),  E^H k = sum_c conj(sens_c) * IFFT2(mask * k)
#   Per-coil fori_loop; FFT2 = Fh @ img @ Fw with bf16 MXU operands.
# --------------------------------------------------------------------------
def _cg_dc_kernel(ix_re_ref, ix_im_ref, dn_re_ref, dn_im_ref,
                  s_re_ref, s_im_ref, m_ref,
                  fhr_ref, fhi_ref, fwr_ref, fwi_ref, mu_ref,
                  x_re_ref, x_im_ref, *, cg_iters):
    mu = mu_ref[0]                         # scalar from SMEM
    eps = jnp.float32(1e-12)

    fhr = fhr_ref[...]                     # (H, H) bf16
    fhi = fhi_ref[...]
    fwr = fwr_ref[...]                     # (W, W) bf16
    fwi = fwi_ref[...]
    nfhi = -fhi
    nfwi = -fwi
    mask = m_ref[0]                        # (H, W) f32
    ncoil = s_re_ref.shape[0]

    # rhs = input_x + mu * denoised (fused; no HBM round trip per unroll)
    rhs_r = ix_re_ref[0] + mu * dn_re_ref[0]
    rhs_i = ix_im_ref[0] + mu * dn_im_ref[0]

    def ehe(pr, pi):
        def coil_body(c, carry):
            ar, ai = carry
            sr = s_re_ref[c]               # (H, W), dynamic leading-axis load
            si = s_im_ref[c]
            # coil image = sens_c * p (complex elementwise, f32 on VPU)
            cr = sr * pr - si * pi
            ci = sr * pi + si * pr
            # forward FFT2 + mask
            tr, ti = _cmatmul_bf16(fhr, fhi, cr, ci)
            kr, ki = _cmatmul_bf16(tr, ti, fwr, fwi)
            kr = kr * mask
            ki = ki * mask
            # inverse FFT2 (DFT matrices are symmetric -> F^H = conj(F))
            tr, ti = _cmatmul_bf16(fhr, nfhi, kr, ki)
            ir, ii = _cmatmul_bf16(tr, ti, fwr, nfwi)
            # accumulate conj(sens_c) * img
            ar = ar + (sr * ir + si * ii)
            ai = ai + (sr * ii - si * ir)
            return ar, ai

        zero = jnp.zeros_like(pr)
        ar, ai = lax.fori_loop(0, ncoil, coil_body, (zero, zero))
        return ar + mu * pr, ai + mu * pi

    rs0 = jnp.sum(rhs_r * rhs_r + rhs_i * rhs_i)
    zero = jnp.zeros_like(rhs_r)

    def cg_body(_, carry):
        x_r, x_i, r_r, r_i, p_r, p_i, rsold = carry
        ap_r, ap_i = ehe(p_r, p_i)
        pap = jnp.sum(p_r * ap_r + p_i * ap_i)
        alpha = rsold / (pap + eps)        # eps-guarded: zero rhs -> alpha = 0, no NaN
        x_r = x_r + alpha * p_r
        x_i = x_i + alpha * p_i
        r_r = r_r - alpha * ap_r
        r_i = r_i - alpha * ap_i
        rsnew = jnp.sum(r_r * r_r + r_i * r_i)
        beta = rsnew / (rsold + eps)
        p_r = r_r + beta * p_r
        p_i = r_i + beta * p_i
        return (x_r, x_i, r_r, r_i, p_r, p_i, rsnew)

    x_r, x_i, _, _, _, _, _ = lax.fori_loop(
        0, cg_iters, cg_body, (zero, zero, rhs_r, rhs_i, rhs_r, rhs_i, rs0))
    x_re_ref[0] = x_r
    x_im_ref[0] = x_i


def cg_dc_block(ix_re, ix_im, dn_re, dn_im, sens_re_f, sens_im_f, mask,
                fhr, fhi, fwr, fwi, mu_arr, cg_iters, ncoil):
    B, H, W = ix_re.shape
    out_shape = (jax.ShapeDtypeStruct((B, H, W), jnp.float32),
                 jax.ShapeDtypeStruct((B, H, W), jnp.float32))
    flops_ehe = ncoil * 16 * (H * H * W + H * W * W) + 14 * H * W * ncoil
    cost = pl.CostEstimate(
        flops=int(B * cg_iters * flops_ehe),
        transcendentals=0,
        bytes_accessed=int(4 * B * (7 * H * W + 2 * ncoil * H * W)
                           + 2 * 2 * (H * H + W * W)),
    )
    grid_spec = pltpu.PrefetchScalarGridSpec(
        num_scalar_prefetch=0,
        grid=(B,),
        in_specs=[
            pl.BlockSpec((1, H, W), lambda b: (b, 0, 0)),       # input_x re
            pl.BlockSpec((1, H, W), lambda b: (b, 0, 0)),       # input_x im
            pl.BlockSpec((1, H, W), lambda b: (b, 0, 0)),       # denoised re
            pl.BlockSpec((1, H, W), lambda b: (b, 0, 0)),       # denoised im
            pl.BlockSpec((ncoil, H, W), lambda b: (b, 0, 0)),   # sens re (B*C, H, W)
            pl.BlockSpec((ncoil, H, W), lambda b: (b, 0, 0)),   # sens im
            pl.BlockSpec((1, H, W), lambda b: (b, 0, 0)),       # trn mask (not coil-tiled)
            pl.BlockSpec((H, H), lambda b: (0, 0)),             # Fh real (bf16)
            pl.BlockSpec((H, H), lambda b: (0, 0)),             # Fh imag
            pl.BlockSpec((W, W), lambda b: (0, 0)),             # Fw real
            pl.BlockSpec((W, W), lambda b: (0, 0)),             # Fw imag
            pl.BlockSpec(memory_space=pltpu.MemorySpace.SMEM),  # mu scalar
        ],
        out_specs=(pl.BlockSpec((1, H, W), lambda b: (b, 0, 0)),
                   pl.BlockSpec((1, H, W), lambda b: (b, 0, 0))),
    )
    return pl.pallas_call(
        functools.partial(_cg_dc_kernel, cg_iters=cg_iters),
        out_shape=out_shape,
        grid_spec=grid_spec,
        compiler_params=pltpu.CompilerParams(dimension_semantics=("parallel",)),
        cost_estimate=cost,
    )(ix_re, ix_im, dn_re, dn_im, sens_re_f, sens_im_f, mask,
      fhr, fhi, fwr, fwi, mu_arr)


# --------------------------------------------------------------------------
# Pallas kernel 3: SSDU k-space transform   k_c = loss_mask * FFT2(sens_c * x)
#   Grid (B, ncoil), both parallel -> >=2 steps for v7x's two TensorCores.
# --------------------------------------------------------------------------
def _ssdu_kspace_kernel(x_re_ref, x_im_ref, s_re_ref, s_im_ref, m_ref,
                        fhr_ref, fhi_ref, fwr_ref, fwi_ref,
                        o_re_ref, o_im_ref):
    xr = x_re_ref[0]
    xi = x_im_ref[0]
    sr = s_re_ref[0]
    si = s_im_ref[0]
    mask = m_ref[0]
    cr = sr * xr - si * xi
    ci = sr * xi + si * xr
    tr, ti = _cmatmul_bf16(fhr_ref[...], fhi_ref[...], cr, ci)
    kr, ki = _cmatmul_bf16(tr, ti, fwr_ref[...], fwi_ref[...])
    o_re_ref[0] = kr * mask
    o_im_ref[0] = ki * mask


def ssdu_kspace_transform(x_re, x_im, sens_re_f, sens_im_f, loss_mask,
                          fhr, fhi, fwr, fwi, ncoil):
    B, H, W = x_re.shape
    out_shape = (jax.ShapeDtypeStruct((B * ncoil, H, W), jnp.float32),
                 jax.ShapeDtypeStruct((B * ncoil, H, W), jnp.float32))
    grid_spec = pltpu.PrefetchScalarGridSpec(
        num_scalar_prefetch=0,
        grid=(B, ncoil),
        in_specs=[
            pl.BlockSpec((1, H, W), lambda b, c: (b, 0, 0)),
            pl.BlockSpec((1, H, W), lambda b, c: (b, 0, 0)),
            pl.BlockSpec((1, H, W), lambda b, c: (b * ncoil + c, 0, 0)),
            pl.BlockSpec((1, H, W), lambda b, c: (b * ncoil + c, 0, 0)),
            pl.BlockSpec((1, H, W), lambda b, c: (b, 0, 0)),
            pl.BlockSpec((H, H), lambda b, c: (0, 0)),
            pl.BlockSpec((H, H), lambda b, c: (0, 0)),
            pl.BlockSpec((W, W), lambda b, c: (0, 0)),
            pl.BlockSpec((W, W), lambda b, c: (0, 0)),
        ],
        out_specs=(pl.BlockSpec((1, H, W), lambda b, c: (b * ncoil + c, 0, 0)),
                   pl.BlockSpec((1, H, W), lambda b, c: (b * ncoil + c, 0, 0))),
    )
    return pl.pallas_call(
        _ssdu_kspace_kernel,
        out_shape=out_shape,
        grid_spec=grid_spec,
        compiler_params=pltpu.CompilerParams(
            dimension_semantics=("parallel", "parallel")),
    )(x_re, x_im, sens_re_f, sens_im_f, loss_mask, fhr, fhi, fwr, fwi)


# --------------------------------------------------------------------------
# Model glue (plain JAX): ResNet regularizer, layout prep, forward
# --------------------------------------------------------------------------
def dft_matrix(n):
    """Orthonormal DFT matrix split into (real, imag)."""
    k = jnp.arange(n, dtype=jnp.float32)
    ang = -2.0 * jnp.pi * jnp.outer(k, k) / n
    scale = 1.0 / jnp.sqrt(jnp.float32(n))
    return jnp.cos(ang) * scale, jnp.sin(ang) * scale


def init_resnet_params(key, nb_res_blocks, nf):
    def conv_init(k, cin, cout):
        w = jax.random.normal(k, (3, 3, cin, cout), jnp.float32) / jnp.sqrt(9.0 * cin)
        b = jnp.zeros((cout,), jnp.float32)
        return w, b

    keys = jax.random.split(key, 3 + 2 * nb_res_blocks)
    params = {
        "first": conv_init(keys[0], 2, nf),
        "blocks": [(
            *conv_init(keys[1 + 2 * j], nf, nf),
            *conv_init(keys[2 + 2 * j], nf, nf),
        ) for j in range(nb_res_blocks)],
        "last": conv_init(keys[1 + 2 * nb_res_blocks], nf, nf),
        "out": conv_init(keys[2 + 2 * nb_res_blocks], nf, 2),
    }
    return params


def resnet_forward(x, params):
    l0 = conv3x3(x, *params["first"], relu=False)
    h = l0
    for (w1, b1, w2, b2) in params["blocks"]:
        t = conv3x3(h, w1, b1, relu=True)
        t = conv3x3(t, w2, b2, relu=False) * 0.1
        h = h + t
    h = conv3x3(h, *params["last"], relu=False)
    h = h + l0
    return conv3x3(h, *params["out"], relu=False)


def unrolled_net_forward(input_x, sens_re, sens_im, trn_mask, loss_mask,
                         params, mu, k_iters=2, cg_iters=10):
    B, H, W, _ = input_x.shape
    C = sens_re.shape[1]

    # DFT matrices (built once in JAX, tiny) cast to bf16 for the MXU.
    fhr, fhi = dft_matrix(H)
    fwr, fwi = dft_matrix(W)
    fhr = fhr.astype(jnp.bfloat16)
    fhi = fhi.astype(jnp.bfloat16)
    fwr = fwr.astype(jnp.bfloat16)
    fwi = fwi.astype(jnp.bfloat16)

    # Coil-stacked layout: (B, C, H, W) -> (B*C, H, W), per-batch coil block on the leading axis.
    sens_re_f = sens_re.reshape(B * C, H, W)
    sens_im_f = sens_im.reshape(B * C, H, W)
    mu_arr = jnp.reshape(mu, (1,)).astype(jnp.float32)

    dc_output = input_x
    for _ in range(k_iters):
        denoised = resnet_forward(dc_output, params)
        xr, xi = cg_dc_block(input_x[..., 0], input_x[..., 1],
                             denoised[..., 0], denoised[..., 1],
                             sens_re_f, sens_im_f, trn_mask,
                             fhr, fhi, fwr, fwi, mu_arr, cg_iters, C)
        dc_output = jnp.stack([xr, xi], axis=-1)

    k_re, k_im = ssdu_kspace_transform(dc_output[..., 0], dc_output[..., 1],
                                       sens_re_f, sens_im_f, loss_mask,
                                       fhr, fhi, fwr, fwi, C)
    nw_kspace = jnp.stack([k_re.reshape(B, C, H, W),
                           k_im.reshape(B, C, H, W)], axis=-1)   # (B, C, H, W, 2)
    return dc_output, nw_kspace


# --------------------------------------------------------------------------
if __name__ == "__main__":
    key = jax.random.PRNGKey(0)
    B, C, H, W = 2, 4, 16, 16
    NF = 32          # ResNet feature channels
    N_LAYERS = 2     # nb_res_blocks
    K_ITERS = 2      # nb_unroll_blocks
    CG_ITERS = 10

    keys = jax.random.split(key, 8)
    input_x = 0.1 * jax.random.normal(keys[0], (B, H, W, 2), jnp.float32)
    sens_re = jax.random.normal(keys[1], (B, C, H, W), jnp.float32) / jnp.sqrt(C)
    sens_im = jax.random.normal(keys[2], (B, C, H, W), jnp.float32) / jnp.sqrt(C)
    trn_mask = (jax.random.uniform(keys[3], (B, H, W)) < 0.5).astype(jnp.float32)
    loss_mask = (jax.random.uniform(keys[4], (B, H, W)) < 0.3).astype(jnp.float32)
    params = init_resnet_params(keys[5], N_LAYERS, NF)
    mu = jnp.float32(0.05)   # learned penalty parameter (init 0.05 as in the module)

    fwd = jax.jit(functools.partial(unrolled_net_forward,
                                    k_iters=K_ITERS, cg_iters=CG_ITERS))
    dc_out, nw_kspace = fwd(input_x, sens_re, sens_im, trn_mask, loss_mask, params, mu)
    jax.block_until_ready((dc_out, nw_kspace))

    assert dc_out.shape == (B, H, W, 2)
    assert nw_kspace.shape == (B, C, H, W, 2)
    assert bool(jnp.all(jnp.isfinite(dc_out)))
    assert bool(jnp.all(jnp.isfinite(nw_kspace)))
    print("KERNEL_OK")
</pallas_src>

<mosaic_0001>
module attributes {stable_mosaic.version = 11 : i64} {
  func.func @_mm_bias_kernel(%arg0: i32, %arg1: memref<512x18xbf16, #tpu.memory_space<vmem>>, %arg2: memref<18x32xbf16, #tpu.memory_space<vmem>>, %arg3: memref<1x32xf32, #tpu.memory_space<vmem>>, %arg4: memref<512x32xf32, #tpu.memory_space<vmem>>) attributes {dimension_semantics = [#tpu.dimension_semantics<parallel>], iteration_bounds = array<i64: 1>, scalar_prefetch = 0 : i64, scratch_operands = 0 : i64, tpu.core_type = #tpu.core_type<tc>, window_params = [{transform_indices = @transform_0, window_bounds = array<i64: 512, 18>}, {pipeline_mode = #tpu.pipeline_mode<synchronous>, transform_indices = @transform_1, window_bounds = array<i64: 18, 32>}, {pipeline_mode = #tpu.pipeline_mode<synchronous>, transform_indices = @transform_2, window_bounds = array<i64: 1, 32>}, {transform_indices = @transform_3, window_bounds = array<i64: 512, 32>}]} {
    %c0 = arith.constant 0 : index
    %c0_0 = arith.constant 0 : index
    %0 = vector.load %arg1[%c0, %c0_0] : memref<512x18xbf16, #tpu.memory_space<vmem>>, vector<512x18xbf16>
    %c0_1 = arith.constant 0 : index
    %c0_2 = arith.constant 0 : index
    %1 = vector.load %arg2[%c0_1, %c0_2] : memref<18x32xbf16, #tpu.memory_space<vmem>>, vector<18x32xbf16>
    %cst = arith.constant dense<0.000000e+00> : vector<512x32xf32>
    %2 = tpu.matmul %0, %1, %cst {dimension_numbers = #tpu.dot_dimension_numbers<[1], [0], [0], [1], [0, 0, 1, 1], [], []>} : vector<512x18xbf16>, vector<18x32xbf16>, vector<512x32xf32> -> vector<512x32xf32>
    %c0_3 = arith.constant 0 : index
    %c0_4 = arith.constant 0 : index
    %3 = vector.load %arg3[%c0_3, %c0_4] : memref<1x32xf32, #tpu.memory_space<vmem>>, vector<1x32xf32>
    %4 = vector.broadcast %3 : vector<1x32xf32> to vector<512x32xf32>
    %5 = arith.addf %2, %4 : vector<512x32xf32>
    %c0_5 = arith.constant 0 : index
    %c0_6 = arith.constant 0 : index
    %6 = vector.load %arg4[%c0_5, %c0_6] : memref<512x32xf32, #tpu.memory_space<vmem>>, vector<512x32xf32>
    tpu.vector_store %arg4[%c0_5, %c0_6], %5 {strides = array<i32>} : memref<512x32xf32, #tpu.memory_space<vmem>>, vector<512x32xf32>,
    return
  }
  func.func @transform_0(%arg0: i32) -> (i32, i32) {
    %c0_i32 = arith.constant 0 : i32
    %c0_i32_0 = arith.constant 0 : i32
    return %arg0, %c0_i32 : i32, i32
  }
  func.func @transform_1(%arg0: i32) -> (i32, i32) {
    %c0_i32 = arith.constant 0 : i32
    %c0_i32_0 = arith.constant 0 : i32
    %c0_i32_1 = arith.constant 0 : i32
    return %c0_i32, %c0_i32_0 : i32, i32
  }
  func.func @transform_2(%arg0: i32) -> (i32, i32) {
    %c0_i32 = arith.constant 0 : i32
    %c0_i32_0 = arith.constant 0 : i32
    %c0_i32_1 = arith.constant 0 : i32
    return %c0_i32, %c0_i32_0 : i32, i32
  }
  func.func @transform_3(%arg0: i32) -> (i32, i32) {
    %c0_i32 = arith.constant 0 : i32
    %c0_i32_0 = arith.constant 0 : i32
    return %arg0, %c0_i32 : i32, i32
  }
}

module attributes {stable_mosaic.version = 11 : i64} {
  func.func @_mm_bias_kernel(%arg0: i32, %arg1: memref<512x288xbf16, #tpu.memory_space<vmem>>, %arg2: memref<288x32xbf16, #tpu.memory_space<vmem>>, %arg3: memref<1x32xf32, #tpu.memory_space<vmem>>, %arg4: memref<512x32xf32, #tpu.memory_space<vmem>>) attributes {dimension_semantics = [#tpu.dimension_semantics<parallel>], iteration_bounds = array<i64: 1>, scalar_prefetch = 0 : i64, scratch_operands = 0 : i64, tpu.core_type = #tpu.core_type<tc>, window_params = [{transform_indices = @transform_0, window_bounds = array<i64: 512, 288>}, {pipeline_mode = #tpu.pipeline_mode<synchronous>, transform_indices = @transform_1, window_bounds = array<i64: 288, 32>}, {pipeline_mode = #tpu.pipeline_mode<synchronous>, transform_indices = @transform_2, window_bounds = array<i64: 1, 32>}, {transform_indices = @transform_3, window_bounds = array<i64: 512, 32>}]} {
    %c0 = arith.constant 0 : index
    %c0_0 = arith.constant 0 : index
    %0 = vector.load %arg1[%c0, %c0_0] : memref<512x288xbf16, #tpu.memory_space<vmem>>, vector<512x288xbf16>
    %c0_1 = arith.constant 0 : index
    %c0_2 = arith.constant 0 : index
    %1 = vector.load %arg2[%c0_1, %c0_2] : memref<288x32xbf16, #tpu.memory_space<vmem>>, vector<288x32xbf16>
    %cst = arith.constant dense<0.000000e+00> : vector<512x32xf32>
    %2 = tpu.matmul %0, %1, %cst {dimension_numbers = #tpu.dot_dimension_numbers<[1], [0], [0], [1], [0, 0, 1, 1], [], []>} : vector<512x288xbf16>, vector<288x32xbf16>, vector<512x32xf32> -> vector<512x32xf32>
    %c0_3 = arith.constant 0 : index
    %c0_4 = arith.constant 0 : index
    %3 = vector.load %arg3[%c0_3, %c0_4] : memref<1x32xf32, #tpu.memory_space<vmem>>, vector<1x32xf32>
    %4 = vector.broadcast %3 : vector<1x32xf32> to vector<512x32xf32>
    %5 = arith.addf %2, %4 : vector<512x32xf32>
    %cst_5 = arith.constant 0.000000e+00 : f32
    %6 = vector.broadcast %cst_5 : f32 to vector<512x32xf32>
    %7 = arith.maximumf %5, %6 : vector<512x32xf32>
    %c0_6 = arith.constant 0 : index
    %c0_7 = arith.constant 0 : index
    %8 = vector.load %arg4[%c0_6, %c0_7] : memref<512x32xf32, #tpu.memory_space<vmem>>, vector<512x32xf32>
    tpu.vector_store %arg4[%c0_6, %c0_7], %7 {strides = array<i32>} : memref<512x32xf32, #tpu.memory_space<vmem>>, vector<512x32xf32>,
    return
  }
  func.func @transform_0(%arg0: i32) -> (i32, i32) {
    %c0_i32 = arith.constant 0 : i32
    %c0_i32_0 = arith.constant 0 : i32
    return %arg0, %c0_i32 : i32, i32
  }
  func.func @transform_1(%arg0: i32) -> (i32, i32) {
    %c0_i32 = arith.constant 0 : i32
    %c0_i32_0 = arith.constant 0 : i32
    %c0_i32_1 = arith.constant 0 : i32
    return %c0_i32, %c0_i32_0 : i32, i32
  }
  func.func @transform_2(%arg0: i32) -> (i32, i32) {
    %c0_i32 = arith.constant 0 : i32
    %c0_i32_0 = arith.constant 0 : i32
    %c0_i32_1 = arith.constant 0 : i32
    return %c0_i32, %c0_i32_0 : i32, i32
  }
  func.func @transform_3(%arg0: i32) -> (i32, i32) {
    %c0_i32 = arith.constant 0 : i32
    %c0_i32_0 = arith.constant 0 : i32
    return %arg0, %c0_i32 : i32, i32
  }
}

module attributes {stable_mosaic.version = 11 : i64} {
  func.func @_mm_bias_kernel(%arg0: i32, %arg1: memref<512x288xbf16, #tpu.memory_space<vmem>>, %arg2: memref<288x32xbf16, #tpu.memory_space<vmem>>, %arg3: memref<1x32xf32, #tpu.memory_space<vmem>>, %arg4: memref<512x32xf32, #tpu.memory_space<vmem>>) attributes {dimension_semantics = [#tpu.dimension_semantics<parallel>], iteration_bounds = array<i64: 1>, scalar_prefetch = 0 : i64, scratch_operands = 0 : i64, tpu.core_type = #tpu.core_type<tc>, window_params = [{transform_indices = @transform_0, window_bounds = array<i64: 512, 288>}, {pipeline_mode = #tpu.pipeline_mode<synchronous>, transform_indices = @transform_1, window_bounds = array<i64: 288, 32>}, {pipeline_mode = #tpu.pipeline_mode<synchronous>, transform_indices = @transform_2, window_bounds = array<i64: 1, 32>}, {transform_indices = @transform_3, window_bounds = array<i64: 512, 32>}]} {
    %c0 = arith.constant 0 : index
    %c0_0 = arith.constant 0 : index
    %0 = vector.load %arg1[%c0, %c0_0] : memref<512x288xbf16, #tpu.memory_space<vmem>>, vector<512x288xbf16>
    %c0_1 = arith.constant 0 : index
    %c0_2 = arith.constant 0 : index
    %1 = vector.load %arg2[%c0_1, %c0_2] : memref<288x32xbf16, #tpu.memory_space<vmem>>, vector<288x32xbf16>
    %cst = arith.constant dense<0.000000e+00> : vector<512x32xf32>
    %2 = tpu.matmul %0, %1, %cst {dimension_numbers = #tpu.dot_dimension_numbers<[1], [0], [0], [1], [0, 0, 1, 1], [], []>} : vector<512x288xbf16>, vector<288x32xbf16>, vector<512x32xf32> -> vector<512x32xf32>
    %c0_3 = arith.constant 0 : index
    %c0_4 = arith.constant 0 : index
    %3 = vector.load %arg3[%c0_3, %c0_4] : memref<1x32xf32, #tpu.memory_space<vmem>>, vector<1x32xf32>
    %4 = vector.broadcast %3 : vector<1x32xf32> to vector<512x32xf32>
    %5 = arith.addf %2, %4 : vector<512x32xf32>
    %c0_5 = arith.constant 0 : index
    %c0_6 = arith.constant 0 : index
    %6 = vector.load %arg4[%c0_5, %c0_6] : memref<512x32xf32, #tpu.memory_space<vmem>>, vector<512x32xf32>
    tpu.vector_store %arg4[%c0_5, %c0_6], %5 {strides = array<i32>} : memref<512x32xf32, #tpu.memory_space<vmem>>, vector<512x32xf32>,
    return
  }
  func.func @transform_0(%arg0: i32) -> (i32, i32) {
    %c0_i32 = arith.constant 0 : i32
    %c0_i32_0 = arith.constant 0 : i32
    return %arg0, %c0_i32 : i32, i32
  }
  func.func @transform_1(%arg0: i32) -> (i32, i32) {
    %c0_i32 = arith.constant 0 : i32
    %c0_i32_0 = arith.constant 0 : i32
    %c0_i32_1 = arith.constant 0 : i32
    return %c0_i32, %c0_i32_0 : i32, i32
  }
  func.func @transform_2(%arg0: i32) -> (i32, i32) {
    %c0_i32 = arith.constant 0 : i32
    %c0_i32_0 = arith.constant 0 : i32
    %c0_i32_1 = arith.constant 0 : i32
    return %c0_i32, %c0_i32_0 : i32, i32
  }
  func.func @transform_3(%arg0: i32) -> (i32, i32) {
    %c0_i32 = arith.constant 0 : i32
    %c0_i32_0 = arith.constant 0 : i32
    return %arg0, %c0_i32 : i32, i32
  }
}

module attributes {stable_mosaic.version = 11 : i64} {
  func.func @_mm_bias_kernel(%arg0: i32, %arg1: memref<512x288xbf16, #tpu.memory_space<vmem>>, %arg2: memref<288x2xbf16, #tpu.memory_space<vmem>>, %arg3: memref<1x2xf32, #tpu.memory_space<vmem>>, %arg4: memref<512x2xf32, #tpu.memory_space<vmem>>) attributes {dimension_semantics = [#tpu.dimension_semantics<parallel>], iteration_bounds = array<i64: 1>, scalar_prefetch = 0 : i64, scratch_operands = 0 : i64, tpu.core_type = #tpu.core_type<tc>, window_params = [{transform_indices = @transform_0, window_bounds = array<i64: 512, 288>}, {pipeline_mode = #tpu.pipeline_mode<synchronous>, transform_indices = @transform_1, window_bounds = array<i64: 288, 2>}, {pipeline_mode = #tpu.pipeline_mode<synchronous>, transform_indices = @transform_2, window_bounds = array<i64: 1, 2>}, {transform_indices = @transform_3, window_bounds = array<i64: 512, 2>}]} {
    %c0 = arith.constant 0 : index
    %c0_0 = arith.constant 0 : index
    %0 = vector.load %arg1[%c0, %c0_0] : memref<512x288xbf16, #tpu.memory_space<vmem>>, vector<512x288xbf16>
    %c0_1 = arith.constant 0 : index
    %c0_2 = arith.constant 0 : index
    %1 = vector.load %arg2[%c0_1, %c0_2] : memref<288x2xbf16, #tpu.memory_space<vmem>>, vector<288x2xbf16>
    %cst = arith.constant dense<0.000000e+00> : vector<512x2xf32>
    %2 = tpu.matmul %0, %1, %cst {dimension_numbers = #tpu.dot_dimension_numbers<[1], [0], [0], [1], [0, 0, 1, 1], [], []>} : vector<512x288xbf16>, vector<288x2xbf16>, vector<512x2xf32> -> vector<512x2xf32>
    %c0_3 = arith.constant 0 : index
    %c0_4 = arith.constant 0 : index
    %3 = vector.load %arg3[%c0_3, %c0_4] : memref<1x2xf32, #tpu.memory_space<vmem>>, vector<1x2xf32>
    %4 = vector.broadcast %3 : vector<1x2xf32> to vector<512x2xf32>
    %5 = arith.addf %2, %4 : vector<512x2xf32>
    %c0_5 = arith.constant 0 : index
    %c0_6 = arith.constant 0 : index
    %6 = vector.load %arg4[%c0_5, %c0_6] : memref<512x2xf32, #tpu.memory_space<vmem>>, vector<512x2xf32>
    tpu.vector_store %arg4[%c0_5, %c0_6], %5 {strides = array<i32>} : memref<512x2xf32, #tpu.memory_space<vmem>>, vector<512x2xf32>,
    return
  }
  func.func @transform_0(%arg0: i32) -> (i32, i32) {
    %c0_i32 = arith.constant 0 : i32
    %c0_i32_0 = arith.constant 0 : i32
    return %arg0, %c0_i32 : i32, i32
  }
  func.func @transform_1(%arg0: i32) -> (i32, i32) {
    %c0_i32 = arith.constant 0 : i32
    %c0_i32_0 = arith.constant 0 : i32
    %c0_i32_1 = arith.constant 0 : i32
    return %c0_i32, %c0_i32_0 : i32, i32
  }
  func.func @transform_2(%arg0: i32) -> (i32, i32) {
    %c0_i32 = arith.constant 0 : i32
    %c0_i32_0 = arith.constant 0 : i32
    %c0_i32_1 = arith.constant 0 : i32
    return %c0_i32, %c0_i32_0 : i32, i32
  }
  func.func @transform_3(%arg0: i32) -> (i32, i32) {
    %c0_i32 = arith.constant 0 : i32
    %c0_i32_0 = arith.constant 0 : i32
    return %arg0, %c0_i32 : i32, i32
  }
}

module attributes {stable_mosaic.version = 11 : i64} {
  func.func @_cg_dc_kernel(%arg0: i32, %arg1: memref<1x16x16xf32, #tpu.memory_space<vmem>>, %arg2: memref<1x16x16xf32, #tpu.memory_space<vmem>>, %arg3: memref<1x16x16xf32, #tpu.memory_space<vmem>>, %arg4: memref<1x16x16xf32, #tpu.memory_space<vmem>>, %arg5: memref<4x16x16xf32, #tpu.memory_space<vmem>>, %arg6: memref<4x16x16xf32, #tpu.memory_space<vmem>>, %arg7: memref<1x16x16xf32, #tpu.memory_space<vmem>>, %arg8: memref<16x16xbf16, #tpu.memory_space<vmem>>, %arg9: memref<16x16xbf16, #tpu.memory_space<vmem>>, %arg10: memref<16x16xbf16, #tpu.memory_space<vmem>>, %arg11: memref<16x16xbf16, #tpu.memory_space<vmem>>, %arg12: memref<1xf32, #tpu.memory_space<smem>>, %arg13: memref<1x16x16xf32, #tpu.memory_space<vmem>>, %arg14: memref<1x16x16xf32, #tpu.memory_space<vmem>>) attributes {dimension_semantics = [#tpu.dimension_semantics<parallel>], iteration_bounds = array<i64: 2>, scalar_prefetch = 0 : i64, scratch_operands = 0 : i64, tpu.core_type = #tpu.core_type<tc>, window_params = [{transform_indices = @transform_0, window_bounds = array<i64: 1, 16, 16>}, {transform_indices = @transform_1, window_bounds = array<i64: 1, 16, 16>}, {transform_indices = @transform_2, window_bounds = array<i64: 1, 16, 16>}, {transform_indices = @transform_3, window_bounds = array<i64: 1, 16, 16>}, {transform_indices = @transform_4, window_bounds = array<i64: 4, 16, 16>}, {transform_indices = @transform_5, window_bounds = array<i64: 4, 16, 16>}, {transform_indices = @transform_6, window_bounds = array<i64: 1, 16, 16>}, {pipeline_mode = #tpu.pipeline_mode<synchronous>, transform_indices = @transform_7, window_bounds = array<i64: 16, 16>}, {pipeline_mode = #tpu.pipeline_mode<synchronous>, transform_indices = @transform_8, window_bounds = array<i64: 16, 16>}, {pipeline_mode = #tpu.pipeline_mode<synchronous>, transform_indices = @transform_9, window_bounds = array<i64: 16, 16>}, {pipeline_mode = #tpu.pipeline_mode<synchronous>, transform_indices = @transform_10, window_bounds = array<i64: 16, 16>}, {transform_indices = @transform_11, window_bounds = array<i64: 1>}, {transform_indices = @transform_12, window_bounds = array<i64: 1, 16, 16>}, {transform_indices = @transform_13, window_bounds = array<i64: 1, 16, 16>}]} {
    %c0 = arith.constant 0 : index
    %0 = memref.load %arg12[%c0] : memref<1xf32, #tpu.memory_space<smem>>
    %c0_0 = arith.constant 0 : index
    %c0_1 = arith.constant 0 : index
    %1 = vector.load %arg8[%c0_0, %c0_1] : memref<16x16xbf16, #tpu.memory_space<vmem>>, vector<16x16xbf16>
    %c0_2 = arith.constant 0 : index
    %c0_3 = arith.constant 0 : index
    %2 = vector.load %arg9[%c0_2, %c0_3] : memref<16x16xbf16, #tpu.memory_space<vmem>>, vector<16x16xbf16>
    %c0_4 = arith.constant 0 : index
    %c0_5 = arith.constant 0 : index
    %3 = vector.load %arg10[%c0_4, %c0_5] : memref<16x16xbf16, #tpu.memory_space<vmem>>, vector<16x16xbf16>
    %c0_6 = arith.constant 0 : index
    %c0_7 = arith.constant 0 : index
    %4 = vector.load %arg11[%c0_6, %c0_7] : memref<16x16xbf16, #tpu.memory_space<vmem>>, vector<16x16xbf16>
    %cst = arith.constant 0.000000e+00 : bf16
    %5 = vector.broadcast %cst : bf16 to vector<16x16xbf16>
    %6 = arith.subf %5, %2 : vector<16x16xbf16>
    %cst_8 = arith.constant 0.000000e+00 : bf16
    %7 = vector.broadcast %cst_8 : bf16 to vector<16x16xbf16>
    %8 = arith.subf %7, %4 : vector<16x16xbf16>
    %c0_9 = arith.constant 0 : index
    %c0_10 = arith.constant 0 : index
    %c0_11 = arith.constant 0 : index
    %9 = vector.load %arg7[%c0_9, %c0_10, %c0_11] : memref<1x16x16xf32, #tpu.memory_space<vmem>>, vector<1x16x16xf32>
    %10 = vector.shape_cast %9 : vector<1x16x16xf32> to vector<16x16xf32>
    %c0_12 = arith.constant 0 : index
    %c0_13 = arith.constant 0 : index
    %c0_14 = arith.constant 0 : index
    %11 = vector.load %arg1[%c0_12, %c0_13, %c0_14] : memref<1x16x16xf32, #tpu.memory_space<vmem>>, vector<1x16x16xf32>
    %12 = vector.shape_cast %11 : vector<1x16x16xf32> to vector<16x16xf32>
    %c0_15 = arith.constant 0 : index
    %c0_16 = arith.constant 0 : index
    %c0_17 = arith.constant 0 : index
    %13 = vector.load %arg3[%c0_15, %c0_16, %c0_17] : memref<1x16x16xf32, #tpu.memory_space<vmem>>, vector<1x16x16xf32>
    %14 = vector.shape_cast %13 : vector<1x16x16xf32> to vector<16x16xf32>
    %15 = vector.broadcast %0 : f32 to vector<16x16xf32>
    %16 = arith.mulf %15, %14 : vector<16x16xf32>
    %17 = arith.addf %12, %16 : vector<16x16xf32>
    %c0_18 = arith.constant 0 : index
    %c0_19 = arith.constant 0 : index
    %c0_20 = arith.constant 0 : index
    %18 = vector.load %arg2[%c0_18, %c0_19, %c0_20] : memref<1x16x16xf32, #tpu.memory_space<vmem>>, vector<1x16x16xf32>
    %19 = vector.shape_cast %18 : vector<1x16x16xf32> to vector<16x16xf32>
    %c0_21 = arith.constant 0 : index
    %c0_22 = arith.constant 0 : index
    %c0_23 = arith.constant 0 : index
    %20 = vector.load %arg4[%c0_21, %c0_22, %c0_23] : memref<1x16x16xf32, #tpu.memory_space<vmem>>, vector<1x16x16xf32>
    %21 = vector.shape_cast %20 : vector<1x16x16xf32> to vector<16x16xf32>
    %22 = vector.broadcast %0 : f32 to vector<16x16xf32>
    %23 = arith.mulf %22, %21 : vector<16x16xf32>
    %24 = arith.addf %19, %23 : vector<16x16xf32>
    %25 = arith.mulf %17, %17 : vector<16x16xf32>
    %26 = arith.mulf %24, %24 : vector<16x16xf32>
    %27 = arith.addf %25, %26 : vector<16x16xf32>
    %28 = vector.shape_cast %27 : vector<16x16xf32> to vector<1x16x16xf32>
    %cst_24 = arith.constant dense<0.000000e+00> : vector<1xf32>
    %29 = vector.multi_reduction <add>, %28, %cst_24 [1, 2] : vector<1x16x16xf32> to vector<1xf32>
    %30 = vector.shape_cast %29 : vector<1xf32> to vector<1x1x1xf32>
    %31 = vector.extract %30[0, 0, 0] : f32 from vector<1x1x1xf32>
    %cst_25 = arith.constant 0.000000e+00 : f32
    %32 = vector.broadcast %cst_25 : f32 to vector<16x16xf32>
    %cst_26 = arith.constant 9.99999996E-13 : f32
    %c0_i32 = arith.constant 0 : i32
    %c10_i32 = arith.constant 10 : i32
    %33 = arith.addi %c0_i32, %c10_i32 : i32
    %c1_i32 = arith.constant 1 : i32
    %34:7 = scf.for %arg15 = %c0_i32 to %33 step %c1_i32 iter_args(%arg16 = %32, %arg17 = %32, %arg18 = %17, %arg19 = %24, %arg20 = %17, %arg21 = %24, %arg22 = %31) -> (vector<16x16xf32>, vector<16x16xf32>, vector<16x16xf32>, vector<16x16xf32>, vector<16x16xf32>, vector<16x16xf32>, f32)  : i32 {
      %cst_33 = arith.constant 0.000000e+00 : f32
      %41 = vector.broadcast %cst_33 : f32 to vector<16x16xf32>
      %c0_i32_34 = arith.constant 0 : i32
      %c4_i32 = arith.constant 4 : i32
      %42 = arith.addi %c0_i32_34, %c4_i32 : i32
      %c1_i32_35 = arith.constant 1 : i32
      %43:2 = scf.for %arg23 = %c0_i32_34 to %42 step %c1_i32_35 iter_args(%arg24 = %41, %arg25 = %41) -> (vector<16x16xf32>, vector<16x16xf32>)  : i32 {
        %86 = arith.index_cast %arg23 : i32 to index
        %c0_39 = arith.constant 0 : index
        %c0_40 = arith.constant 0 : index
        %87 = vector.load %arg5[%86, %c0_39, %c0_40] : memref<4x16x16xf32, #tpu.memory_space<vmem>>, vector<1x16x16xf32>
        %88 = vector.shape_cast %87 : vector<1x16x16xf32> to vector<16x16xf32>
        %89 = arith.index_cast %arg23 : i32 to index
        %c0_41 = arith.constant 0 : index
        %c0_42 = arith.constant 0 : index
        %90 = vector.load %arg6[%89, %c0_41, %c0_42] : memref<4x16x16xf32, #tpu.memory_space<vmem>>, vector<1x16x16xf32>
        %91 = vector.shape_cast %90 : vector<1x16x16xf32> to vector<16x16xf32>
        %92 = arith.mulf %88, %arg20 : vector<16x16xf32>
        %93 = arith.mulf %91, %arg21 : vector<16x16xf32>
        %94 = arith.subf %92, %93 : vector<16x16xf32>
        %95 = arith.mulf %88, %arg21 : vector<16x16xf32>
        %96 = arith.mulf %91, %arg20 : vector<16x16xf32>
        %97 = arith.addf %95, %96 : vector<16x16xf32>
        %98 = arith.truncf %94 : vector<16x16xf32> to vector<16x16xbf16>
        %99 = arith.truncf %97 : vector<16x16xf32> to vector<16x16xbf16>
        %cst_43 = arith.constant dense<0.000000e+00> : vector<16x16xf32>
        %100 = tpu.matmul %1, %98, %cst_43 {dimension_numbers = #tpu.dot_dimension_numbers<[1], [0], [0], [1], [0, 0, 1, 1], [], []>} : vector<16x16xbf16>, vector<16x16xbf16>, vector<16x16xf32> -> vector<16x16xf32>
        %cst_44 = arith.constant dense<0.000000e+00> : vector<16x16xf32>
        %101 = tpu.matmul %2, %99, %cst_44 {dimension_numbers = #tpu.dot_dimension_numbers<[1], [0], [0], [1], [0, 0, 1, 1], [], []>} : vector<16x16xbf16>, vector<16x16xbf16>, vector<16x16xf32> -> vector<16x16xf32>
        %102 = arith.subf %100, %101 : vector<16x16xf32>
        %cst_45 = arith.constant dense<0.000000e+00> : vector<16x16xf32>
        %103 = tpu.matmul %1, %99, %cst_45 {dimension_numbers = #tpu.dot_dimension_numbers<[1], [0], [0], [1], [0, 0, 1, 1], [], []>} : vector<16x16xbf16>, vector<16x16xbf16>, vector<16x16xf32> -> vector<16x16xf32>
        %cst_46 = arith.constant dense<0.000000e+00> : vector<16x16xf32>
        %104 = tpu.matmul %2, %98, %cst_46 {dimension_numbers = #tpu.dot_dimension_numbers<[1], [0], [0], [1], [0, 0, 1, 1], [], []>} : vector<16x16xbf16>, vector<16x16xbf16>, vector<16x16xf32> -> vector<16x16xf32>
        %105 = arith.addf %103, %104 : vector<16x16xf32>
        %106 = arith.truncf %102 : vector<16x16xf32> to vector<16x16xbf16>
        %107 = arith.truncf %105 : vector<16x16xf32> to vector<16x16xbf16>
        %cst_47 = arith.constant dense<0.000000e+00> : vector<16x16xf32>
        %108 = tpu.matmul %106, %3, %cst_47 {dimension_numbers = #tpu.dot_dimension_numbers<[1], [0], [0], [1], [0, 0, 1, 1], [], []>} : vector<16x16xbf16>, vector<16x16xbf16>, vector<16x16xf32> -> vector<16x16xf32>
        %cst_48 = arith.constant dense<0.000000e+00> : vector<16x16xf32>
        %109 = tpu.matmul %107, %4, %cst_48 {dimension_numbers = #tpu.dot_dimension_numbers<[1], [0], [0], [1], [0, 0, 1, 1], [], []>} : vector<16x16xbf16>, vector<16x16xbf16>, vector<16x16xf32> -> vector<16x16xf32>
        %110 = arith.subf %108, %109 : vector<16x16xf32>
        %cst_49 = arith.constant dense<0.000000e+00> : vector<16x16xf32>
        %111 = tpu.matmul %106, %4, %cst_49 {dimension_numbers = #tpu.dot_dimension_numbers<[1], [0], [0], [1], [0, 0, 1, 1], [], []>} : vector<16x16xbf16>, vector<16x16xbf16>, vector<16x16xf32> -> vector<16x16xf32>
        %cst_50 = arith.constant dense<0.000000e+00> : vector<16x16xf32>
        %112 = tpu.matmul %107, %3, %cst_50 {dimension_numbers = #tpu.dot_dimension_numbers<[1], [0], [0], [1], [0, 0, 1, 1], [], []>} : vector<16x16xbf16>, vector<16x16xbf16>, vector<16x16xf32> -> vector<16x16xf32>
        %113 = arith.addf %111, %112 : vector<16x16xf32>
        %114 = arith.mulf %110, %10 : vector<16x16xf32>
        %115 = arith.mulf %113, %10 : vector<16x16xf32>
        %116 = arith.truncf %114 : vector<16x16xf32> to vector<16x16xbf16>
        %117 = arith.truncf %115 : vector<16x16xf32> to vector<16x16xbf16>
        %cst_51 = arith.constant dense<0.000000e+00> : vector<16x16xf32>
        %118 = tpu.matmul %1, %116, %cst_51 {dimension_numbers = #tpu.dot_dimension_numbers<[1], [0], [0], [1], [0, 0, 1, 1], [], []>} : vector<16x16xbf16>, vector<16x16xbf16>, vector<16x16xf32> -> vector<16x16xf32>
        %cst_52 = arith.constant dense<0.000000e+00> : vector<16x16xf32>
        %119 = tpu.matmul %6, %117, %cst_52 {dimension_numbers = #tpu.dot_dimension_numbers<[1], [0], [0], [1], [0, 0, 1, 1], [], []>} : vector<16x16xbf16>, vector<16x16xbf16>, vector<16x16xf32> -> vector<16x16xf32>
        %120 = arith.subf %118, %119 : vector<16x16xf32>
        %cst_53 = arith.constant dense<0.000000e+00> : vector<16x16xf32>
        %121 = tpu.matmul %1, %117, %cst_53 {dimension_numbers = #tpu.dot_dimension_numbers<[1], [0], [0], [1], [0, 0, 1, 1], [], []>} : vector<16x16xbf16>, vector<16x16xbf16>, vector<16x16xf32> -> vector<16x16xf32>
        %cst_54 = arith.constant dense<0.000000e+00> : vector<16x16xf32>
        %122 = tpu.matmul %6, %116, %cst_54 {dimension_numbers = #tpu.dot_dimension_numbers<[1], [0], [0], [1], [0, 0, 1, 1], [], []>} : vector<16x16xbf16>, vector<16x16xbf16>, vector<16x16xf32> -> vector<16x16xf32>
        %123 = arith.addf %121, %122 : vector<16x16xf32>
        %124 = arith.truncf %120 : vector<16x16xf32> to vector<16x16xbf16>
        %125 = arith.truncf %123 : vector<16x16xf32> to vector<16x16xbf16>
        %cst_55 = arith.constant dense<0.000000e+00> : vector<16x16xf32>
        %126 = tpu.matmul %124, %3, %cst_55 {dimension_numbers = #tpu.dot_dimension_numbers<[1], [0], [0], [1], [0, 0, 1, 1], [], []>} : vector<16x16xbf16>, vector<16x16xbf16>, vector<16x16xf32> -> vector<16x16xf32>
        %cst_56 = arith.constant dense<0.000000e+00> : vector<16x16xf32>
        %127 = tpu.matmul %125, %8, %cst_56 {dimension_numbers = #tpu.dot_dimension_numbers<[1], [0], [0], [1], [0, 0, 1, 1], [], []>} : vector<16x16xbf16>, vector<16x16xbf16>, vector<16x16xf32> -> vector<16x16xf32>
        %128 = arith.subf %126, %127 : vector<16x16xf32>
        %cst_57 = arith.constant dense<0.000000e+00> : vector<16x16xf32>
        %129 = tpu.matmul %124, %8, %cst_57 {dimension_numbers = #tpu.dot_dimension_numbers<[1], [0], [0], [1], [0, 0, 1, 1], [], []>} : vector<16x16xbf16>, vector<16x16xbf16>, vector<16x16xf32> -> vector<16x16xf32>
        %cst_58 = arith.constant dense<0.000000e+00> : vector<16x16xf32>
        %130 = tpu.matmul %125, %3, %cst_58 {dimension_numbers = #tpu.dot_dimension_numbers<[1], [0], [0], [1], [0, 0, 1, 1], [], []>} : vector<16x16xbf16>, vector<16x16xbf16>, vector<16x16xf32> -> vector<16x16xf32>
        %131 = arith.addf %129, %130 : vector<16x16xf32>
        %132 = arith.mulf %88, %128 : vector<16x16xf32>
        %133 = arith.mulf %91, %131 : vector<16x16xf32>
        %134 = arith.addf %132, %133 : vector<16x16xf32>
        %135 = arith.addf %arg24, %134 : vector<16x16xf32>
        %136 = arith.mulf %88, %131 : vector<16x16xf32>
        %137 = arith.mulf %91, %128 : vector<16x16xf32>
        %138 = arith.subf %136, %137 : vector<16x16xf32>
        %139 = arith.addf %arg25, %138 : vector<16x16xf32>
        scf.yield %135, %139 : vector<16x16xf32>, vector<16x16xf32>
      }
      %c4_i32_36 = arith.constant 4 : i32
      %44 = vector.broadcast %0 : f32 to vector<16x16xf32>
      %45 = arith.mulf %44, %arg20 : vector<16x16xf32>
      %46 = arith.addf %43#0, %45 : vector<16x16xf32>
      %47 = vector.broadcast %0 : f32 to vector<16x16xf32>
      %48 = arith.mulf %47, %arg21 : vector<16x16xf32>
      %49 = arith.addf %43#1, %48 : vector<16x16xf32>
      %50 = arith.mulf %arg20, %46 : vector<16x16xf32>
      %51 = arith.mulf %arg21, %49 : vector<16x16xf32>
      %52 = arith.addf %50, %51 : vector<16x16xf32>
      %53 = vector.shape_cast %52 : vector<16x16xf32> to vector<1x16x16xf32>
      %cst_37 = arith.constant dense<0.000000e+00> : vector<1xf32>
      %54 = vector.multi_reduction <add>, %53, %cst_37 [1, 2] : vector<1x16x16xf32> to vector<1xf32>
      %55 = vector.shape_cast %54 : vector<1xf32> to vector<1x1x1xf32>
      %56 = vector.extract %55[0, 0, 0] : f32 from vector<1x1x1xf32>
      %57 = arith.addf %56, %cst_26 : f32
      %58 = arith.divf %arg22, %57 : f32
      %59 = vector.broadcast %58 : f32 to vector<16x16xf32>
      %60 = arith.mulf %59, %arg20 : vector<16x16xf32>
      %61 = arith.addf %arg16, %60 : vector<16x16xf32>
      %62 = vector.broadcast %58 : f32 to vector<16x16xf32>
      %63 = arith.mulf %62, %arg21 : vector<16x16xf32>
      %64 = arith.addf %arg17, %63 : vector<16x16xf32>
      %65 = vector.broadcast %58 : f32 to vector<16x16xf32>
      %66 = arith.mulf %65, %46 : vector<16x16xf32>
      %67 = arith.subf %arg18, %66 : vector<16x16xf32>
      %68 = vector.broadcast %58 : f32 to vector<16x16xf32>
      %69 = arith.mulf %68, %49 : vector<16x16xf32>
      %70 = arith.subf %arg19, %69 : vector<16x16xf32>
      %71 = arith.mulf %67, %67 : vector<16x16xf32>
      %72 = arith.mulf %70, %70 : vector<16x16xf32>
      %73 = arith.addf %71, %72 : vector<16x16xf32>
      %74 = vector.shape_cast %73 : vector<16x16xf32> to vector<1x16x16xf32>
      %cst_38 = arith.constant dense<0.000000e+00> : vector<1xf32>
      %75 = vector.multi_reduction <add>, %74, %cst_38 [1, 2] : vector<1x16x16xf32> to vector<1xf32>
      %76 = vector.shape_cast %75 : vector<1xf32> to vector<1x1x1xf32>
      %77 = vector.extract %76[0, 0, 0] : f32 from vector<1x1x1xf32>
      %78 = arith.addf %arg22, %cst_26 : f32
      %79 = arith.divf %77, %78 : f32
      %80 = vector.broadcast %79 : f32 to vector<16x16xf32>
      %81 = arith.mulf %80, %arg20 : vector<16x16xf32>
      %82 = arith.addf %67, %81 : vector<16x16xf32>
      %83 = vector.broadcast %79 : f32 to vector<16x16xf32>
      %84 = arith.mulf %83, %arg21 : vector<16x16xf32>
      %85 = arith.addf %70, %84 : vector<16x16xf32>
      scf.yield %61, %64, %67, %70, %82, %85, %77 : vector<16x16xf32>, vector<16x16xf32>, vector<16x16xf32>, vector<16x16xf32>, vector<16x16xf32>, vector<16x16xf32>, f32
    }
    %c0_27 = arith.constant 0 : index
    %c0_28 = arith.constant 0 : index
    %c0_29 = arith.constant 0 : index
    %35 = vector.load %arg13[%c0_27, %c0_28, %c0_29] : memref<1x16x16xf32, #tpu.memory_space<vmem>>, vector<1x16x16xf32>
    %36 = vector.shape_cast %35 : vector<1x16x16xf32> to vector<16x16xf32>
    %37 = vector.shape_cast %34#0 : vector<16x16xf32> to vector<1x16x16xf32>
    tpu.vector_store %arg13[%c0_27, %c0_28, %c0_29], %37 {strides = array<i32>} : memref<1x16x16xf32, #tpu.memory_space<vmem>>, vector<1x16x16xf32>,
    %c0_30 = arith.constant 0 : index
    %c0_31 = arith.constant 0 : index
    %c0_32 = arith.constant 0 : index
    %38 = vector.load %arg14[%c0_30, %c0_31, %c0_32] : memref<1x16x16xf32, #tpu.memory_space<vmem>>, vector<1x16x16xf32>
    %39 = vector.shape_cast %38 : vector<1x16x16xf32> to vector<16x16xf32>
    %40 = vector.shape_cast %34#1 : vector<16x16xf32> to vector<1x16x16xf32>
    tpu.vector_store %arg14[%c0_30, %c0_31, %c0_32], %40 {strides = array<i32>} : memref<1x16x16xf32, #tpu.memory_space<vmem>>, vector<1x16x16xf32>,
    return
  }
  func.func @transform_0(%arg0: i32) -> (i32, i32, i32) {
    %c0_i32 = arith.constant 0 : i32
    %c0_i32_0 = arith.constant 0 : i32
    %c0_i32_1 = arith.constant 0 : i32
    return %arg0, %c0_i32, %c0_i32_0 : i32, i32, i32
  }
  func.func @transform_1(%arg0: i32) -> (i32, i32, i32) {
    %c0_i32 = arith.constant 0 : i32
    %c0_i32_0 = arith.constant 0 : i32
    %c0_i32_1 = arith.constant 0 : i32
    return %arg0, %c0_i32, %c0_i32_0 : i32, i32, i32
  }
  func.func @transform_2(%arg0: i32) -> (i32, i32, i32) {
    %c0_i32 = arith.constant 0 : i32
    %c0_i32_0 = arith.constant 0 : i32
    %c0_i32_1 = arith.constant 0 : i32
    return %arg0, %c0_i32, %c0_i32_0 : i32, i32, i32
  }
  func.func @transform_3(%arg0: i32) -> (i32, i32, i32) {
    %c0_i32 = arith.constant 0 : i32
    %c0_i32_0 = arith.constant 0 : i32
    %c0_i32_1 = arith.constant 0 : i32
    return %arg0, %c0_i32, %c0_i32_0 : i32, i32, i32
  }
  func.func @transform_4(%arg0: i32) -> (i32, i32, i32) {
    %c0_i32 = arith.constant 0 : i32
    %c0_i32_0 = arith.constant 0 : i32
    %c0_i32_1 = arith.constant 0 : i32
    return %arg0, %c0_i32, %c0_i32_0 : i32, i32, i32
  }
  func.func @transform_5(%arg0: i32) -> (i32, i32, i32) {
    %c0_i32 = arith.constant 0 : i32
    %c0_i32_0 = arith.constant 0 : i32
    %c0_i32_1 = arith.constant 0 : i32
    return %arg0, %c0_i32, %c0_i32_0 : i32, i32, i32
  }
  func.func @transform_6(%arg0: i32) -> (i32, i32, i32) {
    %c0_i32 = arith.constant 0 : i32
    %c0_i32_0 = arith.constant 0 : i32
    %c0_i32_1 = arith.constant 0 : i32
    return %arg0, %c0_i32, %c0_i32_0 : i32, i32, i32
  }
  func.func @transform_7(%arg0: i32) -> (i32, i32) {
    %c0_i32 = arith.constant 0 : i32
    %c0_i32_0 = arith.constant 0 : i32
    %c0_i32_1 = arith.constant 0 : i32
    return %c0_i32, %c0_i32_0 : i32, i32
  }
  func.func @transform_8(%arg0: i32) -> (i32, i32) {
    %c0_i32 = arith.constant 0 : i32
    %c0_i32_0 = arith.constant 0 : i32
    %c0_i32_1 = arith.constant 0 : i32
    return %c0_i32, %c0_i32_0 : i32, i32
  }
  func.func @transform_9(%arg0: i32) -> (i32, i32) {
    %c0_i32 = arith.constant 0 : i32
    %c0_i32_0 = arith.constant 0 : i32
    %c0_i32_1 = arith.constant 0 : i32
    return %c0_i32, %c0_i32_0 : i32, i32
  }
  func.func @transform_10(%arg0: i32) -> (i32, i32) {
    %c0_i32 = arith.constant 0 : i32
    %c0_i32_0 = arith.constant 0 : i32
    %c0_i32_1 = arith.constant 0 : i32
    return %c0_i32, %c0_i32_0 : i32, i32
  }
  func.func @transform_11(%arg0: i32) -> i32 {
    %c0_i32 = arith.constant 0 : i32
    %c0_i32_0 = arith.constant 0 : i32
    return %c0_i32 : i32
  }
  func.func @transform_12(%arg0: i32) -> (i32, i32, i32) {
    %c0_i32 = arith.constant 0 : i32
    %c0_i32_0 = arith.constant 0 : i32
    %c0_i32_1 = arith.constant 0 : i32
    return %arg0, %c0_i32, %c0_i32_0 : i32, i32, i32
  }
  func.func @transform_13(%arg0: i32) -> (i32, i32, i32) {
    %c0_i32 = arith.constant 0 : i32
    %c0_i32_0 = arith.constant 0 : i32
    %c0_i32_1 = arith.constant 0 : i32
    return %arg0, %c0_i32, %c0_i32_0 : i32, i32, i32
  }
}

module attributes {stable_mosaic.version = 11 : i64} {
  func.func @_ssdu_kspace_kernel(%arg0: i32, %arg1: i32, %arg2: memref<1x16x16xf32, #tpu.memory_space<vmem>>, %arg3: memref<1x16x16xf32, #tpu.memory_space<vmem>>, %arg4: memref<1x16x16xf32, #tpu.memory_space<vmem>>, %arg5: memref<1x16x16xf32, #tpu.memory_space<vmem>>, %arg6: memref<1x16x16xf32, #tpu.memory_space<vmem>>, %arg7: memref<16x16xbf16, #tpu.memory_space<vmem>>, %arg8: memref<16x16xbf16, #tpu.memory_space<vmem>>, %arg9: memref<16x16xbf16, #tpu.memory_space<vmem>>, %arg10: memref<16x16xbf16, #tpu.memory_space<vmem>>, %arg11: memref<1x16x16xf32, #tpu.memory_space<vmem>>, %arg12: memref<1x16x16xf32, #tpu.memory_space<vmem>>) attributes {dimension_semantics = [#tpu.dimension_semantics<parallel>, #tpu.dimension_semantics<parallel>], iteration_bounds = array<i64: 2, 4>, scalar_prefetch = 0 : i64, scratch_operands = 0 : i64, tpu.core_type = #tpu.core_type<tc>, window_params = [{transform_indices = @transform_0, window_bounds = array<i64: 1, 16, 16>}, {transform_indices = @transform_1, window_bounds = array<i64: 1, 16, 16>}, {transform_indices = @transform_2, window_bounds = array<i64: 1, 16, 16>}, {transform_indices = @transform_3, window_bounds = array<i64: 1, 16, 16>}, {transform_indices = @transform_4, window_bounds = array<i64: 1, 16, 16>}, {pipeline_mode = #tpu.pipeline_mode<synchronous>, transform_indices = @transform_5, window_bounds = array<i64: 16, 16>}, {pipeline_mode = #tpu.pipeline_mode<synchronous>, transform_indices = @transform_6, window_bounds = array<i64: 16, 16>}, {pipeline_mode = #tpu.pipeline_mode<synchronous>, transform_indices = @transform_7, window_bounds = array<i64: 16, 16>}, {pipeline_mode = #tpu.pipeline_mode<synchronous>, transform_indices = @transform_8, window_bounds = array<i64: 16, 16>}, {transform_indices = @transform_9, window_bounds = array<i64: 1, 16, 16>}, {transform_indices = @transform_10, window_bounds = array<i64: 1, 16, 16>}]} {
    %c0 = arith.constant 0 : index
    %c0_0 = arith.constant 0 : index
    %c0_1 = arith.constant 0 : index
    %0 = vector.load %arg2[%c0, %c0_0, %c0_1] : memref<1x16x16xf32, #tpu.memory_space<vmem>>, vector<1x16x16xf32>
    %1 = vector.shape_cast %0 : vector<1x16x16xf32> to vector<16x16xf32>
    %c0_2 = arith.constant 0 : index
    %c0_3 = arith.constant 0 : index
    %c0_4 = arith.constant 0 : index
    %2 = vector.load %arg3[%c0_2, %c0_3, %c0_4] : memref<1x16x16xf32, #tpu.memory_space<vmem>>, vector<1x16x16xf32>
    %3 = vector.shape_cast %2 : vector<1x16x16xf32> to vector<16x16xf32>
    %c0_5 = arith.constant 0 : index
    %c0_6 = arith.constant 0 : index
    %c0_7 = arith.constant 0 : index
    %4 = vector.load %arg4[%c0_5, %c0_6, %c0_7] : memref<1x16x16xf32, #tpu.memory_space<vmem>>, vector<1x16x16xf32>
    %5 = vector.shape_cast %4 : vector<1x16x16xf32> to vector<16x16xf32>
    %c0_8 = arith.constant 0 : index
    %c0_9 = arith.constant 0 : index
    %c0_10 = arith.constant 0 : index
    %6 = vector.load %arg5[%c0_8, %c0_9, %c0_10] : memref<1x16x16xf32, #tpu.memory_space<vmem>>, vector<1x16x16xf32>
    %7 = vector.shape_cast %6 : vector<1x16x16xf32> to vector<16x16xf32>
    %c0_11 = arith.constant 0 : index
    %c0_12 = arith.constant 0 : index
    %c0_13 = arith.constant 0 : index
    %8 = vector.load %arg6[%c0_11, %c0_12, %c0_13] : memref<1x16x16xf32, #tpu.memory_space<vmem>>, vector<1x16x16xf32>
    %9 = vector.shape_cast %8 : vector<1x16x16xf32> to vector<16x16xf32>
    %10 = arith.mulf %5, %1 : vector<16x16xf32>
    %11 = arith.mulf %7, %3 : vector<16x16xf32>
    %12 = arith.subf %10, %11 : vector<16x16xf32>
    %13 = arith.mulf %5, %3 : vector<16x16xf32>
    %14 = arith.mulf %7, %1 : vector<16x16xf32>
    %15 = arith.addf %13, %14 : vector<16x16xf32>
    %c0_14 = arith.constant 0 : index
    %c0_15 = arith.constant 0 : index
    %16 = vector.load %arg7[%c0_14, %c0_15] : memref<16x16xbf16, #tpu.memory_space<vmem>>, vector<16x16xbf16>
    %c0_16 = arith.constant 0 : index
    %c0_17 = arith.constant 0 : index
    %17 = vector.load %arg8[%c0_16, %c0_17] : memref<16x16xbf16, #tpu.memory_space<vmem>>, vector<16x16xbf16>
    %18 = arith.truncf %12 : vector<16x16xf32> to vector<16x16xbf16>
    %19 = arith.truncf %15 : vector<16x16xf32> to vector<16x16xbf16>
    %cst = arith.constant dense<0.000000e+00> : vector<16x16xf32>
    %20 = tpu.matmul %16, %18, %cst {dimension_numbers = #tpu.dot_dimension_numbers<[1], [0], [0], [1], [0, 0, 1, 1], [], []>} : vector<16x16xbf16>, vector<16x16xbf16>, vector<16x16xf32> -> vector<16x16xf32>
    %cst_18 = arith.constant dense<0.000000e+00> : vector<16x16xf32>
    %21 = tpu.matmul %17, %19, %cst_18 {dimension_numbers = #tpu.dot_dimension_numbers<[1], [0], [0], [1], [0, 0, 1, 1], [], []>} : vector<16x16xbf16>, vector<16x16xbf16>, vector<16x16xf32> -> vector<16x16xf32>
    %22 = arith.subf %20, %21 : vector<16x16xf32>
    %cst_19 = arith.constant dense<0.000000e+00> : vector<16x16xf32>
    %23 = tpu.matmul %16, %19, %cst_19 {dimension_numbers = #tpu.dot_dimension_numbers<[1], [0], [0], [1], [0, 0, 1, 1], [], []>} : vector<16x16xbf16>, vector<16x16xbf16>, vector<16x16xf32> -> vector<16x16xf32>
    %cst_20 = arith.constant dense<0.000000e+00> : vector<16x16xf32>
    %24 = tpu.matmul %17, %18, %cst_20 {dimension_numbers = #tpu.dot_dimension_numbers<[1], [0], [0], [1], [0, 0, 1, 1], [], []>} : vector<16x16xbf16>, vector<16x16xbf16>, vector<16x16xf32> -> vector<16x16xf32>
    %25 = arith.addf %23, %24 : vector<16x16xf32>
    %c0_21 = arith.constant 0 : index
    %c0_22 = arith.constant 0 : index
    %26 = vector.load %arg9[%c0_21, %c0_22] : memref<16x16xbf16, #tpu.memory_space<vmem>>, vector<16x16xbf16>
    %c0_23 = arith.constant 0 : index
    %c0_24 = arith.constant 0 : index
    %27 = vector.load %arg10[%c0_23, %c0_24] : memref<16x16xbf16, #tpu.memory_space<vmem>>, vector<16x16xbf16>
    %28 = arith.truncf %22 : vector<16x16xf32> to vector<16x16xbf16>
    %29 = arith.truncf %25 : vector<16x16xf32> to vector<16x16xbf16>
    %cst_25 = arith.constant dense<0.000000e+00> : vector<16x16xf32>
    %30 = tpu.matmul %28, %26, %cst_25 {dimension_numbers = #tpu.dot_dimension_numbers<[1], [0], [0], [1], [0, 0, 1, 1], [], []>} : vector<16x16xbf16>, vector<16x16xbf16>, vector<16x16xf32> -> vector<16x16xf32>
    %cst_26 = arith.constant dense<0.000000e+00> : vector<16x16xf32>
    %31 = tpu.matmul %29, %27, %cst_26 {dimension_numbers = #tpu.dot_dimension_numbers<[1], [0], [0], [1], [0, 0, 1, 1], [], []>} : vector<16x16xbf16>, vector<16x16xbf16>, vector<16x16xf32> -> vector<16x16xf32>
    %32 = arith.subf %30, %31 : vector<16x16xf32>
    %cst_27 = arith.constant dense<0.000000e+00> : vector<16x16xf32>
    %33 = tpu.matmul %28, %27, %cst_27 {dimension_numbers = #tpu.dot_dimension_numbers<[1], [0], [0], [1], [0, 0, 1, 1], [], []>} : vector<16x16xbf16>, vector<16x16xbf16>, vector<16x16xf32> -> vector<16x16xf32>
    %cst_28 = arith.constant dense<0.000000e+00> : vector<16x16xf32>
    %34 = tpu.matmul %29, %26, %cst_28 {dimension_numbers = #tpu.dot_dimension_numbers<[1], [0], [0], [1], [0, 0, 1, 1], [], []>} : vector<16x16xbf16>, vector<16x16xbf16>, vector<16x16xf32> -> vector<16x16xf32>
    %35 = arith.addf %33, %34 : vector<16x16xf32>
    %36 = arith.mulf %32, %9 : vector<16x16xf32>
    %c0_29 = arith.constant 0 : index
    %c0_30 = arith.constant 0 : index
    %c0_31 = arith.constant 0 : index
    %37 = vector.load %arg11[%c0_29, %c0_30, %c0_31] : memref<1x16x16xf32, #tpu.memory_space<vmem>>, vector<1x16x16xf32>
    %38 = vector.shape_cast %37 : vector<1x16x16xf32> to vector<16x16xf32>
    %39 = vector.shape_cast %36 : vector<16x16xf32> to vector<1x16x16xf32>
    tpu.vector_store %arg11[%c0_29, %c0_30, %c0_31], %39 {strides = array<i32>} : memref<1x16x16xf32, #tpu.memory_space<vmem>>, vector<1x16x16xf32>,
    %40 = arith.mulf %35, %9 : vector<16x16xf32>
    %c0_32 = arith.constant 0 : index
    %c0_33 = arith.constant 0 : index
    %c0_34 = arith.constant 0 : index
    %41 = vector.load %arg12[%c0_32, %c0_33, %c0_34] : memref<1x16x16xf32, #tpu.memory_space<vmem>>, vector<1x16x16xf32>
    %42 = vector.shape_cast %41 : vector<1x16x16xf32> to vector<16x16xf32>
    %43 = vector.shape_cast %40 : vector<16x16xf32> to vector<1x16x16xf32>
    tpu.vector_store %arg12[%c0_32, %c0_33, %c0_34], %43 {strides = array<i32>} : memref<1x16x16xf32, #tpu.memory_space<vmem>>, vector<1x16x16xf32>,
    return
  }
  func.func @transform_0(%arg0: i32, %arg1: i32) -> (i32, i32, i32) {
    %c0_i32 = arith.constant 0 : i32
    %c0_i32_0 = arith.constant 0 : i32
    %c0_i32_1 = arith.constant 0 : i32
    return %arg0, %c0_i32, %c0_i32_0 : i32, i32, i32
  }
  func.func @transform_1(%arg0: i32, %arg1: i32) -> (i32, i32, i32) {
    %c0_i32 = arith.constant 0 : i32
    %c0_i32_0 = arith.constant 0 : i32
    %c0_i32_1 = arith.constant 0 : i32
    return %arg0, %c0_i32, %c0_i32_0 : i32, i32, i32
  }
  func.func @transform_2(%arg0: i32, %arg1: i32) -> (i32, i32, i32) {
    %c4_i32 = arith.constant 4 : i32
    %0 = arith.muli %arg0, %c4_i32 : i32
    %1 = arith.addi %0, %arg1 : i32
    %c0_i32 = arith.constant 0 : i32
    %c0_i32_0 = arith.constant 0 : i32
    %c0_i32_1 = arith.constant 0 : i32
    return %1, %c0_i32, %c0_i32_0 : i32, i32, i32
  }
  func.func @transform_3(%arg0: i32, %arg1: i32) -> (i32, i32, i32) {
    %c4_i32 = arith.constant 4 : i32
    %0 = arith.muli %arg0, %c4_i32 : i32
    %1 = arith.addi %0, %arg1 : i32
    %c0_i32 = arith.constant 0 : i32
    %c0_i32_0 = arith.constant 0 : i32
    %c0_i32_1 = arith.constant 0 : i32
    return %1, %c0_i32, %c0_i32_0 : i32, i32, i32
  }
  func.func @transform_4(%arg0: i32, %arg1: i32) -> (i32, i32, i32) {
    %c0_i32 = arith.constant 0 : i32
    %c0_i32_0 = arith.constant 0 : i32
    %c0_i32_1 = arith.constant 0 : i32
    return %arg0, %c0_i32, %c0_i32_0 : i32, i32, i32
  }
  func.func @transform_5(%arg0: i32, %arg1: i32) -> (i32, i32) {
    %c0_i32 = arith.constant 0 : i32
    %c0_i32_0 = arith.constant 0 : i32
    %c0_i32_1 = arith.constant 0 : i32
    return %c0_i32, %c0_i32_0 : i32, i32
  }
  func.func @transform_6(%arg0: i32, %arg1: i32) -> (i32, i32) {
    %c0_i32 = arith.constant 0 : i32
    %c0_i32_0 = arith.constant 0 : i32
    %c0_i32_1 = arith.constant 0 : i32
    return %c0_i32, %c0_i32_0 : i32, i32
  }
  func.func @transform_7(%arg0: i32, %arg1: i32) -> (i32, i32) {
    %c0_i32 = arith.constant 0 : i32
    %c0_i32_0 = arith.constant 0 : i32
    %c0_i32_1 = arith.constant 0 : i32
    return %c0_i32, %c0_i32_0 : i32, i32
  }
  func.func @transform_8(%arg0: i32, %arg1: i32) -> (i32, i32) {
    %c0_i32 = arith.constant 0 : i32
    %c0_i32_0 = arith.constant 0 : i32
    %c0_i32_1 = arith.constant 0 : i32
    return %c0_i32, %c0_i32_0 : i32, i32
  }
  func.func @transform_9(%arg0: i32, %arg1: i32) -> (i32, i32, i32) {
    %c4_i32 = arith.constant 4 : i32
    %0 = arith.muli %arg0, %c4_i32 : i32
    %1 = arith.addi %0, %arg1 : i32
    %c0_i32 = arith.constant 0 : i32
    %c0_i32_0 = arith.constant 0 : i32
    %c0_i32_1 = arith.constant 0 : i32
    return %1, %c0_i32, %c0_i32_0 : i32, i32, i32
  }
  func.func @transform_10(%arg0: i32, %arg1: i32) -> (i32, i32, i32) {
    %c4_i32 = arith.constant 4 : i32
    %0 = arith.muli %arg0, %c4_i32 : i32
    %1 = arith.addi %0, %arg1 : i32
    %c0_i32 = arith.constant 0 : i32
    %c0_i32_0 = arith.constant 0 : i32
    %c0_i32_1 = arith.constant 0 : i32
    return %1, %c0_i32, %c0_i32_0 : i32, i32, i32
  }
}

</mosaic_0001>

<llo_original>
// kernel: unrolled_net_forward.17
$region0: #{unrolled_net_forward.17}
  #allocation0 [shape = 'u32[]', space=smem, size = 0x4, offset = 0x4, fixed_abs, tag = 'smem constant byte address 0x4 - core index']
  #allocation1 [shape = 'u32[144,128]{1,0:T(1,128)}', space=vmem, size = 0x12000, scoped, tag = 'internal scratch']
  %s0 = inlined_call_operand.vmem [shape: bf16[512,18], index: 0, kind: input, shape index: {}]
  %s1 = inlined_call_operand.vmem [shape: bf16[18,32], index: 1, kind: input, shape index: {}]
  %s2 = inlined_call_operand.vmem [shape: f32[1,32], index: 2, kind: input, shape index: {}]
  %s3 = inlined_call_operand.vmem [shape: f32[512,32], index: 3, kind: output, shape index: {}]
  %s4 = sld [smem:[#allocation0]]
  $region22: #{unrolled_net_forward.17} parent=0
    _
  %s6 = ssub.s32 1, %s4
  %s7 = scalar_select 0, %s6, %s4
  // Predicated region
  $region2: #{unrolled_net_forward.17} parent=0 // pred_check
    _
  $region3: #{unrolled_net_forward.17} parent=0 // pred_check_branch
    %9 = sbr.rel (0) target = $region5
  $region4: #{unrolled_net_forward.17} parent=0 // pred_region
    _
  $region5: #{unrolled_net_forward.17} parent=0 // pred_fallthru
    _
  // Predicated region
  $region6: #{unrolled_net_forward.17} parent=0 // pred_check
    _
  $region7: #{unrolled_net_forward.17} parent=0 // pred_check_branch
    %11 = sbr.rel (0) target = $region9
  $region8: #{unrolled_net_forward.17} parent=0 // pred_region
    _
  $region9: #{unrolled_net_forward.17} parent=0 // pred_fallthru
    _
  // Predicated region
  $region10: #{unrolled_net_forward.17} parent=0 // pred_check
    _
  $region11: #{unrolled_net_forward.17} parent=0 // pred_check_branch
    %13 = sbr.rel (0) target = $region13
  $region12: #{unrolled_net_forward.17} parent=0 // pred_region
    _
  $region13: #{unrolled_net_forward.17} parent=0 // pred_fallthru
    _
  %v15 = vld [vmem:[%s0] sm:$0xf]
  %v16 = vld [vmem:[%s0 + $0x4] sm:$0xf]
  %v17 = vld [vmem:[%s0 + $0x8] sm:$0xf]
  %v18 = vld [vmem:[%s0 + $0xc] sm:$0xf]
  %v19 = vld [vmem:[%s0 + $0x10] sm:$0xf]
  %v20 = vld [vmem:[%s0 + $0x14] sm:$0xf]
  %v21 = vld [vmem:[%s0 + $0x18] sm:$0xf]
  %v22 = vld [vmem:[%s0 + $0x1c] sm:$0xf]
  %v23 = vld [vmem:[%s0 + $0x20] sm:$0xf]
  %v24 = vld [vmem:[%s0 + $0x24] sm:$0xf]
  %v25 = vld [vmem:[%s0 + $0x28] sm:$0xf]
  %v26 = vld [vmem:[%s0 + $0x2c] sm:$0xf]
  %v27 = vld [vmem:[%s0 + $0x30] sm:$0xf]
  %v28 = vld [vmem:[%s0 + $0x34] sm:$0xf]
  %v29 = vld [vmem:[%s0 + $0x38] sm:$0xf]
  %v30 = vld [vmem:[%s0 + $0x3c] sm:$0xf]
  %v31 = vld [vmem:[%s0 + $0x40] sm:$0xf]
  %v32 = vld [vmem:[%s0 + $0x44] sm:$0xf]
  %v33 = vld [vmem:[%s0 + $0x48] sm:$0xf]
  %v34 = vld [vmem:[%s0 + $0x4c] sm:$0xf]
  %v35 = vld [vmem:[%s0 + $0x50] sm:$0xf]
  %v36 = vld [vmem:[%s0 + $0x54] sm:$0xf]
  %v37 = vld [vmem:[%s0 + $0x58] sm:$0xf]
  %v38 = vld [vmem:[%s0 + $0x5c] sm:$0xf]
  %v39 = vld [vmem:[%s0 + $0x60] sm:$0xf]
  %v40 = vld [vmem:[%s0 + $0x64] sm:$0xf]
  %v41 = vld [vmem:[%s0 + $0x68] sm:$0xf]
  %v42 = vld [vmem:[%s0 + $0x6c] sm:$0xf]
  %v43 = vld [vmem:[%s0 + $0x70] sm:$0xf]
  %v44 = vld [vmem:[%s0 + $0x74] sm:$0xf]
  %v45 = vld [vmem:[%s0 + $0x78] sm:$0xf]
  %v46 = vld [vmem:[%s0 + $0x7c] sm:$0xf]
  %v47 = vld [vmem:[%s0 + $0x80] sm:$0xf]
  %v48 = vld [vmem:[%s0 + $0x84] sm:$0xf]
  %v49 = vld [vmem:[%s0 + $0x88] sm:$0xf]
  %v50 = vld [vmem:[%s0 + $0x8c] sm:$0xf]
  %v51 = vld [vmem:[%s0 + $0x90] sm:$0xf]
  %v52 = vld [vmem:[%s0 + $0x94] sm:$0xf]
  %v53 = vld [vmem:[%s0 + $0x98] sm:$0xf]
  %v54 = vld [vmem:[%s0 + $0x9c] sm:$0xf]
  %v55 = vld [vmem:[%s0 + $0xa0] sm:$0xf]
  %v56 = vld [vmem:[%s0 + $0xa4] sm:$0xf]
  %v57 = vld [vmem:[%s0 + $0xa8] sm:$0xf]
  %v58 = vld [vmem:[%s0 + $0xac] sm:$0xf]
  %v59 = vld [vmem:[%s0 + $0xb0] sm:$0xf]
  %v60 = vld [vmem:[%s0 + $0xb4] sm:$0xf]
  %v61 = vld [vmem:[%s0 + $0xb8] sm:$0xf]
  %v62 = vld [vmem:[%s0 + $0xbc] sm:$0xf]
  %v63 = vld [vmem:[%s0 + $0xc0] sm:$0xf]
  %v64 = vld [vmem:[%s0 + $0xc4] sm:$0xf]
  %v65 = vld [vmem:[%s0 + $0xc8] sm:$0xf]
  %v66 = vld [vmem:[%s0 + $0xcc] sm:$0xf]
  %v67 = vld [vmem:[%s0 + $0xd0] sm:$0xf]
  %v68 = vld [vmem:[%s0 + $0xd4] sm:$0xf]
  %v69 = vld [vmem:[%s0 + $0xd8] sm:$0xf]
  %v70 = vld [vmem:[%s0 + $0xdc] sm:$0xf]
  %v71 = vld [vmem:[%s0 + $0xe0] sm:$0xf]
  %v72 = vld [vmem:[%s0 + $0xe4] sm:$0xf]
  %v73 = vld [vmem:[%s0 + $0xe8] sm:$0xf]
  %v74 = vld [vmem:[%s0 + $0xec] sm:$0xf]
  %v75 = vld [vmem:[%s0 + $0xf0] sm:$0xf]
  %v76 = vld [vmem:[%s0 + $0xf4] sm:$0xf]
  %v77 = vld [vmem:[%s0 + $0xf8] sm:$0xf]
  %v78 = vld [vmem:[%s0 + $0xfc] sm:$0xf]
  %v79 = vld [vmem:[%s1] sm:$0xf]
  %v80 = vld [vmem:[%s1 + $0x4] sm:$0xf]
  %v81 = vld [vmem:[%s1 + $0x8] sm:$0x1]
  %v82 = vld [vmem:[%s2] sm:$0x1]
  %v84 = vlaneseq
  %v85 = vshrl.u32 %v84, 7
  %v86 = vsub.s32 0, %v85
  %v87 = vrot.slane %v82, %v86
  %v153 = vunpack.c.l.b16 %v15
  %v154 = vunpack.c.l.b16 %v16
  %v155 = vunpack.c.l.b16 %v17
  %v156 = vunpack.c.l.b16 %v18
  %v157 = vunpack.c.l.b16 %v19
  %v158 = vunpack.c.l.b16 %v20
  %v159 = vunpack.c.l.b16 %v21
  %v160 = vunpack.c.l.b16 %v22
  %v161 = vunpack.c.l.b16 %v23
  %v162 = vunpack.c.l.b16 %v24
  %v163 = vunpack.c.l.b16 %v25
  %v164 = vunpack.c.l.b16 %v26
  %v165 = vunpack.c.l.b16 %v27
  %v166 = vunpack.c.l.b16 %v28
  %v167 = vunpack.c.l.b16 %v29
  %v168 = vunpack.c.l.b16 %v30
  %v169 = vunpack.c.l.b16 %v31
  %v170 = vunpack.c.l.b16 %v32
  %v171 = vunpack.c.l.b16 %v33
  %v172 = vunpack.c.l.b16 %v34
  %v173 = vunpack.c.l.b16 %v35
  %v174 = vunpack.c.l.b16 %v36
  %v175 = vunpack.c.l.b16 %v37
  %v176 = vunpack.c.l.b16 %v38
  %v177 = vunpack.c.l.b16 %v39
  %v178 = vunpack.c.l.b16 %v40
  %v179 = vunpack.c.l.b16 %v41
  %v180 = vunpack.c.l.b16 %v42
  %v181 = vunpack.c.l.b16 %v43
  %v182 = vunpack.c.l.b16 %v44
  %v183 = vunpack.c.l.b16 %v45
  %v184 = vunpack.c.l.b16 %v46
  %v185 = vunpack.c.l.b16 %v47
  %v186 = vunpack.c.l.b16 %v48
  %v187 = vunpack.c.l.b16 %v49
  %v188 = vunpack.c.l.b16 %v50
  %v189 = vunpack.c.l.b16 %v51
  %v190 = vunpack.c.l.b16 %v52
  %v191 = vunpack.c.l.b16 %v53
  %v192 = vunpack.c.l.b16 %v54
  %v193 = vunpack.c.l.b16 %v55
  %v194 = vunpack.c.l.b16 %v56
  %v195 = vunpack.c.l.b16 %v57
  %v196 = vunpack.c.l.b16 %v58
  %v197 = vunpack.c.l.b16 %v59
  %v198 = vunpack.c.l.b16 %v60
  %v199 = vunpack.c.l.b16 %v61
  %v200 = vunpack.c.l.b16 %v62
  %v201 = vunpack.c.l.b16 %v63
  %v202 = vunpack.c.l.b16 %v64
  %v203 = vunpack.c.l.b16 %v65
  %v204 = vunpack.c.l.b16 %v66
  %v205 = vunpack.c.l.b16 %v67
  %v206 = vunpack.c.l.b16 %v68
  %v207 = vunpack.c.l.b16 %v69
  %v208 = vunpack.c.l.b16 %v70
  %v209 = vunpack.c.l.b16 %v71
  %v210 = vunpack.c.l.b16 %v72
  %v211 = vunpack.c.l.b16 %v73
  %v212 = vunpack.c.l.b16 %v74
  %v213 = vunpack.c.l.b16 %v75
  %v214 = vunpack.c.l.b16 %v76
  %v215 = vunpack.c.l.b16 %v77
  %v216 = vunpack.c.l.b16 %v78
  %v217 = vpack.c.b16 %v154, %v153
  %v218 = vpack.c.b16 %v156, %v155
  %v219 = vpack.c.b16 %v158, %v157
  %v220 = vpack.c.b16 %v160, %v159
  %v221 = vpack.c.b16 %v162, %v161
  %v222 = vpack.c.b16 %v164, %v163
  %v223 = vpack.c.b16 %v166, %v165
  %v224 = vpack.c.b16 %v168, %v167
  %v225 = vpack.c.b16 %v170, %v169
  %v226 = vpack.c.b16 %v172, %v171
  %v227 = vpack.c.b16 %v174, %v173
  %v228 = vpack.c.b16 %v176, %v175
  %v229 = vpack.c.b16 %v178, %v177
  %v230 = vpack.c.b16 %v180, %v179
  %v231 = vpack.c.b16 %v182, %v181
  %v232 = vpack.c.b16 %v184, %v183
  %v233 = vpack.c.b16 %v186, %v185
  %v234 = vpack.c.b16 %v188, %v187
  %v235 = vpack.c.b16 %v190, %v189
  %v236 = vpack.c.b16 %v192, %v191
  %v237 = vpack.c.b16 %v194, %v193
  %v238 = vpack.c.b16 %v196, %v195
  %v239 = vpack.c.b16 %v198, %v197
  %v240 = vpack.c.b16 %v200, %v199
  %v241 = vpack.c.b16 %v202, %v201
  %v242 = vpack.c.b16 %v204, %v203
  %v243 = vpack.c.b16 %v206, %v205
  %v244 = vpack.c.b16 %v208, %v207
  %v245 = vpack.c.b16 %v210, %v209
  %v246 = vpack.c.b16 %v212, %v211
  %v247 = vpack.c.b16 %v214, %v213
  %v248 = vpack.c.b16 %v216, %v215
  %v252 = vunpack.c.l.b16 %v79
  %v253 = vunpack.c.l.b16 %v80
  %v254 = vunpack.c.l.b16 %v81
  %v255 = vpack.c.b16 %v253, %v252
  %v256 = vpack.c.b16 %v254, %v254
  %vm258 = vcmask 146432
  %v260 = vsel %vm258, %v217, 0
  %v263 = vsel %vm258, %v218, 0
  %v266 = vsel %vm258, %v219, 0
  %v269 = vsel %vm258, %v220, 0
  %v272 = vsel %vm258, %v221, 0
  %v275 = vsel %vm258, %v222, 0
  %v278 = vsel %vm258, %v223, 0
  %v281 = vsel %vm258, %v224, 0
  %v284 = vsel %vm258, %v225, 0
  %v287 = vsel %vm258, %v226, 0
  %v290 = vsel %vm258, %v227, 0
  %v293 = vsel %vm258, %v228, 0
  %v296 = vsel %vm258, %v229, 0
  %v299 = vsel %vm258, %v230, 0
  %v302 = vsel %vm258, %v231, 0
  %v305 = vsel %vm258, %v232, 0
  %v308 = vsel %vm258, %v233, 0
  %v311 = vsel %vm258, %v234, 0
  %v314 = vsel %vm258, %v235, 0
  %v317 = vsel %vm258, %v236, 0
  %v320 = vsel %vm258, %v237, 0
  %v323 = vsel %vm258, %v238, 0
  %v326 = vsel %vm258, %v239, 0
  %v329 = vsel %vm258, %v240, 0
  %v332 = vsel %vm258, %v241, 0
  %v335 = vsel %vm258, %v242, 0
  %v338 = vsel %vm258, %v243, 0
  %v341 = vsel %vm258, %v244, 0
  %v344 = vsel %vm258, %v245, 0
  %v347 = vsel %vm258, %v246, 0
  %v350 = vsel %vm258, %v247, 0
  %v353 = vsel %vm258, %v248, 0
  %vm355 = vcmask 1040384
  %v357 = vsel %vm355, %v256, 0
  %359 = vmatprep.subr.bf16.mxu0 0
  %360 = vmatpush1.bf16.msra.mxu0 %v255
  %361 = vmatprep.subr.bf16.mxu0 0
  %362 = vmatpush1.bf16.msra.mxu0 %v357
  %363 = vmatprep.subr.bf16.mxu0 0
  %364 = vmatpush1.bf16.msra.mxu0 0
  %365 = vmatprep.subr.bf16.mxu0 0
  %366 = vmatpush1.bf16.msra.mxu0 0
  %367 = vmatprep.subr.bf16.mxu0 0
  %368 = vmatpush1.bf16.msra.mxu0 0
  %369 = vmatprep.subr.bf16.mxu0 0
  %370 = vmatpush1.bf16.msra.mxu0 0
  %371 = vmatprep.subr.bf16.mxu0 0
  %372 = vmatpush1.bf16.msra.mxu0 0
  %373 = vmatprep.subr.bf16.mxu0 0
  %374 = vmatpush1.bf16.msra.mxu0 0
  %375 = vmatprep.subr.bf16.mxu0 0
  %376 = vmatpush1.bf16.msra.mxu0 0
  %377 = vmatprep.subr.bf16.mxu0 0
  %378 = vmatpush1.bf16.msra.mxu0 0
  %379 = vmatprep.subr.bf16.mxu0 0
  %380 = vmatpush1.bf16.msra.mxu0 0
  %381 = vmatprep.subr.bf16.mxu0 0
  %382 = vmatpush1.bf16.msra.mxu0 0
  %383 = vmatprep.subr.bf16.mxu0 0
  %384 = vmatpush1.bf16.msra.mxu0 0
  %385 = vmatprep.subr.bf16.mxu0 0
  %386 = vmatpush1.bf16.msra.mxu0 0
  %387 = vmatprep.subr.bf16.mxu0 0
  %388 = vmatpush1.bf16.msra.mxu0 0
  %389 = vmatprep.subr.bf16.mxu0 0
  %390 = vmatpush1.bf16.msra.mxu0 0
  %391 = vmatprep.mubr.bf16.mxu0 0
  %392 = vmatmul.mubr.bf16.gmra.mrb[0].mxu0 %v260
  %v393 = vpop.f32.mrb[0].mxu0
  %v394 = vadd.f32 %v87, %v393
  %v395 = vpop.f32.mrb[0].mxu0
  %v396 = vpop.f32.mrb[0].mxu0
  %v397 = vadd.f32 %v87, %v396
  %v398 = vpop.f32.mrb[0].mxu0
  %399 = vmatprep.mubr.bf16.mxu0 0
  %400 = vmatmul.mubr.bf16.gmra.mrb[0].mxu0 %v263
  %v401 = vpop.f32.mrb[0].mxu0
  %v402 = vadd.f32 %v87, %v401
  %v403 = vpop.f32.mrb[0].mxu0
  %v404 = vpop.f32.mrb[0].mxu0
  %v405 = vadd.f32 %v87, %v404
  %v406 = vpop.f32.mrb[0].mxu0
  %407 = vmatprep.mubr.bf16.mxu0 0
  %408 = vmatmul.mubr.bf16.gmra.mrb[0].mxu0 %v266
  %v409 = vpop.f32.mrb[0].mxu0
  %v410 = vadd.f32 %v87, %v409
  %v411 = vpop.f32.mrb[0].mxu0
  %v412 = vpop.f32.mrb[0].mxu0
  %v413 = vadd.f32 %v87, %v412
  %v414 = vpop.f32.mrb[0].mxu0
  %415 = vmatprep.mubr.bf16.mxu0 0
  %416 = vmatmul.mubr.bf16.gmra.mrb[0].mxu0 %v269
  %v417 = vpop.f32.mrb[0].mxu0
  %v418 = vadd.f32 %v87, %v417
  %v419 = vpop.f32.mrb[0].mxu0
  %v420 = vpop.f32.mrb[0].mxu0
  %v421 = vadd.f32 %v87, %v420
  %v422 = vpop.f32.mrb[0].mxu0
  %423 = vmatprep.mubr.bf16.mxu0 0
  %424 = vmatmul.mubr.bf16.gmra.mrb[0].mxu0 %v272
  %v425 = vpop.f32.mrb[0].mxu0
  %v426 = vadd.f32 %v87, %v425
  %v427 = vpop.f32.mrb[0].mxu0
  %v428 = vpop.f32.mrb[0].mxu0
  %v429 = vadd.f32 %v87, %v428
  %v430 = vpop.f32.mrb[0].mxu0
  %431 = vmatprep.mubr.bf16.mxu0 0
  %432 = vmatmul.mubr.bf16.gmra.mrb[0].mxu0 %v275
  %v433 = vpop.f32.mrb[0].mxu0
  %v434 = vadd.f32 %v87, %v433
  %v435 = vpop.f32.mrb[0].mxu0
  %v436 = vpop.f32.mrb[0].mxu0
  %v437 = vadd.f32 %v87, %v436
  %v438 = vpop.f32.mrb[0].mxu0
  %439 = vmatprep.mubr.bf16.mxu0 0
  %440 = vmatmul.mubr.bf16.gmra.mrb[0].mxu0 %v278
  %v441 = vpop.f32.mrb[0].mxu0
  %v442 = vadd.f32 %v87, %v441
  %v443 = vpop.f32.mrb[0].mxu0
  %v444 = vpop.f32.mrb[0].mxu0
  %v445 = vadd.f32 %v87, %v444
  %v446 = vpop.f32.mrb[0].mxu0
  %447 = vmatprep.mubr.bf16.mxu0 0
  %448 = vmatmul.mubr.bf16.gmra.mrb[0].mxu0 %v281
  %v449 = vpop.f32.mrb[0].mxu0
  %v450 = vadd.f32 %v87, %v449
  %v451 = vpop.f32.mrb[0].mxu0
  %v452 = vpop.f32.mrb[0].mxu0
  %v453 = vadd.f32 %v87, %v452
  %v454 = vpop.f32.mrb[0].mxu0
  %455 = vmatprep.mubr.bf16.mxu0 0
  %456 = vmatmul.mubr.bf16.gmra.mrb[0].mxu0 %v284
  %v457 = vpop.f32.mrb[0].mxu0
  %v458 = vadd.f32 %v87, %v457
  %v459 = vpop.f32.mrb[0].mxu0
  %v460 = vpop.f32.mrb[0].mxu0
  %v461 = vadd.f32 %v87, %v460
  %v462 = vpop.f32.mrb[0].mxu0
  %463 = vmatprep.mubr.bf16.mxu0 0
  %464 = vmatmul.mubr.bf16.gmra.mrb[0].mxu0 %v287
  %v465 = vpop.f32.mrb[0].mxu0
  %v466 = vadd.f32 %v87, %v465
  %v467 = vpop.f32.mrb[0].mxu0
  %v468 = vpop.f32.mrb[0].mxu0
  %v469 = vadd.f32 %v87, %v468
  %v470 = vpop.f32.mrb[0].mxu0
  %471 = vmatprep.mubr.bf16.mxu0 0
  %472 = vmatmul.mubr.bf16.gmra.mrb[0].mxu0 %v290
  %v473 = vpop.f32.mrb[0].mxu0
  %v474 = vadd.f32 %v87, %v473
  %v475 = vpop.f32.mrb[0].mxu0
  %v476 = vpop.f32.mrb[0].mxu0
  %v477 = vadd.f32 %v87, %v476
  %v478 = vpop.f32.mrb[0].mxu0
  %479 = vmatprep.mubr.bf16.mxu0 0
  %480 = vmatmul.mubr.bf16.gmra.mrb[0].mxu0 %v293
  %v481 = vpop.f32.mrb[0].mxu0
  %v482 = vadd.f32 %v87, %v481
  %v483 = vpop.f32.mrb[0].mxu0
  %v484 = vpop.f32.mrb[0].mxu0
  %v485 = vadd.f32 %v87, %v484
  %v486 = vpop.f32.mrb[0].mxu0
  %487 = vmatprep.mubr.bf16.mxu0 0
  %488 = vmatmul.mubr.bf16.gmra.mrb[0].mxu0 %v296
  %v489 = vpop.f32.mrb[0].mxu0
  %v490 = vadd.f32 %v87, %v489
  %v491 = vpop.f32.mrb[0].mxu0
  %v492 = vpop.f32.mrb[0].mxu0
  %v493 = vadd.f32 %v87, %v492
  %v494 = vpop.f32.mrb[0].mxu0
  %495 = vmatprep.mubr.bf16.mxu0 0
  %496 = vmatmul.mubr.bf16.gmra.mrb[0].mxu0 %v299
  %v497 = vpop.f32.mrb[0].mxu0
  %v498 = vadd.f32 %v87, %v497
  %v499 = vpop.f32.mrb[0].mxu0
  %v500 = vpop.f32.mrb[0].mxu0
  %v501 = vadd.f32 %v87, %v500
  %v502 = vpop.f32.mrb[0].mxu0
  %503 = vmatprep.mubr.bf16.mxu0 0
  %504 = vmatmul.mubr.bf16.gmra.mrb[0].mxu0 %v302
  %v505 = vpop.f32.mrb[0].mxu0
  %v506 = vadd.f32 %v87, %v505
  %v507 = vpop.f32.mrb[0].mxu0
  %v508 = vpop.f32.mrb[0].mxu0
  %v509 = vadd.f32 %v87, %v508
  %v510 = vpop.f32.mrb[0].mxu0
  %511 = vmatprep.mubr.bf16.mxu0 0
  %512 = vmatmul.mubr.bf16.gmra.mrb[0].mxu0 %v305
  %v513 = vpop.f32.mrb[0].mxu0
  %v514 = vadd.f32 %v87, %v513
  %v515 = vpop.f32.mrb[0].mxu0
  %v516 = vpop.f32.mrb[0].mxu0
  %v517 = vadd.f32 %v87, %v516
  %v518 = vpop.f32.mrb[0].mxu0
  %519 = vmatprep.mubr.bf16.mxu0 0
  %520 = vmatmul.mubr.bf16.gmra.mrb[0].mxu0 %v308
  %v521 = vpop.f32.mrb[0].mxu0
  %v522 = vadd.f32 %v87, %v521
  %v523 = vpop.f32.mrb[0].mxu0
  %v524 = vpop.f32.mrb[0].mxu0
  %v525 = vadd.f32 %v87, %v524
  %v526 = vpop.f32.mrb[0].mxu0
  %527 = vmatprep.mubr.bf16.mxu0 0
  %528 = vmatmul.mubr.bf16.gmra.mrb[0].mxu0 %v311
  %v529 = vpop.f32.mrb[0].mxu0
  %v530 = vadd.f32 %v87, %v529
  %v531 = vpop.f32.mrb[0].mxu0
  %v532 = vpop.f32.mrb[0].mxu0
  %v533 = vadd.f32 %v87, %v532
  %v534 = vpop.f32.mrb[0].mxu0
  %535 = vmatprep.mubr.bf16.mxu0 0
  %536 = vmatmul.mubr.bf16.gmra.mrb[0].mxu0 %v314
  %v537 = vpop.f32.mrb[0].mxu0
  %v538 = vadd.f32 %v87, %v537
  %v539 = vpop.f32.mrb[0].mxu0
  %v540 = vpop.f32.mrb[0].mxu0
  %v541 = vadd.f32 %v87, %v540
  %v542 = vpop.f32.mrb[0].mxu0
  %543 = vmatprep.mubr.bf16.mxu0 0
  %544 = vmatmul.mubr.bf16.gmra.mrb[0].mxu0 %v317
  %v545 = vpop.f32.mrb[0].mxu0
  %v546 = vadd.f32 %v87, %v545
  %v547 = vpop.f32.mrb[0].mxu0
  %v548 = vpop.f32.mrb[0].mxu0
  %v549 = vadd.f32 %v87, %v548
  %v550 = vpop.f32.mrb[0].mxu0
  %551 = vmatprep.mubr.bf16.mxu0 0
  %552 = vmatmul.mubr.bf16.gmra.mrb[0].mxu0 %v320
  %v553 = vpop.f32.mrb[0].mxu0
  %v554 = vadd.f32 %v87, %v553
  %v555 = vpop.f32.mrb[0].mxu0
  %v556 = vpop.f32.mrb[0].mxu0
  %v557 = vadd.f32 %v87, %v556
  %v558 = vpop.f32.mrb[0].mxu0
  %559 = vmatprep.mubr.bf16.mxu0 0
  %560 = vmatmul.mubr.bf16.gmra.mrb[0].mxu0 %v323
  %v561 = vpop.f32.mrb[0].mxu0
  %v562 = vadd.f32 %v87, %v561
  %v563 = vpop.f32.mrb[0].mxu0
  %v564 = vpop.f32.mrb[0].mxu0
  %v565 = vadd.f32 %v87, %v564
  %v566 = vpop.f32.mrb[0].mxu0
  %567 = vmatprep.mubr.bf16.mxu0 0
  %568 = vmatmul.mubr.bf16.gmra.mrb[0].mxu0 %v326
  %v569 = vpop.f32.mrb[0].mxu0
  %v570 = vadd.f32 %v87, %v569
  %v571 = vpop.f32.mrb[0].mxu0
  %v572 = vpop.f32.mrb[0].mxu0
  %v573 = vadd.f32 %v87, %v572
  %v574 = vpop.f32.mrb[0].mxu0
  %575 = vmatprep.mubr.bf16.mxu0 0
  %576 = vmatmul.mubr.bf16.gmra.mrb[0].mxu0 %v329
  %v577 = vpop.f32.mrb[0].mxu0
  %v578 = vadd.f32 %v87, %v577
  %v579 = vpop.f32.mrb[0].mxu0
  %v580 = vpop.f32.mrb[0].mxu0
  %v581 = vadd.f32 %v87, %v580
  %v582 = vpop.f32.mrb[0].mxu0
  %583 = vmatprep.mubr.bf16.mxu0 0
  %584 = vmatmul.mubr.bf16.gmra.mrb[0].mxu0 %v332
  %v585 = vpop.f32.mrb[0].mxu0
  %v586 = vadd.f32 %v87, %v585
  %v587 = vpop.f32.mrb[0].mxu0
  %v588 = vpop.f32.mrb[0].mxu0
  %v589 = vadd.f32 %v87, %v588
  %v590 = vpop.f32.mrb[0].mxu0
  %591 = vmatprep.mubr.bf16.mxu0 0
  %592 = vmatmul.mubr.bf16.gmra.mrb[0].mxu0 %v335
  %v593 = vpop.f32.mrb[0].mxu0
  %v594 = vadd.f32 %v87, %v593
  %v595 = vpop.f32.mrb[0].mxu0
  %v596 = vpop.f32.mrb[0].mxu0
  %v597 = vadd.f32 %v87, %v596
  %v598 = vpop.f32.mrb[0].mxu0
  %599 = vmatprep.mubr.bf16.mxu0 0
  %600 = vmatmul.mubr.bf16.gmra.mrb[0].mxu0 %v338
  %v601 = vpop.f32.mrb[0].mxu0
  %v602 = vadd.f32 %v87, %v601
  %v603 = vpop.f32.mrb[0].mxu0
  %v604 = vpop.f32.mrb[0].mxu0
  %v605 = vadd.f32 %v87, %v604
  %v606 = vpop.f32.mrb[0].mxu0
  %607 = vmatprep.mubr.bf16.mxu0 0
  %608 = vmatmul.mubr.bf16.gmra.mrb[0].mxu0 %v341
  %v609 = vpop.f32.mrb[0].mxu0
  %v610 = vadd.f32 %v87, %v609
  %v611 = vpop.f32.mrb[0].mxu0
  %v612 = vpop.f32.mrb[0].mxu0
  %v613 = vadd.f32 %v87, %v612
  %v614 = vpop.f32.mrb[0].mxu0
  %615 = vmatprep.mubr.bf16.mxu0 0
  %616 = vmatmul.mubr.bf16.gmra.mrb[0].mxu0 %v344
  %v617 = vpop.f32.mrb[0].mxu0
  %v618 = vadd.f32 %v87, %v617
  %v619 = vpop.f32.mrb[0].mxu0
  %v620 = vpop.f32.mrb[0].mxu0
  %v621 = vadd.f32 %v87, %v620
  %v622 = vpop.f32.mrb[0].mxu0
  %623 = vmatprep.mubr.bf16.mxu0 0
  %624 = vmatmul.mubr.bf16.gmra.mrb[0].mxu0 %v347
  %v625 = vpop.f32.mrb[0].mxu0
  %v626 = vadd.f32 %v87, %v625
  %v627 = vpop.f32.mrb[0].mxu0
  %v628 = vpop.f32.mrb[0].mxu0
  %v629 = vadd.f32 %v87, %v628
  %v630 = vpop.f32.mrb[0].mxu0
  %631 = vmatprep.mubr.bf16.mxu0 0
  %632 = vmatmul.mubr.bf16.gmra.mrb[0].mxu0 %v350
  %v633 = vpop.f32.mrb[0].mxu0
  %v634 = vadd.f32 %v87, %v633
  %v635 = vpop.f32.mrb[0].mxu0
  %v636 = vpop.f32.mrb[0].mxu0
  %v637 = vadd.f32 %v87, %v636
  %v638 = vpop.f32.mrb[0].mxu0
  %639 = vmatprep.mubr.bf16.mxu0 0
  %640 = vmatmul.mubr.bf16.gmra.mrb[0].mxu0 %v353
  %v641 = vpop.f32.mrb[0].mxu0
  %v642 = vadd.f32 %v87, %v641
  %v643 = vpop.f32.mrb[0].mxu0
  %v644 = vpop.f32.mrb[0].mxu0
  %v645 = vadd.f32 %v87, %v644
  %v646 = vpop.f32.mrb[0].mxu0
  %647 = vdwg.mxu0
  %vm648 = vcmask 261120
  %649 = vst.msk [vmem:[%s3] sm:$0xff] %vm648, %v394
  %650 = vst.msk [vmem:[%s3 + $0x8] sm:$0xff] %vm648, %v397
  %651 = vst.msk [vmem:[%s3 + $0x10] sm:$0xff] %vm648, %v402
  %652 = vst.msk [vmem:[%s3 + $0x18] sm:$0xff] %vm648, %v405
  %653 = vst.msk [vmem:[%s3 + $0x20] sm:$0xff] %vm648, %v410
  %654 = vst.msk [vmem:[%s3 + $0x28] sm:$0xff] %vm648, %v413
  %655 = vst.msk [vmem:[%s3 + $0x30] sm:$0xff] %vm648, %v418
  %656 = vst.msk [vmem:[%s3 + $0x38] sm:$0xff] %vm648, %v421
  %657 = vst.msk [vmem:[%s3 + $0x40] sm:$0xff] %vm648, %v426
  %658 = vst.msk [vmem:[%s3 + $0x48] sm:$0xff] %vm648, %v429
  %659 = vst.msk [vmem:[%s3 + $0x50] sm:$0xff] %vm648, %v434
  %660 = vst.msk [vmem:[%s3 + $0x58] sm:$0xff] %vm648, %v437
  %661 = vst.msk [vmem:[%s3 + $0x60] sm:$0xff] %vm648, %v442
  %662 = vst.msk [vmem:[%s3 + $0x68] sm:$0xff] %vm648, %v445
  %663 = vst.msk [vmem:[%s3 + $0x70] sm:$0xff] %vm648, %v450
  %664 = vst.msk [vmem:[%s3 + $0x78] sm:$0xff] %vm648, %v453
  %665 = vst.msk [vmem:[%s3 + $0x80] sm:$0xff] %vm648, %v458
  %666 = vst.msk [vmem:[%s3 + $0x88] sm:$0xff] %vm648, %v461
  %667 = vst.msk [vmem:[%s3 + $0x90] sm:$0xff] %vm648, %v466
  %668 = vst.msk [vmem:[%s3 + $0x98] sm:$0xff] %vm648, %v469
  %669 = vst.msk [vmem:[%s3 + $0xa0] sm:$0xff] %vm648, %v474
  %670 = vst.msk [vmem:[%s3 + $0xa8] sm:$0xff] %vm648, %v477
  %671 = vst.msk [vmem:[%s3 + $0xb0] sm:$0xff] %vm648, %v482
  %672 = vst.msk [vmem:[%s3 + $0xb8] sm:$0xff] %vm648, %v485
  %673 = vst.msk [vmem:[%s3 + $0xc0] sm:$0xff] %vm648, %v490
  %674 = vst.msk [vmem:[%s3 + $0xc8] sm:$0xff] %vm648, %v493
  %675 = vst.msk [vmem:[%s3 + $0xd0] sm:$0xff] %vm648, %v498
  %676 = vst.msk [vmem:[%s3 + $0xd8] sm:$0xff] %vm648, %v501
  %677 = vst.msk [vmem:[%s3 + $0xe0] sm:$0xff] %vm648, %v506
  %678 = vst.msk [vmem:[%s3 + $0xe8] sm:$0xff] %vm648, %v509
  %679 = vst.msk [vmem:[%s3 + $0xf0] sm:$0xff] %vm648, %v514
  %680 = vst.msk [vmem:[%s3 + $0xf8] sm:$0xff] %vm648, %v517
  %681 = vst.msk [vmem:[%s3 + $0x100] sm:$0xff] %vm648, %v522
  %682 = vst.msk [vmem:[%s3 + $0x108] sm:$0xff] %vm648, %v525
  %683 = vst.msk [vmem:[%s3 + $0x110] sm:$0xff] %vm648, %v530
  %684 = vst.msk [vmem:[%s3 + $0x118] sm:$0xff] %vm648, %v533
  %685 = vst.msk [vmem:[%s3 + $0x120] sm:$0xff] %vm648, %v538
  %686 = vst.msk [vmem:[%s3 + $0x128] sm:$0xff] %vm648, %v541
  %687 = vst.msk [vmem:[%s3 + $0x130] sm:$0xff] %vm648, %v546
  %688 = vst.msk [vmem:[%s3 + $0x138] sm:$0xff] %vm648, %v549
  %689 = vst.msk [vmem:[%s3 + $0x140] sm:$0xff] %vm648, %v554
  %690 = vst.msk [vmem:[%s3 + $0x148] sm:$0xff] %vm648, %v557
  %691 = vst.msk [vmem:[%s3 + $0x150] sm:$0xff] %vm648, %v562
  %692 = vst.msk [vmem:[%s3 + $0x158] sm:$0xff] %vm648, %v565
  %693 = vst.msk [vmem:[%s3 + $0x160] sm:$0xff] %vm648, %v570
  %694 = vst.msk [vmem:[%s3 + $0x168] sm:$0xff] %vm648, %v573
  %695 = vst.msk [vmem:[%s3 + $0x170] sm:$0xff] %vm648, %v578
  %696 = vst.msk [vmem:[%s3 + $0x178] sm:$0xff] %vm648, %v581
  %697 = vst.msk [vmem:[%s3 + $0x180] sm:$0xff] %vm648, %v586
  %698 = vst.msk [vmem:[%s3 + $0x188] sm:$0xff] %vm648, %v589
  %699 = vst.msk [vmem:[%s3 + $0x190] sm:$0xff] %vm648, %v594
  %700 = vst.msk [vmem:[%s3 + $0x198] sm:$0xff] %vm648, %v597
  %701 = vst.msk [vmem:[%s3 + $0x1a0] sm:$0xff] %vm648, %v602
  %702 = vst.msk [vmem:[%s3 + $0x1a8] sm:$0xff] %vm648, %v605
  %703 = vst.msk [vmem:[%s3 + $0x1b0] sm:$0xff] %vm648, %v610
  %704 = vst.msk [vmem:[%s3 + $0x1b8] sm:$0xff] %vm648, %v613
  %705 = vst.msk [vmem:[%s3 + $0x1c0] sm:$0xff] %vm648, %v618
  %706 = vst.msk [vmem:[%s3 + $0x1c8] sm:$0xff] %vm648, %v621
  %707 = vst.msk [vmem:[%s3 + $0x1d0] sm:$0xff] %vm648, %v626
  %708 = vst.msk [vmem:[%s3 + $0x1d8] sm:$0xff] %vm648, %v629
  %709 = vst.msk [vmem:[%s3 + $0x1e0] sm:$0xff] %vm648, %v634
  %710 = vst.msk [vmem:[%s3 + $0x1e8] sm:$0xff] %vm648, %v637
  %711 = vst.msk [vmem:[%s3 + $0x1f0] sm:$0xff] %vm648, %v642
  %712 = vst.msk [vmem:[%s3 + $0x1f8] sm:$0xff] %vm648, %v645
  // Predicated region
  $region14: #{unrolled_net_forward.17} parent=0 // pred_check
    _
  $region15: #{unrolled_net_forward.17} parent=0 // pred_check_branch
    %714 = sbr.rel (0) target = $region17
  $region16: #{unrolled_net_forward.17} parent=0 // pred_region
    _
  $region17: #{unrolled_net_forward.17} parent=0 // pred_fallthru
    _
  // Predicated region
  $region18: #{unrolled_net_forward.17} parent=0 // pred_check
    _
  $region19: #{unrolled_net_forward.17} parent=0 // pred_check_branch
    %716 = sbr.rel (0) target = $region21
  $region20: #{unrolled_net_forward.17} parent=0 // pred_region
    _
  $region21: #{unrolled_net_forward.17} parent=0 // pred_fallthru
    _

// kernel: unrolled_net_forward.18
$region0: #{unrolled_net_forward.18}
  #allocation0 [shape = 'u32[]', space=smem, size = 0x4, offset = 0x4, fixed_abs, tag = 'smem constant byte address 0x4 - core index']
  #allocation1 [shape = 'u32[144,128]{1,0:T(1,128)}', space=vmem, size = 0x12000, scoped, tag = 'internal scratch']
  %s0 = inlined_call_operand.vmem [shape: bf16[512,288], index: 0, kind: input, shape index: {}]
  %s1 = inlined_call_operand.vmem [shape: bf16[288,32], index: 1, kind: input, shape index: {}]
  %s2 = inlined_call_operand.vmem [shape: f32[1,32], index: 2, kind: input, shape index: {}]
  %s3 = inlined_call_operand.vmem [shape: f32[512,32], index: 3, kind: output, shape index: {}]
  %s4 = sld [smem:[#allocation0]]
  $region22: #{unrolled_net_forward.18} parent=0
    _
  %s6 = ssub.s32 1, %s4
  %s7 = scalar_select 0, %s6, %s4
  // Predicated region
  $region2: #{unrolled_net_forward.18} parent=0 // pred_check
    _
  $region3: #{unrolled_net_forward.18} parent=0 // pred_check_branch
    %9 = sbr.rel (0) target = $region5
  $region4: #{unrolled_net_forward.18} parent=0 // pred_region
    _
  $region5: #{unrolled_net_forward.18} parent=0 // pred_fallthru
    _
  // Predicated region
  $region6: #{unrolled_net_forward.18} parent=0 // pred_check
    _
  $region7: #{unrolled_net_forward.18} parent=0 // pred_check_branch
    %11 = sbr.rel (0) target = $region9
  $region8: #{unrolled_net_forward.18} parent=0 // pred_region
    _
  $region9: #{unrolled_net_forward.18} parent=0 // pred_fallthru
    _
  // Predicated region
  $region10: #{unrolled_net_forward.18} parent=0 // pred_check
    _
  $region11: #{unrolled_net_forward.18} parent=0 // pred_check_branch
    %13 = sbr.rel (0) target = $region13
  $region12: #{unrolled_net_forward.18} parent=0 // pred_region
    _
  $region13: #{unrolled_net_forward.18} parent=0 // pred_fallthru
    _
  %v15 = vld [vmem:[%s0] sm:$0xff]
  %v16 = vld [vmem:[%s0 + $0x8] sm:$0xf]
  %v17 = vld [vmem:[%s0 + $0xc] sm:$0xff]
  %v18 = vld [vmem:[%s0 + $0x14] sm:$0xf]
  %v19 = vld [vmem:[%s0 + $0x18] sm:$0xff]
  %v20 = vld [vmem:[%s0 + $0x20] sm:$0xf]
  %v21 = vld [vmem:[%s0 + $0x24] sm:$0xff]
  %v22 = vld [vmem:[%s0 + $0x2c] sm:$0xf]
  %v23 = vld [vmem:[%s0 + $0x30] sm:$0xff]
  %v24 = vld [vmem:[%s0 + $0x38] sm:$0xf]
  %v25 = vld [vmem:[%s0 + $0x3c] sm:$0xff]
  %v26 = vld [vmem:[%s0 + $0x44] sm:$0xf]
  %v27 = vld [vmem:[%s0 + $0x48] sm:$0xff]
  %v28 = vld [vmem:[%s0 + $0x50] sm:$0xf]
  %v29 = vld [vmem:[%s0 + $0x54] sm:$0xff]
  %v30 = vld [vmem:[%s0 + $0x5c] sm:$0xf]
  %v31 = vld [vmem:[%s0 + $0x60] sm:$0xff]
  %v32 = vld [vmem:[%s0 + $0x68] sm:$0xf]
  %v33 = vld [vmem:[%s0 + $0x6c] sm:$0xff]
  %v34 = vld [vmem:[%s0 + $0x74] sm:$0xf]
  %v35 = vld [vmem:[%s0 + $0x78] sm:$0xff]
  %v36 = vld [vmem:[%s0 + $0x80] sm:$0xf]
  %v37 = vld [vmem:[%s0 + $0x84] sm:$0xff]
  %v38 = vld [vmem:[%s0 + $0x8c] sm:$0xf]
  %v39 = vld [vmem:[%s0 + $0x90] sm:$0xff]
  %v40 = vld [vmem:[%s0 + $0x98] sm:$0xf]
  %v41 = vld [vmem:[%s0 + $0x9c] sm:$0xff]
  %v42 = vld [vmem:[%s0 + $0xa4] sm:$0xf]
  %v43 = vld [vmem:[%s0 + $0xa8] sm:$0xff]
  %v44 = vld [vmem:[%s0 + $0xb0] sm:$0xf]
  %v45 = vld [vmem:[%s0 + $0xb4] sm:$0xff]
  %v46 = vld [vmem:[%s0 + $0xbc] sm:$0xf]
  %v47 = vld [vmem:[%s0 + $0xc0] sm:$0xff]
  %v48 = vld [vmem:[%s0 + $0xc8] sm:$0xf]
  %v49 = vld [vmem:[%s0 + $0xcc] sm:$0xff]
  %v50 = vld [vmem:[%s0 + $0xd4] sm:$0xf]
  %v51 = vld [vmem:[%s0 + $0xd8] sm:$0xff]
  %v52 = vld [vmem:[%s0 + $0xe0] sm:$0xf]
  %v53 = vld [vmem:[%s0 + $0xe4] sm:$0xff]
  %v54 = vld [vmem:[%s0 + $0xec] sm:$0xf]
  %v55 = vld [vmem:[%s0 + $0xf0] sm:$0xff]
  %v56 = vld [vmem:[%s0 + $0xf8] sm:$0xf]
  %v57 = vld [vmem:[%s0 + $0xfc] sm:$0xff]
  %v58 = vld [vmem:[%s0 + $0x104] sm:$0xf]
  %v59 = vld [vmem:[%s0 + $0x108] sm:$0xff]
  %v60 = vld [vmem:[%s0 + $0x110] sm:$0xf]
  %v61 = vld [vmem:[%s0 + $0x114] sm:$0xff]
  %v62 = vld [vmem:[%s0 + $0x11c] sm:$0xf]
  %v63 = vld [vmem:[%s0 + $0x120] sm:$0xff]
  %v64 = vld [vmem:[%s0 + $0x128] sm:$0xf]
  %v65 = vld [vmem:[%s0 + $0x12c] sm:$0xff]
  %v66 = vld [vmem:[%s0 + $0x134] sm:$0xf]
  %v67 = vld [vmem:[%s0 + $0x138] sm:$0xff]
  %v68 = vld [vmem:[%s0 + $0x140] sm:$0xf]
  %v69 = vld [vmem:[%s0 + $0x144] sm:$0xff]
  %v70 = vld [vmem:[%s0 + $0x14c] sm:$0xf]
  %v71 = vld [vmem:[%s0 + $0x150] sm:$0xff]
  %v72 = vld [vmem:[%s0 + $0x158] sm:$0xf]
  %v73 = vld [vmem:[%s0 + $0x15c] sm:$0xff]
  %v74 = vld [vmem:[%s0 + $0x164] sm:$0xf]
  %v75 = vld [vmem:[%s0 + $0x168] sm:$0xff]
  %v76 = vld [vmem:[%s0 + $0x170] sm:$0xf]
  %v77 = vld [vmem:[%s0 + $0x174] sm:$0xff]
  %v78 = vld [vmem:[%s0 + $0x17c] sm:$0xf]
  %v79 = vld [vmem:[%s0 + $0x180] sm:$0xff]
  %v80 = vld [vmem:[%s0 + $0x188] sm:$0xf]
  %v81 = vld [vmem:[%s0 + $0x18c] sm:$0xff]
  %v82 = vld [vmem:[%s0 + $0x194] sm:$0xf]
  %v83 = vld [vmem:[%s0 + $0x198] sm:$0xff]
  %v84 = vld [vmem:[%s0 + $0x1a0] sm:$0xf]
  %v85 = vld [vmem:[%s0 + $0x1a4] sm:$0xff]
  %v86 = vld [vmem:[%s0 + $0x1ac] sm:$0xf]
  %v87 = vld [vmem:[%s0 + $0x1b0] sm:$0xff]
  %v88 = vld [vmem:[%s0 + $0x1b8] sm:$0xf]
  %v89 = vld [vmem:[%s0 + $0x1bc] sm:$0xff]
  %v90 = vld [vmem:[%s0 + $0x1c4] sm:$0xf]
  %v91 = vld [vmem:[%s0 + $0x1c8] sm:$0xff]
  %v92 = vld [vmem:[%s0 + $0x1d0] sm:$0xf]
  %v93 = vld [vmem:[%s0 + $0x1d4] sm:$0xff]
  %v94 = vld [vmem:[%s0 + $0x1dc] sm:$0xf]
  %v95 = vld [vmem:[%s0 + $0x1e0] sm:$0xff]
  %v96 = vld [vmem:[%s0 + $0x1e8] sm:$0xf]
  %v97 = vld [vmem:[%s0 + $0x1ec] sm:$0xff]
  %v98 = vld [vmem:[%s0 + $0x1f4] sm:$0xf]
  %v99 = vld [vmem:[%s0 + $0x1f8] sm:$0xff]
  %v100 = vld [vmem:[%s0 + $0x200] sm:$0xf]
  %v101 = vld [vmem:[%s0 + $0x204] sm:$0xff]
  %v102 = vld [vmem:[%s0 + $0x20c] sm:$0xf]
  %v103 = vld [vmem:[%s0 + $0x210] sm:$0xff]
  %v104 = vld [vmem:[%s0 + $0x218] sm:$0xf]
  %v105 = vld [vmem:[%s0 + $0x21c] sm:$0xff]
  %v106 = vld [vmem:[%s0 + $0x224] sm:$0xf]
  %v107 = vld [vmem:[%s0 + $0x228] sm:$0xff]
  %v108 = vld [vmem:[%s0 + $0x230] sm:$0xf]
  %v109 = vld [vmem:[%s0 + $0x234] sm:$0xff]
  %v110 = vld [vmem:[%s0 + $0x23c] sm:$0xf]
  %v111 = vld [vmem:[%s0 + $0x240] sm:$0xff]
  %v112 = vld [vmem:[%s0 + $0x248] sm:$0xf]
  %v113 = vld [vmem:[%s0 + $0x24c] sm:$0xff]
  %v114 = vld [vmem:[%s0 + $0x254] sm:$0xf]
  %v115 = vld [vmem:[%s0 + $0x258] sm:$0xff]
  %v116 = vld [vmem:[%s0 + $0x260] sm:$0xf]
  %v117 = vld [vmem:[%s0 + $0x264] sm:$0xff]
  %v118 = vld [vmem:[%s0 + $0x26c] sm:$0xf]
  %v119 = vld [vmem:[%s0 + $0x270] sm:$0xff]
  %v120 = vld [vmem:[%s0 + $0x278] sm:$0xf]
  %v121 = vld [vmem:[%s0 + $0x27c] sm:$0xff]
  %v122 = vld [vmem:[%s0 + $0x284] sm:$0xf]
  %v123 = vld [vmem:[%s0 + $0x288] sm:$0xff]
  %v124 = vld [vmem:[%s0 + $0x290] sm:$0xf]
  %v125 = vld [vmem:[%s0 + $0x294] sm:$0xff]
  %v126 = vld [vmem:[%s0 + $0x29c] sm:$0xf]
  %v127 = vld [vmem:[%s0 + $0x2a0] sm:$0xff]
  %v128 = vld [vmem:[%s0 + $0x2a8] sm:$0xf]
  %v129 = vld [vmem:[%s0 + $0x2ac] sm:$0xff]
  %v130 = vld [vmem:[%s0 + $0x2b4] sm:$0xf]
  %v131 = vld [vmem:[%s0 + $0x2b8] sm:$0xff]
  %v132 = vld [vmem:[%s0 + $0x2c0] sm:$0xf]
  %v133 = vld [vmem:[%s0 + $0x2c4] sm:$0xff]
  %v134 = vld [vmem:[%s0 + $0x2cc] sm:$0xf]
  %v135 = vld [vmem:[%s0 + $0x2d0] sm:$0xff]
  %v136 = vld [vmem:[%s0 + $0x2d8] sm:$0xf]
  %v137 = vld [vmem:[%s0 + $0x2dc] sm:$0xff]
  %v138 = vld [vmem:[%s0 + $0x2e4] sm:$0xf]
  %v139 = vld [vmem:[%s0 + $0x2e8] sm:$0xff]
  %v140 = vld [vmem:[%s0 + $0x2f0] sm:$0xf]
  %v141 = vld [vmem:[%s0 + $0x2f4] sm:$0xff]
  %v142 = vld [vmem:[%s0 + $0x2fc] sm:$0xf]
  %v143 = vld [vmem:[%s1] sm:$0xf]
  %v144 = vld [vmem:[%s1 + $0x4] sm:$0xf]
  %v145 = vld [vmem:[%s1 + $0x8] sm:$0xf]
  %v146 = vld [vmem:[%s1 + $0xc] sm:$0xf]
  %v147 = vld [vmem:[%s1 + $0x10] sm:$0xf]
  %v148 = vld [vmem:[%s1 + $0x14] sm:$0xf]
  %v149 = vld [vmem:[%s1 + $0x18] sm:$0xf]
  %v150 = vld [vmem:[%s1 + $0x1c] sm:$0xf]
  %v151 = vld [vmem:[%s1 + $0x20] sm:$0xf]
  %v152 = vld [vmem:[%s1 + $0x24] sm:$0xf]
  %v153 = vld [vmem:[%s1 + $0x28] sm:$0xf]
  %v154 = vld [vmem:[%s1 + $0x2c] sm:$0xf]
  %v155 = vld [vmem:[%s1 + $0x30] sm:$0xf]
  %v156 = vld [vmem:[%s1 + $0x34] sm:$0xf]
  %v157 = vld [vmem:[%s1 + $0x38] sm:$0xf]
  %v158 = vld [vmem:[%s1 + $0x3c] sm:$0xf]
  %v159 = vld [vmem:[%s1 + $0x40] sm:$0xf]
  %v160 = vld [vmem:[%s1 + $0x44] sm:$0xf]
  %v161 = vld [vmem:[%s1 + $0x48] sm:$0xf]
  %v162 = vld [vmem:[%s1 + $0x4c] sm:$0xf]
  %v163 = vld [vmem:[%s1 + $0x50] sm:$0xf]
  %v164 = vld [vmem:[%s1 + $0x54] sm:$0xf]
  %v165 = vld [vmem:[%s1 + $0x58] sm:$0xf]
  %v166 = vld [vmem:[%s1 + $0x5c] sm:$0xf]
  %v167 = vld [vmem:[%s1 + $0x60] sm:$0xf]
  %v168 = vld [vmem:[%s1 + $0x64] sm:$0xf]
  %v169 = vld [vmem:[%s1 + $0x68] sm:$0xf]
  %v170 = vld [vmem:[%s1 + $0x6c] sm:$0xf]
  %v171 = vld [vmem:[%s1 + $0x70] sm:$0xf]
  %v172 = vld [vmem:[%s1 + $0x74] sm:$0xf]
  %v173 = vld [vmem:[%s1 + $0x78] sm:$0xf]
  %v174 = vld [vmem:[%s1 + $0x7c] sm:$0xf]
  %v175 = vld [vmem:[%s1 + $0x80] sm:$0xf]
  %v176 = vld [vmem:[%s1 + $0x84] sm:$0xf]
  %v177 = vld [vmem:[%s1 + $0x88] sm:$0xf]
  %v178 = vld [vmem:[%s1 + $0x8c] sm:$0xf]
  %v179 = vld [vmem:[%s2] sm:$0x1]
  %v181 = vlaneseq
  %v182 = vshrl.u32 %v181, 7
  %v183 = vsub.s32 0, %v182
  %v184 = vrot.slane %v179, %v183
  %v314 = vunpack.c.l.b16 %v15
  %v315 = vunpack.c.h.b16 %v15
  %v316 = vunpack.c.l.b16 %v16
  %v317 = vunpack.c.l.b16 %v17
  %v318 = vunpack.c.h.b16 %v17
  %v319 = vunpack.c.l.b16 %v18
  %v320 = vunpack.c.l.b16 %v19
  %v321 = vunpack.c.h.b16 %v19
  %v322 = vunpack.c.l.b16 %v20
  %v323 = vunpack.c.l.b16 %v21
  %v324 = vunpack.c.h.b16 %v21
  %v325 = vunpack.c.l.b16 %v22
  %v326 = vunpack.c.l.b16 %v23
  %v327 = vunpack.c.h.b16 %v23
  %v328 = vunpack.c.l.b16 %v24
  %v329 = vunpack.c.l.b16 %v25
  %v330 = vunpack.c.h.b16 %v25
  %v331 = vunpack.c.l.b16 %v26
  %v332 = vunpack.c.l.b16 %v27
  %v333 = vunpack.c.h.b16 %v27
  %v334 = vunpack.c.l.b16 %v28
  %v335 = vunpack.c.l.b16 %v29
  %v336 = vunpack.c.h.b16 %v29
  %v337 = vunpack.c.l.b16 %v30
  %v338 = vunpack.c.l.b16 %v31
  %v339 = vunpack.c.h.b16 %v31
  %v340 = vunpack.c.l.b16 %v32
  %v341 = vunpack.c.l.b16 %v33
  %v342 = vunpack.c.h.b16 %v33
  %v343 = vunpack.c.l.b16 %v34
  %v344 = vunpack.c.l.b16 %v35
  %v345 = vunpack.c.h.b16 %v35
  %v346 = vunpack.c.l.b16 %v36
  %v347 = vunpack.c.l.b16 %v37
  %v348 = vunpack.c.h.b16 %v37
  %v349 = vunpack.c.l.b16 %v38
  %v350 = vunpack.c.l.b16 %v39
  %v351 = vunpack.c.h.b16 %v39
  %v352 = vunpack.c.l.b16 %v40
  %v353 = vunpack.c.l.b16 %v41
  %v354 = vunpack.c.h.b16 %v41
  %v355 = vunpack.c.l.b16 %v42
  %v356 = vunpack.c.l.b16 %v43
  %v357 = vunpack.c.h.b16 %v43
  %v358 = vunpack.c.l.b16 %v44
  %v359 = vunpack.c.l.b16 %v45
  %v360 = vunpack.c.h.b16 %v45
  %v361 = vunpack.c.l.b16 %v46
  %v362 = vunpack.c.l.b16 %v47
  %v363 = vunpack.c.h.b16 %v47
  %v364 = vunpack.c.l.b16 %v48
  %v365 = vunpack.c.l.b16 %v49
  %v366 = vunpack.c.h.b16 %v49
  %v367 = vunpack.c.l.b16 %v50
  %v368 = vunpack.c.l.b16 %v51
  %v369 = vunpack.c.h.b16 %v51
  %v370 = vunpack.c.l.b16 %v52
  %v371 = vunpack.c.l.b16 %v53
  %v372 = vunpack.c.h.b16 %v53
  %v373 = vunpack.c.l.b16 %v54
  %v374 = vunpack.c.l.b16 %v55
  %v375 = vunpack.c.h.b16 %v55
  %v376 = vunpack.c.l.b16 %v56
  %v377 = vunpack.c.l.b16 %v57
  %v378 = vunpack.c.h.b16 %v57
  %v379 = vunpack.c.l.b16 %v58
  %v380 = vunpack.c.l.b16 %v59
  %v381 = vunpack.c.h.b16 %v59
  %v382 = vunpack.c.l.b16 %v60
  %v383 = vunpack.c.l.b16 %v61
  %v384 = vunpack.c.h.b16 %v61
  %v385 = vunpack.c.l.b16 %v62
  %v386 = vunpack.c.l.b16 %v63
  %v387 = vunpack.c.h.b16 %v63
  %v388 = vunpack.c.l.b16 %v64
  %v389 = vunpack.c.l.b16 %v65
  %v390 = vunpack.c.h.b16 %v65
  %v391 = vunpack.c.l.b16 %v66
  %v392 = vunpack.c.l.b16 %v67
  %v393 = vunpack.c.h.b16 %v67
  %v394 = vunpack.c.l.b16 %v68
  %v395 = vunpack.c.l.b16 %v69
  %v396 = vunpack.c.h.b16 %v69
  %v397 = vunpack.c.l.b16 %v70
  %v398 = vunpack.c.l.b16 %v71
  %v399 = vunpack.c.h.b16 %v71
  %v400 = vunpack.c.l.b16 %v72
  %v401 = vunpack.c.l.b16 %v73
  %v402 = vunpack.c.h.b16 %v73
  %v403 = vunpack.c.l.b16 %v74
  %v404 = vunpack.c.l.b16 %v75
  %v405 = vunpack.c.h.b16 %v75
  %v406 = vunpack.c.l.b16 %v76
  %v407 = vunpack.c.l.b16 %v77
  %v408 = vunpack.c.h.b16 %v77
  %v409 = vunpack.c.l.b16 %v78
  %v410 = vunpack.c.l.b16 %v79
  %v411 = vunpack.c.h.b16 %v79
  %v412 = vunpack.c.l.b16 %v80
  %v413 = vunpack.c.l.b16 %v81
  %v414 = vunpack.c.h.b16 %v81
  %v415 = vunpack.c.l.b16 %v82
  %v416 = vunpack.c.l.b16 %v83
  %v417 = vunpack.c.h.b16 %v83
  %v418 = vunpack.c.l.b16 %v84
  %v419 = vunpack.c.l.b16 %v85
  %v420 = vunpack.c.h.b16 %v85
  %v421 = vunpack.c.l.b16 %v86
  %v422 = vunpack.c.l.b16 %v87
  %v423 = vunpack.c.h.b16 %v87
  %v424 = vunpack.c.l.b16 %v88
  %v425 = vunpack.c.l.b16 %v89
  %v426 = vunpack.c.h.b16 %v89
  %v427 = vunpack.c.l.b16 %v90
  %v428 = vunpack.c.l.b16 %v91
  %v429 = vunpack.c.h.b16 %v91
  %v430 = vunpack.c.l.b16 %v92
  %v431 = vunpack.c.l.b16 %v93
  %v432 = vunpack.c.h.b16 %v93
  %v433 = vunpack.c.l.b16 %v94
  %v434 = vunpack.c.l.b16 %v95
  %v435 = vunpack.c.h.b16 %v95
  %v436 = vunpack.c.l.b16 %v96
  %v437 = vunpack.c.l.b16 %v97
  %v438 = vunpack.c.h.b16 %v97
  %v439 = vunpack.c.l.b16 %v98
  %v440 = vunpack.c.l.b16 %v99
  %v441 = vunpack.c.h.b16 %v99
  %v442 = vunpack.c.l.b16 %v100
  %v443 = vunpack.c.l.b16 %v101
  %v444 = vunpack.c.h.b16 %v101
  %v445 = vunpack.c.l.b16 %v102
  %v446 = vunpack.c.l.b16 %v103
  %v447 = vunpack.c.h.b16 %v103
  %v448 = vunpack.c.l.b16 %v104
  %v449 = vunpack.c.l.b16 %v105
  %v450 = vunpack.c.h.b16 %v105
  %v451 = vunpack.c.l.b16 %v106
  %v452 = vunpack.c.l.b16 %v107
  %v453 = vunpack.c.h.b16 %v107
  %v454 = vunpack.c.l.b16 %v108
  %v455 = vunpack.c.l.b16 %v109
  %v456 = vunpack.c.h.b16 %v109
  %v457 = vunpack.c.l.b16 %v110
  %v458 = vunpack.c.l.b16 %v111
  %v459 = vunpack.c.h.b16 %v111
  %v460 = vunpack.c.l.b16 %v112
  %v461 = vunpack.c.l.b16 %v113
  %v462 = vunpack.c.h.b16 %v113
  %v463 = vunpack.c.l.b16 %v114
  %v464 = vunpack.c.l.b16 %v115
  %v465 = vunpack.c.h.b16 %v115
  %v466 = vunpack.c.l.b16 %v116
  %v467 = vunpack.c.l.b16 %v117
  %v468 = vunpack.c.h.b16 %v117
  %v469 = vunpack.c.l.b16 %v118
  %v470 = vunpack.c.l.b16 %v119
  %v471 = vunpack.c.h.b16 %v119
  %v472 = vunpack.c.l.b16 %v120
  %v473 = vunpack.c.l.b16 %v121
  %v474 = vunpack.c.h.b16 %v121
  %v475 = vunpack.c.l.b16 %v122
  %v476 = vunpack.c.l.b16 %v123
  %v477 = vunpack.c.h.b16 %v123
  %v478 = vunpack.c.l.b16 %v124
  %v479 = vunpack.c.l.b16 %v125
  %v480 = vunpack.c.h.b16 %v125
  %v481 = vunpack.c.l.b16 %v126
  %v482 = vunpack.c.l.b16 %v127
  %v483 = vunpack.c.h.b16 %v127
  %v484 = vunpack.c.l.b16 %v128
  %v485 = vunpack.c.l.b16 %v129
  %v486 = vunpack.c.h.b16 %v129
  %v487 = vunpack.c.l.b16 %v130
  %v488 = vunpack.c.l.b16 %v131
  %v489 = vunpack.c.h.b16 %v131
  %v490 = vunpack.c.l.b16 %v132
  %v491 = vunpack.c.l.b16 %v133
  %v492 = vunpack.c.h.b16 %v133
  %v493 = vunpack.c.l.b16 %v134
  %v494 = vunpack.c.l.b16 %v135
  %v495 = vunpack.c.h.b16 %v135
  %v496 = vunpack.c.l.b16 %v136
  %v497 = vunpack.c.l.b16 %v137
  %v498 = vunpack.c.h.b16 %v137
  %v499 = vunpack.c.l.b16 %v138
  %v500 = vunpack.c.l.b16 %v139
  %v501 = vunpack.c.h.b16 %v139
  %v502 = vunpack.c.l.b16 %v140
  %v503 = vunpack.c.l.b16 %v141
  %v504 = vunpack.c.h.b16 %v141
  %v505 = vunpack.c.l.b16 %v142
  %v506 = vpack.c.b16 %v317, %v314
  %v507 = vpack.c.b16 %v318, %v315
  %v508 = vpack.c.b16 %v319, %v316
  %v509 = vpack.c.b16 %v323, %v320
  %v510 = vpack.c.b16 %v324, %v321
  %v511 = vpack.c.b16 %v325, %v322
  %v512 = vpack.c.b16 %v329, %v326
  %v513 = vpack.c.b16 %v330, %v327
  %v514 = vpack.c.b16 %v331, %v328
  %v515 = vpack.c.b16 %v335, %v332
  %v516 = vpack.c.b16 %v336, %v333
  %v517 = vpack.c.b16 %v337, %v334
  %v518 = vpack.c.b16 %v341, %v338
  %v519 = vpack.c.b16 %v342, %v339
  %v520 = vpack.c.b16 %v343, %v340
  %v521 = vpack.c.b16 %v347, %v344
  %v522 = vpack.c.b16 %v348, %v345
  %v523 = vpack.c.b16 %v349, %v346
  %v524 = vpack.c.b16 %v353, %v350
  %v525 = vpack.c.b16 %v354, %v351
  %v526 = vpack.c.b16 %v355, %v352
  %v527 = vpack.c.b16 %v359, %v356
  %v528 = vpack.c.b16 %v360, %v357
  %v529 = vpack.c.b16 %v361, %v358
  %v530 = vpack.c.b16 %v365, %v362
  %v531 = vpack.c.b16 %v366, %v363
  %v532 = vpack.c.b16 %v367, %v364
  %v533 = vpack.c.b16 %v371, %v368
  %v534 = vpack.c.b16 %v372, %v369
  %v535 = vpack.c.b16 %v373, %v370
  %v536 = vpack.c.b16 %v377, %v374
  %v537 = vpack.c.b16 %v378, %v375
  %v538 = vpack.c.b16 %v379, %v376
  %v539 = vpack.c.b16 %v383, %v380
  %v540 = vpack.c.b16 %v384, %v381
  %v541 = vpack.c.b16 %v385, %v382
  %v542 = vpack.c.b16 %v389, %v386
  %v543 = vpack.c.b16 %v390, %v387
  %v544 = vpack.c.b16 %v391, %v388
  %v545 = vpack.c.b16 %v395, %v392
  %v546 = vpack.c.b16 %v396, %v393
  %v547 = vpack.c.b16 %v397, %v394
  %v548 = vpack.c.b16 %v401, %v398
  %v549 = vpack.c.b16 %v402, %v399
  %v550 = vpack.c.b16 %v403, %v400
  %v551 = vpack.c.b16 %v407, %v404
  %v552 = vpack.c.b16 %v408, %v405
  %v553 = vpack.c.b16 %v409, %v406
  %v554 = vpack.c.b16 %v413, %v410
  %v555 = vpack.c.b16 %v414, %v411
  %v556 = vpack.c.b16 %v415, %v412
  %v557 = vpack.c.b16 %v419, %v416
  %v558 = vpack.c.b16 %v420, %v417
  %v559 = vpack.c.b16 %v421, %v418
  %v560 = vpack.c.b16 %v425, %v422
  %v561 = vpack.c.b16 %v426, %v423
  %v562 = vpack.c.b16 %v427, %v424
  %v563 = vpack.c.b16 %v431, %v428
  %v564 = vpack.c.b16 %v432, %v429
  %v565 = vpack.c.b16 %v433, %v430
  %v566 = vpack.c.b16 %v437, %v434
  %v567 = vpack.c.b16 %v438, %v435
  %v568 = vpack.c.b16 %v439, %v436
  %v569 = vpack.c.b16 %v443, %v440
  %v570 = vpack.c.b16 %v444, %v441
  %v571 = vpack.c.b16 %v445, %v442
  %v572 = vpack.c.b16 %v449, %v446
  %v573 = vpack.c.b16 %v450, %v447
  %v574 = vpack.c.b16 %v451, %v448
  %v575 = vpack.c.b16 %v455, %v452
  %v576 = vpack.c.b16 %v456, %v453
  %v577 = vpack.c.b16 %v457, %v454
  %v578 = vpack.c.b16 %v461, %v458
  %v579 = vpack.c.b16 %v462, %v459
  %v580 = vpack.c.b16 %v463, %v460
  %v581 = vpack.c.b16 %v467, %v464
  %v582 = vpack.c.b16 %v468, %v465
  %v583 = vpack.c.b16 %v469, %v466
  %v584 = vpack.c.b16 %v473, %v470
  %v585 = vpack.c.b16 %v474, %v471
  %v586 = vpack.c.b16 %v475, %v472
  %v587 = vpack.c.b16 %v479, %v476
  %v588 = vpack.c.b16 %v480, %v477
  %v589 = vpack.c.b16 %v481, %v478
  %v590 = vpack.c.b16 %v485, %v482
  %v591 = vpack.c.b16 %v486, %v483
  %v592 = vpack.c.b16 %v487, %v484
  %v593 = vpack.c.b16 %v491, %v488
  %v594 = vpack.c.b16 %v492, %v489
  %v595 = vpack.c.b16 %v493, %v490
  %v596 = vpack.c.b16 %v497, %v494
  %v597 = vpack.c.b16 %v498, %v495
  %v598 = vpack.c.b16 %v499, %v496
  %v599 = vpack.c.b16 %v503, %v500
  %v600 = vpack.c.b16 %v504, %v501
  %v601 = vpack.c.b16 %v505, %v502
  %v702 = vunpack.c.l.b16 %v143
  %v703 = vunpack.c.l.b16 %v144
  %v704 = vunpack.c.l.b16 %v145
  %v705 = vunpack.c.l.b16 %v146
  %v706 = vunpack.c.l.b16 %v147
  %v707 = vunpack.c.l.b16 %v148
  %v708 = vunpack.c.l.b16 %v149
  %v709 = vunpack.c.l.b16 %v150
  %v710 = vunpack.c.l.b16 %v151
  %v711 = vunpack.c.l.b16 %v152
  %v712 = vunpack.c.l.b16 %v153
  %v713 = vunpack.c.l.b16 %v154
  %v714 = vunpack.c.l.b16 %v155
  %v715 = vunpack.c.l.b16 %v156
  %v716 = vunpack.c.l.b16 %v157
  %v717 = vunpack.c.l.b16 %v158
  %v718 = vunpack.c.l.b16 %v159
  %v719 = vunpack.c.l.b16 %v160
  %v720 = vunpack.c.l.b16 %v161
  %v721 = vunpack.c.l.b16 %v162
  %v722 = vunpack.c.l.b16 %v163
  %v723 = vunpack.c.l.b16 %v164
  %v724 = vunpack.c.l.b16 %v165
  %v725 = vunpack.c.l.b16 %v166
  %v726 = vunpack.c.l.b16 %v167
  %v727 = vunpack.c.l.b16 %v168
  %v728 = vunpack.c.l.b16 %v169
  %v729 = vunpack.c.l.b16 %v170
  %v730 = vunpack.c.l.b16 %v171
  %v731 = vunpack.c.l.b16 %v172
  %v732 = vunpack.c.l.b16 %v173
  %v733 = vunpack.c.l.b16 %v174
  %v734 = vunpack.c.l.b16 %v175
  %v735 = vunpack.c.l.b16 %v176
  %v736 = vunpack.c.l.b16 %v177
  %v737 = vunpack.c.l.b16 %v178
  %v738 = vpack.c.b16 %v703, %v702
  %v739 = vpack.c.b16 %v705, %v704
  %v740 = vpack.c.b16 %v707, %v706
  %v741 = vpack.c.b16 %v709, %v708
  %v742 = vpack.c.b16 %v711, %v710
  %v743 = vpack.c.b16 %v713, %v712
  %v744 = vpack.c.b16 %v715, %v714
  %v745 = vpack.c.b16 %v717, %v716
  %v746 = vpack.c.b16 %v719, %v718
  %v747 = vpack.c.b16 %v721, %v720
  %v748 = vpack.c.b16 %v723, %v722
  %v749 = vpack.c.b16 %v725, %v724
  %v750 = vpack.c.b16 %v727, %v726
  %v751 = vpack.c.b16 %v729, %v728
  %v752 = vpack.c.b16 %v731, %v730
  %v753 = vpack.c.b16 %v733, %v732
  %v754 = vpack.c.b16 %v735, %v734
  %v755 = vpack.c.b16 %v737, %v736
  %vm774 = vcmask 261120
  %v776 = vsel %vm774, %v508, 0
  %v779 = vsel %vm774, %v511, 0
  %v782 = vsel %vm774, %v514, 0
  %v785 = vsel %vm774, %v517, 0
  %v788 = vsel %vm774, %v520, 0
  %v791 = vsel %vm774, %v523, 0
  %v794 = vsel %vm774, %v526, 0
  %v797 = vsel %vm774, %v529, 0
  %v800 = vsel %vm774, %v532, 0
  %v803 = vsel %vm774, %v535, 0
  %v806 = vsel %vm774, %v538, 0
  %v809 = vsel %vm774, %v541, 0
  %v812 = vsel %vm774, %v544, 0
  %v815 = vsel %vm774, %v547, 0
  %v818 = vsel %vm774, %v550, 0
  %v821 = vsel %vm774, %v553, 0
  %v824 = vsel %vm774, %v556, 0
  %v827 = vsel %vm774, %v559, 0
  %v830 = vsel %vm774, %v562, 0
  %v833 = vsel %vm774, %v565, 0
  %v836 = vsel %vm774, %v568, 0
  %v839 = vsel %vm774, %v571, 0
  %v842 = vsel %vm774, %v574, 0
  %v845 = vsel %vm774, %v577, 0
  %v848 = vsel %vm774, %v580, 0
  %v851 = vsel %vm774, %v583, 0
  %v854 = vsel %vm774, %v586, 0
  %v857 = vsel %vm774, %v589, 0
  %v860 = vsel %vm774, %v592, 0
  %v863 = vsel %vm774, %v595, 0
  %v866 = vsel %vm774, %v598, 0
  %v869 = vsel %vm774, %v601, 0
  %871 = vmatprep.subr.bf16.mxu0 0
  %872 = vmatpush1.bf16.msra.mxu0 %v738
  %873 = vmatprep.subr.bf16.mxu0 0
  %874 = vmatpush1.bf16.msra.mxu0 %v739
  %875 = vmatprep.subr.bf16.mxu0 0
  %876 = vmatpush1.bf16.msra.mxu0 %v740
  %877 = vmatprep.subr.bf16.mxu0 0
  %878 = vmatpush1.bf16.msra.mxu0 %v741
  %879 = vmatprep.subr.bf16.mxu0 0
  %880 = vmatpush1.bf16.msra.mxu0 %v742
  %881 = vmatprep.subr.bf16.mxu0 0
  %882 = vmatpush1.bf16.msra.mxu0 %v743
  %883 = vmatprep.subr.bf16.mxu0 0
  %884 = vmatpush1.bf16.msra.mxu0 %v744
  %885 = vmatprep.subr.bf16.mxu0 0
  %886 = vmatpush1.bf16.msra.mxu0 %v745
  %887 = vmatprep.subr.bf16.mxu0 0
  %888 = vmatpush1.bf16.msra.mxu0 %v746
  %889 = vmatprep.subr.bf16.mxu0 0
  %890 = vmatpush1.bf16.msra.mxu0 %v747
  %891 = vmatprep.subr.bf16.mxu0 0
  %892 = vmatpush1.bf16.msra.mxu0 %v748
  %893 = vmatprep.subr.bf16.mxu0 0
  %894 = vmatpush1.bf16.msra.mxu0 %v749
  %895 = vmatprep.subr.bf16.mxu0 0
  %896 = vmatpush1.bf16.msra.mxu0 %v750
  %897 = vmatprep.subr.bf16.mxu0 0
  %898 = vmatpush1.bf16.msra.mxu0 %v751
  %899 = vmatprep.subr.bf16.mxu0 0
  %900 = vmatpush1.bf16.msra.mxu0 %v752
  %901 = vmatprep.subr.bf16.mxu0 0
  %902 = vmatpush1.bf16.msra.mxu0 %v753
  %903 = vmatprep.mubr.bf16.mxu0 %v507
  %904 = vmatmul.mubr.bf16.gmra.mrb[0].mxu0 %v506
  %v905 = vpop.f32.mrb[0].mxu0
  %v906 = vadd.f32 %v184, %v905
  %v907 = vpop.f32.mrb[0].mxu0
  %v908 = vpop.f32.mrb[0].mxu0
  %v909 = vadd.f32 %v184, %v908
  %v910 = vpop.f32.mrb[0].mxu0
  %911 = vmatprep.mubr.bf16.mxu0 %v510
  %912 = vmatmul.mubr.bf16.gmra.mrb[0].mxu0 %v509
  %v913 = vpop.f32.mrb[0].mxu0
  %v914 = vadd.f32 %v184, %v913
  %v915 = vpop.f32.mrb[0].mxu0
  %v916 = vpop.f32.mrb[0].mxu0
  %v917 = vadd.f32 %v184, %v916
  %v918 = vpop.f32.mrb[0].mxu0
  %919 = vmatprep.mubr.bf16.mxu0 %v513
  %920 = vmatmul.mubr.bf16.gmra.mrb[0].mxu0 %v512
  %v921 = vpop.f32.mrb[0].mxu0
  %v922 = vadd.f32 %v184, %v921
  %v923 = vpop.f32.mrb[0].mxu0
  %v924 = vpop.f32.mrb[0].mxu0
  %v925 = vadd.f32 %v184, %v924
  %v926 = vpop.f32.mrb[0].mxu0
  %927 = vmatprep.mubr.bf16.mxu0 %v516
  %928 = vmatmul.mubr.bf16.gmra.mrb[0].mxu0 %v515
  %v929 = vpop.f32.mrb[0].mxu0
  %v930 = vadd.f32 %v184, %v929
  %v931 = vpop.f32.mrb[0].mxu0
  %v932 = vpop.f32.mrb[0].mxu0
  %v933 = vadd.f32 %v184, %v932
  %v934 = vpop.f32.mrb[0].mxu0
  %935 = vmatprep.mubr.bf16.mxu0 %v519
  %936 = vmatmul.mubr.bf16.gmra.mrb[0].mxu0 %v518
  %v937 = vpop.f32.mrb[0].mxu0
  %v938 = vadd.f32 %v184, %v937
  %v939 = vpop.f32.mrb[0].mxu0
  %v940 = vpop.f32.mrb[0].mxu0
  %v941 = vadd.f32 %v184, %v940
  %v942 = vpop.f32.mrb[0].mxu0
  %943 = vmatprep.mubr.bf16.mxu0 %v522
  %944 = vmatmul.mubr.bf16.gmra.mrb[0].mxu0 %v521
  %v945 = vpop.f32.mrb[0].mxu0
  %v946 = vadd.f32 %v184, %v945
  %v947 = vpop.f32.mrb[0].mxu0
  %v948 = vpop.f32.mrb[0].mxu0
  %v949 = vadd.f32 %v184, %v948
  %v950 = vpop.f32.mrb[0].mxu0
  %951 = vmatprep.mubr.bf16.mxu0 %v525
  %952 = vmatmul.mubr.bf16.gmra.mrb[0].mxu0 %v524
  %v953 = vpop.f32.mrb[0].mxu0
  %v954 = vadd.f32 %v184, %v953
  %v955 = vpop.f32.mrb[0].mxu0
  %v956 = vpop.f32.mrb[0].mxu0
  %v957 = vadd.f32 %v184, %v956
  %v958 = vpop.f32.mrb[0].mxu0
  %959 = vmatprep.mubr.bf16.mxu0 %v528
  %960 = vmatmul.mubr.bf16.gmra.mrb[0].mxu0 %v527
  %v961 = vpop.f32.mrb[0].mxu0
  %v962 = vadd.f32 %v184, %v961
  %v963 = vpop.f32.mrb[0].mxu0
  %v964 = vpop.f32.mrb[0].mxu0
  %v965 = vadd.f32 %v184, %v964
  %v966 = vpop.f32.mrb[0].mxu0
  %967 = vmatprep.mubr.bf16.mxu0 %v531
  %968 = vmatmul.mubr.bf16.gmra.mrb[0].mxu0 %v530
  %v969 = vpop.f32.mrb[0].mxu0
  %v970 = vadd.f32 %v184, %v969
  %v971 = vpop.f32.mrb[0].mxu0
  %v972 = vpop.f32.mrb[0].mxu0
  %v973 = vadd.f32 %v184, %v972
  %v974 = vpop.f32.mrb[0].mxu0
  %975 = vmatprep.mubr.bf16.mxu0 %v534
  %976 = vmatmul.mubr.bf16.gmra.mrb[0].mxu0 %v533
  %v977 = vpop.f32.mrb[0].mxu0
  %v978 = vadd.f32 %v184, %v977
  %v979 = vpop.f32.mrb[0].mxu0
  %v980 = vpop.f32.mrb[0].mxu0
  %v981 = vadd.f32 %v184, %v980
  %v982 = vpop.f32.mrb[0].mxu0
  %983 = vmatprep.mubr.bf16.mxu0 %v537
  %984 = vmatmul.mubr.bf16.gmra.mrb[0].mxu0 %v536
  %v985 = vpop.f32.mrb[0].mxu0
  %v986 = vadd.f32 %v184, %v985
  %v987 = vpop.f32.mrb[0].mxu0
  %v988 = vpop.f32.mrb[0].mxu0
  %v989 = vadd.f32 %v184, %v988
  %v990 = vpop.f32.mrb[0].mxu0
  %991 = vmatprep.mubr.bf16.mxu0 %v540
  %992 = vmatmul.mubr.bf16.gmra.mrb[0].mxu0 %v539
  %v993 = vpop.f32.mrb[0].mxu0
  %v994 = vadd.f32 %v184, %v993
  %v995 = vpop.f32.mrb[0].mxu0
  %v996 = vpop.f32.mrb[0].mxu0
  %v997 = vadd.f32 %v184, %v996
  %v998 = vpop.f32.mrb[0].mxu0
  %999 = vmatprep.mubr.bf16.mxu0 %v543
  %1000 = vmatmul.mubr.bf16.gmra.mrb[0].mxu0 %v542
  %v1001 = vpop.f32.mrb[0].mxu0
  %v1002 = vadd.f32 %v184, %v1001
  %v1003 = vpop.f32.mrb[0].mxu0
  %v1004 = vpop.f32.mrb[0].mxu0
  %v1005 = vadd.f32 %v184, %v1004
  %v1006 = vpop.f32.mrb[0].mxu0
  %1007 = vmatprep.mubr.bf16.mxu0 %v546
  %1008 = vmatmul.mubr.bf16.gmra.mrb[0].mxu0 %v545
  %v1009 = vpop.f32.mrb[0].mxu0
  %v1010 = vadd.f32 %v184, %v1009
  %v1011 = vpop.f32.mrb[0].mxu0
  %v1012 = vpop.f32.mrb[0].mxu0
  %v1013 = vadd.f32 %v184, %v1012
  %v1014 = vpop.f32.mrb[0].mxu0
  %1015 = vmatprep.mubr.bf16.mxu0 %v549
  %1016 = vmatmul.mubr.bf16.gmra.mrb[0].mxu0 %v548
  %v1017 = vpop.f32.mrb[0].mxu0
  %v1018 = vadd.f32 %v184, %v1017
  %v1019 = vpop.f32.mrb[0].mxu0
  %v1020 = vpop.f32.mrb[0].mxu0
  %v1021 = vadd.f32 %v184, %v1020
  %v1022 = vpop.f32.mrb[0].mxu0
  %1023 = vmatprep.mubr.bf16.mxu0 %v552
  %1024 = vmatmul.mubr.bf16.gmra.mrb[0].mxu0 %v551
  %v1025 = vpop.f32.mrb[0].mxu0
  %v1026 = vadd.f32 %v184, %v1025
  %v1027 = vpop.f32.mrb[0].mxu0
  %v1028 = vpop.f32.mrb[0].mxu0
  %v1029 = vadd.f32 %v184, %v1028
  %v1030 = vpop.f32.mrb[0].mxu0
  %1031 = vmatprep.mubr.bf16.mxu0 %v555
  %1032 = vmatmul.mubr.bf16.gmra.mrb[0].mxu0 %v554
  %v1033 = vpop.f32.mrb[0].mxu0
  %v1034 = vadd.f32 %v184, %v1033
  %v1035 = vpop.f32.mrb[0].mxu0
  %v1036 = vpop.f32.mrb[0].mxu0
  %v1037 = vadd.f32 %v184, %v1036
  %v1038 = vpop.f32.mrb[0].mxu0
  %1039 = vmatprep.mubr.bf16.mxu0 %v558
  %1040 = vmatmul.mubr.bf16.gmra.mrb[0].mxu0 %v557
  %v1041 = vpop.f32.mrb[0].mxu0
  %v1042 = vadd.f32 %v184, %v1041
  %v1043 = vpop.f32.mrb[0].mxu0
  %v1044 = vpop.f32.mrb[0].mxu0
  %v1045 = vadd.f32 %v184, %v1044
  %v1046 = vpop.f32.mrb[0].mxu0
  %1047 = vmatprep.mubr.bf16.mxu0 %v561
  %1048 = vmatmul.mubr.bf16.gmra.mrb[0].mxu0 %v560
  %v1049 = vpop.f32.mrb[0].mxu0
  %v1050 = vadd.f32 %v184, %v1049
  %v1051 = vpop.f32.mrb[0].mxu0
  %v1052 = vpop.f32.mrb[0].mxu0
  %v1053 = vadd.f32 %v184, %v1052
  %v1054 = vpop.f32.mrb[0].mxu0
  %1055 = vmatprep.mubr.bf16.mxu0 %v564
  %1056 = vmatmul.mubr.bf16.gmra.mrb[0].mxu0 %v563
  %v1057 = vpop.f32.mrb[0].mxu0
  %v1058 = vadd.f32 %v184, %v1057
  %v1059 = vpop.f32.mrb[0].mxu0
  %v1060 = vpop.f32.mrb[0].mxu0
  %v1061 = vadd.f32 %v184, %v1060
  %v1062 = vpop.f32.mrb[0].mxu0
  %1063 = vmatprep.mubr.bf16.mxu0 %v567
  %1064 = vmatmul.mubr.bf16.gmra.mrb[0].mxu0 %v566
  %v1065 = vpop.f32.mrb[0].mxu0
  %v1066 = vadd.f32 %v184, %v1065
  %v1067 = vpop.f32.mrb[0].mxu0
  %v1068 = vpop.f32.mrb[0].mxu0
  %v1069 = vadd.f32 %v184, %v1068
  %v1070 = vpop.f32.mrb[0].mxu0
  %1071 = vmatprep.mubr.bf16.mxu0 %v570
  %1072 = vmatmul.mubr.bf16.gmra.mrb[0].mxu0 %v569
  %v1073 = vpop.f32.mrb[0].mxu0
  %v1074 = vadd.f32 %v184, %v1073
  %v1075 = vpop.f32.mrb[0].mxu0
  %v1076 = vpop.f32.mrb[0].mxu0
  %v1077 = vadd.f32 %v184, %v1076
  %v1078 = vpop.f32.mrb[0].mxu0
  %1079 = vmatprep.mubr.bf16.mxu0 %v573
  %1080 = vmatmul.mubr.bf16.gmra.mrb[0].mxu0 %v572
  %v1081 = vpop.f32.mrb[0].mxu0
  %v1082 = vadd.f32 %v184, %v1081
  %v1083 = vpop.f32.mrb[0].mxu0
  %v1084 = vpop.f32.mrb[0].mxu0
  %v1085 = vadd.f32 %v184, %v1084
  %v1086 = vpop.f32.mrb[0].mxu0
  %1087 = vmatprep.mubr.bf16.mxu0 %v576
  %1088 = vmatmul.mubr.bf16.gmra.mrb[0].mxu0 %v575
  %v1089 = vpop.f32.mrb[0].mxu0
  %v1090 = vadd.f32 %v184, %v1089
  %v1091 = vpop.f32.mrb[0].mxu0
  %v1092 = vpop.f32.mrb[0].mxu0
  %v1093 = vadd.f32 %v184, %v1092
  %v1094 = vpop.f32.mrb[0].mxu0
  %1095 = vmatprep.mubr.bf16.mxu0 %v579
  %1096 = vmatmul.mubr.bf16.gmra.mrb[0].mxu0 %v578
  %v1097 = vpop.f32.mrb[0].mxu0
  %v1098 = vadd.f32 %v184, %v1097
  %v1099 = vpop.f32.mrb[0].mxu0
  %v1100 = vpop.f32.mrb[0].mxu0
  %v1101 = vadd.f32 %v184, %v1100
  %v1102 = vpop.f32.mrb[0].mxu0
  %1103 = vmatprep.mubr.bf16.mxu0 %v582
  %1104 = vmatmul.mubr.bf16.gmra.mrb[0].mxu0 %v581
  %v1105 = vpop.f32.mrb[0].mxu0
  %v1106 = vadd.f32 %v184, %v1105
  %v1107 = vpop.f32.mrb[0].mxu0
  %v1108 = vpop.f32.mrb[0].mxu0
  %v1109 = vadd.f32 %v184, %v1108
  %v1110 = vpop.f32.mrb[0].mxu0
  %1111 = vmatprep.mubr.bf16.mxu0 %v585
  %1112 = vmatmul.mubr.bf16.gmra.mrb[0].mxu0 %v584
  %v1113 = vpop.f32.mrb[0].mxu0
  %v1114 = vadd.f32 %v184, %v1113
  %v1115 = vpop.f32.mrb[0].mxu0
  %v1116 = vpop.f32.mrb[0].mxu0
  %v1117 = vadd.f32 %v184, %v1116
  %v1118 = vpop.f32.mrb[0].mxu0
  %1119 = vmatprep.mubr.bf16.mxu0 %v588
  %1120 = vmatmul.mubr.bf16.gmra.mrb[0].mxu0 %v587
  %v1121 = vpop.f32.mrb[0].mxu0
  %v1122 = vadd.f32 %v184, %v1121
  %v1123 = vpop.f32.mrb[0].mxu0
  %v1124 = vpop.f32.mrb[0].mxu0
  %v1125 = vadd.f32 %v184, %v1124
  %v1126 = vpop.f32.mrb[0].mxu0
  %1127 = vmatprep.mubr.bf16.mxu0 %v591
  %1128 = vmatmul.mubr.bf16.gmra.mrb[0].mxu0 %v590
  %v1129 = vpop.f32.mrb[0].mxu0
  %v1130 = vadd.f32 %v184, %v1129
  %v1131 = vpop.f32.mrb[0].mxu0
  %v1132 = vpop.f32.mrb[0].mxu0
  %v1133 = vadd.f32 %v184, %v1132
  %v1134 = vpop.f32.mrb[0].mxu0
  %1135 = vmatprep.mubr.bf16.mxu0 %v594
  %1136 = vmatmul.mubr.bf16.gmra.mrb[0].mxu0 %v593
  %v1137 = vpop.f32.mrb[0].mxu0
  %v1138 = vadd.f32 %v184, %v1137
  %v1139 = vpop.f32.mrb[0].mxu0
  %v1140 = vpop.f32.mrb[0].mxu0
  %v1141 = vadd.f32 %v184, %v1140
  %v1142 = vpop.f32.mrb[0].mxu0
  %1143 = vmatprep.mubr.bf16.mxu0 %v597
  %1144 = vmatmul.mubr.bf16.gmra.mrb[0].mxu0 %v596
  %v1145 = vpop.f32.mrb[0].mxu0
  %v1146 = vadd.f32 %v184, %v1145
  %v1147 = vpop.f32.mrb[0].mxu0
  %v1148 = vpop.f32.mrb[0].mxu0
  %v1149 = vadd.f32 %v184, %v1148
  %v1150 = vpop.f32.mrb[0].mxu0
  %1151 = vmatprep.mubr.bf16.mxu0 %v600
  %1152 = vmatmul.mubr.bf16.gmra.mrb[0].mxu0 %v599
  %v1153 = vpop.f32.mrb[0].mxu0
  %v1154 = vadd.f32 %v184, %v1153
  %v1155 = vpop.f32.mrb[0].mxu0
  %v1156 = vpop.f32.mrb[0].mxu0
  %v1157 = vadd.f32 %v184, %v1156
  %v1158 = vpop.f32.mrb[0].mxu0
  %1159 = vdwg.mxu0
  %1160 = vmatprep.subr.bf16.mxu0 0
  %1161 = vmatpush1.bf16.msra.mxu0 %v754
  %1162 = vmatprep.subr.bf16.mxu0 0
  %1163 = vmatpush1.bf16.msra.mxu0 %v755
  %1164 = vmatprep.subr.bf16.mxu0 0
  %1165 = vmatpush1.bf16.msra.mxu0 0
  %1166 = vmatprep.subr.bf16.mxu0 0
  %1167 = vmatpush1.bf16.msra.mxu0 0
  %1168 = vmatprep.subr.bf16.mxu0 0
  %1169 = vmatpush1.bf16.msra.mxu0 0
  %1170 = vmatprep.subr.bf16.mxu0 0
  %1171 = vmatpush1.bf16.msra.mxu0 0
  %1172 = vmatprep.subr.bf16.mxu0 0
  %1173 = vmatpush1.bf16.msra.mxu0 0
  %1174 = vmatprep.subr.bf16.mxu0 0
  %1175 = vmatpush1.bf16.msra.mxu0 0
  %1176 = vmatprep.subr.bf16.mxu0 0
  %1177 = vmatpush1.bf16.msra.mxu0 0
  %1178 = vmatprep.subr.bf16.mxu0 0
  %1179 = vmatpush1.bf16.msra.mxu0 0
  %1180 = vmatprep.subr.bf16.mxu0 0
  %1181 = vmatpush1.bf16.msra.mxu0 0
  %1182 = vmatprep.subr.bf16.mxu0 0
  %1183 = vmatpush1.bf16.msra.mxu0 0
  %1184 = vmatprep.subr.bf16.mxu0 0
  %1185 = vmatpush1.bf16.msra.mxu0 0
  %1186 = vmatprep.subr.bf16.mxu0 0
  %1187 = vmatpush1.bf16.msra.mxu0 0
  %1188 = vmatprep.subr.bf16.mxu0 0
  %1189 = vmatpush1.bf16.msra.mxu0 0
  %1190 = vmatprep.subr.bf16.mxu0 0
  %1191 = vmatpush1.bf16.msra.mxu0 0
  %1192 = vmatprep.mubr.bf16.mxu0 0
  %1193 = vmatmul.mubr.bf16.gmra.mrb[0].mxu0 %v776
  %v1194 = vpop.f32.mrb[0].mxu0
  %v1195 = vadd.f32 %v906, %v1194
  %v1196 = vpop.f32.mrb[0].mxu0
  %v1197 = vpop.f32.mrb[0].mxu0
  %v1198 = vadd.f32 %v909, %v1197
  %v1199 = vpop.f32.mrb[0].mxu0
  %1200 = vmatprep.mubr.bf16.mxu0 0
  %1201 = vmatmul.mubr.bf16.gmra.mrb[0].mxu0 %v779
  %v1202 = vpop.f32.mrb[0].mxu0
  %v1203 = vadd.f32 %v914, %v1202
  %v1204 = vpop.f32.mrb[0].mxu0
  %v1205 = vpop.f32.mrb[0].mxu0
  %v1206 = vadd.f32 %v917, %v1205
  %v1207 = vpop.f32.mrb[0].mxu0
  %1208 = vmatprep.mubr.bf16.mxu0 0
  %1209 = vmatmul.mubr.bf16.gmra.mrb[0].mxu0 %v782
  %v1210 = vpop.f32.mrb[0].mxu0
  %v1211 = vadd.f32 %v922, %v1210
  %v1212 = vpop.f32.mrb[0].mxu0
  %v1213 = vpop.f32.mrb[0].mxu0
  %v1214 = vadd.f32 %v925, %v1213
  %v1215 = vpop.f32.mrb[0].mxu0
  %1216 = vmatprep.mubr.bf16.mxu0 0
  %1217 = vmatmul.mubr.bf16.gmra.mrb[0].mxu0 %v785
  %v1218 = vpop.f32.mrb[0].mxu0
  %v1219 = vadd.f32 %v930, %v1218
  %v1220 = vpop.f32.mrb[0].mxu0
  %v1221 = vpop.f32.mrb[0].mxu0
  %v1222 = vadd.f32 %v933, %v1221
  %v1223 = vpop.f32.mrb[0].mxu0
  %1224 = vmatprep.mubr.bf16.mxu0 0
  %1225 = vmatmul.mubr.bf16.gmra.mrb[0].mxu0 %v788
  %v1226 = vpop.f32.mrb[0].mxu0
  %v1227 = vadd.f32 %v938, %v1226
  %v1228 = vpop.f32.mrb[0].mxu0
  %v1229 = vpop.f32.mrb[0].mxu0
  %v1230 = vadd.f32 %v941, %v1229
  %v1231 = vpop.f32.mrb[0].mxu0
  %1232 = vmatprep.mubr.bf16.mxu0 0
  %1233 = vmatmul.mubr.bf16.gmra.mrb[0].mxu0 %v791
  %v1234 = vpop.f32.mrb[0].mxu0
  %v1235 = vadd.f32 %v946, %v1234
  %v1236 = vpop.f32.mrb[0].mxu0
  %v1237 = vpop.f32.mrb[0].mxu0
  %v1238 = vadd.f32 %v949, %v1237
  %v1239 = vpop.f32.mrb[0].mxu0
  %1240 = vmatprep.mubr.bf16.mxu0 0
  %1241 = vmatmul.mubr.bf16.gmra.mrb[0].mxu0 %v794
  %v1242 = vpop.f32.mrb[0].mxu0
  %v1243 = vadd.f32 %v954, %v1242
  %v1244 = vpop.f32.mrb[0].mxu0
  %v1245 = vpop.f32.mrb[0].mxu0
  %v1246 = vadd.f32 %v957, %v1245
  %v1247 = vpop.f32.mrb[0].mxu0
  %1248 = vmatprep.mubr.bf16.mxu0 0
  %1249 = vmatmul.mubr.bf16.gmra.mrb[0].mxu0 %v797
  %v1250 = vpop.f32.mrb[0].mxu0
  %v1251 = vadd.f32 %v962, %v1250
  %v1252 = vpop.f32.mrb[0].mxu0
  %v1253 = vpop.f32.mrb[0].mxu0
  %v1254 = vadd.f32 %v965, %v1253
  %v1255 = vpop.f32.mrb[0].mxu0
  %1256 = vmatprep.mubr.bf16.mxu0 0
  %1257 = vmatmul.mubr.bf16.gmra.mrb[0].mxu0 %v800
  %v1258 = vpop.f32.mrb[0].mxu0
  %v1259 = vadd.f32 %v970, %v1258
  %v1260 = vpop.f32.mrb[0].mxu0
  %v1261 = vpop.f32.mrb[0].mxu0
  %v1262 = vadd.f32 %v973, %v1261
  %v1263 = vpop.f32.mrb[0].mxu0
  %1264 = vmatprep.mubr.bf16.mxu0 0
  %1265 = vmatmul.mubr.bf16.gmra.mrb[0].mxu0 %v803
  %v1266 = vpop.f32.mrb[0].mxu0
  %v1267 = vadd.f32 %v978, %v1266
  %v1268 = vpop.f32.mrb[0].mxu0
  %v1269 = vpop.f32.mrb[0].mxu0
  %v1270 = vadd.f32 %v981, %v1269
  %v1271 = vpop.f32.mrb[0].mxu0
  %1272 = vmatprep.mubr.bf16.mxu0 0
  %1273 = vmatmul.mubr.bf16.gmra.mrb[0].mxu0 %v806
  %v1274 = vpop.f32.mrb[0].mxu0
  %v1275 = vadd.f32 %v986, %v1274
  %v1276 = vpop.f32.mrb[0].mxu0
  %v1277 = vpop.f32.mrb[0].mxu0
  %v1278 = vadd.f32 %v989, %v1277
  %v1279 = vpop.f32.mrb[0].mxu0
  %1280 = vmatprep.mubr.bf16.mxu0 0
  %1281 = vmatmul.mubr.bf16.gmra.mrb[0].mxu0 %v809
  %v1282 = vpop.f32.mrb[0].mxu0
  %v1283 = vadd.f32 %v994, %v1282
  %v1284 = vpop.f32.mrb[0].mxu0
  %v1285 = vpop.f32.mrb[0].mxu0
  %v1286 = vadd.f32 %v997, %v1285
  %v1287 = vpop.f32.mrb[0].mxu0
  %1288 = vmatprep.mubr.bf16.mxu0 0
  %1289 = vmatmul.mubr.bf16.gmra.mrb[0].mxu0 %v812
  %v1290 = vpop.f32.mrb[0].mxu0
  %v1291 = vadd.f32 %v1002, %v1290
  %v1292 = vpop.f32.mrb[0].mxu0
  %v1293 = vpop.f32.mrb[0].mxu0
  %v1294 = vadd.f32 %v1005, %v1293
  %v1295 = vpop.f32.mrb[0].mxu0
  %1296 = vmatprep.mubr.bf16.mxu0 0
  %1297 = vmatmul.mubr.bf16.gmra.mrb[0].mxu0 %v815
  %v1298 = vpop.f32.mrb[0].mxu0
  %v1299 = vadd.f32 %v1010, %v1298
  %v1300 = vpop.f32.mrb[0].mxu0
  %v1301 = vpop.f32.mrb[0].mxu0
  %v1302 = vadd.f32 %v1013, %v1301
  %v1303 = vpop.f32.mrb[0].mxu0
  %1304 = vmatprep.mubr.bf16.mxu0 0
  %1305 = vmatmul.mubr.bf16.gmra.mrb[0].mxu0 %v818
  %v1306 = vpop.f32.mrb[0].mxu0
  %v1307 = vadd.f32 %v1018, %v1306
  %v1308 = vpop.f32.mrb[0].mxu0
  %v1309 = vpop.f32.mrb[0].mxu0
  %v1310 = vadd.f32 %v1021, %v1309
  %v1311 = vpop.f32.mrb[0].mxu0
  %1312 = vmatprep.mubr.bf16.mxu0 0
  %1313 = vmatmul.mubr.bf16.gmra.mrb[0].mxu0 %v821
  %v1314 = vpop.f32.mrb[0].mxu0
  %v1315 = vadd.f32 %v1026, %v1314
  %v1316 = vpop.f32.mrb[0].mxu0
  %v1317 = vpop.f32.mrb[0].mxu0
  %v1318 = vadd.f32 %v1029, %v1317
  %v1319 = vpop.f32.mrb[0].mxu0
  %1320 = vmatprep.mubr.bf16.mxu0 0
  %1321 = vmatmul.mubr.bf16.gmra.mrb[0].mxu0 %v824
  %v1322 = vpop.f32.mrb[0].mxu0
  %v1323 = vadd.f32 %v1034, %v1322
  %v1324 = vpop.f32.mrb[0].mxu0
  %v1325 = vpop.f32.mrb[0].mxu0
  %v1326 = vadd.f32 %v1037, %v1325
  %v1327 = vpop.f32.mrb[0].mxu0
  %1328 = vmatprep.mubr.bf16.mxu0 0
  %1329 = vmatmul.mubr.bf16.gmra.mrb[0].mxu0 %v827
  %v1330 = vpop.f32.mrb[0].mxu0
  %v1331 = vadd.f32 %v1042, %v1330
  %v1332 = vpop.f32.mrb[0].mxu0
  %v1333 = vpop.f32.mrb[0].mxu0
  %v1334 = vadd.f32 %v1045, %v1333
  %v1335 = vpop.f32.mrb[0].mxu0
  %1336 = vmatprep.mubr.bf16.mxu0 0
  %1337 = vmatmul.mubr.bf16.gmra.mrb[0].mxu0 %v830
  %v1338 = vpop.f32.mrb[0].mxu0
  %v1339 = vadd.f32 %v1050, %v1338
  %v1340 = vpop.f32.mrb[0].mxu0
  %v1341 = vpop.f32.mrb[0].mxu0
  %v1342 = vadd.f32 %v1053, %v1341
  %v1343 = vpop.f32.mrb[0].mxu0
  %1344 = vmatprep.mubr.bf16.mxu0 0
  %1345 = vmatmul.mubr.bf16.gmra.mrb[0].mxu0 %v833
  %v1346 = vpop.f32.mrb[0].mxu0
  %v1347 = vadd.f32 %v1058, %v1346
  %v1348 = vpop.f32.mrb[0].mxu0
  %v1349 = vpop.f32.mrb[0].mxu0
  %v1350 = vadd.f32 %v1061, %v1349
  %v1351 = vpop.f32.mrb[0].mxu0
  %1352 = vmatprep.mubr.bf16.mxu0 0
  %1353 = vmatmul.mubr.bf16.gmra.mrb[0].mxu0 %v836
  %v1354 = vpop.f32.mrb[0].mxu0
  %v1355 = vadd.f32 %v1066, %v1354
  %v1356 = vpop.f32.mrb[0].mxu0
  %v1357 = vpop.f32.mrb[0].mxu0
  %v1358 = vadd.f32 %v1069, %v1357
  %v1359 = vpop.f32.mrb[0].mxu0
  %1360 = vmatprep.mubr.bf16.mxu0 0
  %1361 = vmatmul.mubr.bf16.gmra.mrb[0].mxu0 %v839
  %v1362 = vpop.f32.mrb[0].mxu0
  %v1363 = vadd.f32 %v1074, %v1362
  %v1364 = vpop.f32.mrb[0].mxu0
  %v1365 = vpop.f32.mrb[0].mxu0
  %v1366 = vadd.f32 %v1077, %v1365
  %v1367 = vpop.f32.mrb[0].mxu0
  %1368 = vmatprep.mubr.bf16.mxu0 0
  %1369 = vmatmul.mubr.bf16.gmra.mrb[0].mxu0 %v842
  %v1370 = vpop.f32.mrb[0].mxu0
  %v1371 = vadd.f32 %v1082, %v1370
  %v1372 = vpop.f32.mrb[0].mxu0
  %v1373 = vpop.f32.mrb[0].mxu0
  %v1374 = vadd.f32 %v1085, %v1373
  %v1375 = vpop.f32.mrb[0].mxu0
  %1376 = vmatprep.mubr.bf16.mxu0 0
  %1377 = vmatmul.mubr.bf16.gmra.mrb[0].mxu0 %v845
  %v1378 = vpop.f32.mrb[0].mxu0
  %v1379 = vadd.f32 %v1090, %v1378
  %v1380 = vpop.f32.mrb[0].mxu0
  %v1381 = vpop.f32.mrb[0].mxu0
  %v1382 = vadd.f32 %v1093, %v1381
  %v1383 = vpop.f32.mrb[0].mxu0
  %1384 = vmatprep.mubr.bf16.mxu0 0
  %1385 = vmatmul.mubr.bf16.gmra.mrb[0].mxu0 %v848
  %v1386 = vpop.f32.mrb[0].mxu0
  %v1387 = vadd.f32 %v1098, %v1386
  %v1388 = vpop.f32.mrb[0].mxu0
  %v1389 = vpop.f32.mrb[0].mxu0
  %v1390 = vadd.f32 %v1101, %v1389
  %v1391 = vpop.f32.mrb[0].mxu0
  %1392 = vmatprep.mubr.bf16.mxu0 0
  %1393 = vmatmul.mubr.bf16.gmra.mrb[0].mxu0 %v851
  %v1394 = vpop.f32.mrb[0].mxu0
  %v1395 = vadd.f32 %v1106, %v1394
  %v1396 = vpop.f32.mrb[0].mxu0
  %v1397 = vpop.f32.mrb[0].mxu0
  %v1398 = vadd.f32 %v1109, %v1397
  %v1399 = vpop.f32.mrb[0].mxu0
  %1400 = vmatprep.mubr.bf16.mxu0 0
  %1401 = vmatmul.mubr.bf16.gmra.mrb[0].mxu0 %v854
  %v1402 = vpop.f32.mrb[0].mxu0
  %v1403 = vadd.f32 %v1114, %v1402
  %v1404 = vpop.f32.mrb[0].mxu0
  %v1405 = vpop.f32.mrb[0].mxu0
  %v1406 = vadd.f32 %v1117, %v1405
  %v1407 = vpop.f32.mrb[0].mxu0
  %1408 = vmatprep.mubr.bf16.mxu0 0
  %1409 = vmatmul.mubr.bf16.gmra.mrb[0].mxu0 %v857
  %v1410 = vpop.f32.mrb[0].mxu0
  %v1411 = vadd.f32 %v1122, %v1410
  %v1412 = vpop.f32.mrb[0].mxu0
  %v1413 = vpop.f32.mrb[0].mxu0
  %v1414 = vadd.f32 %v1125, %v1413
  %v1415 = vpop.f32.mrb[0].mxu0
  %1416 = vmatprep.mubr.bf16.mxu0 0
  %1417 = vmatmul.mubr.bf16.gmra.mrb[0].mxu0 %v860
  %v1418 = vpop.f32.mrb[0].mxu0
  %v1419 = vadd.f32 %v1130, %v1418
  %v1420 = vpop.f32.mrb[0].mxu0
  %v1421 = vpop.f32.mrb[0].mxu0
  %v1422 = vadd.f32 %v1133, %v1421
  %v1423 = vpop.f32.mrb[0].mxu0
  %1424 = vmatprep.mubr.bf16.mxu0 0
  %1425 = vmatmul.mubr.bf16.gmra.mrb[0].mxu0 %v863
  %v1426 = vpop.f32.mrb[0].mxu0
  %v1427 = vadd.f32 %v1138, %v1426
  %v1428 = vpop.f32.mrb[0].mxu0
  %v1429 = vpop.f32.mrb[0].mxu0
  %v1430 = vadd.f32 %v1141, %v1429
  %v1431 = vpop.f32.mrb[0].mxu0
  %1432 = vmatprep.mubr.bf16.mxu0 0
  %1433 = vmatmul.mubr.bf16.gmra.mrb[0].mxu0 %v866
  %v1434 = vpop.f32.mrb[0].mxu0
  %v1435 = vadd.f32 %v1146, %v1434
  %v1436 = vpop.f32.mrb[0].mxu0
  %v1437 = vpop.f32.mrb[0].mxu0
  %v1438 = vadd.f32 %v1149, %v1437
  %v1439 = vpop.f32.mrb[0].mxu0
  %1440 = vmatprep.mubr.bf16.mxu0 0
  %1441 = vmatmul.mubr.bf16.gmra.mrb[0].mxu0 %v869
  %v1442 = vpop.f32.mrb[0].mxu0
  %v1443 = vadd.f32 %v1154, %v1442
  %v1444 = vpop.f32.mrb[0].mxu0
  %v1445 = vpop.f32.mrb[0].mxu0
  %v1446 = vadd.f32 %v1157, %v1445
  %v1447 = vpop.f32.mrb[0].mxu0
  %1448 = vdwg.mxu0
  %v1449 = vmax.f32 %v1195, 0.0
  %v1450 = vmax.f32 %v1198, 0.0
  %v1451 = vmax.f32 %v1203, 0.0
  %v1452 = vmax.f32 %v1206, 0.0
  %v1453 = vmax.f32 %v1211, 0.0
  %v1454 = vmax.f32 %v1214, 0.0
  %v1455 = vmax.f32 %v1219, 0.0
  %v1456 = vmax.f32 %v1222, 0.0
  %v1457 = vmax.f32 %v1227, 0.0
  %v1458 = vmax.f32 %v1230, 0.0
  %v1459 = vmax.f32 %v1235, 0.0
  %v1460 = vmax.f32 %v1238, 0.0
  %v1461 = vmax.f32 %v1243, 0.0
  %v1462 = vmax.f32 %v1246, 0.0
  %v1463 = vmax.f32 %v1251, 0.0
  %v1464 = vmax.f32 %v1254, 0.0
  %v1465 = vmax.f32 %v1259, 0.0
  %v1466 = vmax.f32 %v1262, 0.0
  %v1467 = vmax.f32 %v1267, 0.0
  %v1468 = vmax.f32 %v1270, 0.0
  %v1469 = vmax.f32 %v1275, 0.0
  %v1470 = vmax.f32 %v1278, 0.0
  %v1471 = vmax.f32 %v1283, 0.0
  %v1472 = vmax.f32 %v1286, 0.0
  %v1473 = vmax.f32 %v1291, 0.0
  %v1474 = vmax.f32 %v1294, 0.0
  %v1475 = vmax.f32 %v1299, 0.0
  %v1476 = vmax.f32 %v1302, 0.0
  %v1477 = vmax.f32 %v1307, 0.0
  %v1478 = vmax.f32 %v1310, 0.0
  %v1479 = vmax.f32 %v1315, 0.0
  %v1480 = vmax.f32 %v1318, 0.0
  %v1481 = vmax.f32 %v1323, 0.0
  %v1482 = vmax.f32 %v1326, 0.0
  %v1483 = vmax.f32 %v1331, 0.0
  %v1484 = vmax.f32 %v1334, 0.0
  %v1485 = vmax.f32 %v1339, 0.0
  %v1486 = vmax.f32 %v1342, 0.0
  %v1487 = vmax.f32 %v1347, 0.0
  %v1488 = vmax.f32 %v1350, 0.0
  %v1489 = vmax.f32 %v1355, 0.0
  %v1490 = vmax.f32 %v1358, 0.0
  %v1491 = vmax.f32 %v1363, 0.0
  %v1492 = vmax.f32 %v1366, 0.0
  %v1493 = vmax.f32 %v1371, 0.0
  %v1494 = vmax.f32 %v1374, 0.0
  %v1495 = vmax.f32 %v1379, 0.0
  %v1496 = vmax.f32 %v1382, 0.0
  %v1497 = vmax.f32 %v1387, 0.0
  %v1498 = vmax.f32 %v1390, 0.0
  %v1499 = vmax.f32 %v1395, 0.0
  %v1500 = vmax.f32 %v1398, 0.0
  %v1501 = vmax.f32 %v1403, 0.0
  %v1502 = vmax.f32 %v1406, 0.0
  %v1503 = vmax.f32 %v1411, 0.0
  %v1504 = vmax.f32 %v1414, 0.0
  %v1505 = vmax.f32 %v1419, 0.0
  %v1506 = vmax.f32 %v1422, 0.0
  %v1507 = vmax.f32 %v1427, 0.0
  %v1508 = vmax.f32 %v1430, 0.0
  %v1509 = vmax.f32 %v1435, 0.0
  %v1510 = vmax.f32 %v1438, 0.0
  %v1511 = vmax.f32 %v1443, 0.0
  %v1512 = vmax.f32 %v1446, 0.0
  %1513 = vst.msk [vmem:[%s3] sm:$0xff] %vm774, %v1449
  %1514 = vst.msk [vmem:[%s3 + $0x8] sm:$0xff] %vm774, %v1450
  %1515 = vst.msk [vmem:[%s3 + $0x10] sm:$0xff] %vm774, %v1451
  %1516 = vst.msk [vmem:[%s3 + $0x18] sm:$0xff] %vm774, %v1452
  %1517 = vst.msk [vmem:[%s3 + $0x20] sm:$0xff] %vm774, %v1453
  %1518 = vst.msk [vmem:[%s3 + $0x28] sm:$0xff] %vm774, %v1454
  %1519 = vst.msk [vmem:[%s3 + $0x30] sm:$0xff] %vm774, %v1455
  %1520 = vst.msk [vmem:[%s3 + $0x38] sm:$0xff] %vm774, %v1456
  %1521 = vst.msk [vmem:[%s3 + $0x40] sm:$0xff] %vm774, %v1457
  %1522 = vst.msk [vmem:[%s3 + $0x48] sm:$0xff] %vm774, %v1458
  %1523 = vst.msk [vmem:[%s3 + $0x50] sm:$0xff] %vm774, %v1459
  %1524 = vst.msk [vmem:[%s3 + $0x58] sm:$0xff] %vm774, %v1460
  %1525 = vst.msk [vmem:[%s3 + $0x60] sm:$0xff] %vm774, %v1461
  %1526 = vst.msk [vmem:[%s3 + $0x68] sm:$0xff] %vm774, %v1462
  %1527 = vst.msk [vmem:[%s3 + $0x70] sm:$0xff] %vm774, %v1463
  %1528 = vst.msk [vmem:[%s3 + $0x78] sm:$0xff] %vm774, %v1464
  %1529 = vst.msk [vmem:[%s3 + $0x80] sm:$0xff] %vm774, %v1465
  %1530 = vst.msk [vmem:[%s3 + $0x88] sm:$0xff] %vm774, %v1466
  %1531 = vst.msk [vmem:[%s3 + $0x90] sm:$0xff] %vm774, %v1467
  %1532 = vst.msk [vmem:[%s3 + $0x98] sm:$0xff] %vm774, %v1468
  %1533 = vst.msk [vmem:[%s3 + $0xa0] sm:$0xff] %vm774, %v1469
  %1534 = vst.msk [vmem:[%s3 + $0xa8] sm:$0xff] %vm774, %v1470
  %1535 = vst.msk [vmem:[%s3 + $0xb0] sm:$0xff] %vm774, %v1471
  %1536 = vst.msk [vmem:[%s3 + $0xb8] sm:$0xff] %vm774, %v1472
  %1537 = vst.msk [vmem:[%s3 + $0xc0] sm:$0xff] %vm774, %v1473
  %1538 = vst.msk [vmem:[%s3 + $0xc8] sm:$0xff] %vm774, %v1474
  %1539 = vst.msk [vmem:[%s3 + $0xd0] sm:$0xff] %vm774, %v1475
  %1540 = vst.msk [vmem:[%s3 + $0xd8] sm:$0xff] %vm774, %v1476
  %1541 = vst.msk [vmem:[%s3 + $0xe0] sm:$0xff] %vm774, %v1477
  %1542 = vst.msk [vmem:[%s3 + $0xe8] sm:$0xff] %vm774, %v1478
  %1543 = vst.msk [vmem:[%s3 + $0xf0] sm:$0xff] %vm774, %v1479
  %1544 = vst.msk [vmem:[%s3 + $0xf8] sm:$0xff] %vm774, %v1480
  %1545 = vst.msk [vmem:[%s3 + $0x100] sm:$0xff] %vm774, %v1481
  %1546 = vst.msk [vmem:[%s3 + $0x108] sm:$0xff] %vm774, %v1482
  %1547 = vst.msk [vmem:[%s3 + $0x110] sm:$0xff] %vm774, %v1483
  %1548 = vst.msk [vmem:[%s3 + $0x118] sm:$0xff] %vm774, %v1484
  %1549 = vst.msk [vmem:[%s3 + $0x120] sm:$0xff] %vm774, %v1485
  %1550 = vst.msk [vmem:[%s3 + $0x128] sm:$0xff] %vm774, %v1486
  %1551 = vst.msk [vmem:[%s3 + $0x130] sm:$0xff] %vm774, %v1487
  %1552 = vst.msk [vmem:[%s3 + $0x138] sm:$0xff] %vm774, %v1488
  %1553 = vst.msk [vmem:[%s3 + $0x140] sm:$0xff] %vm774, %v1489
  %1554 = vst.msk [vmem:[%s3 + $0x148] sm:$0xff] %vm774, %v1490
  %1555 = vst.msk [vmem:[%s3 + $0x150] sm:$0xff] %vm774, %v1491
  %1556 = vst.msk [vmem:[%s3 + $0x158] sm:$0xff] %vm774, %v1492
  %1557 = vst.msk [vmem:[%s3 + $0x160] sm:$0xff] %vm774, %v1493
  %1558 = vst.msk [vmem:[%s3 + $0x168] sm:$0xff] %vm774, %v1494
  %1559 = vst.msk [vmem:[%s3 + $0x170] sm:$0xff] %vm774, %v1495
  %1560 = vst.msk [vmem:[%s3 + $0x178] sm:$0xff] %vm774, %v1496
  %1561 = vst.msk [vmem:[%s3 + $0x180] sm:$0xff] %vm774, %v1497
  %1562 = vst.msk [vmem:[%s3 + $0x188] sm:$0xff] %vm774, %v1498
  %1563 = vst.msk [vmem:[%s3 + $0x190] sm:$0xff] %vm774, %v1499
  %1564 = vst.msk [vmem:[%s3 + $0x198] sm:$0xff] %vm774, %v1500
  %1565 = vst.msk [vmem:[%s3 + $0x1a0] sm:$0xff] %vm774, %v1501
  %1566 = vst.msk [vmem:[%s3 + $0x1a8] sm:$0xff] %vm774, %v1502
  %1567 = vst.msk [vmem:[%s3 + $0x1b0] sm:$0xff] %vm774, %v1503
  %1568 = vst.msk [vmem:[%s3 + $0x1b8] sm:$0xff] %vm774, %v1504
  %1569 = vst.msk [vmem:[%s3 + $0x1c0] sm:$0xff] %vm774, %v1505
  %1570 = vst.msk [vmem:[%s3 + $0x1c8] sm:$0xff] %vm774, %v1506
  %1571 = vst.msk [vmem:[%s3 + $0x1d0] sm:$0xff] %vm774, %v1507
  %1572 = vst.msk [vmem:[%s3 + $0x1d8] sm:$0xff] %vm774, %v1508
  %1573 = vst.msk [vmem:[%s3 + $0x1e0] sm:$0xff] %vm774, %v1509
  %1574 = vst.msk [vmem:[%s3 + $0x1e8] sm:$0xff] %vm774, %v1510
  %1575 = vst.msk [vmem:[%s3 + $0x1f0] sm:$0xff] %vm774, %v1511
  %1576 = vst.msk [vmem:[%s3 + $0x1f8] sm:$0xff] %vm774, %v1512
  // Predicated region
  $region14: #{unrolled_net_forward.18} parent=0 // pred_check
    _
  $region15: #{unrolled_net_forward.18} parent=0 // pred_check_branch
    %1578 = sbr.rel (0) target = $region17
  $region16: #{unrolled_net_forward.18} parent=0 // pred_region
    _
  $region17: #{unrolled_net_forward.18} parent=0 // pred_fallthru
    _
  // Predicated region
  $region18: #{unrolled_net_forward.18} parent=0 // pred_check
    _
  $region19: #{unrolled_net_forward.18} parent=0 // pred_check_branch
    %1580 = sbr.rel (0) target = $region21
  $region20: #{unrolled_net_forward.18} parent=0 // pred_region
    _
  $region21: #{unrolled_net_forward.18} parent=0 // pred_fallthru
    _

// kernel: unrolled_net_forward.19
$region0: #{unrolled_net_forward.19}
  #allocation0 [shape = 'u32[]', space=smem, size = 0x4, offset = 0x4, fixed_abs, tag = 'smem constant byte address 0x4 - core index']
  #allocation1 [shape = 'u32[144,128]{1,0:T(1,128)}', space=vmem, size = 0x12000, scoped, tag = 'internal scratch']
  %s0 = inlined_call_operand.vmem [shape: bf16[512,288], index: 0, kind: input, shape index: {}]
  %s1 = inlined_call_operand.vmem [shape: bf16[288,32], index: 1, kind: input, shape index: {}]
  %s2 = inlined_call_operand.vmem [shape: f32[1,32], index: 2, kind: input, shape index: {}]
  %s3 = inlined_call_operand.vmem [shape: f32[512,32], index: 3, kind: output, shape index: {}]
  %s4 = sld [smem:[#allocation0]]
  $region22: #{unrolled_net_forward.19} parent=0
    _
  %s6 = ssub.s32 1, %s4
  %s7 = scalar_select 0, %s6, %s4
  // Predicated region
  $region2: #{unrolled_net_forward.19} parent=0 // pred_check
    _
  $region3: #{unrolled_net_forward.19} parent=0 // pred_check_branch
    %9 = sbr.rel (0) target = $region5
  $region4: #{unrolled_net_forward.19} parent=0 // pred_region
    _
  $region5: #{unrolled_net_forward.19} parent=0 // pred_fallthru
    _
  // Predicated region
  $region6: #{unrolled_net_forward.19} parent=0 // pred_check
    _
  $region7: #{unrolled_net_forward.19} parent=0 // pred_check_branch
    %11 = sbr.rel (0) target = $region9
  $region8: #{unrolled_net_forward.19} parent=0 // pred_region
    _
  $region9: #{unrolled_net_forward.19} parent=0 // pred_fallthru
    _
  // Predicated region
  $region10: #{unrolled_net_forward.19} parent=0 // pred_check
    _
  $region11: #{unrolled_net_forward.19} parent=0 // pred_check_branch
    %13 = sbr.rel (0) target = $region13
  $region12: #{unrolled_net_forward.19} parent=0 // pred_region
    _
  $region13: #{unrolled_net_forward.19} parent=0 // pred_fallthru
    _
  %v15 = vld [vmem:[%s0] sm:$0xff]
  %v16 = vld [vmem:[%s0 + $0x8] sm:$0xf]
  %v17 = vld [vmem:[%s0 + $0xc] sm:$0xff]
  %v18 = vld [vmem:[%s0 + $0x14] sm:$0xf]
  %v19 = vld [vmem:[%s0 + $0x18] sm:$0xff]
  %v20 = vld [vmem:[%s0 + $0x20] sm:$0xf]
  %v21 = vld [vmem:[%s0 + $0x24] sm:$0xff]
  %v22 = vld [vmem:[%s0 + $0x2c] sm:$0xf]
  %v23 = vld [vmem:[%s0 + $0x30] sm:$0xff]
  %v24 = vld [vmem:[%s0 + $0x38] sm:$0xf]
  %v25 = vld [vmem:[%s0 + $0x3c] sm:$0xff]
  %v26 = vld [vmem:[%s0 + $0x44] sm:$0xf]
  %v27 = vld [vmem:[%s0 + $0x48] sm:$0xff]
  %v28 = vld [vmem:[%s0 + $0x50] sm:$0xf]
  %v29 = vld [vmem:[%s0 + $0x54] sm:$0xff]
  %v30 = vld [vmem:[%s0 + $0x5c] sm:$0xf]
  %v31 = vld [vmem:[%s0 + $0x60] sm:$0xff]
  %v32 = vld [vmem:[%s0 + $0x68] sm:$0xf]
  %v33 = vld [vmem:[%s0 + $0x6c] sm:$0xff]
  %v34 = vld [vmem:[%s0 + $0x74] sm:$0xf]
  %v35 = vld [vmem:[%s0 + $0x78] sm:$0xff]
  %v36 = vld [vmem:[%s0 + $0x80] sm:$0xf]
  %v37 = vld [vmem:[%s0 + $0x84] sm:$0xff]
  %v38 = vld [vmem:[%s0 + $0x8c] sm:$0xf]
  %v39 = vld [vmem:[%s0 + $0x90] sm:$0xff]
  %v40 = vld [vmem:[%s0 + $0x98] sm:$0xf]
  %v41 = vld [vmem:[%s0 + $0x9c] sm:$0xff]
  %v42 = vld [vmem:[%s0 + $0xa4] sm:$0xf]
  %v43 = vld [vmem:[%s0 + $0xa8] sm:$0xff]
  %v44 = vld [vmem:[%s0 + $0xb0] sm:$0xf]
  %v45 = vld [vmem:[%s0 + $0xb4] sm:$0xff]
  %v46 = vld [vmem:[%s0 + $0xbc] sm:$0xf]
  %v47 = vld [vmem:[%s0 + $0xc0] sm:$0xff]
  %v48 = vld [vmem:[%s0 + $0xc8] sm:$0xf]
  %v49 = vld [vmem:[%s0 + $0xcc] sm:$0xff]
  %v50 = vld [vmem:[%s0 + $0xd4] sm:$0xf]
  %v51 = vld [vmem:[%s0 + $0xd8] sm:$0xff]
  %v52 = vld [vmem:[%s0 + $0xe0] sm:$0xf]
  %v53 = vld [vmem:[%s0 + $0xe4] sm:$0xff]
  %v54 = vld [vmem:[%s0 + $0xec] sm:$0xf]
  %v55 = vld [vmem:[%s0 + $0xf0] sm:$0xff]
  %v56 = vld [vmem:[%s0 + $0xf8] sm:$0xf]
  %v57 = vld [vmem:[%s0 + $0xfc] sm:$0xff]
  %v58 = vld [vmem:[%s0 + $0x104] sm:$0xf]
  %v59 = vld [vmem:[%s0 + $0x108] sm:$0xff]
  %v60 = vld [vmem:[%s0 + $0x110] sm:$0xf]
  %v61 = vld [vmem:[%s0 + $0x114] sm:$0xff]
  %v62 = vld [vmem:[%s0 + $0x11c] sm:$0xf]
  %v63 = vld [vmem:[%s0 + $0x120] sm:$0xff]
  %v64 = vld [vmem:[%s0 + $0x128] sm:$0xf]
  %v65 = vld [vmem:[%s0 + $0x12c] sm:$0xff]
  %v66 = vld [vmem:[%s0 + $0x134] sm:$0xf]
  %v67 = vld [vmem:[%s0 + $0x138] sm:$0xff]
  %v68 = vld [vmem:[%s0 + $0x140] sm:$0xf]
  %v69 = vld [vmem:[%s0 + $0x144] sm:$0xff]
  %v70 = vld [vmem:[%s0 + $0x14c] sm:$0xf]
  %v71 = vld [vmem:[%s0 + $0x150] sm:$0xff]
  %v72 = vld [vmem:[%s0 + $0x158] sm:$0xf]
  %v73 = vld [vmem:[%s0 + $0x15c] sm:$0xff]
  %v74 = vld [vmem:[%s0 + $0x164] sm:$0xf]
  %v75 = vld [vmem:[%s0 + $0x168] sm:$0xff]
  %v76 = vld [vmem:[%s0 + $0x170] sm:$0xf]
  %v77 = vld [vmem:[%s0 + $0x174] sm:$0xff]
  %v78 = vld [vmem:[%s0 + $0x17c] sm:$0xf]
  %v79 = vld [vmem:[%s0 + $0x180] sm:$0xff]
  %v80 = vld [vmem:[%s0 + $0x188] sm:$0xf]
  %v81 = vld [vmem:[%s0 + $0x18c] sm:$0xff]
  %v82 = vld [vmem:[%s0 + $0x194] sm:$0xf]
  %v83 = vld [vmem:[%s0 + $0x198] sm:$0xff]
  %v84 = vld [vmem:[%s0 + $0x1a0] sm:$0xf]
  %v85 = vld [vmem:[%s0 + $0x1a4] sm:$0xff]
  %v86 = vld [vmem:[%s0 + $0x1ac] sm:$0xf]
  %v87 = vld [vmem:[%s0 + $0x1b0] sm:$0xff]
  %v88 = vld [vmem:[%s0 + $0x1b8] sm:$0xf]
  %v89 = vld [vmem:[%s0 + $0x1bc] sm:$0xff]
  %v90 = vld [vmem:[%s0 + $0x1c4] sm:$0xf]
  %v91 = vld [vmem:[%s0 + $0x1c8] sm:$0xff]
  %v92 = vld [vmem:[%s0 + $0x1d0] sm:$0xf]
  %v93 = vld [vmem:[%s0 + $0x1d4] sm:$0xff]
  %v94 = vld [vmem:[%s0 + $0x1dc] sm:$0xf]
  %v95 = vld [vmem:[%s0 + $0x1e0] sm:$0xff]
  %v96 = vld [vmem:[%s0 + $0x1e8] sm:$0xf]
  %v97 = vld [vmem:[%s0 + $0x1ec] sm:$0xff]
  %v98 = vld [vmem:[%s0 + $0x1f4] sm:$0xf]
  %v99 = vld [vmem:[%s0 + $0x1f8] sm:$0xff]
  %v100 = vld [vmem:[%s0 + $0x200] sm:$0xf]
  %v101 = vld [vmem:[%s0 + $0x204] sm:$0xff]
  %v102 = vld [vmem:[%s0 + $0x20c] sm:$0xf]
  %v103 = vld [vmem:[%s0 + $0x210] sm:$0xff]
  %v104 = vld [vmem:[%s0 + $0x218] sm:$0xf]
  %v105 = vld [vmem:[%s0 + $0x21c] sm:$0xff]
  %v106 = vld [vmem:[%s0 + $0x224] sm:$0xf]
  %v107 = vld [vmem:[%s0 + $0x228] sm:$0xff]
  %v108 = vld [vmem:[%s0 + $0x230] sm:$0xf]
  %v109 = vld [vmem:[%s0 + $0x234] sm:$0xff]
  %v110 = vld [vmem:[%s0 + $0x23c] sm:$0xf]
  %v111 = vld [vmem:[%s0 + $0x240] sm:$0xff]
  %v112 = vld [vmem:[%s0 + $0x248] sm:$0xf]
  %v113 = vld [vmem:[%s0 + $0x24c] sm:$0xff]
  %v114 = vld [vmem:[%s0 + $0x254] sm:$0xf]
  %v115 = vld [vmem:[%s0 + $0x258] sm:$0xff]
  %v116 = vld [vmem:[%s0 + $0x260] sm:$0xf]
  %v117 = vld [vmem:[%s0 + $0x264] sm:$0xff]
  %v118 = vld [vmem:[%s0 + $0x26c] sm:$0xf]
  %v119 = vld [vmem:[%s0 + $0x270] sm:$0xff]
  %v120 = vld [vmem:[%s0 + $0x278] sm:$0xf]
  %v121 = vld [vmem:[%s0 + $0x27c] sm:$0xff]
  %v122 = vld [vmem:[%s0 + $0x284] sm:$0xf]
  %v123 = vld [vmem:[%s0 + $0x288] sm:$0xff]
  %v124 = vld [vmem:[%s0 + $0x290] sm:$0xf]
  %v125 = vld [vmem:[%s0 + $0x294] sm:$0xff]
  %v126 = vld [vmem:[%s0 + $0x29c] sm:$0xf]
  %v127 = vld [vmem:[%s0 + $0x2a0] sm:$0xff]
  %v128 = vld [vmem:[%s0 + $0x2a8] sm:$0xf]
  %v129 = vld [vmem:[%s0 + $0x2ac] sm:$0xff]
  %v130 = vld [vmem:[%s0 + $0x2b4] sm:$0xf]
  %v131 = vld [vmem:[%s0 + $0x2b8] sm:$0xff]
  %v132 = vld [vmem:[%s0 + $0x2c0] sm:$0xf]
  %v133 = vld [vmem:[%s0 + $0x2c4] sm:$0xff]
  %v134 = vld [vmem:[%s0 + $0x2cc] sm:$0xf]
  %v135 = vld [vmem:[%s0 + $0x2d0] sm:$0xff]
  %v136 = vld [vmem:[%s0 + $0x2d8] sm:$0xf]
  %v137 = vld [vmem:[%s0 + $0x2dc] sm:$0xff]
  %v138 = vld [vmem:[%s0 + $0x2e4] sm:$0xf]
  %v139 = vld [vmem:[%s0 + $0x2e8] sm:$0xff]
  %v140 = vld [vmem:[%s0 + $0x2f0] sm:$0xf]
  %v141 = vld [vmem:[%s0 + $0x2f4] sm:$0xff]
  %v142 = vld [vmem:[%s0 + $0x2fc] sm:$0xf]
  %v143 = vld [vmem:[%s1] sm:$0xf]
  %v144 = vld [vmem:[%s1 + $0x4] sm:$0xf]
  %v145 = vld [vmem:[%s1 + $0x8] sm:$0xf]
  %v146 = vld [vmem:[%s1 + $0xc] sm:$0xf]
  %v147 = vld [vmem:[%s1 + $0x10] sm:$0xf]
  %v148 = vld [vmem:[%s1 + $0x14] sm:$0xf]
  %v149 = vld [vmem:[%s1 + $0x18] sm:$0xf]
  %v150 = vld [vmem:[%s1 + $0x1c] sm:$0xf]
  %v151 = vld [vmem:[%s1 + $0x20] sm:$0xf]
  %v152 = vld [vmem:[%s1 + $0x24] sm:$0xf]
  %v153 = vld [vmem:[%s1 + $0x28] sm:$0xf]
  %v154 = vld [vmem:[%s1 + $0x2c] sm:$0xf]
  %v155 = vld [vmem:[%s1 + $0x30] sm:$0xf]
  %v156 = vld [vmem:[%s1 + $0x34] sm:$0xf]
  %v157 = vld [vmem:[%s1 + $0x38] sm:$0xf]
  %v158 = vld [vmem:[%s1 + $0x3c] sm:$0xf]
  %v159 = vld [vmem:[%s1 + $0x40] sm:$0xf]
  %v160 = vld [vmem:[%s1 + $0x44] sm:$0xf]
  %v161 = vld [vmem:[%s1 + $0x48] sm:$0xf]
  %v162 = vld [vmem:[%s1 + $0x4c] sm:$0xf]
  %v163 = vld [vmem:[%s1 + $0x50] sm:$0xf]
  %v164 = vld [vmem:[%s1 + $0x54] sm:$0xf]
  %v165 = vld [vmem:[%s1 + $0x58] sm:$0xf]
  %v166 = vld [vmem:[%s1 + $0x5c] sm:$0xf]
  %v167 = vld [vmem:[%s1 + $0x60] sm:$0xf]
  %v168 = vld [vmem:[%s1 + $0x64] sm:$0xf]
  %v169 = vld [vmem:[%s1 + $0x68] sm:$0xf]
  %v170 = vld [vmem:[%s1 + $0x6c] sm:$0xf]
  %v171 = vld [vmem:[%s1 + $0x70] sm:$0xf]
  %v172 = vld [vmem:[%s1 + $0x74] sm:$0xf]
  %v173 = vld [vmem:[%s1 + $0x78] sm:$0xf]
  %v174 = vld [vmem:[%s1 + $0x7c] sm:$0xf]
  %v175 = vld [vmem:[%s1 + $0x80] sm:$0xf]
  %v176 = vld [vmem:[%s1 + $0x84] sm:$0xf]
  %v177 = vld [vmem:[%s1 + $0x88] sm:$0xf]
  %v178 = vld [vmem:[%s1 + $0x8c] sm:$0xf]
  %v179 = vld [vmem:[%s2] sm:$0x1]
  %v181 = vlaneseq
  %v182 = vshrl.u32 %v181, 7
  %v183 = vsub.s32 0, %v182
  %v184 = vrot.slane %v179, %v183
  %v314 = vunpack.c.l.b16 %v15
  %v315 = vunpack.c.h.b16 %v15
  %v316 = vunpack.c.l.b16 %v16
  %v317 = vunpack.c.l.b16 %v17
  %v318 = vunpack.c.h.b16 %v17
  %v319 = vunpack.c.l.b16 %v18
  %v320 = vunpack.c.l.b16 %v19
  %v321 = vunpack.c.h.b16 %v19
  %v322 = vunpack.c.l.b16 %v20
  %v323 = vunpack.c.l.b16 %v21
  %v324 = vunpack.c.h.b16 %v21
  %v325 = vunpack.c.l.b16 %v22
  %v326 = vunpack.c.l.b16 %v23
  %v327 = vunpack.c.h.b16 %v23
  %v328 = vunpack.c.l.b16 %v24
  %v329 = vunpack.c.l.b16 %v25
  %v330 = vunpack.c.h.b16 %v25
  %v331 = vunpack.c.l.b16 %v26
  %v332 = vunpack.c.l.b16 %v27
  %v333 = vunpack.c.h.b16 %v27
  %v334 = vunpack.c.l.b16 %v28
  %v335 = vunpack.c.l.b16 %v29
  %v336 = vunpack.c.h.b16 %v29
  %v337 = vunpack.c.l.b16 %v30
  %v338 = vunpack.c.l.b16 %v31
  %v339 = vunpack.c.h.b16 %v31
  %v340 = vunpack.c.l.b16 %v32
  %v341 = vunpack.c.l.b16 %v33
  %v342 = vunpack.c.h.b16 %v33
  %v343 = vunpack.c.l.b16 %v34
  %v344 = vunpack.c.l.b16 %v35
  %v345 = vunpack.c.h.b16 %v35
  %v346 = vunpack.c.l.b16 %v36
  %v347 = vunpack.c.l.b16 %v37
  %v348 = vunpack.c.h.b16 %v37
  %v349 = vunpack.c.l.b16 %v38
  %v350 = vunpack.c.l.b16 %v39
  %v351 = vunpack.c.h.b16 %v39
  %v352 = vunpack.c.l.b16 %v40
  %v353 = vunpack.c.l.b16 %v41
  %v354 = vunpack.c.h.b16 %v41
  %v355 = vunpack.c.l.b16 %v42
  %v356 = vunpack.c.l.b16 %v43
  %v357 = vunpack.c.h.b16 %v43
  %v358 = vunpack.c.l.b16 %v44
  %v359 = vunpack.c.l.b16 %v45
  %v360 = vunpack.c.h.b16 %v45
  %v361 = vunpack.c.l.b16 %v46
  %v362 = vunpack.c.l.b16 %v47
  %v363 = vunpack.c.h.b16 %v47
  %v364 = vunpack.c.l.b16 %v48
  %v365 = vunpack.c.l.b16 %v49
  %v366 = vunpack.c.h.b16 %v49
  %v367 = vunpack.c.l.b16 %v50
  %v368 = vunpack.c.l.b16 %v51
  %v369 = vunpack.c.h.b16 %v51
  %v370 = vunpack.c.l.b16 %v52
  %v371 = vunpack.c.l.b16 %v53
  %v372 = vunpack.c.h.b16 %v53
  %v373 = vunpack.c.l.b16 %v54
  %v374 = vunpack.c.l.b16 %v55
  %v375 = vunpack.c.h.b16 %v55
  %v376 = vunpack.c.l.b16 %v56
  %v377 = vunpack.c.l.b16 %v57
  %v378 = vunpack.c.h.b16 %v57
  %v379 = vunpack.c.l.b16 %v58
  %v380 = vunpack.c.l.b16 %v59
  %v381 = vunpack.c.h.b16 %v59
  %v382 = vunpack.c.l.b16 %v60
  %v383 = vunpack.c.l.b16 %v61
  %v384 = vunpack.c.h.b16 %v61
  %v385 = vunpack.c.l.b16 %v62
  %v386 = vunpack.c.l.b16 %v63
  %v387 = vunpack.c.h.b16 %v63
  %v388 = vunpack.c.l.b16 %v64
  %v389 = vunpack.c.l.b16 %v65
  %v390 = vunpack.c.h.b16 %v65
  %v391 = vunpack.c.l.b16 %v66
  %v392 = vunpack.c.l.b16 %v67
  %v393 = vunpack.c.h.b16 %v67
  %v394 = vunpack.c.l.b16 %v68
  %v395 = vunpack.c.l.b16 %v69
  %v396 = vunpack.c.h.b16 %v69
  %v397 = vunpack.c.l.b16 %v70
  %v398 = vunpack.c.l.b16 %v71
  %v399 = vunpack.c.h.b16 %v71
  %v400 = vunpack.c.l.b16 %v72
  %v401 = vunpack.c.l.b16 %v73
  %v402 = vunpack.c.h.b16 %v73
  %v403 = vunpack.c.l.b16 %v74
  %v404 = vunpack.c.l.b16 %v75
  %v405 = vunpack.c.h.b16 %v75
  %v406 = vunpack.c.l.b16 %v76
  %v407 = vunpack.c.l.b16 %v77
  %v408 = vunpack.c.h.b16 %v77
  %v409 = vunpack.c.l.b16 %v78
  %v410 = vunpack.c.l.b16 %v79
  %v411 = vunpack.c.h.b16 %v79
  %v412 = vunpack.c.l.b16 %v80
  %v413 = vunpack.c.l.b16 %v81
  %v414 = vunpack.c.h.b16 %v81
  %v415 = vunpack.c.l.b16 %v82
  %v416 = vunpack.c.l.b16 %v83
  %v417 = vunpack.c.h.b16 %v83
  %v418 = vunpack.c.l.b16 %v84
  %v419 = vunpack.c.l.b16 %v85
  %v420 = vunpack.c.h.b16 %v85
  %v421 = vunpack.c.l.b16 %v86
  %v422 = vunpack.c.l.b16 %v87
  %v423 = vunpack.c.h.b16 %v87
  %v424 = vunpack.c.l.b16 %v88
  %v425 = vunpack.c.l.b16 %v89
  %v426 = vunpack.c.h.b16 %v89
  %v427 = vunpack.c.l.b16 %v90
  %v428 = vunpack.c.l.b16 %v91
  %v429 = vunpack.c.h.b16 %v91
  %v430 = vunpack.c.l.b16 %v92
  %v431 = vunpack.c.l.b16 %v93
  %v432 = vunpack.c.h.b16 %v93
  %v433 = vunpack.c.l.b16 %v94
  %v434 = vunpack.c.l.b16 %v95
  %v435 = vunpack.c.h.b16 %v95
  %v436 = vunpack.c.l.b16 %v96
  %v437 = vunpack.c.l.b16 %v97
  %v438 = vunpack.c.h.b16 %v97
  %v439 = vunpack.c.l.b16 %v98
  %v440 = vunpack.c.l.b16 %v99
  %v441 = vunpack.c.h.b16 %v99
  %v442 = vunpack.c.l.b16 %v100
  %v443 = vunpack.c.l.b16 %v101
  %v444 = vunpack.c.h.b16 %v101
  %v445 = vunpack.c.l.b16 %v102
  %v446 = vunpack.c.l.b16 %v103
  %v447 = vunpack.c.h.b16 %v103
  %v448 = vunpack.c.l.b16 %v104
  %v449 = vunpack.c.l.b16 %v105
  %v450 = vunpack.c.h.b16 %v105
  %v451 = vunpack.c.l.b16 %v106
  %v452 = vunpack.c.l.b16 %v107
  %v453 = vunpack.c.h.b16 %v107
  %v454 = vunpack.c.l.b16 %v108
  %v455 = vunpack.c.l.b16 %v109
  %v456 = vunpack.c.h.b16 %v109
  %v457 = vunpack.c.l.b16 %v110
  %v458 = vunpack.c.l.b16 %v111
  %v459 = vunpack.c.h.b16 %v111
  %v460 = vunpack.c.l.b16 %v112
  %v461 = vunpack.c.l.b16 %v113
  %v462 = vunpack.c.h.b16 %v113
  %v463 = vunpack.c.l.b16 %v114
  %v464 = vunpack.c.l.b16 %v115
  %v465 = vunpack.c.h.b16 %v115
  %v466 = vunpack.c.l.b16 %v116
  %v467 = vunpack.c.l.b16 %v117
  %v468 = vunpack.c.h.b16 %v117
  %v469 = vunpack.c.l.b16 %v118
  %v470 = vunpack.c.l.b16 %v119
  %v471 = vunpack.c.h.b16 %v119
  %v472 = vunpack.c.l.b16 %v120
  %v473 = vunpack.c.l.b16 %v121
  %v474 = vunpack.c.h.b16 %v121
  %v475 = vunpack.c.l.b16 %v122
  %v476 = vunpack.c.l.b16 %v123
  %v477 = vunpack.c.h.b16 %v123
  %v478 = vunpack.c.l.b16 %v124
  %v479 = vunpack.c.l.b16 %v125
  %v480 = vunpack.c.h.b16 %v125
  %v481 = vunpack.c.l.b16 %v126
  %v482 = vunpack.c.l.b16 %v127
  %v483 = vunpack.c.h.b16 %v127
  %v484 = vunpack.c.l.b16 %v128
  %v485 = vunpack.c.l.b16 %v129
  %v486 = vunpack.c.h.b16 %v129
  %v487 = vunpack.c.l.b16 %v130
  %v488 = vunpack.c.l.b16 %v131
  %v489 = vunpack.c.h.b16 %v131
  %v490 = vunpack.c.l.b16 %v132
  %v491 = vunpack.c.l.b16 %v133
  %v492 = vunpack.c.h.b16 %v133
  %v493 = vunpack.c.l.b16 %v134
  %v494 = vunpack.c.l.b16 %v135
  %v495 = vunpack.c.h.b16 %v135
  %v496 = vunpack.c.l.b16 %v136
  %v497 = vunpack.c.l.b16 %v137
  %v498 = vunpack.c.h.b16 %v137
  %v499 = vunpack.c.l.b16 %v138
  %v500 = vunpack.c.l.b16 %v139
  %v501 = vunpack.c.h.b16 %v139
  %v502 = vunpack.c.l.b16 %v140
  %v503 = vunpack.c.l.b16 %v141
  %v504 = vunpack.c.h.b16 %v141
  %v505 = vunpack.c.l.b16 %v142
  %v506 = vpack.c.b16 %v317, %v314
  %v507 = vpack.c.b16 %v318, %v315
  %v508 = vpack.c.b16 %v319, %v316
  %v509 = vpack.c.b16 %v323, %v320
  %v510 = vpack.c.b16 %v324, %v321
  %v511 = vpack.c.b16 %v325, %v322
  %v512 = vpack.c.b16 %v329, %v326
  %v513 = vpack.c.b16 %v330, %v327
  %v514 = vpack.c.b16 %v331, %v328
  %v515 = vpack.c.b16 %v335, %v332
  %v516 = vpack.c.b16 %v336, %v333
  %v517 = vpack.c.b16 %v337, %v334
  %v518 = vpack.c.b16 %v341, %v338
  %v519 = vpack.c.b16 %v342, %v339
  %v520 = vpack.c.b16 %v343, %v340
  %v521 = vpack.c.b16 %v347, %v344
  %v522 = vpack.c.b16 %v348, %v345
  %v523 = vpack.c.b16 %v349, %v346
  %v524 = vpack.c.b16 %v353, %v350
  %v525 = vpack.c.b16 %v354, %v351
  %v526 = vpack.c.b16 %v355, %v352
  %v527 = vpack.c.b16 %v359, %v356
  %v528 = vpack.c.b16 %v360, %v357
  %v529 = vpack.c.b16 %v361, %v358
  %v530 = vpack.c.b16 %v365, %v362
  %v531 = vpack.c.b16 %v366, %v363
  %v532 = vpack.c.b16 %v367, %v364
  %v533 = vpack.c.b16 %v371, %v368
  %v534 = vpack.c.b16 %v372, %v369
  %v535 = vpack.c.b16 %v373, %v370
  %v536 = vpack.c.b16 %v377, %v374
  %v537 = vpack.c.b16 %v378, %v375
  %v538 = vpack.c.b16 %v379, %v376
  %v539 = vpack.c.b16 %v383, %v380
  %v540 = vpack.c.b16 %v384, %v381
  %v541 = vpack.c.b16 %v385, %v382
  %v542 = vpack.c.b16 %v389, %v386
  %v543 = vpack.c.b16 %v390, %v387
  %v544 = vpack.c.b16 %v391, %v388
  %v545 = vpack.c.b16 %v395, %v392
  %v546 = vpack.c.b16 %v396, %v393
  %v547 = vpack.c.b16 %v397, %v394
  %v548 = vpack.c.b16 %v401, %v398
  %v549 = vpack.c.b16 %v402, %v399
  %v550 = vpack.c.b16 %v403, %v400
  %v551 = vpack.c.b16 %v407, %v404
  %v552 = vpack.c.b16 %v408, %v405
  %v553 = vpack.c.b16 %v409, %v406
  %v554 = vpack.c.b16 %v413, %v410
  %v555 = vpack.c.b16 %v414, %v411
  %v556 = vpack.c.b16 %v415, %v412
  %v557 = vpack.c.b16 %v419, %v416
  %v558 = vpack.c.b16 %v420, %v417
  %v559 = vpack.c.b16 %v421, %v418
  %v560 = vpack.c.b16 %v425, %v422
  %v561 = vpack.c.b16 %v426, %v423
  %v562 = vpack.c.b16 %v427, %v424
  %v563 = vpack.c.b16 %v431, %v428
  %v564 = vpack.c.b16 %v432, %v429
  %v565 = vpack.c.b16 %v433, %v430
  %v566 = vpack.c.b16 %v437, %v434
  %v567 = vpack.c.b16 %v438, %v435
  %v568 = vpack.c.b16 %v439, %v436
  %v569 = vpack.c.b16 %v443, %v440
  %v570 = vpack.c.b16 %v444, %v441
  %v571 = vpack.c.b16 %v445, %v442
  %v572 = vpack.c.b16 %v449, %v446
  %v573 = vpack.c.b16 %v450, %v447
  %v574 = vpack.c.b16 %v451, %v448
  %v575 = vpack.c.b16 %v455, %v452
  %v576 = vpack.c.b16 %v456, %v453
  %v577 = vpack.c.b16 %v457, %v454
  %v578 = vpack.c.b16 %v461, %v458
  %v579 = vpack.c.b16 %v462, %v459
  %v580 = vpack.c.b16 %v463, %v460
  %v581 = vpack.c.b16 %v467, %v464
  %v582 = vpack.c.b16 %v468, %v465
  %v583 = vpack.c.b16 %v469, %v466
  %v584 = vpack.c.b16 %v473, %v470
  %v585 = vpack.c.b16 %v474, %v471
  %v586 = vpack.c.b16 %v475, %v472
  %v587 = vpack.c.b16 %v479, %v476
  %v588 = vpack.c.b16 %v480, %v477
  %v589 = vpack.c.b16 %v481, %v478
  %v590 = vpack.c.b16 %v485, %v482
  %v591 = vpack.c.b16 %v486, %v483
  %v592 = vpack.c.b16 %v487, %v484
  %v593 = vpack.c.b16 %v491, %v488
  %v594 = vpack.c.b16 %v492, %v489
  %v595 = vpack.c.b16 %v493, %v490
  %v596 = vpack.c.b16 %v497, %v494
  %v597 = vpack.c.b16 %v498, %v495
  %v598 = vpack.c.b16 %v499, %v496
  %v599 = vpack.c.b16 %v503, %v500
  %v600 = vpack.c.b16 %v504, %v501
  %v601 = vpack.c.b16 %v505, %v502
  %v702 = vunpack.c.l.b16 %v143
  %v703 = vunpack.c.l.b16 %v144
  %v704 = vunpack.c.l.b16 %v145
  %v705 = vunpack.c.l.b16 %v146
  %v706 = vunpack.c.l.b16 %v147
  %v707 = vunpack.c.l.b16 %v148
  %v708 = vunpack.c.l.b16 %v149
  %v709 = vunpack.c.l.b16 %v150
  %v710 = vunpack.c.l.b16 %v151
  %v711 = vunpack.c.l.b16 %v152
  %v712 = vunpack.c.l.b16 %v153
  %v713 = vunpack.c.l.b16 %v154
  %v714 = vunpack.c.l.b16 %v155
  %v715 = vunpack.c.l.b16 %v156
  %v716 = vunpack.c.l.b16 %v157
  %v717 = vunpack.c.l.b16 %v158
  %v718 = vunpack.c.l.b16 %v159
  %v719 = vunpack.c.l.b16 %v160
  %v720 = vunpack.c.l.b16 %v161
  %v721 = vunpack.c.l.b16 %v162
  %v722 = vunpack.c.l.b16 %v163
  %v723 = vunpack.c.l.b16 %v164
  %v724 = vunpack.c.l.b16 %v165
  %v725 = vunpack.c.l.b16 %v166
  %v726 = vunpack.c.l.b16 %v167
  %v727 = vunpack.c.l.b16 %v168
  %v728 = vunpack.c.l.b16 %v169
  %v729 = vunpack.c.l.b16 %v170
  %v730 = vunpack.c.l.b16 %v171
  %v731 = vunpack.c.l.b16 %v172
  %v732 = vunpack.c.l.b16 %v173
  %v733 = vunpack.c.l.b16 %v174
  %v734 = vunpack.c.l.b16 %v175
  %v735 = vunpack.c.l.b16 %v176
  %v736 = vunpack.c.l.b16 %v177
  %v737 = vunpack.c.l.b16 %v178
  %v738 = vpack.c.b16 %v703, %v702
  %v739 = vpack.c.b16 %v705, %v704
  %v740 = vpack.c.b16 %v707, %v706
  %v741 = vpack.c.b16 %v709, %v708
  %v742 = vpack.c.b16 %v711, %v710
  %v743 = vpack.c.b16 %v713, %v712
  %v744 = vpack.c.b16 %v715, %v714
  %v745 = vpack.c.b16 %v717, %v716
  %v746 = vpack.c.b16 %v719, %v718
  %v747 = vpack.c.b16 %v721, %v720
  %v748 = vpack.c.b16 %v723, %v722
  %v749 = vpack.c.b16 %v725, %v724
  %v750 = vpack.c.b16 %v727, %v726
  %v751 = vpack.c.b16 %v729, %v728
  %v752 = vpack.c.b16 %v731, %v730
  %v753 = vpack.c.b16 %v733, %v732
  %v754 = vpack.c.b16 %v735, %v734
  %v755 = vpack.c.b16 %v737, %v736
  %vm774 = vcmask 261120
  %v776 = vsel %vm774, %v508, 0
  %v779 = vsel %vm774, %v511, 0
  %v782 = vsel %vm774, %v514, 0
  %v785 = vsel %vm774, %v517, 0
  %v788 = vsel %vm774, %v520, 0
  %v791 = vsel %vm774, %v523, 0
  %v794 = vsel %vm774, %v526, 0
  %v797 = vsel %vm774, %v529, 0
  %v800 = vsel %vm774, %v532, 0
  %v803 = vsel %vm774, %v535, 0
  %v806 = vsel %vm774, %v538, 0
  %v809 = vsel %vm774, %v541, 0
  %v812 = vsel %vm774, %v544, 0
  %v815 = vsel %vm774, %v547, 0
  %v818 = vsel %vm774, %v550, 0
  %v821 = vsel %vm774, %v553, 0
  %v824 = vsel %vm774, %v556, 0
  %v827 = vsel %vm774, %v559, 0
  %v830 = vsel %vm774, %v562, 0
  %v833 = vsel %vm774, %v565, 0
  %v836 = vsel %vm774, %v568, 0
  %v839 = vsel %vm774, %v571, 0
  %v842 = vsel %vm774, %v574, 0
  %v845 = vsel %vm774, %v577, 0
  %v848 = vsel %vm774, %v580, 0
  %v851 = vsel %vm774, %v583, 0
  %v854 = vsel %vm774, %v586, 0
  %v857 = vsel %vm774, %v589, 0
  %v860 = vsel %vm774, %v592, 0
  %v863 = vsel %vm774, %v595, 0
  %v866 = vsel %vm774, %v598, 0
  %v869 = vsel %vm774, %v601, 0
  %871 = vmatprep.subr.bf16.mxu0 0
  %872 = vmatpush1.bf16.msra.mxu0 %v738
  %873 = vmatprep.subr.bf16.mxu0 0
  %874 = vmatpush1.bf16.msra.mxu0 %v739
  %875 = vmatprep.subr.bf16.mxu0 0
  %876 = vmatpush1.bf16.msra.mxu0 %v740
  %877 = vmatprep.subr.bf16.mxu0 0
  %878 = vmatpush1.bf16.msra.mxu0 %v741
  %879 = vmatprep.subr.bf16.mxu0 0
  %880 = vmatpush1.bf16.msra.mxu0 %v742
  %881 = vmatprep.subr.bf16.mxu0 0
  %882 = vmatpush1.bf16.msra.mxu0 %v743
  %883 = vmatprep.subr.bf16.mxu0 0
  %884 = vmatpush1.bf16.msra.mxu0 %v744
  %885 = vmatprep.subr.bf16.mxu0 0
  %886 = vmatpush1.bf16.msra.mxu0 %v745
  %887 = vmatprep.subr.bf16.mxu0 0
  %888 = vmatpush1.bf16.msra.mxu0 %v746
  %889 = vmatprep.subr.bf16.mxu0 0
  %890 = vmatpush1.bf16.msra.mxu0 %v747
  %891 = vmatprep.subr.bf16.mxu0 0
  %892 = vmatpush1.bf16.msra.mxu0 %v748
  %893 = vmatprep.subr.bf16.mxu0 0
  %894 = vmatpush1.bf16.msra.mxu0 %v749
  %895 = vmatprep.subr.bf16.mxu0 0
  %896 = vmatpush1.bf16.msra.mxu0 %v750
  %897 = vmatprep.subr.bf16.mxu0 0
  %898 = vmatpush1.bf16.msra.mxu0 %v751
  %899 = vmatprep.subr.bf16.mxu0 0
  %900 = vmatpush1.bf16.msra.mxu0 %v752
  %901 = vmatprep.subr.bf16.mxu0 0
  %902 = vmatpush1.bf16.msra.mxu0 %v753
  %903 = vmatprep.mubr.bf16.mxu0 %v507
  %904 = vmatmul.mubr.bf16.gmra.mrb[0].mxu0 %v506
  %v905 = vpop.f32.mrb[0].mxu0
  %v906 = vadd.f32 %v184, %v905
  %v907 = vpop.f32.mrb[0].mxu0
  %v908 = vpop.f32.mrb[0].mxu0
  %v909 = vadd.f32 %v184, %v908
  %v910 = vpop.f32.mrb[0].mxu0
  %911 = vmatprep.mubr.bf16.mxu0 %v510
  %912 = vmatmul.mubr.bf16.gmra.mrb[0].mxu0 %v509
  %v913 = vpop.f32.mrb[0].mxu0
  %v914 = vadd.f32 %v184, %v913
  %v915 = vpop.f32.mrb[0].mxu0
  %v916 = vpop.f32.mrb[0].mxu0
  %v917 = vadd.f32 %v184, %v916
  %v918 = vpop.f32.mrb[0].mxu0
  %919 = vmatprep.mubr.bf16.mxu0 %v513
  %920 = vmatmul.mubr.bf16.gmra.mrb[0].mxu0 %v512
  %v921 = vpop.f32.mrb[0].mxu0
  %v922 = vadd.f32 %v184, %v921
  %v923 = vpop.f32.mrb[0].mxu0
  %v924 = vpop.f32.mrb[0].mxu0
  %v925 = vadd.f32 %v184, %v924
  %v926 = vpop.f32.mrb[0].mxu0
  %927 = vmatprep.mubr.bf16.mxu0 %v516
  %928 = vmatmul.mubr.bf16.gmra.mrb[0].mxu0 %v515
  %v929 = vpop.f32.mrb[0].mxu0
  %v930 = vadd.f32 %v184, %v929
  %v931 = vpop.f32.mrb[0].mxu0
  %v932 = vpop.f32.mrb[0].mxu0
  %v933 = vadd.f32 %v184, %v932
  %v934 = vpop.f32.mrb[0].mxu0
  %935 = vmatprep.mubr.bf16.mxu0 %v519
  %936 = vmatmul.mubr.bf16.gmra.mrb[0].mxu0 %v518
  %v937 = vpop.f32.mrb[0].mxu0
  %v938 = vadd.f32 %v184, %v937
  %v939 = vpop.f32.mrb[0].mxu0
  %v940 = vpop.f32.mrb[0].mxu0
  %v941 = vadd.f32 %v184, %v940
  %v942 = vpop.f32.mrb[0].mxu0
  %943 = vmatprep.mubr.bf16.mxu0 %v522
  %944 = vmatmul.mubr.bf16.gmra.mrb[0].mxu0 %v521
  %v945 = vpop.f32.mrb[0].mxu0
  %v946 = vadd.f32 %v184, %v945
  %v947 = vpop.f32.mrb[0].mxu0
  %v948 = vpop.f32.mrb[0].mxu0
  %v949 = vadd.f32 %v184, %v948
  %v950 = vpop.f32.mrb[0].mxu0
  %951 = vmatprep.mubr.bf16.mxu0 %v525
  %952 = vmatmul.mubr.bf16.gmra.mrb[0].mxu0 %v524
  %v953 = vpop.f32.mrb[0].mxu0
  %v954 = vadd.f32 %v184, %v953
  %v955 = vpop.f32.mrb[0].mxu0
  %v956 = vpop.f32.mrb[0].mxu0
  %v957 = vadd.f32 %v184, %v956
  %v958 = vpop.f32.mrb[0].mxu0
  %959 = vmatprep.mubr.bf16.mxu0 %v528
  %960 = vmatmul.mubr.bf16.gmra.mrb[0].mxu0 %v527
  %v961 = vpop.f32.mrb[0].mxu0
  %v962 = vadd.f32 %v184, %v961
  %v963 = vpop.f32.mrb[0].mxu0
  %v964 = vpop.f32.mrb[0].mxu0
  %v965 = vadd.f32 %v184, %v964
  %v966 = vpop.f32.mrb[0].mxu0
  %967 = vmatprep.mubr.bf16.mxu0 %v531
  %968 = vmatmul.mubr.bf16.gmra.mrb[0].mxu0 %v530
  %v969 = vpop.f32.mrb[0].mxu0
  %v970 = vadd.f32 %v184, %v969
  %v971 = vpop.f32.mrb[0].mxu0
  %v972 = vpop.f32.mrb[0].mxu0
  %v973 = vadd.f32 %v184, %v972
  %v974 = vpop.f32.mrb[0].mxu0
  %975 = vmatprep.mubr.bf16.mxu0 %v534
  %976 = vmatmul.mubr.bf16.gmra.mrb[0].mxu0 %v533
  %v977 = vpop.f32.mrb[0].mxu0
  %v978 = vadd.f32 %v184, %v977
  %v979 = vpop.f32.mrb[0].mxu0
  %v980 = vpop.f32.mrb[0].mxu0
  %v981 = vadd.f32 %v184, %v980
  %v982 = vpop.f32.mrb[0].mxu0
  %983 = vmatprep.mubr.bf16.mxu0 %v537
  %984 = vmatmul.mubr.bf16.gmra.mrb[0].mxu0 %v536
  %v985 = vpop.f32.mrb[0].mxu0
  %v986 = vadd.f32 %v184, %v985
  %v987 = vpop.f32.mrb[0].mxu0
  %v988 = vpop.f32.mrb[0].mxu0
  %v989 = vadd.f32 %v184, %v988
  %v990 = vpop.f32.mrb[0].mxu0
  %991 = vmatprep.mubr.bf16.mxu0 %v540
  %992 = vmatmul.mubr.bf16.gmra.mrb[0].mxu0 %v539
  %v993 = vpop.f32.mrb[0].mxu0
  %v994 = vadd.f32 %v184, %v993
  %v995 = vpop.f32.mrb[0].mxu0
  %v996 = vpop.f32.mrb[0].mxu0
  %v997 = vadd.f32 %v184, %v996
  %v998 = vpop.f32.mrb[0].mxu0
  %999 = vmatprep.mubr.bf16.mxu0 %v543
  %1000 = vmatmul.mubr.bf16.gmra.mrb[0].mxu0 %v542
  %v1001 = vpop.f32.mrb[0].mxu0
  %v1002 = vadd.f32 %v184, %v1001
  %v1003 = vpop.f32.mrb[0].mxu0
  %v1004 = vpop.f32.mrb[0].mxu0
  %v1005 = vadd.f32 %v184, %v1004
  %v1006 = vpop.f32.mrb[0].mxu0
  %1007 = vmatprep.mubr.bf16.mxu0 %v546
  %1008 = vmatmul.mubr.bf16.gmra.mrb[0].mxu0 %v545
  %v1009 = vpop.f32.mrb[0].mxu0
  %v1010 = vadd.f32 %v184, %v1009
  %v1011 = vpop.f32.mrb[0].mxu0
  %v1012 = vpop.f32.mrb[0].mxu0
  %v1013 = vadd.f32 %v184, %v1012
  %v1014 = vpop.f32.mrb[0].mxu0
  %1015 = vmatprep.mubr.bf16.mxu0 %v549
  %1016 = vmatmul.mubr.bf16.gmra.mrb[0].mxu0 %v548
  %v1017 = vpop.f32.mrb[0].mxu0
  %v1018 = vadd.f32 %v184, %v1017
  %v1019 = vpop.f32.mrb[0].mxu0
  %v1020 = vpop.f32.mrb[0].mxu0
  %v1021 = vadd.f32 %v184, %v1020
  %v1022 = vpop.f32.mrb[0].mxu0
  %1023 = vmatprep.mubr.bf16.mxu0 %v552
  %1024 = vmatmul.mubr.bf16.gmra.mrb[0].mxu0 %v551
  %v1025 = vpop.f32.mrb[0].mxu0
  %v1026 = vadd.f32 %v184, %v1025
  %v1027 = vpop.f32.mrb[0].mxu0
  %v1028 = vpop.f32.mrb[0].mxu0
  %v1029 = vadd.f32 %v184, %v1028
  %v1030 = vpop.f32.mrb[0].mxu0
  %1031 = vmatprep.mubr.bf16.mxu0 %v555
  %1032 = vmatmul.mubr.bf16.gmra.mrb[0].mxu0 %v554
  %v1033 = vpop.f32.mrb[0].mxu0
  %v1034 = vadd.f32 %v184, %v1033
  %v1035 = vpop.f32.mrb[0].mxu0
  %v1036 = vpop.f32.mrb[0].mxu0
  %v1037 = vadd.f32 %v184, %v1036
  %v1038 = vpop.f32.mrb[0].mxu0
  %1039 = vmatprep.mubr.bf16.mxu0 %v558
  %1040 = vmatmul.mubr.bf16.gmra.mrb[0].mxu0 %v557
  %v1041 = vpop.f32.mrb[0].mxu0
  %v1042 = vadd.f32 %v184, %v1041
  %v1043 = vpop.f32.mrb[0].mxu0
  %v1044 = vpop.f32.mrb[0].mxu0
  %v1045 = vadd.f32 %v184, %v1044
  %v1046 = vpop.f32.mrb[0].mxu0
  %1047 = vmatprep.mubr.bf16.mxu0 %v561
  %1048 = vmatmul.mubr.bf16.gmra.mrb[0].mxu0 %v560
  %v1049 = vpop.f32.mrb[0].mxu0
  %v1050 = vadd.f32 %v184, %v1049
  %v1051 = vpop.f32.mrb[0].mxu0
  %v1052 = vpop.f32.mrb[0].mxu0
  %v1053 = vadd.f32 %v184, %v1052
  %v1054 = vpop.f32.mrb[0].mxu0
  %1055 = vmatprep.mubr.bf16.mxu0 %v564
  %1056 = vmatmul.mubr.bf16.gmra.mrb[0].mxu0 %v563
  %v1057 = vpop.f32.mrb[0].mxu0
  %v1058 = vadd.f32 %v184, %v1057
  %v1059 = vpop.f32.mrb[0].mxu0
  %v1060 = vpop.f32.mrb[0].mxu0
  %v1061 = vadd.f32 %v184, %v1060
  %v1062 = vpop.f32.mrb[0].mxu0
  %1063 = vmatprep.mubr.bf16.mxu0 %v567
  %1064 = vmatmul.mubr.bf16.gmra.mrb[0].mxu0 %v566
  %v1065 = vpop.f32.mrb[0].mxu0
  %v1066 = vadd.f32 %v184, %v1065
  %v1067 = vpop.f32.mrb[0].mxu0
  %v1068 = vpop.f32.mrb[0].mxu0
  %v1069 = vadd.f32 %v184, %v1068
  %v1070 = vpop.f32.mrb[0].mxu0
  %1071 = vmatprep.mubr.bf16.mxu0 %v570
  %1072 = vmatmul.mubr.bf16.gmra.mrb[0].mxu0 %v569
  %v1073 = vpop.f32.mrb[0].mxu0
  %v1074 = vadd.f32 %v184, %v1073
  %v1075 = vpop.f32.mrb[0].mxu0
  %v1076 = vpop.f32.mrb[0].mxu0
  %v1077 = vadd.f32 %v184, %v1076
  %v1078 = vpop.f32.mrb[0].mxu0
  %1079 = vmatprep.mubr.bf16.mxu0 %v573
  %1080 = vmatmul.mubr.bf16.gmra.mrb[0].mxu0 %v572
  %v1081 = vpop.f32.mrb[0].mxu0
  %v1082 = vadd.f32 %v184, %v1081
  %v1083 = vpop.f32.mrb[0].mxu0
  %v1084 = vpop.f32.mrb[0].mxu0
  %v1085 = vadd.f32 %v184, %v1084
  %v1086 = vpop.f32.mrb[0].mxu0
  %1087 = vmatprep.mubr.bf16.mxu0 %v576
  %1088 = vmatmul.mubr.bf16.gmra.mrb[0].mxu0 %v575
  %v1089 = vpop.f32.mrb[0].mxu0
  %v1090 = vadd.f32 %v184, %v1089
  %v1091 = vpop.f32.mrb[0].mxu0
  %v1092 = vpop.f32.mrb[0].mxu0
  %v1093 = vadd.f32 %v184, %v1092
  %v1094 = vpop.f32.mrb[0].mxu0
  %1095 = vmatprep.mubr.bf16.mxu0 %v579
  %1096 = vmatmul.mubr.bf16.gmra.mrb[0].mxu0 %v578
  %v1097 = vpop.f32.mrb[0].mxu0
  %v1098 = vadd.f32 %v184, %v1097
  %v1099 = vpop.f32.mrb[0].mxu0
  %v1100 = vpop.f32.mrb[0].mxu0
  %v1101 = vadd.f32 %v184, %v1100
  %v1102 = vpop.f32.mrb[0].mxu0
  %1103 = vmatprep.mubr.bf16.mxu0 %v582
  %1104 = vmatmul.mubr.bf16.gmra.mrb[0].mxu0 %v581
  %v1105 = vpop.f32.mrb[0].mxu0
  %v1106 = vadd.f32 %v184, %v1105
  %v1107 = vpop.f32.mrb[0].mxu0
  %v1108 = vpop.f32.mrb[0].mxu0
  %v1109 = vadd.f32 %v184, %v1108
  %v1110 = vpop.f32.mrb[0].mxu0
  %1111 = vmatprep.mubr.bf16.mxu0 %v585
  %1112 = vmatmul.mubr.bf16.gmra.mrb[0].mxu0 %v584
  %v1113 = vpop.f32.mrb[0].mxu0
  %v1114 = vadd.f32 %v184, %v1113
  %v1115 = vpop.f32.mrb[0].mxu0
  %v1116 = vpop.f32.mrb[0].mxu0
  %v1117 = vadd.f32 %v184, %v1116
  %v1118 = vpop.f32.mrb[0].mxu0
  %1119 = vmatprep.mubr.bf16.mxu0 %v588
  %1120 = vmatmul.mubr.bf16.gmra.mrb[0].mxu0 %v587
  %v1121 = vpop.f32.mrb[0].mxu0
  %v1122 = vadd.f32 %v184, %v1121
  %v1123 = vpop.f32.mrb[0].mxu0
  %v1124 = vpop.f32.mrb[0].mxu0
  %v1125 = vadd.f32 %v184, %v1124
  %v1126 = vpop.f32.mrb[0].mxu0
  %1127 = vmatprep.mubr.bf16.mxu0 %v591
  %1128 = vmatmul.mubr.bf16.gmra.mrb[0].mxu0 %v590
  %v1129 = vpop.f32.mrb[0].mxu0
  %v1130 = vadd.f32 %v184, %v1129
  %v1131 = vpop.f32.mrb[0].mxu0
  %v1132 = vpop.f32.mrb[0].mxu0
  %v1133 = vadd.f32 %v184, %v1132
  %v1134 = vpop.f32.mrb[0].mxu0
  %1135 = vmatprep.mubr.bf16.mxu0 %v594
  %1136 = vmatmul.mubr.bf16.gmra.mrb[0].mxu0 %v593
  %v1137 = vpop.f32.mrb[0].mxu0
  %v1138 = vadd.f32 %v184, %v1137
  %v1139 = vpop.f32.mrb[0].mxu0
  %v1140 = vpop.f32.mrb[0].mxu0
  %v1141 = vadd.f32 %v184, %v1140
  %v1142 = vpop.f32.mrb[0].mxu0
  %1143 = vmatprep.mubr.bf16.mxu0 %v597
  %1144 = vmatmul.mubr.bf16.gmra.mrb[0].mxu0 %v596
  %v1145 = vpop.f32.mrb[0].mxu0
  %v1146 = vadd.f32 %v184, %v1145
  %v1147 = vpop.f32.mrb[0].mxu0
  %v1148 = vpop.f32.mrb[0].mxu0
  %v1149 = vadd.f32 %v184, %v1148
  %v1150 = vpop.f32.mrb[0].mxu0
  %1151 = vmatprep.mubr.bf16.mxu0 %v600
  %1152 = vmatmul.mubr.bf16.gmra.mrb[0].mxu0 %v599
  %v1153 = vpop.f32.mrb[0].mxu0
  %v1154 = vadd.f32 %v184, %v1153
  %v1155 = vpop.f32.mrb[0].mxu0
  %v1156 = vpop.f32.mrb[0].mxu0
  %v1157 = vadd.f32 %v184, %v1156
  %v1158 = vpop.f32.mrb[0].mxu0
  %1159 = vdwg.mxu0
  %1160 = vmatprep.subr.bf16.mxu0 0
  %1161 = vmatpush1.bf16.msra.mxu0 %v754
  %1162 = vmatprep.subr.bf16.mxu0 0
  %1163 = vmatpush1.bf16.msra.mxu0 %v755
  %1164 = vmatprep.subr.bf16.mxu0 0
  %1165 = vmatpush1.bf16.msra.mxu0 0
  %1166 = vmatprep.subr.bf16.mxu0 0
  %1167 = vmatpush1.bf16.msra.mxu0 0
  %1168 = vmatprep.subr.bf16.mxu0 0
  %1169 = vmatpush1.bf16.msra.mxu0 0
  %1170 = vmatprep.subr.bf16.mxu0 0
  %1171 = vmatpush1.bf16.msra.mxu0 0
  %1172 = vmatprep.subr.bf16.mxu0 0
  %1173 = vmatpush1.bf16.msra.mxu0 0
  %1174 = vmatprep.subr.bf16.mxu0 0
  %1175 = vmatpush1.bf16.msra.mxu0 0
  %1176 = vmatprep.subr.bf16.mxu0 0
  %1177 = vmatpush1.bf16.msra.mxu0 0
  %1178 = vmatprep.subr.bf16.mxu0 0
  %1179 = vmatpush1.bf16.msra.mxu0 0
  %1180 = vmatprep.subr.bf16.mxu0 0
  %1181 = vmatpush1.bf16.msra.mxu0 0
  %1182 = vmatprep.subr.bf16.mxu0 0
  %1183 = vmatpush1.bf16.msra.mxu0 0
  %1184 = vmatprep.subr.bf16.mxu0 0
  %1185 = vmatpush1.bf16.msra.mxu0 0
  %1186 = vmatprep.subr.bf16.mxu0 0
  %1187 = vmatpush1.bf16.msra.mxu0 0
  %1188 = vmatprep.subr.bf16.mxu0 0
  %1189 = vmatpush1.bf16.msra.mxu0 0
  %1190 = vmatprep.subr.bf16.mxu0 0
  %1191 = vmatpush1.bf16.msra.mxu0 0
  %1192 = vmatprep.mubr.bf16.mxu0 0
  %1193 = vmatmul.mubr.bf16.gmra.mrb[0].mxu0 %v776
  %v1194 = vpop.f32.mrb[0].mxu0
  %v1195 = vadd.f32 %v906, %v1194
  %v1196 = vpop.f32.mrb[0].mxu0
  %v1197 = vpop.f32.mrb[0].mxu0
  %v1198 = vadd.f32 %v909, %v1197
  %v1199 = vpop.f32.mrb[0].mxu0
  %1200 = vmatprep.mubr.bf16.mxu0 0
  %1201 = vmatmul.mubr.bf16.gmra.mrb[0].mxu0 %v779
  %v1202 = vpop.f32.mrb[0].mxu0
  %v1203 = vadd.f32 %v914, %v1202
  %v1204 = vpop.f32.mrb[0].mxu0
  %v1205 = vpop.f32.mrb[0].mxu0
  %v1206 = vadd.f32 %v917, %v1205
  %v1207 = vpop.f32.mrb[0].mxu0
  %1208 = vmatprep.mubr.bf16.mxu0 0
  %1209 = vmatmul.mubr.bf16.gmra.mrb[0].mxu0 %v782
  %v1210 = vpop.f32.mrb[0].mxu0
  %v1211 = vadd.f32 %v922, %v1210
  %v1212 = vpop.f32.mrb[0].mxu0
  %v1213 = vpop.f32.mrb[0].mxu0
  %v1214 = vadd.f32 %v925, %v1213
  %v1215 = vpop.f32.mrb[0].mxu0
  %1216 = vmatprep.mubr.bf16.mxu0 0
  %1217 = vmatmul.mubr.bf16.gmra.mrb[0].mxu0 %v785
  %v1218 = vpop.f32.mrb[0].mxu0
  %v1219 = vadd.f32 %v930, %v1218
  %v1220 = vpop.f32.mrb[0].mxu0
  %v1221 = vpop.f32.mrb[0].mxu0
  %v1222 = vadd.f32 %v933, %v1221
  %v1223 = vpop.f32.mrb[0].mxu0
  %1224 = vmatprep.mubr.bf16.mxu0 0
  %1225 = vmatmul.mubr.bf16.gmra.mrb[0].mxu0 %v788
  %v1226 = vpop.f32.mrb[0].mxu0
  %v1227 = vadd.f32 %v938, %v1226
  %v1228 = vpop.f32.mrb[0].mxu0
  %v1229 = vpop.f32.mrb[0].mxu0
  %v1230 = vadd.f32 %v941, %v1229
  %v1231 = vpop.f32.mrb[0].mxu0
  %1232 = vmatprep.mubr.bf16.mxu0 0
  %1233 = vmatmul.mubr.bf16.gmra.mrb[0].mxu0 %v791
  %v1234 = vpop.f32.mrb[0].mxu0
  %v1235 = vadd.f32 %v946, %v1234
  %v1236 = vpop.f32.mrb[0].mxu0
  %v1237 = vpop.f32.mrb[0].mxu0
  %v1238 = vadd.f32 %v949, %v1237
  %v1239 = vpop.f32.mrb[0].mxu0
  %1240 = vmatprep.mubr.bf16.mxu0 0
  %1241 = vmatmul.mubr.bf16.gmra.mrb[0].mxu0 %v794
  %v1242 = vpop.f32.mrb[0].mxu0
  %v1243 = vadd.f32 %v954, %v1242
  %v1244 = vpop.f32.mrb[0].mxu0
  %v1245 = vpop.f32.mrb[0].mxu0
  %v1246 = vadd.f32 %v957, %v1245
  %v1247 = vpop.f32.mrb[0].mxu0
  %1248 = vmatprep.mubr.bf16.mxu0 0
  %1249 = vmatmul.mubr.bf16.gmra.mrb[0].mxu0 %v797
  %v1250 = vpop.f32.mrb[0].mxu0
  %v1251 = vadd.f32 %v962, %v1250
  %v1252 = vpop.f32.mrb[0].mxu0
  %v1253 = vpop.f32.mrb[0].mxu0
  %v1254 = vadd.f32 %v965, %v1253
  %v1255 = vpop.f32.mrb[0].mxu0
  %1256 = vmatprep.mubr.bf16.mxu0 0
  %1257 = vmatmul.mubr.bf16.gmra.mrb[0].mxu0 %v800
  %v1258 = vpop.f32.mrb[0].mxu0
  %v1259 = vadd.f32 %v970, %v1258
  %v1260 = vpop.f32.mrb[0].mxu0
  %v1261 = vpop.f32.mrb[0].mxu0
  %v1262 = vadd.f32 %v973, %v1261
  %v1263 = vpop.f32.mrb[0].mxu0
  %1264 = vmatprep.mubr.bf16.mxu0 0
  %1265 = vmatmul.mubr.bf16.gmra.mrb[0].mxu0 %v803
  %v1266 = vpop.f32.mrb[0].mxu0
  %v1267 = vadd.f32 %v978, %v1266
  %v1268 = vpop.f32.mrb[0].mxu0
  %v1269 = vpop.f32.mrb[0].mxu0
  %v1270 = vadd.f32 %v981, %v1269
  %v1271 = vpop.f32.mrb[0].mxu0
  %1272 = vmatprep.mubr.bf16.mxu0 0
  %1273 = vmatmul.mubr.bf16.gmra.mrb[0].mxu0 %v806
  %v1274 = vpop.f32.mrb[0].mxu0
  %v1275 = vadd.f32 %v986, %v1274
  %v1276 = vpop.f32.mrb[0].mxu0
  %v1277 = vpop.f32.mrb[0].mxu0
  %v1278 = vadd.f32 %v989, %v1277
  %v1279 = vpop.f32.mrb[0].mxu0
  %1280 = vmatprep.mubr.bf16.mxu0 0
  %1281 = vmatmul.mubr.bf16.gmra.mrb[0].mxu0 %v809
  %v1282 = vpop.f32.mrb[0].mxu0
  %v1283 = vadd.f32 %v994, %v1282
  %v1284 = vpop.f32.mrb[0].mxu0
  %v1285 = vpop.f32.mrb[0].mxu0
  %v1286 = vadd.f32 %v997, %v1285
  %v1287 = vpop.f32.mrb[0].mxu0
  %1288 = vmatprep.mubr.bf16.mxu0 0
  %1289 = vmatmul.mubr.bf16.gmra.mrb[0].mxu0 %v812
  %v1290 = vpop.f32.mrb[0].mxu0
  %v1291 = vadd.f32 %v1002, %v1290
  %v1292 = vpop.f32.mrb[0].mxu0
  %v1293 = vpop.f32.mrb[0].mxu0
  %v1294 = vadd.f32 %v1005, %v1293
  %v1295 = vpop.f32.mrb[0].mxu0
  %1296 = vmatprep.mubr.bf16.mxu0 0
  %1297 = vmatmul.mubr.bf16.gmra.mrb[0].mxu0 %v815
  %v1298 = vpop.f32.mrb[0].mxu0
  %v1299 = vadd.f32 %v1010, %v1298
  %v1300 = vpop.f32.mrb[0].mxu0
  %v1301 = vpop.f32.mrb[0].mxu0
  %v1302 = vadd.f32 %v1013, %v1301
  %v1303 = vpop.f32.mrb[0].mxu0
  %1304 = vmatprep.mubr.bf16.mxu0 0
  %1305 = vmatmul.mubr.bf16.gmra.mrb[0].mxu0 %v818
  %v1306 = vpop.f32.mrb[0].mxu0
  %v1307 = vadd.f32 %v1018, %v1306
  %v1308 = vpop.f32.mrb[0].mxu0
  %v1309 = vpop.f32.mrb[0].mxu0
  %v1310 = vadd.f32 %v1021, %v1309
  %v1311 = vpop.f32.mrb[0].mxu0
  %1312 = vmatprep.mubr.bf16.mxu0 0
  %1313 = vmatmul.mubr.bf16.gmra.mrb[0].mxu0 %v821
  %v1314 = vpop.f32.mrb[0].mxu0
  %v1315 = vadd.f32 %v1026, %v1314
  %v1316 = vpop.f32.mrb[0].mxu0
  %v1317 = vpop.f32.mrb[0].mxu0
  %v1318 = vadd.f32 %v1029, %v1317
  %v1319 = vpop.f32.mrb[0].mxu0
  %1320 = vmatprep.mubr.bf16.mxu0 0
  %1321 = vmatmul.mubr.bf16.gmra.mrb[0].mxu0 %v824
  %v1322 = vpop.f32.mrb[0].mxu0
  %v1323 = vadd.f32 %v1034, %v1322
  %v1324 = vpop.f32.mrb[0].mxu0
  %v1325 = vpop.f32.mrb[0].mxu0
  %v1326 = vadd.f32 %v1037, %v1325
  %v1327 = vpop.f32.mrb[0].mxu0
  %1328 = vmatprep.mubr.bf16.mxu0 0
  %1329 = vmatmul.mubr.bf16.gmra.mrb[0].mxu0 %v827
  %v1330 = vpop.f32.mrb[0].mxu0
  %v1331 = vadd.f32 %v1042, %v1330
  %v1332 = vpop.f32.mrb[0].mxu0
  %v1333 = vpop.f32.mrb[0].mxu0
  %v1334 = vadd.f32 %v1045, %v1333
  %v1335 = vpop.f32.mrb[0].mxu0
  %1336 = vmatprep.mubr.bf16.mxu0 0
  %1337 = vmatmul.mubr.bf16.gmra.mrb[0].mxu0 %v830
  %v1338 = vpop.f32.mrb[0].mxu0
  %v1339 = vadd.f32 %v1050, %v1338
  %v1340 = vpop.f32.mrb[0].mxu0
  %v1341 = vpop.f32.mrb[0].mxu0
  %v1342 = vadd.f32 %v1053, %v1341
  %v1343 = vpop.f32.mrb[0].mxu0
  %1344 = vmatprep.mubr.bf16.mxu0 0
  %1345 = vmatmul.mubr.bf16.gmra.mrb[0].mxu0 %v833
  %v1346 = vpop.f32.mrb[0].mxu0
  %v1347 = vadd.f32 %v1058, %v1346
  %v1348 = vpop.f32.mrb[0].mxu0
  %v1349 = vpop.f32.mrb[0].mxu0
  %v1350 = vadd.f32 %v1061, %v1349
  %v1351 = vpop.f32.mrb[0].mxu0
  %1352 = vmatprep.mubr.bf16.mxu0 0
  %1353 = vmatmul.mubr.bf16.gmra.mrb[0].mxu0 %v836
  %v1354 = vpop.f32.mrb[0].mxu0
  %v1355 = vadd.f32 %v1066, %v1354
  %v1356 = vpop.f32.mrb[0].mxu0
  %v1357 = vpop.f32.mrb[0].mxu0
  %v1358 = vadd.f32 %v1069, %v1357
  %v1359 = vpop.f32.mrb[0].mxu0
  %1360 = vmatprep.mubr.bf16.mxu0 0
  %1361 = vmatmul.mubr.bf16.gmra.mrb[0].mxu0 %v839
  %v1362 = vpop.f32.mrb[0].mxu0
  %v1363 = vadd.f32 %v1074, %v1362
  %v1364 = vpop.f32.mrb[0].mxu0
  %v1365 = vpop.f32.mrb[0].mxu0
  %v1366 = vadd.f32 %v1077, %v1365
  %v1367 = vpop.f32.mrb[0].mxu0
  %1368 = vmatprep.mubr.bf16.mxu0 0
  %1369 = vmatmul.mubr.bf16.gmra.mrb[0].mxu0 %v842
  %v1370 = vpop.f32.mrb[0].mxu0
  %v1371 = vadd.f32 %v1082, %v1370
  %v1372 = vpop.f32.mrb[0].mxu0
  %v1373 = vpop.f32.mrb[0].mxu0
  %v1374 = vadd.f32 %v1085, %v1373
  %v1375 = vpop.f32.mrb[0].mxu0
  %1376 = vmatprep.mubr.bf16.mxu0 0
  %1377 = vmatmul.mubr.bf16.gmra.mrb[0].mxu0 %v845
  %v1378 = vpop.f32.mrb[0].mxu0
  %v1379 = vadd.f32 %v1090, %v1378
  %v1380 = vpop.f32.mrb[0].mxu0
  %v1381 = vpop.f32.mrb[0].mxu0
  %v1382 = vadd.f32 %v1093, %v1381
  %v1383 = vpop.f32.mrb[0].mxu0
  %1384 = vmatprep.mubr.bf16.mxu0 0
  %1385 = vmatmul.mubr.bf16.gmra.mrb[0].mxu0 %v848
  %v1386 = vpop.f32.mrb[0].mxu0
  %v1387 = vadd.f32 %v1098, %v1386
  %v1388 = vpop.f32.mrb[0].mxu0
  %v1389 = vpop.f32.mrb[0].mxu0
  %v1390 = vadd.f32 %v1101, %v1389
  %v1391 = vpop.f32.mrb[0].mxu0
  %1392 = vmatprep.mubr.bf16.mxu0 0
  %1393 = vmatmul.mubr.bf16.gmra.mrb[0].mxu0 %v851
  %v1394 = vpop.f32.mrb[0].mxu0
  %v1395 = vadd.f32 %v1106, %v1394
  %v1396 = vpop.f32.mrb[0].mxu0
  %v1397 = vpop.f32.mrb[0].mxu0
  %v1398 = vadd.f32 %v1109, %v1397
  %v1399 = vpop.f32.mrb[0].mxu0
  %1400 = vmatprep.mubr.bf16.mxu0 0
  %1401 = vmatmul.mubr.bf16.gmra.mrb[0].mxu0 %v854
  %v1402 = vpop.f32.mrb[0].mxu0
  %v1403 = vadd.f32 %v1114, %v1402
  %v1404 = vpop.f32.mrb[0].mxu0
  %v1405 = vpop.f32.mrb[0].mxu0
  %v1406 = vadd.f32 %v1117, %v1405
  %v1407 = vpop.f32.mrb[0].mxu0
  %1408 = vmatprep.mubr.bf16.mxu0 0
  %1409 = vmatmul.mubr.bf16.gmra.mrb[0].mxu0 %v857
  %v1410 = vpop.f32.mrb[0].mxu0
  %v1411 = vadd.f32 %v1122, %v1410
  %v1412 = vpop.f32.mrb[0].mxu0
  %v1413 = vpop.f32.mrb[0].mxu0
  %v1414 = vadd.f32 %v1125, %v1413
  %v1415 = vpop.f32.mrb[0].mxu0
  %1416 = vmatprep.mubr.bf16.mxu0 0
  %1417 = vmatmul.mubr.bf16.gmra.mrb[0].mxu0 %v860
  %v1418 = vpop.f32.mrb[0].mxu0
  %v1419 = vadd.f32 %v1130, %v1418
  %v1420 = vpop.f32.mrb[0].mxu0
  %v1421 = vpop.f32.mrb[0].mxu0
  %v1422 = vadd.f32 %v1133, %v1421
  %v1423 = vpop.f32.mrb[0].mxu0
  %1424 = vmatprep.mubr.bf16.mxu0 0
  %1425 = vmatmul.mubr.bf16.gmra.mrb[0].mxu0 %v863
  %v1426 = vpop.f32.mrb[0].mxu0
  %v1427 = vadd.f32 %v1138, %v1426
  %v1428 = vpop.f32.mrb[0].mxu0
  %v1429 = vpop.f32.mrb[0].mxu0
  %v1430 = vadd.f32 %v1141, %v1429
  %v1431 = vpop.f32.mrb[0].mxu0
  %1432 = vmatprep.mubr.bf16.mxu0 0
  %1433 = vmatmul.mubr.bf16.gmra.mrb[0].mxu0 %v866
  %v1434 = vpop.f32.mrb[0].mxu0
  %v1435 = vadd.f32 %v1146, %v1434
  %v1436 = vpop.f32.mrb[0].mxu0
  %v1437 = vpop.f32.mrb[0].mxu0
  %v1438 = vadd.f32 %v1149, %v1437
  %v1439 = vpop.f32.mrb[0].mxu0
  %1440 = vmatprep.mubr.bf16.mxu0 0
  %1441 = vmatmul.mubr.bf16.gmra.mrb[0].mxu0 %v869
  %v1442 = vpop.f32.mrb[0].mxu0
  %v1443 = vadd.f32 %v1154, %v1442
  %v1444 = vpop.f32.mrb[0].mxu0
  %v1445 = vpop.f32.mrb[0].mxu0
  %v1446 = vadd.f32 %v1157, %v1445
  %v1447 = vpop.f32.mrb[0].mxu0
  %1448 = vdwg.mxu0
  %1449 = vst.msk [vmem:[%s3] sm:$0xff] %vm774, %v1195
  %1450 = vst.msk [vmem:[%s3 + $0x8] sm:$0xff] %vm774, %v1198
  %1451 = vst.msk [vmem:[%s3 + $0x10] sm:$0xff] %vm774, %v1203
  %1452 = vst.msk [vmem:[%s3 + $0x18] sm:$0xff] %vm774, %v1206
  %1453 = vst.msk [vmem:[%s3 + $0x20] sm:$0xff] %vm774, %v1211
  %1454 = vst.msk [vmem:[%s3 + $0x28] sm:$0xff] %vm774, %v1214
  %1455 = vst.msk [vmem:[%s3 + $0x30] sm:$0xff] %vm774, %v1219
  %1456 = vst.msk [vmem:[%s3 + $0x38] sm:$0xff] %vm774, %v1222
  %1457 = vst.msk [vmem:[%s3 + $0x40] sm:$0xff] %vm774, %v1227
  %1458 = vst.msk [vmem:[%s3 + $0x48] sm:$0xff] %vm774, %v1230
  %1459 = vst.msk [vmem:[%s3 + $0x50] sm:$0xff] %vm774, %v1235
  %1460 = vst.msk [vmem:[%s3 + $0x58] sm:$0xff] %vm774, %v1238
  %1461 = vst.msk [vmem:[%s3 + $0x60] sm:$0xff] %vm774, %v1243
  %1462 = vst.msk [vmem:[%s3 + $0x68] sm:$0xff] %vm774, %v1246
  %1463 = vst.msk [vmem:[%s3 + $0x70] sm:$0xff] %vm774, %v1251
  %1464 = vst.msk [vmem:[%s3 + $0x78] sm:$0xff] %vm774, %v1254
  %1465 = vst.msk [vmem:[%s3 + $0x80] sm:$0xff] %vm774, %v1259
  %1466 = vst.msk [vmem:[%s3 + $0x88] sm:$0xff] %vm774, %v1262
  %1467 = vst.msk [vmem:[%s3 + $0x90] sm:$0xff] %vm774, %v1267
  %1468 = vst.msk [vmem:[%s3 + $0x98] sm:$0xff] %vm774, %v1270
  %1469 = vst.msk [vmem:[%s3 + $0xa0] sm:$0xff] %vm774, %v1275
  %1470 = vst.msk [vmem:[%s3 + $0xa8] sm:$0xff] %vm774, %v1278
  %1471 = vst.msk [vmem:[%s3 + $0xb0] sm:$0xff] %vm774, %v1283
  %1472 = vst.msk [vmem:[%s3 + $0xb8] sm:$0xff] %vm774, %v1286
  %1473 = vst.msk [vmem:[%s3 + $0xc0] sm:$0xff] %vm774, %v1291
  %1474 = vst.msk [vmem:[%s3 + $0xc8] sm:$0xff] %vm774, %v1294
  %1475 = vst.msk [vmem:[%s3 + $0xd0] sm:$0xff] %vm774, %v1299
  %1476 = vst.msk [vmem:[%s3 + $0xd8] sm:$0xff] %vm774, %v1302
  %1477 = vst.msk [vmem:[%s3 + $0xe0] sm:$0xff] %vm774, %v1307
  %1478 = vst.msk [vmem:[%s3 + $0xe8] sm:$0xff] %vm774, %v1310
  %1479 = vst.msk [vmem:[%s3 + $0xf0] sm:$0xff] %vm774, %v1315
  %1480 = vst.msk [vmem:[%s3 + $0xf8] sm:$0xff] %vm774, %v1318
  %1481 = vst.msk [vmem:[%s3 + $0x100] sm:$0xff] %vm774, %v1323
  %1482 = vst.msk [vmem:[%s3 + $0x108] sm:$0xff] %vm774, %v1326
  %1483 = vst.msk [vmem:[%s3 + $0x110] sm:$0xff] %vm774, %v1331
  %1484 = vst.msk [vmem:[%s3 + $0x118] sm:$0xff] %vm774, %v1334
  %1485 = vst.msk [vmem:[%s3 + $0x120] sm:$0xff] %vm774, %v1339
  %1486 = vst.msk [vmem:[%s3 + $0x128] sm:$0xff] %vm774, %v1342
  %1487 = vst.msk [vmem:[%s3 + $0x130] sm:$0xff] %vm774, %v1347
  %1488 = vst.msk [vmem:[%s3 + $0x138] sm:$0xff] %vm774, %v1350
  %1489 = vst.msk [vmem:[%s3 + $0x140] sm:$0xff] %vm774, %v1355
  %1490 = vst.msk [vmem:[%s3 + $0x148] sm:$0xff] %vm774, %v1358
  %1491 = vst.msk [vmem:[%s3 + $0x150] sm:$0xff] %vm774, %v1363
  %1492 = vst.msk [vmem:[%s3 + $0x158] sm:$0xff] %vm774, %v1366
  %1493 = vst.msk [vmem:[%s3 + $0x160] sm:$0xff] %vm774, %v1371
  %1494 = vst.msk [vmem:[%s3 + $0x168] sm:$0xff] %vm774, %v1374
  %1495 = vst.msk [vmem:[%s3 + $0x170] sm:$0xff] %vm774, %v1379
  %1496 = vst.msk [vmem:[%s3 + $0x178] sm:$0xff] %vm774, %v1382
  %1497 = vst.msk [vmem:[%s3 + $0x180] sm:$0xff] %vm774, %v1387
  %1498 = vst.msk [vmem:[%s3 + $0x188] sm:$0xff] %vm774, %v1390
  %1499 = vst.msk [vmem:[%s3 + $0x190] sm:$0xff] %vm774, %v1395
  %1500 = vst.msk [vmem:[%s3 + $0x198] sm:$0xff] %vm774, %v1398
  %1501 = vst.msk [vmem:[%s3 + $0x1a0] sm:$0xff] %vm774, %v1403
  %1502 = vst.msk [vmem:[%s3 + $0x1a8] sm:$0xff] %vm774, %v1406
  %1503 = vst.msk [vmem:[%s3 + $0x1b0] sm:$0xff] %vm774, %v1411
  %1504 = vst.msk [vmem:[%s3 + $0x1b8] sm:$0xff] %vm774, %v1414
  %1505 = vst.msk [vmem:[%s3 + $0x1c0] sm:$0xff] %vm774, %v1419
  %1506 = vst.msk [vmem:[%s3 + $0x1c8] sm:$0xff] %vm774, %v1422
  %1507 = vst.msk [vmem:[%s3 + $0x1d0] sm:$0xff] %vm774, %v1427
  %1508 = vst.msk [vmem:[%s3 + $0x1d8] sm:$0xff] %vm774, %v1430
  %1509 = vst.msk [vmem:[%s3 + $0x1e0] sm:$0xff] %vm774, %v1435
  %1510 = vst.msk [vmem:[%s3 + $0x1e8] sm:$0xff] %vm774, %v1438
  %1511 = vst.msk [vmem:[%s3 + $0x1f0] sm:$0xff] %vm774, %v1443
  %1512 = vst.msk [vmem:[%s3 + $0x1f8] sm:$0xff] %vm774, %v1446
  // Predicated region
  $region14: #{unrolled_net_forward.19} parent=0 // pred_check
    _
  $region15: #{unrolled_net_forward.19} parent=0 // pred_check_branch
    %1514 = sbr.rel (0) target = $region17
  $region16: #{unrolled_net_forward.19} parent=0 // pred_region
    _
  $region17: #{unrolled_net_forward.19} parent=0 // pred_fallthru
    _
  // Predicated region
  $region18: #{unrolled_net_forward.19} parent=0 // pred_check
    _
  $region19: #{unrolled_net_forward.19} parent=0 // pred_check_branch
    %1516 = sbr.rel (0) target = $region21
  $region20: #{unrolled_net_forward.19} parent=0 // pred_region
    _
  $region21: #{unrolled_net_forward.19} parent=0 // pred_fallthru
    _

// kernel: unrolled_net_forward.23
$region0: #{unrolled_net_forward.23}
  #allocation0 [shape = 'u32[]', space=smem, size = 0x4, offset = 0x4, fixed_abs, tag = 'smem constant byte address 0x4 - core index']
  #allocation1 [shape = 'u32[144,128]{1,0:T(1,128)}', space=vmem, size = 0x12000, scoped, tag = 'internal scratch']
  %s0 = inlined_call_operand.vmem [shape: bf16[512,288], index: 0, kind: input, shape index: {}]
  %s1 = inlined_call_operand.vmem [shape: bf16[288,2], index: 1, kind: input, shape index: {}]
  %s2 = inlined_call_operand.vmem [shape: f32[1,2], index: 2, kind: input, shape index: {}]
  %s3 = inlined_call_operand.vmem [shape: f32[512,2], index: 3, kind: output, shape index: {}]
  %s4 = sld [smem:[#allocation0]]
  $region22: #{unrolled_net_forward.23} parent=0
    _
  %s6 = ssub.s32 1, %s4
  %s7 = scalar_select 0, %s6, %s4
  // Predicated region
  $region2: #{unrolled_net_forward.23} parent=0 // pred_check
    _
  $region3: #{unrolled_net_forward.23} parent=0 // pred_check_branch
    %9 = sbr.rel (0) target = $region5
  $region4: #{unrolled_net_forward.23} parent=0 // pred_region
    _
  $region5: #{unrolled_net_forward.23} parent=0 // pred_fallthru
    _
  // Predicated region
  $region6: #{unrolled_net_forward.23} parent=0 // pred_check
    _
  $region7: #{unrolled_net_forward.23} parent=0 // pred_check_branch
    %11 = sbr.rel (0) target = $region9
  $region8: #{unrolled_net_forward.23} parent=0 // pred_region
    _
  $region9: #{unrolled_net_forward.23} parent=0 // pred_fallthru
    _
  // Predicated region
  $region10: #{unrolled_net_forward.23} parent=0 // pred_check
    _
  $region11: #{unrolled_net_forward.23} parent=0 // pred_check_branch
    %13 = sbr.rel (0) target = $region13
  $region12: #{unrolled_net_forward.23} parent=0 // pred_region
    _
  $region13: #{unrolled_net_forward.23} parent=0 // pred_fallthru
    _
  %v15 = vld [vmem:[%s0] sm:$0xff]
  %v16 = vld [vmem:[%s0 + $0x8] sm:$0xf]
  %v17 = vld [vmem:[%s0 + $0xc] sm:$0xff]
  %v18 = vld [vmem:[%s0 + $0x14] sm:$0xf]
  %v19 = vld [vmem:[%s0 + $0x18] sm:$0xff]
  %v20 = vld [vmem:[%s0 + $0x20] sm:$0xf]
  %v21 = vld [vmem:[%s0 + $0x24] sm:$0xff]
  %v22 = vld [vmem:[%s0 + $0x2c] sm:$0xf]
  %v23 = vld [vmem:[%s0 + $0x30] sm:$0xff]
  %v24 = vld [vmem:[%s0 + $0x38] sm:$0xf]
  %v25 = vld [vmem:[%s0 + $0x3c] sm:$0xff]
  %v26 = vld [vmem:[%s0 + $0x44] sm:$0xf]
  %v27 = vld [vmem:[%s0 + $0x48] sm:$0xff]
  %v28 = vld [vmem:[%s0 + $0x50] sm:$0xf]
  %v29 = vld [vmem:[%s0 + $0x54] sm:$0xff]
  %v30 = vld [vmem:[%s0 + $0x5c] sm:$0xf]
  %v31 = vld [vmem:[%s0 + $0x60] sm:$0xff]
  %v32 = vld [vmem:[%s0 + $0x68] sm:$0xf]
  %v33 = vld [vmem:[%s0 + $0x6c] sm:$0xff]
  %v34 = vld [vmem:[%s0 + $0x74] sm:$0xf]
  %v35 = vld [vmem:[%s0 + $0x78] sm:$0xff]
  %v36 = vld [vmem:[%s0 + $0x80] sm:$0xf]
  %v37 = vld [vmem:[%s0 + $0x84] sm:$0xff]
  %v38 = vld [vmem:[%s0 + $0x8c] sm:$0xf]
  %v39 = vld [vmem:[%s0 + $0x90] sm:$0xff]
  %v40 = vld [vmem:[%s0 + $0x98] sm:$0xf]
  %v41 = vld [vmem:[%s0 + $0x9c] sm:$0xff]
  %v42 = vld [vmem:[%s0 + $0xa4] sm:$0xf]
  %v43 = vld [vmem:[%s0 + $0xa8] sm:$0xff]
  %v44 = vld [vmem:[%s0 + $0xb0] sm:$0xf]
  %v45 = vld [vmem:[%s0 + $0xb4] sm:$0xff]
  %v46 = vld [vmem:[%s0 + $0xbc] sm:$0xf]
  %v47 = vld [vmem:[%s0 + $0xc0] sm:$0xff]
  %v48 = vld [vmem:[%s0 + $0xc8] sm:$0xf]
  %v49 = vld [vmem:[%s0 + $0xcc] sm:$0xff]
  %v50 = vld [vmem:[%s0 + $0xd4] sm:$0xf]
  %v51 = vld [vmem:[%s0 + $0xd8] sm:$0xff]
  %v52 = vld [vmem:[%s0 + $0xe0] sm:$0xf]
  %v53 = vld [vmem:[%s0 + $0xe4] sm:$0xff]
  %v54 = vld [vmem:[%s0 + $0xec] sm:$0xf]
  %v55 = vld [vmem:[%s0 + $0xf0] sm:$0xff]
  %v56 = vld [vmem:[%s0 + $0xf8] sm:$0xf]
  %v57 = vld [vmem:[%s0 + $0xfc] sm:$0xff]
  %v58 = vld [vmem:[%s0 + $0x104] sm:$0xf]
  %v59 = vld [vmem:[%s0 + $0x108] sm:$0xff]
  %v60 = vld [vmem:[%s0 + $0x110] sm:$0xf]
  %v61 = vld [vmem:[%s0 + $0x114] sm:$0xff]
  %v62 = vld [vmem:[%s0 + $0x11c] sm:$0xf]
  %v63 = vld [vmem:[%s0 + $0x120] sm:$0xff]
  %v64 = vld [vmem:[%s0 + $0x128] sm:$0xf]
  %v65 = vld [vmem:[%s0 + $0x12c] sm:$0xff]
  %v66 = vld [vmem:[%s0 + $0x134] sm:$0xf]
  %v67 = vld [vmem:[%s0 + $0x138] sm:$0xff]
  %v68 = vld [vmem:[%s0 + $0x140] sm:$0xf]
  %v69 = vld [vmem:[%s0 + $0x144] sm:$0xff]
  %v70 = vld [vmem:[%s0 + $0x14c] sm:$0xf]
  %v71 = vld [vmem:[%s0 + $0x150] sm:$0xff]
  %v72 = vld [vmem:[%s0 + $0x158] sm:$0xf]
  %v73 = vld [vmem:[%s0 + $0x15c] sm:$0xff]
  %v74 = vld [vmem:[%s0 + $0x164] sm:$0xf]
  %v75 = vld [vmem:[%s0 + $0x168] sm:$0xff]
  %v76 = vld [vmem:[%s0 + $0x170] sm:$0xf]
  %v77 = vld [vmem:[%s0 + $0x174] sm:$0xff]
  %v78 = vld [vmem:[%s0 + $0x17c] sm:$0xf]
  %v79 = vld [vmem:[%s0 + $0x180] sm:$0xff]
  %v80 = vld [vmem:[%s0 + $0x188] sm:$0xf]
  %v81 = vld [vmem:[%s0 + $0x18c] sm:$0xff]
  %v82 = vld [vmem:[%s0 + $0x194] sm:$0xf]
  %v83 = vld [vmem:[%s0 + $0x198] sm:$0xff]
  %v84 = vld [vmem:[%s0 + $0x1a0] sm:$0xf]
  %v85 = vld [vmem:[%s0 + $0x1a4] sm:$0xff]
  %v86 = vld [vmem:[%s0 + $0x1ac] sm:$0xf]
  %v87 = vld [vmem:[%s0 + $0x1b0] sm:$0xff]
  %v88 = vld [vmem:[%s0 + $0x1b8] sm:$0xf]
  %v89 = vld [vmem:[%s0 + $0x1bc] sm:$0xff]
  %v90 = vld [vmem:[%s0 + $0x1c4] sm:$0xf]
  %v91 = vld [vmem:[%s0 + $0x1c8] sm:$0xff]
  %v92 = vld [vmem:[%s0 + $0x1d0] sm:$0xf]
  %v93 = vld [vmem:[%s0 + $0x1d4] sm:$0xff]
  %v94 = vld [vmem:[%s0 + $0x1dc] sm:$0xf]
  %v95 = vld [vmem:[%s0 + $0x1e0] sm:$0xff]
  %v96 = vld [vmem:[%s0 + $0x1e8] sm:$0xf]
  %v97 = vld [vmem:[%s0 + $0x1ec] sm:$0xff]
  %v98 = vld [vmem:[%s0 + $0x1f4] sm:$0xf]
  %v99 = vld [vmem:[%s0 + $0x1f8] sm:$0xff]
  %v100 = vld [vmem:[%s0 + $0x200] sm:$0xf]
  %v101 = vld [vmem:[%s0 + $0x204] sm:$0xff]
  %v102 = vld [vmem:[%s0 + $0x20c] sm:$0xf]
  %v103 = vld [vmem:[%s0 + $0x210] sm:$0xff]
  %v104 = vld [vmem:[%s0 + $0x218] sm:$0xf]
  %v105 = vld [vmem:[%s0 + $0x21c] sm:$0xff]
  %v106 = vld [vmem:[%s0 + $0x224] sm:$0xf]
  %v107 = vld [vmem:[%s0 + $0x228] sm:$0xff]
  %v108 = vld [vmem:[%s0 + $0x230] sm:$0xf]
  %v109 = vld [vmem:[%s0 + $0x234] sm:$0xff]
  %v110 = vld [vmem:[%s0 + $0x23c] sm:$0xf]
  %v111 = vld [vmem:[%s0 + $0x240] sm:$0xff]
  %v112 = vld [vmem:[%s0 + $0x248] sm:$0xf]
  %v113 = vld [vmem:[%s0 + $0x24c] sm:$0xff]
  %v114 = vld [vmem:[%s0 + $0x254] sm:$0xf]
  %v115 = vld [vmem:[%s0 + $0x258] sm:$0xff]
  %v116 = vld [vmem:[%s0 + $0x260] sm:$0xf]
  %v117 = vld [vmem:[%s0 + $0x264] sm:$0xff]
  %v118 = vld [vmem:[%s0 + $0x26c] sm:$0xf]
  %v119 = vld [vmem:[%s0 + $0x270] sm:$0xff]
  %v120 = vld [vmem:[%s0 + $0x278] sm:$0xf]
  %v121 = vld [vmem:[%s0 + $0x27c] sm:$0xff]
  %v122 = vld [vmem:[%s0 + $0x284] sm:$0xf]
  %v123 = vld [vmem:[%s0 + $0x288] sm:$0xff]
  %v124 = vld [vmem:[%s0 + $0x290] sm:$0xf]
  %v125 = vld [vmem:[%s0 + $0x294] sm:$0xff]
  %v126 = vld [vmem:[%s0 + $0x29c] sm:$0xf]
  %v127 = vld [vmem:[%s0 + $0x2a0] sm:$0xff]
  %v128 = vld [vmem:[%s0 + $0x2a8] sm:$0xf]
  %v129 = vld [vmem:[%s0 + $0x2ac] sm:$0xff]
  %v130 = vld [vmem:[%s0 + $0x2b4] sm:$0xf]
  %v131 = vld [vmem:[%s0 + $0x2b8] sm:$0xff]
  %v132 = vld [vmem:[%s0 + $0x2c0] sm:$0xf]
  %v133 = vld [vmem:[%s0 + $0x2c4] sm:$0xff]
  %v134 = vld [vmem:[%s0 + $0x2cc] sm:$0xf]
  %v135 = vld [vmem:[%s0 + $0x2d0] sm:$0xff]
  %v136 = vld [vmem:[%s0 + $0x2d8] sm:$0xf]
  %v137 = vld [vmem:[%s0 + $0x2dc] sm:$0xff]
  %v138 = vld [vmem:[%s0 + $0x2e4] sm:$0xf]
  %v139 = vld [vmem:[%s0 + $0x2e8] sm:$0xff]
  %v140 = vld [vmem:[%s0 + $0x2f0] sm:$0xf]
  %v141 = vld [vmem:[%s0 + $0x2f4] sm:$0xff]
  %v142 = vld [vmem:[%s0 + $0x2fc] sm:$0xf]
  %v143 = vld [vmem:[%s1] sm:$0xf]
  %v144 = vld [vmem:[%s1 + $0x4] sm:$0xf]
  %v145 = vld [vmem:[%s1 + $0x8] sm:$0xf]
  %v146 = vld [vmem:[%s1 + $0xc] sm:$0xf]
  %v147 = vld [vmem:[%s1 + $0x10] sm:$0xf]
  %v148 = vld [vmem:[%s1 + $0x14] sm:$0xf]
  %v149 = vld [vmem:[%s1 + $0x18] sm:$0xf]
  %v150 = vld [vmem:[%s1 + $0x1c] sm:$0xf]
  %v151 = vld [vmem:[%s1 + $0x20] sm:$0xf]
  %v152 = vld [vmem:[%s1 + $0x24] sm:$0xf]
  %v153 = vld [vmem:[%s1 + $0x28] sm:$0xf]
  %v154 = vld [vmem:[%s1 + $0x2c] sm:$0xf]
  %v155 = vld [vmem:[%s1 + $0x30] sm:$0xf]
  %v156 = vld [vmem:[%s1 + $0x34] sm:$0xf]
  %v157 = vld [vmem:[%s1 + $0x38] sm:$0xf]
  %v158 = vld [vmem:[%s1 + $0x3c] sm:$0xf]
  %v159 = vld [vmem:[%s1 + $0x40] sm:$0xf]
  %v160 = vld [vmem:[%s1 + $0x44] sm:$0xf]
  %v161 = vld [vmem:[%s1 + $0x48] sm:$0xf]
  %v162 = vld [vmem:[%s1 + $0x4c] sm:$0xf]
  %v163 = vld [vmem:[%s1 + $0x50] sm:$0xf]
  %v164 = vld [vmem:[%s1 + $0x54] sm:$0xf]
  %v165 = vld [vmem:[%s1 + $0x58] sm:$0xf]
  %v166 = vld [vmem:[%s1 + $0x5c] sm:$0xf]
  %v167 = vld [vmem:[%s1 + $0x60] sm:$0xf]
  %v168 = vld [vmem:[%s1 + $0x64] sm:$0xf]
  %v169 = vld [vmem:[%s1 + $0x68] sm:$0xf]
  %v170 = vld [vmem:[%s1 + $0x6c] sm:$0xf]
  %v171 = vld [vmem:[%s1 + $0x70] sm:$0xf]
  %v172 = vld [vmem:[%s1 + $0x74] sm:$0xf]
  %v173 = vld [vmem:[%s1 + $0x78] sm:$0xf]
  %v174 = vld [vmem:[%s1 + $0x7c] sm:$0xf]
  %v175 = vld [vmem:[%s1 + $0x80] sm:$0xf]
  %v176 = vld [vmem:[%s1 + $0x84] sm:$0xf]
  %v177 = vld [vmem:[%s1 + $0x88] sm:$0xf]
  %v178 = vld [vmem:[%s1 + $0x8c] sm:$0xf]
  %v179 = vld [vmem:[%s2] sm:$0x1]
  %v181 = vlaneseq
  %v182 = vshrl.u32 %v181, 7
  %v183 = vsub.s32 0, %v182
  %v184 = vrot.slane %v179, %v183
  %v314 = vunpack.c.l.b16 %v15
  %v315 = vunpack.c.h.b16 %v15
  %v316 = vunpack.c.l.b16 %v16
  %v317 = vunpack.c.l.b16 %v17
  %v318 = vunpack.c.h.b16 %v17
  %v319 = vunpack.c.l.b16 %v18
  %v320 = vunpack.c.l.b16 %v19
  %v321 = vunpack.c.h.b16 %v19
  %v322 = vunpack.c.l.b16 %v20
  %v323 = vunpack.c.l.b16 %v21
  %v324 = vunpack.c.h.b16 %v21
  %v325 = vunpack.c.l.b16 %v22
  %v326 = vunpack.c.l.b16 %v23
  %v327 = vunpack.c.h.b16 %v23
  %v328 = vunpack.c.l.b16 %v24
  %v329 = vunpack.c.l.b16 %v25
  %v330 = vunpack.c.h.b16 %v25
  %v331 = vunpack.c.l.b16 %v26
  %v332 = vunpack.c.l.b16 %v27
  %v333 = vunpack.c.h.b16 %v27
  %v334 = vunpack.c.l.b16 %v28
  %v335 = vunpack.c.l.b16 %v29
  %v336 = vunpack.c.h.b16 %v29
  %v337 = vunpack.c.l.b16 %v30
  %v338 = vunpack.c.l.b16 %v31
  %v339 = vunpack.c.h.b16 %v31
  %v340 = vunpack.c.l.b16 %v32
  %v341 = vunpack.c.l.b16 %v33
  %v342 = vunpack.c.h.b16 %v33
  %v343 = vunpack.c.l.b16 %v34
  %v344 = vunpack.c.l.b16 %v35
  %v345 = vunpack.c.h.b16 %v35
  %v346 = vunpack.c.l.b16 %v36
  %v347 = vunpack.c.l.b16 %v37
  %v348 = vunpack.c.h.b16 %v37
  %v349 = vunpack.c.l.b16 %v38
  %v350 = vunpack.c.l.b16 %v39
  %v351 = vunpack.c.h.b16 %v39
  %v352 = vunpack.c.l.b16 %v40
  %v353 = vunpack.c.l.b16 %v41
  %v354 = vunpack.c.h.b16 %v41
  %v355 = vunpack.c.l.b16 %v42
  %v356 = vunpack.c.l.b16 %v43
  %v357 = vunpack.c.h.b16 %v43
  %v358 = vunpack.c.l.b16 %v44
  %v359 = vunpack.c.l.b16 %v45
  %v360 = vunpack.c.h.b16 %v45
  %v361 = vunpack.c.l.b16 %v46
  %v362 = vunpack.c.l.b16 %v47
  %v363 = vunpack.c.h.b16 %v47
  %v364 = vunpack.c.l.b16 %v48
  %v365 = vunpack.c.l.b16 %v49
  %v366 = vunpack.c.h.b16 %v49
  %v367 = vunpack.c.l.b16 %v50
  %v368 = vunpack.c.l.b16 %v51
  %v369 = vunpack.c.h.b16 %v51
  %v370 = vunpack.c.l.b16 %v52
  %v371 = vunpack.c.l.b16 %v53
  %v372 = vunpack.c.h.b16 %v53
  %v373 = vunpack.c.l.b16 %v54
  %v374 = vunpack.c.l.b16 %v55
  %v375 = vunpack.c.h.b16 %v55
  %v376 = vunpack.c.l.b16 %v56
  %v377 = vunpack.c.l.b16 %v57
  %v378 = vunpack.c.h.b16 %v57
  %v379 = vunpack.c.l.b16 %v58
  %v380 = vunpack.c.l.b16 %v59
  %v381 = vunpack.c.h.b16 %v59
  %v382 = vunpack.c.l.b16 %v60
  %v383 = vunpack.c.l.b16 %v61
  %v384 = vunpack.c.h.b16 %v61
  %v385 = vunpack.c.l.b16 %v62
  %v386 = vunpack.c.l.b16 %v63
  %v387 = vunpack.c.h.b16 %v63
  %v388 = vunpack.c.l.b16 %v64
  %v389 = vunpack.c.l.b16 %v65
  %v390 = vunpack.c.h.b16 %v65
  %v391 = vunpack.c.l.b16 %v66
  %v392 = vunpack.c.l.b16 %v67
  %v393 = vunpack.c.h.b16 %v67
  %v394 = vunpack.c.l.b16 %v68
  %v395 = vunpack.c.l.b16 %v69
  %v396 = vunpack.c.h.b16 %v69
  %v397 = vunpack.c.l.b16 %v70
  %v398 = vunpack.c.l.b16 %v71
  %v399 = vunpack.c.h.b16 %v71
  %v400 = vunpack.c.l.b16 %v72
  %v401 = vunpack.c.l.b16 %v73
  %v402 = vunpack.c.h.b16 %v73
  %v403 = vunpack.c.l.b16 %v74
  %v404 = vunpack.c.l.b16 %v75
  %v405 = vunpack.c.h.b16 %v75
  %v406 = vunpack.c.l.b16 %v76
  %v407 = vunpack.c.l.b16 %v77
  %v408 = vunpack.c.h.b16 %v77
  %v409 = vunpack.c.l.b16 %v78
  %v410 = vunpack.c.l.b16 %v79
  %v411 = vunpack.c.h.b16 %v79
  %v412 = vunpack.c.l.b16 %v80
  %v413 = vunpack.c.l.b16 %v81
  %v414 = vunpack.c.h.b16 %v81
  %v415 = vunpack.c.l.b16 %v82
  %v416 = vunpack.c.l.b16 %v83
  %v417 = vunpack.c.h.b16 %v83
  %v418 = vunpack.c.l.b16 %v84
  %v419 = vunpack.c.l.b16 %v85
  %v420 = vunpack.c.h.b16 %v85
  %v421 = vunpack.c.l.b16 %v86
  %v422 = vunpack.c.l.b16 %v87
  %v423 = vunpack.c.h.b16 %v87
  %v424 = vunpack.c.l.b16 %v88
  %v425 = vunpack.c.l.b16 %v89
  %v426 = vunpack.c.h.b16 %v89
  %v427 = vunpack.c.l.b16 %v90
  %v428 = vunpack.c.l.b16 %v91
  %v429 = vunpack.c.h.b16 %v91
  %v430 = vunpack.c.l.b16 %v92
  %v431 = vunpack.c.l.b16 %v93
  %v432 = vunpack.c.h.b16 %v93
  %v433 = vunpack.c.l.b16 %v94
  %v434 = vunpack.c.l.b16 %v95
  %v435 = vunpack.c.h.b16 %v95
  %v436 = vunpack.c.l.b16 %v96
  %v437 = vunpack.c.l.b16 %v97
  %v438 = vunpack.c.h.b16 %v97
  %v439 = vunpack.c.l.b16 %v98
  %v440 = vunpack.c.l.b16 %v99
  %v441 = vunpack.c.h.b16 %v99
  %v442 = vunpack.c.l.b16 %v100
  %v443 = vunpack.c.l.b16 %v101
  %v444 = vunpack.c.h.b16 %v101
  %v445 = vunpack.c.l.b16 %v102
  %v446 = vunpack.c.l.b16 %v103
  %v447 = vunpack.c.h.b16 %v103
  %v448 = vunpack.c.l.b16 %v104
  %v449 = vunpack.c.l.b16 %v105
  %v450 = vunpack.c.h.b16 %v105
  %v451 = vunpack.c.l.b16 %v106
  %v452 = vunpack.c.l.b16 %v107
  %v453 = vunpack.c.h.b16 %v107
  %v454 = vunpack.c.l.b16 %v108
  %v455 = vunpack.c.l.b16 %v109
  %v456 = vunpack.c.h.b16 %v109
  %v457 = vunpack.c.l.b16 %v110
  %v458 = vunpack.c.l.b16 %v111
  %v459 = vunpack.c.h.b16 %v111
  %v460 = vunpack.c.l.b16 %v112
  %v461 = vunpack.c.l.b16 %v113
  %v462 = vunpack.c.h.b16 %v113
  %v463 = vunpack.c.l.b16 %v114
  %v464 = vunpack.c.l.b16 %v115
  %v465 = vunpack.c.h.b16 %v115
  %v466 = vunpack.c.l.b16 %v116
  %v467 = vunpack.c.l.b16 %v117
  %v468 = vunpack.c.h.b16 %v117
  %v469 = vunpack.c.l.b16 %v118
  %v470 = vunpack.c.l.b16 %v119
  %v471 = vunpack.c.h.b16 %v119
  %v472 = vunpack.c.l.b16 %v120
  %v473 = vunpack.c.l.b16 %v121
  %v474 = vunpack.c.h.b16 %v121
  %v475 = vunpack.c.l.b16 %v122
  %v476 = vunpack.c.l.b16 %v123
  %v477 = vunpack.c.h.b16 %v123
  %v478 = vunpack.c.l.b16 %v124
  %v479 = vunpack.c.l.b16 %v125
  %v480 = vunpack.c.h.b16 %v125
  %v481 = vunpack.c.l.b16 %v126
  %v482 = vunpack.c.l.b16 %v127
  %v483 = vunpack.c.h.b16 %v127
  %v484 = vunpack.c.l.b16 %v128
  %v485 = vunpack.c.l.b16 %v129
  %v486 = vunpack.c.h.b16 %v129
  %v487 = vunpack.c.l.b16 %v130
  %v488 = vunpack.c.l.b16 %v131
  %v489 = vunpack.c.h.b16 %v131
  %v490 = vunpack.c.l.b16 %v132
  %v491 = vunpack.c.l.b16 %v133
  %v492 = vunpack.c.h.b16 %v133
  %v493 = vunpack.c.l.b16 %v134
  %v494 = vunpack.c.l.b16 %v135
  %v495 = vunpack.c.h.b16 %v135
  %v496 = vunpack.c.l.b16 %v136
  %v497 = vunpack.c.l.b16 %v137
  %v498 = vunpack.c.h.b16 %v137
  %v499 = vunpack.c.l.b16 %v138
  %v500 = vunpack.c.l.b16 %v139
  %v501 = vunpack.c.h.b16 %v139
  %v502 = vunpack.c.l.b16 %v140
  %v503 = vunpack.c.l.b16 %v141
  %v504 = vunpack.c.h.b16 %v141
  %v505 = vunpack.c.l.b16 %v142
  %v506 = vpack.c.b16 %v317, %v314
  %v507 = vpack.c.b16 %v318, %v315
  %v508 = vpack.c.b16 %v319, %v316
  %v509 = vpack.c.b16 %v323, %v320
  %v510 = vpack.c.b16 %v324, %v321
  %v511 = vpack.c.b16 %v325, %v322
  %v512 = vpack.c.b16 %v329, %v326
  %v513 = vpack.c.b16 %v330, %v327
  %v514 = vpack.c.b16 %v331, %v328
  %v515 = vpack.c.b16 %v335, %v332
  %v516 = vpack.c.b16 %v336, %v333
  %v517 = vpack.c.b16 %v337, %v334
  %v518 = vpack.c.b16 %v341, %v338
  %v519 = vpack.c.b16 %v342, %v339
  %v520 = vpack.c.b16 %v343, %v340
  %v521 = vpack.c.b16 %v347, %v344
  %v522 = vpack.c.b16 %v348, %v345
  %v523 = vpack.c.b16 %v349, %v346
  %v524 = vpack.c.b16 %v353, %v350
  %v525 = vpack.c.b16 %v354, %v351
  %v526 = vpack.c.b16 %v355, %v352
  %v527 = vpack.c.b16 %v359, %v356
  %v528 = vpack.c.b16 %v360, %v357
  %v529 = vpack.c.b16 %v361, %v358
  %v530 = vpack.c.b16 %v365, %v362
  %v531 = vpack.c.b16 %v366, %v363
  %v532 = vpack.c.b16 %v367, %v364
  %v533 = vpack.c.b16 %v371, %v368
  %v534 = vpack.c.b16 %v372, %v369
  %v535 = vpack.c.b16 %v373, %v370
  %v536 = vpack.c.b16 %v377, %v374
  %v537 = vpack.c.b16 %v378, %v375
  %v538 = vpack.c.b16 %v379, %v376
  %v539 = vpack.c.b16 %v383, %v380
  %v540 = vpack.c.b16 %v384, %v381
  %v541 = vpack.c.b16 %v385, %v382
  %v542 = vpack.c.b16 %v389, %v386
  %v543 = vpack.c.b16 %v390, %v387
  %v544 = vpack.c.b16 %v391, %v388
  %v545 = vpack.c.b16 %v395, %v392
  %v546 = vpack.c.b16 %v396, %v393
  %v547 = vpack.c.b16 %v397, %v394
  %v548 = vpack.c.b16 %v401, %v398
  %v549 = vpack.c.b16 %v402, %v399
  %v550 = vpack.c.b16 %v403, %v400
  %v551 = vpack.c.b16 %v407, %v404
  %v552 = vpack.c.b16 %v408, %v405
  %v553 = vpack.c.b16 %v409, %v406
  %v554 = vpack.c.b16 %v413, %v410
  %v555 = vpack.c.b16 %v414, %v411
  %v556 = vpack.c.b16 %v415, %v412
  %v557 = vpack.c.b16 %v419, %v416
  %v558 = vpack.c.b16 %v420, %v417
  %v559 = vpack.c.b16 %v421, %v418
  %v560 = vpack.c.b16 %v425, %v422
  %v561 = vpack.c.b16 %v426, %v423
  %v562 = vpack.c.b16 %v427, %v424
  %v563 = vpack.c.b16 %v431, %v428
  %v564 = vpack.c.b16 %v432, %v429
  %v565 = vpack.c.b16 %v433, %v430
  %v566 = vpack.c.b16 %v437, %v434
  %v567 = vpack.c.b16 %v438, %v435
  %v568 = vpack.c.b16 %v439, %v436
  %v569 = vpack.c.b16 %v443, %v440
  %v570 = vpack.c.b16 %v444, %v441
  %v571 = vpack.c.b16 %v445, %v442
  %v572 = vpack.c.b16 %v449, %v446
  %v573 = vpack.c.b16 %v450, %v447
  %v574 = vpack.c.b16 %v451, %v448
  %v575 = vpack.c.b16 %v455, %v452
  %v576 = vpack.c.b16 %v456, %v453
  %v577 = vpack.c.b16 %v457, %v454
  %v578 = vpack.c.b16 %v461, %v458
  %v579 = vpack.c.b16 %v462, %v459
  %v580 = vpack.c.b16 %v463, %v460
  %v581 = vpack.c.b16 %v467, %v464
  %v582 = vpack.c.b16 %v468, %v465
  %v583 = vpack.c.b16 %v469, %v466
  %v584 = vpack.c.b16 %v473, %v470
  %v585 = vpack.c.b16 %v474, %v471
  %v586 = vpack.c.b16 %v475, %v472
  %v587 = vpack.c.b16 %v479, %v476
  %v588 = vpack.c.b16 %v480, %v477
  %v589 = vpack.c.b16 %v481, %v478
  %v590 = vpack.c.b16 %v485, %v482
  %v591 = vpack.c.b16 %v486, %v483
  %v592 = vpack.c.b16 %v487, %v484
  %v593 = vpack.c.b16 %v491, %v488
  %v594 = vpack.c.b16 %v492, %v489
  %v595 = vpack.c.b16 %v493, %v490
  %v596 = vpack.c.b16 %v497, %v494
  %v597 = vpack.c.b16 %v498, %v495
  %v598 = vpack.c.b16 %v499, %v496
  %v599 = vpack.c.b16 %v503, %v500
  %v600 = vpack.c.b16 %v504, %v501
  %v601 = vpack.c.b16 %v505, %v502
  %v702 = vunpack.c.l.b16 %v143
  %v703 = vunpack.c.l.b16 %v144
  %v704 = vunpack.c.l.b16 %v145
  %v705 = vunpack.c.l.b16 %v146
  %v706 = vunpack.c.l.b16 %v147
  %v707 = vunpack.c.l.b16 %v148
  %v708 = vunpack.c.l.b16 %v149
  %v709 = vunpack.c.l.b16 %v150
  %v710 = vunpack.c.l.b16 %v151
  %v711 = vunpack.c.l.b16 %v152
  %v712 = vunpack.c.l.b16 %v153
  %v713 = vunpack.c.l.b16 %v154
  %v714 = vunpack.c.l.b16 %v155
  %v715 = vunpack.c.l.b16 %v156
  %v716 = vunpack.c.l.b16 %v157
  %v717 = vunpack.c.l.b16 %v158
  %v718 = vunpack.c.l.b16 %v159
  %v719 = vunpack.c.l.b16 %v160
  %v720 = vunpack.c.l.b16 %v161
  %v721 = vunpack.c.l.b16 %v162
  %v722 = vunpack.c.l.b16 %v163
  %v723 = vunpack.c.l.b16 %v164
  %v724 = vunpack.c.l.b16 %v165
  %v725 = vunpack.c.l.b16 %v166
  %v726 = vunpack.c.l.b16 %v167
  %v727 = vunpack.c.l.b16 %v168
  %v728 = vunpack.c.l.b16 %v169
  %v729 = vunpack.c.l.b16 %v170
  %v730 = vunpack.c.l.b16 %v171
  %v731 = vunpack.c.l.b16 %v172
  %v732 = vunpack.c.l.b16 %v173
  %v733 = vunpack.c.l.b16 %v174
  %v734 = vunpack.c.l.b16 %v175
  %v735 = vunpack.c.l.b16 %v176
  %v736 = vunpack.c.l.b16 %v177
  %v737 = vunpack.c.l.b16 %v178
  %v738 = vpack.c.b16 %v703, %v702
  %v739 = vpack.c.b16 %v705, %v704
  %v740 = vpack.c.b16 %v707, %v706
  %v741 = vpack.c.b16 %v709, %v708
  %v742 = vpack.c.b16 %v711, %v710
  %v743 = vpack.c.b16 %v713, %v712
  %v744 = vpack.c.b16 %v715, %v714
  %v745 = vpack.c.b16 %v717, %v716
  %v746 = vpack.c.b16 %v719, %v718
  %v747 = vpack.c.b16 %v721, %v720
  %v748 = vpack.c.b16 %v723, %v722
  %v749 = vpack.c.b16 %v725, %v724
  %v750 = vpack.c.b16 %v727, %v726
  %v751 = vpack.c.b16 %v729, %v728
  %v752 = vpack.c.b16 %v731, %v730
  %v753 = vpack.c.b16 %v733, %v732
  %v754 = vpack.c.b16 %v735, %v734
  %v755 = vpack.c.b16 %v737, %v736
  %vm774 = vcmask 261120
  %v776 = vsel %vm774, %v508, 0
  %v779 = vsel %vm774, %v511, 0
  %v782 = vsel %vm774, %v514, 0
  %v785 = vsel %vm774, %v517, 0
  %v788 = vsel %vm774, %v520, 0
  %v791 = vsel %vm774, %v523, 0
  %v794 = vsel %vm774, %v526, 0
  %v797 = vsel %vm774, %v529, 0
  %v800 = vsel %vm774, %v532, 0
  %v803 = vsel %vm774, %v535, 0
  %v806 = vsel %vm774, %v538, 0
  %v809 = vsel %vm774, %v541, 0
  %v812 = vsel %vm774, %v544, 0
  %v815 = vsel %vm774, %v547, 0
  %v818 = vsel %vm774, %v550, 0
  %v821 = vsel %vm774, %v553, 0
  %v824 = vsel %vm774, %v556, 0
  %v827 = vsel %vm774, %v559, 0
  %v830 = vsel %vm774, %v562, 0
  %v833 = vsel %vm774, %v565, 0
  %v836 = vsel %vm774, %v568, 0
  %v839 = vsel %vm774, %v571, 0
  %v842 = vsel %vm774, %v574, 0
  %v845 = vsel %vm774, %v577, 0
  %v848 = vsel %vm774, %v580, 0
  %v851 = vsel %vm774, %v583, 0
  %v854 = vsel %vm774, %v586, 0
  %v857 = vsel %vm774, %v589, 0
  %v860 = vsel %vm774, %v592, 0
  %v863 = vsel %vm774, %v595, 0
  %v866 = vsel %vm774, %v598, 0
  %v869 = vsel %vm774, %v601, 0
  %871 = vmatprep.subr.bf16.mxu0 0
  %872 = vmatpush1.bf16.msra.mxu0 %v738
  %873 = vmatprep.subr.bf16.mxu0 0
  %874 = vmatpush1.bf16.msra.mxu0 %v739
  %875 = vmatprep.subr.bf16.mxu0 0
  %876 = vmatpush1.bf16.msra.mxu0 %v740
  %877 = vmatprep.subr.bf16.mxu0 0
  %878 = vmatpush1.bf16.msra.mxu0 %v741
  %879 = vmatprep.subr.bf16.mxu0 0
  %880 = vmatpush1.bf16.msra.mxu0 %v742
  %881 = vmatprep.subr.bf16.mxu0 0
  %882 = vmatpush1.bf16.msra.mxu0 %v743
  %883 = vmatprep.subr.bf16.mxu0 0
  %884 = vmatpush1.bf16.msra.mxu0 %v744
  %885 = vmatprep.subr.bf16.mxu0 0
  %886 = vmatpush1.bf16.msra.mxu0 %v745
  %887 = vmatprep.subr.bf16.mxu0 0
  %888 = vmatpush1.bf16.msra.mxu0 %v746
  %889 = vmatprep.subr.bf16.mxu0 0
  %890 = vmatpush1.bf16.msra.mxu0 %v747
  %891 = vmatprep.subr.bf16.mxu0 0
  %892 = vmatpush1.bf16.msra.mxu0 %v748
  %893 = vmatprep.subr.bf16.mxu0 0
  %894 = vmatpush1.bf16.msra.mxu0 %v749
  %895 = vmatprep.subr.bf16.mxu0 0
  %896 = vmatpush1.bf16.msra.mxu0 %v750
  %897 = vmatprep.subr.bf16.mxu0 0
  %898 = vmatpush1.bf16.msra.mxu0 %v751
  %899 = vmatprep.subr.bf16.mxu0 0
  %900 = vmatpush1.bf16.msra.mxu0 %v752
  %901 = vmatprep.subr.bf16.mxu0 0
  %902 = vmatpush1.bf16.msra.mxu0 %v753
  %903 = vmatprep.mubr.bf16.mxu0 %v507
  %904 = vmatmul.mubr.bf16.gmra.mrb[0].mxu0 %v506
  %v905 = vpop.f32.mrb[0].mxu0
  %v906 = vadd.f32 %v184, %v905
  %v907 = vpop.f32.mrb[0].mxu0
  %v908 = vpop.f32.mrb[0].mxu0
  %v909 = vadd.f32 %v184, %v908
  %v910 = vpop.f32.mrb[0].mxu0
  %911 = vmatprep.mubr.bf16.mxu0 %v510
  %912 = vmatmul.mubr.bf16.gmra.mrb[0].mxu0 %v509
  %v913 = vpop.f32.mrb[0].mxu0
  %v914 = vadd.f32 %v184, %v913
  %v915 = vpop.f32.mrb[0].mxu0
  %v916 = vpop.f32.mrb[0].mxu0
  %v917 = vadd.f32 %v184, %v916
  %v918 = vpop.f32.mrb[0].mxu0
  %919 = vmatprep.mubr.bf16.mxu0 %v513
  %920 = vmatmul.mubr.bf16.gmra.mrb[0].mxu0 %v512
  %v921 = vpop.f32.mrb[0].mxu0
  %v922 = vadd.f32 %v184, %v921
  %v923 = vpop.f32.mrb[0].mxu0
  %v924 = vpop.f32.mrb[0].mxu0
  %v925 = vadd.f32 %v184, %v924
  %v926 = vpop.f32.mrb[0].mxu0
  %927 = vmatprep.mubr.bf16.mxu0 %v516
  %928 = vmatmul.mubr.bf16.gmra.mrb[0].mxu0 %v515
  %v929 = vpop.f32.mrb[0].mxu0
  %v930 = vadd.f32 %v184, %v929
  %v931 = vpop.f32.mrb[0].mxu0
  %v932 = vpop.f32.mrb[0].mxu0
  %v933 = vadd.f32 %v184, %v932
  %v934 = vpop.f32.mrb[0].mxu0
  %935 = vmatprep.mubr.bf16.mxu0 %v519
  %936 = vmatmul.mubr.bf16.gmra.mrb[0].mxu0 %v518
  %v937 = vpop.f32.mrb[0].mxu0
  %v938 = vadd.f32 %v184, %v937
  %v939 = vpop.f32.mrb[0].mxu0
  %v940 = vpop.f32.mrb[0].mxu0
  %v941 = vadd.f32 %v184, %v940
  %v942 = vpop.f32.mrb[0].mxu0
  %943 = vmatprep.mubr.bf16.mxu0 %v522
  %944 = vmatmul.mubr.bf16.gmra.mrb[0].mxu0 %v521
  %v945 = vpop.f32.mrb[0].mxu0
  %v946 = vadd.f32 %v184, %v945
  %v947 = vpop.f32.mrb[0].mxu0
  %v948 = vpop.f32.mrb[0].mxu0
  %v949 = vadd.f32 %v184, %v948
  %v950 = vpop.f32.mrb[0].mxu0
  %951 = vmatprep.mubr.bf16.mxu0 %v525
  %952 = vmatmul.mubr.bf16.gmra.mrb[0].mxu0 %v524
  %v953 = vpop.f32.mrb[0].mxu0
  %v954 = vadd.f32 %v184, %v953
  %v955 = vpop.f32.mrb[0].mxu0
  %v956 = vpop.f32.mrb[0].mxu0
  %v957 = vadd.f32 %v184, %v956
  %v958 = vpop.f32.mrb[0].mxu0
  %959 = vmatprep.mubr.bf16.mxu0 %v528
  %960 = vmatmul.mubr.bf16.gmra.mrb[0].mxu0 %v527
  %v961 = vpop.f32.mrb[0].mxu0
  %v962 = vadd.f32 %v184, %v961
  %v963 = vpop.f32.mrb[0].mxu0
  %v964 = vpop.f32.mrb[0].mxu0
  %v965 = vadd.f32 %v184, %v964
  %v966 = vpop.f32.mrb[0].mxu0
  %967 = vmatprep.mubr.bf16.mxu0 %v531
  %968 = vmatmul.mubr.bf16.gmra.mrb[0].mxu0 %v530
  %v969 = vpop.f32.mrb[0].mxu0
  %v970 = vadd.f32 %v184, %v969
  %v971 = vpop.f32.mrb[0].mxu0
  %v972 = vpop.f32.mrb[0].mxu0
  %v973 = vadd.f32 %v184, %v972
  %v974 = vpop.f32.mrb[0].mxu0
  %975 = vmatprep.mubr.bf16.mxu0 %v534
  %976 = vmatmul.mubr.bf16.gmra.mrb[0].mxu0 %v533
  %v977 = vpop.f32.mrb[0].mxu0
  %v978 = vadd.f32 %v184, %v977
  %v979 = vpop.f32.mrb[0].mxu0
  %v980 = vpop.f32.mrb[0].mxu0
  %v981 = vadd.f32 %v184, %v980
  %v982 = vpop.f32.mrb[0].mxu0
  %983 = vmatprep.mubr.bf16.mxu0 %v537
  %984 = vmatmul.mubr.bf16.gmra.mrb[0].mxu0 %v536
  %v985 = vpop.f32.mrb[0].mxu0
  %v986 = vadd.f32 %v184, %v985
  %v987 = vpop.f32.mrb[0].mxu0
  %v988 = vpop.f32.mrb[0].mxu0
  %v989 = vadd.f32 %v184, %v988
  %v990 = vpop.f32.mrb[0].mxu0
  %991 = vmatprep.mubr.bf16.mxu0 %v540
  %992 = vmatmul.mubr.bf16.gmra.mrb[0].mxu0 %v539
  %v993 = vpop.f32.mrb[0].mxu0
  %v994 = vadd.f32 %v184, %v993
  %v995 = vpop.f32.mrb[0].mxu0
  %v996 = vpop.f32.mrb[0].mxu0
  %v997 = vadd.f32 %v184, %v996
  %v998 = vpop.f32.mrb[0].mxu0
  %999 = vmatprep.mubr.bf16.mxu0 %v543
  %1000 = vmatmul.mubr.bf16.gmra.mrb[0].mxu0 %v542
  %v1001 = vpop.f32.mrb[0].mxu0
  %v1002 = vadd.f32 %v184, %v1001
  %v1003 = vpop.f32.mrb[0].mxu0
  %v1004 = vpop.f32.mrb[0].mxu0
  %v1005 = vadd.f32 %v184, %v1004
  %v1006 = vpop.f32.mrb[0].mxu0
  %1007 = vmatprep.mubr.bf16.mxu0 %v546
  %1008 = vmatmul.mubr.bf16.gmra.mrb[0].mxu0 %v545
  %v1009 = vpop.f32.mrb[0].mxu0
  %v1010 = vadd.f32 %v184, %v1009
  %v1011 = vpop.f32.mrb[0].mxu0
  %v1012 = vpop.f32.mrb[0].mxu0
  %v1013 = vadd.f32 %v184, %v1012
  %v1014 = vpop.f32.mrb[0].mxu0
  %1015 = vmatprep.mubr.bf16.mxu0 %v549
  %1016 = vmatmul.mubr.bf16.gmra.mrb[0].mxu0 %v548
  %v1017 = vpop.f32.mrb[0].mxu0
  %v1018 = vadd.f32 %v184, %v1017
  %v1019 = vpop.f32.mrb[0].mxu0
  %v1020 = vpop.f32.mrb[0].mxu0
  %v1021 = vadd.f32 %v184, %v1020
  %v1022 = vpop.f32.mrb[0].mxu0
  %1023 = vmatprep.mubr.bf16.mxu0 %v552
  %1024 = vmatmul.mubr.bf16.gmra.mrb[0].mxu0 %v551
  %v1025 = vpop.f32.mrb[0].mxu0
  %v1026 = vadd.f32 %v184, %v1025
  %v1027 = vpop.f32.mrb[0].mxu0
  %v1028 = vpop.f32.mrb[0].mxu0
  %v1029 = vadd.f32 %v184, %v1028
  %v1030 = vpop.f32.mrb[0].mxu0
  %1031 = vmatprep.mubr.bf16.mxu0 %v555
  %1032 = vmatmul.mubr.bf16.gmra.mrb[0].mxu0 %v554
  %v1033 = vpop.f32.mrb[0].mxu0
  %v1034 = vadd.f32 %v184, %v1033
  %v1035 = vpop.f32.mrb[0].mxu0
  %v1036 = vpop.f32.mrb[0].mxu0
  %v1037 = vadd.f32 %v184, %v1036
  %v1038 = vpop.f32.mrb[0].mxu0
  %1039 = vmatprep.mubr.bf16.mxu0 %v558
  %1040 = vmatmul.mubr.bf16.gmra.mrb[0].mxu0 %v557
  %v1041 = vpop.f32.mrb[0].mxu0
  %v1042 = vadd.f32 %v184, %v1041
  %v1043 = vpop.f32.mrb[0].mxu0
  %v1044 = vpop.f32.mrb[0].mxu0
  %v1045 = vadd.f32 %v184, %v1044
  %v1046 = vpop.f32.mrb[0].mxu0
  %1047 = vmatprep.mubr.bf16.mxu0 %v561
  %1048 = vmatmul.mubr.bf16.gmra.mrb[0].mxu0 %v560
  %v1049 = vpop.f32.mrb[0].mxu0
  %v1050 = vadd.f32 %v184, %v1049
  %v1051 = vpop.f32.mrb[0].mxu0
  %v1052 = vpop.f32.mrb[0].mxu0
  %v1053 = vadd.f32 %v184, %v1052
  %v1054 = vpop.f32.mrb[0].mxu0
  %1055 = vmatprep.mubr.bf16.mxu0 %v564
  %1056 = vmatmul.mubr.bf16.gmra.mrb[0].mxu0 %v563
  %v1057 = vpop.f32.mrb[0].mxu0
  %v1058 = vadd.f32 %v184, %v1057
  %v1059 = vpop.f32.mrb[0].mxu0
  %v1060 = vpop.f32.mrb[0].mxu0
  %v1061 = vadd.f32 %v184, %v1060
  %v1062 = vpop.f32.mrb[0].mxu0
  %1063 = vmatprep.mubr.bf16.mxu0 %v567
  %1064 = vmatmul.mubr.bf16.gmra.mrb[0].mxu0 %v566
  %v1065 = vpop.f32.mrb[0].mxu0
  %v1066 = vadd.f32 %v184, %v1065
  %v1067 = vpop.f32.mrb[0].mxu0
  %v1068 = vpop.f32.mrb[0].mxu0
  %v1069 = vadd.f32 %v184, %v1068
  %v1070 = vpop.f32.mrb[0].mxu0
  %1071 = vmatprep.mubr.bf16.mxu0 %v570
  %1072 = vmatmul.mubr.bf16.gmra.mrb[0].mxu0 %v569
  %v1073 = vpop.f32.mrb[0].mxu0
  %v1074 = vadd.f32 %v184, %v1073
  %v1075 = vpop.f32.mrb[0].mxu0
  %v1076 = vpop.f32.mrb[0].mxu0
  %v1077 = vadd.f32 %v184, %v1076
  %v1078 = vpop.f32.mrb[0].mxu0
  %1079 = vmatprep.mubr.bf16.mxu0 %v573
  %1080 = vmatmul.mubr.bf16.gmra.mrb[0].mxu0 %v572
  %v1081 = vpop.f32.mrb[0].mxu0
  %v1082 = vadd.f32 %v184, %v1081
  %v1083 = vpop.f32.mrb[0].mxu0
  %v1084 = vpop.f32.mrb[0].mxu0
  %v1085 = vadd.f32 %v184, %v1084
  %v1086 = vpop.f32.mrb[0].mxu0
  %1087 = vmatprep.mubr.bf16.mxu0 %v576
  %1088 = vmatmul.mubr.bf16.gmra.mrb[0].mxu0 %v575
  %v1089 = vpop.f32.mrb[0].mxu0
  %v1090 = vadd.f32 %v184, %v1089
  %v1091 = vpop.f32.mrb[0].mxu0
  %v1092 = vpop.f32.mrb[0].mxu0
  %v1093 = vadd.f32 %v184, %v1092
  %v1094 = vpop.f32.mrb[0].mxu0
  %1095 = vmatprep.mubr.bf16.mxu0 %v579
  %1096 = vmatmul.mubr.bf16.gmra.mrb[0].mxu0 %v578
  %v1097 = vpop.f32.mrb[0].mxu0
  %v1098 = vadd.f32 %v184, %v1097
  %v1099 = vpop.f32.mrb[0].mxu0
  %v1100 = vpop.f32.mrb[0].mxu0
  %v1101 = vadd.f32 %v184, %v1100
  %v1102 = vpop.f32.mrb[0].mxu0
  %1103 = vmatprep.mubr.bf16.mxu0 %v582
  %1104 = vmatmul.mubr.bf16.gmra.mrb[0].mxu0 %v581
  %v1105 = vpop.f32.mrb[0].mxu0
  %v1106 = vadd.f32 %v184, %v1105
  %v1107 = vpop.f32.mrb[0].mxu0
  %v1108 = vpop.f32.mrb[0].mxu0
  %v1109 = vadd.f32 %v184, %v1108
  %v1110 = vpop.f32.mrb[0].mxu0
  %1111 = vmatprep.mubr.bf16.mxu0 %v585
  %1112 = vmatmul.mubr.bf16.gmra.mrb[0].mxu0 %v584
  %v1113 = vpop.f32.mrb[0].mxu0
  %v1114 = vadd.f32 %v184, %v1113
  %v1115 = vpop.f32.mrb[0].mxu0
  %v1116 = vpop.f32.mrb[0].mxu0
  %v1117 = vadd.f32 %v184, %v1116
  %v1118 = vpop.f32.mrb[0].mxu0
  %1119 = vmatprep.mubr.bf16.mxu0 %v588
  %1120 = vmatmul.mubr.bf16.gmra.mrb[0].mxu0 %v587
  %v1121 = vpop.f32.mrb[0].mxu0
  %v1122 = vadd.f32 %v184, %v1121
  %v1123 = vpop.f32.mrb[0].mxu0
  %v1124 = vpop.f32.mrb[0].mxu0
  %v1125 = vadd.f32 %v184, %v1124
  %v1126 = vpop.f32.mrb[0].mxu0
  %1127 = vmatprep.mubr.bf16.mxu0 %v591
  %1128 = vmatmul.mubr.bf16.gmra.mrb[0].mxu0 %v590
  %v1129 = vpop.f32.mrb[0].mxu0
  %v1130 = vadd.f32 %v184, %v1129
  %v1131 = vpop.f32.mrb[0].mxu0
  %v1132 = vpop.f32.mrb[0].mxu0
  %v1133 = vadd.f32 %v184, %v1132
  %v1134 = vpop.f32.mrb[0].mxu0
  %1135 = vmatprep.mubr.bf16.mxu0 %v594
  %1136 = vmatmul.mubr.bf16.gmra.mrb[0].mxu0 %v593
  %v1137 = vpop.f32.mrb[0].mxu0
  %v1138 = vadd.f32 %v184, %v1137
  %v1139 = vpop.f32.mrb[0].mxu0
  %v1140 = vpop.f32.mrb[0].mxu0
  %v1141 = vadd.f32 %v184, %v1140
  %v1142 = vpop.f32.mrb[0].mxu0
  %1143 = vmatprep.mubr.bf16.mxu0 %v597
  %1144 = vmatmul.mubr.bf16.gmra.mrb[0].mxu0 %v596
  %v1145 = vpop.f32.mrb[0].mxu0
  %v1146 = vadd.f32 %v184, %v1145
  %v1147 = vpop.f32.mrb[0].mxu0
  %v1148 = vpop.f32.mrb[0].mxu0
  %v1149 = vadd.f32 %v184, %v1148
  %v1150 = vpop.f32.mrb[0].mxu0
  %1151 = vmatprep.mubr.bf16.mxu0 %v600
  %1152 = vmatmul.mubr.bf16.gmra.mrb[0].mxu0 %v599
  %v1153 = vpop.f32.mrb[0].mxu0
  %v1154 = vadd.f32 %v184, %v1153
  %v1155 = vpop.f32.mrb[0].mxu0
  %v1156 = vpop.f32.mrb[0].mxu0
  %v1157 = vadd.f32 %v184, %v1156
  %v1158 = vpop.f32.mrb[0].mxu0
  %1159 = vdwg.mxu0
  %1160 = vmatprep.subr.bf16.mxu0 0
  %1161 = vmatpush1.bf16.msra.mxu0 %v754
  %1162 = vmatprep.subr.bf16.mxu0 0
  %1163 = vmatpush1.bf16.msra.mxu0 %v755
  %1164 = vmatprep.subr.bf16.mxu0 0
  %1165 = vmatpush1.bf16.msra.mxu0 0
  %1166 = vmatprep.subr.bf16.mxu0 0
  %1167 = vmatpush1.bf16.msra.mxu0 0
  %1168 = vmatprep.subr.bf16.mxu0 0
  %1169 = vmatpush1.bf16.msra.mxu0 0
  %1170 = vmatprep.subr.bf16.mxu0 0
  %1171 = vmatpush1.bf16.msra.mxu0 0
  %1172 = vmatprep.subr.bf16.mxu0 0
  %1173 = vmatpush1.bf16.msra.mxu0 0
  %1174 = vmatprep.subr.bf16.mxu0 0
  %1175 = vmatpush1.bf16.msra.mxu0 0
  %1176 = vmatprep.subr.bf16.mxu0 0
  %1177 = vmatpush1.bf16.msra.mxu0 0
  %1178 = vmatprep.subr.bf16.mxu0 0
  %1179 = vmatpush1.bf16.msra.mxu0 0
  %1180 = vmatprep.subr.bf16.mxu0 0
  %1181 = vmatpush1.bf16.msra.mxu0 0
  %1182 = vmatprep.subr.bf16.mxu0 0
  %1183 = vmatpush1.bf16.msra.mxu0 0
  %1184 = vmatprep.subr.bf16.mxu0 0
  %1185 = vmatpush1.bf16.msra.mxu0 0
  %1186 = vmatprep.subr.bf16.mxu0 0
  %1187 = vmatpush1.bf16.msra.mxu0 0
  %1188 = vmatprep.subr.bf16.mxu0 0
  %1189 = vmatpush1.bf16.msra.mxu0 0
  %1190 = vmatprep.subr.bf16.mxu0 0
  %1191 = vmatpush1.bf16.msra.mxu0 0
  %1192 = vmatprep.mubr.bf16.mxu0 0
  %1193 = vmatmul.mubr.bf16.gmra.mrb[0].mxu0 %v776
  %v1194 = vpop.f32.mrb[0].mxu0
  %v1195 = vadd.f32 %v906, %v1194
  %v1196 = vpop.f32.mrb[0].mxu0
  %v1197 = vpop.f32.mrb[0].mxu0
  %v1198 = vadd.f32 %v909, %v1197
  %v1199 = vpop.f32.mrb[0].mxu0
  %1200 = vmatprep.mubr.bf16.mxu0 0
  %1201 = vmatmul.mubr.bf16.gmra.mrb[0].mxu0 %v779
  %v1202 = vpop.f32.mrb[0].mxu0
  %v1203 = vadd.f32 %v914, %v1202
  %v1204 = vpop.f32.mrb[0].mxu0
  %v1205 = vpop.f32.mrb[0].mxu0
  %v1206 = vadd.f32 %v917, %v1205
  %v1207 = vpop.f32.mrb[0].mxu0
  %1208 = vmatprep.mubr.bf16.mxu0 0
  %1209 = vmatmul.mubr.bf16.gmra.mrb[0].mxu0 %v782
  %v1210 = vpop.f32.mrb[0].mxu0
  %v1211 = vadd.f32 %v922, %v1210
  %v1212 = vpop.f32.mrb[0].mxu0
  %v1213 = vpop.f32.mrb[0].mxu0
  %v1214 = vadd.f32 %v925, %v1213
  %v1215 = vpop.f32.mrb[0].mxu0
  %1216 = vmatprep.mubr.bf16.mxu0 0
  %1217 = vmatmul.mubr.bf16.gmra.mrb[0].mxu0 %v785
  %v1218 = vpop.f32.mrb[0].mxu0
  %v1219 = vadd.f32 %v930, %v1218
  %v1220 = vpop.f32.mrb[0].mxu0
  %v1221 = vpop.f32.mrb[0].mxu0
  %v1222 = vadd.f32 %v933, %v1221
  %v1223 = vpop.f32.mrb[0].mxu0
  %1224 = vmatprep.mubr.bf16.mxu0 0
  %1225 = vmatmul.mubr.bf16.gmra.mrb[0].mxu0 %v788
  %v1226 = vpop.f32.mrb[0].mxu0
  %v1227 = vadd.f32 %v938, %v1226
  %v1228 = vpop.f32.mrb[0].mxu0
  %v1229 = vpop.f32.mrb[0].mxu0
  %v1230 = vadd.f32 %v941, %v1229
  %v1231 = vpop.f32.mrb[0].mxu0
  %1232 = vmatprep.mubr.bf16.mxu0 0
  %1233 = vmatmul.mubr.bf16.gmra.mrb[0].mxu0 %v791
  %v1234 = vpop.f32.mrb[0].mxu0
  %v1235 = vadd.f32 %v946, %v1234
  %v1236 = vpop.f32.mrb[0].mxu0
  %v1237 = vpop.f32.mrb[0].mxu0
  %v1238 = vadd.f32 %v949, %v1237
  %v1239 = vpop.f32.mrb[0].mxu0
  %1240 = vmatprep.mubr.bf16.mxu0 0
  %1241 = vmatmul.mubr.bf16.gmra.mrb[0].mxu0 %v794
  %v1242 = vpop.f32.mrb[0].mxu0
  %v1243 = vadd.f32 %v954, %v1242
  %v1244 = vpop.f32.mrb[0].mxu0
  %v1245 = vpop.f32.mrb[0].mxu0
  %v1246 = vadd.f32 %v957, %v1245
  %v1247 = vpop.f32.mrb[0].mxu0
  %1248 = vmatprep.mubr.bf16.mxu0 0
  %1249 = vmatmul.mubr.bf16.gmra.mrb[0].mxu0 %v797
  %v1250 = vpop.f32.mrb[0].mxu0
  %v1251 = vadd.f32 %v962, %v1250
  %v1252 = vpop.f32.mrb[0].mxu0
  %v1253 = vpop.f32.mrb[0].mxu0
  %v1254 = vadd.f32 %v965, %v1253
  %v1255 = vpop.f32.mrb[0].mxu0
  %1256 = vmatprep.mubr.bf16.mxu0 0
  %1257 = vmatmul.mubr.bf16.gmra.mrb[0].mxu0 %v800
  %v1258 = vpop.f32.mrb[0].mxu0
  %v1259 = vadd.f32 %v970, %v1258
  %v1260 = vpop.f32.mrb[0].mxu0
  %v1261 = vpop.f32.mrb[0].mxu0
  %v1262 = vadd.f32 %v973, %v1261
  %v1263 = vpop.f32.mrb[0].mxu0
  %1264 = vmatprep.mubr.bf16.mxu0 0
  %1265 = vmatmul.mubr.bf16.gmra.mrb[0].mxu0 %v803
  %v1266 = vpop.f32.mrb[0].mxu0
  %v1267 = vadd.f32 %v978, %v1266
  %v1268 = vpop.f32.mrb[0].mxu0
  %v1269 = vpop.f32.mrb[0].mxu0
  %v1270 = vadd.f32 %v981, %v1269
  %v1271 = vpop.f32.mrb[0].mxu0
  %1272 = vmatprep.mubr.bf16.mxu0 0
  %1273 = vmatmul.mubr.bf16.gmra.mrb[0].mxu0 %v806
  %v1274 = vpop.f32.mrb[0].mxu0
  %v1275 = vadd.f32 %v986, %v1274
  %v1276 = vpop.f32.mrb[0].mxu0
  %v1277 = vpop.f32.mrb[0].mxu0
  %v1278 = vadd.f32 %v989, %v1277
  %v1279 = vpop.f32.mrb[0].mxu0
  %1280 = vmatprep.mubr.bf16.mxu0 0
  %1281 = vmatmul.mubr.bf16.gmra.mrb[0].mxu0 %v809
  %v1282 = vpop.f32.mrb[0].mxu0
  %v1283 = vadd.f32 %v994, %v1282
  %v1284 = vpop.f32.mrb[0].mxu0
  %v1285 = vpop.f32.mrb[0].mxu0
  %v1286 = vadd.f32 %v997, %v1285
  %v1287 = vpop.f32.mrb[0].mxu0
  %1288 = vmatprep.mubr.bf16.mxu0 0
  %1289 = vmatmul.mubr.bf16.gmra.mrb[0].mxu0 %v812
  %v1290 = vpop.f32.mrb[0].mxu0
  %v1291 = vadd.f32 %v1002, %v1290
  %v1292 = vpop.f32.mrb[0].mxu0
  %v1293 = vpop.f32.mrb[0].mxu0
  %v1294 = vadd.f32 %v1005, %v1293
  %v1295 = vpop.f32.mrb[0].mxu0
  %1296 = vmatprep.mubr.bf16.mxu0 0
  %1297 = vmatmul.mubr.bf16.gmra.mrb[0].mxu0 %v815
  %v1298 = vpop.f32.mrb[0].mxu0
  %v1299 = vadd.f32 %v1010, %v1298
  %v1300 = vpop.f32.mrb[0].mxu0
  %v1301 = vpop.f32.mrb[0].mxu0
  %v1302 = vadd.f32 %v1013, %v1301
  %v1303 = vpop.f32.mrb[0].mxu0
  %1304 = vmatprep.mubr.bf16.mxu0 0
  %1305 = vmatmul.mubr.bf16.gmra.mrb[0].mxu0 %v818
  %v1306 = vpop.f32.mrb[0].mxu0
  %v1307 = vadd.f32 %v1018, %v1306
  %v1308 = vpop.f32.mrb[0].mxu0
  %v1309 = vpop.f32.mrb[0].mxu0
  %v1310 = vadd.f32 %v1021, %v1309
  %v1311 = vpop.f32.mrb[0].mxu0
  %1312 = vmatprep.mubr.bf16.mxu0 0
  %1313 = vmatmul.mubr.bf16.gmra.mrb[0].mxu0 %v821
  %v1314 = vpop.f32.mrb[0].mxu0
  %v1315 = vadd.f32 %v1026, %v1314
  %v1316 = vpop.f32.mrb[0].mxu0
  %v1317 = vpop.f32.mrb[0].mxu0
  %v1318 = vadd.f32 %v1029, %v1317
  %v1319 = vpop.f32.mrb[0].mxu0
  %1320 = vmatprep.mubr.bf16.mxu0 0
  %1321 = vmatmul.mubr.bf16.gmra.mrb[0].mxu0 %v824
  %v1322 = vpop.f32.mrb[0].mxu0
  %v1323 = vadd.f32 %v1034, %v1322
  %v1324 = vpop.f32.mrb[0].mxu0
  %v1325 = vpop.f32.mrb[0].mxu0
  %v1326 = vadd.f32 %v1037, %v1325
  %v1327 = vpop.f32.mrb[0].mxu0
  %1328 = vmatprep.mubr.bf16.mxu0 0
  %1329 = vmatmul.mubr.bf16.gmra.mrb[0].mxu0 %v827
  %v1330 = vpop.f32.mrb[0].mxu0
  %v1331 = vadd.f32 %v1042, %v1330
  %v1332 = vpop.f32.mrb[0].mxu0
  %v1333 = vpop.f32.mrb[0].mxu0
  %v1334 = vadd.f32 %v1045, %v1333
  %v1335 = vpop.f32.mrb[0].mxu0
  %1336 = vmatprep.mubr.bf16.mxu0 0
  %1337 = vmatmul.mubr.bf16.gmra.mrb[0].mxu0 %v830
  %v1338 = vpop.f32.mrb[0].mxu0
  %v1339 = vadd.f32 %v1050, %v1338
  %v1340 = vpop.f32.mrb[0].mxu0
  %v1341 = vpop.f32.mrb[0].mxu0
  %v1342 = vadd.f32 %v1053, %v1341
  %v1343 = vpop.f32.mrb[0].mxu0
  %1344 = vmatprep.mubr.bf16.mxu0 0
  %1345 = vmatmul.mubr.bf16.gmra.mrb[0].mxu0 %v833
  %v1346 = vpop.f32.mrb[0].mxu0
  %v1347 = vadd.f32 %v1058, %v1346
  %v1348 = vpop.f32.mrb[0].mxu0
  %v1349 = vpop.f32.mrb[0].mxu0
  %v1350 = vadd.f32 %v1061, %v1349
  %v1351 = vpop.f32.mrb[0].mxu0
  %1352 = vmatprep.mubr.bf16.mxu0 0
  %1353 = vmatmul.mubr.bf16.gmra.mrb[0].mxu0 %v836
  %v1354 = vpop.f32.mrb[0].mxu0
  %v1355 = vadd.f32 %v1066, %v1354
  %v1356 = vpop.f32.mrb[0].mxu0
  %v1357 = vpop.f32.mrb[0].mxu0
  %v1358 = vadd.f32 %v1069, %v1357
  %v1359 = vpop.f32.mrb[0].mxu0
  %1360 = vmatprep.mubr.bf16.mxu0 0
  %1361 = vmatmul.mubr.bf16.gmra.mrb[0].mxu0 %v839
  %v1362 = vpop.f32.mrb[0].mxu0
  %v1363 = vadd.f32 %v1074, %v1362
  %v1364 = vpop.f32.mrb[0].mxu0
  %v1365 = vpop.f32.mrb[0].mxu0
  %v1366 = vadd.f32 %v1077, %v1365
  %v1367 = vpop.f32.mrb[0].mxu0
  %1368 = vmatprep.mubr.bf16.mxu0 0
  %1369 = vmatmul.mubr.bf16.gmra.mrb[0].mxu0 %v842
  %v1370 = vpop.f32.mrb[0].mxu0
  %v1371 = vadd.f32 %v1082, %v1370
  %v1372 = vpop.f32.mrb[0].mxu0
  %v1373 = vpop.f32.mrb[0].mxu0
  %v1374 = vadd.f32 %v1085, %v1373
  %v1375 = vpop.f32.mrb[0].mxu0
  %1376 = vmatprep.mubr.bf16.mxu0 0
  %1377 = vmatmul.mubr.bf16.gmra.mrb[0].mxu0 %v845
  %v1378 = vpop.f32.mrb[0].mxu0
  %v1379 = vadd.f32 %v1090, %v1378
  %v1380 = vpop.f32.mrb[0].mxu0
  %v1381 = vpop.f32.mrb[0].mxu0
  %v1382 = vadd.f32 %v1093, %v1381
  %v1383 = vpop.f32.mrb[0].mxu0
  %1384 = vmatprep.mubr.bf16.mxu0 0
  %1385 = vmatmul.mubr.bf16.gmra.mrb[0].mxu0 %v848
  %v1386 = vpop.f32.mrb[0].mxu0
  %v1387 = vadd.f32 %v1098, %v1386
  %v1388 = vpop.f32.mrb[0].mxu0
  %v1389 = vpop.f32.mrb[0].mxu0
  %v1390 = vadd.f32 %v1101, %v1389
  %v1391 = vpop.f32.mrb[0].mxu0
  %1392 = vmatprep.mubr.bf16.mxu0 0
  %1393 = vmatmul.mubr.bf16.gmra.mrb[0].mxu0 %v851
  %v1394 = vpop.f32.mrb[0].mxu0
  %v1395 = vadd.f32 %v1106, %v1394
  %v1396 = vpop.f32.mrb[0].mxu0
  %v1397 = vpop.f32.mrb[0].mxu0
  %v1398 = vadd.f32 %v1109, %v1397
  %v1399 = vpop.f32.mrb[0].mxu0
  %1400 = vmatprep.mubr.bf16.mxu0 0
  %1401 = vmatmul.mubr.bf16.gmra.mrb[0].mxu0 %v854
  %v1402 = vpop.f32.mrb[0].mxu0
  %v1403 = vadd.f32 %v1114, %v1402
  %v1404 = vpop.f32.mrb[0].mxu0
  %v1405 = vpop.f32.mrb[0].mxu0
  %v1406 = vadd.f32 %v1117, %v1405
  %v1407 = vpop.f32.mrb[0].mxu0
  %1408 = vmatprep.mubr.bf16.mxu0 0
  %1409 = vmatmul.mubr.bf16.gmra.mrb[0].mxu0 %v857
  %v1410 = vpop.f32.mrb[0].mxu0
  %v1411 = vadd.f32 %v1122, %v1410
  %v1412 = vpop.f32.mrb[0].mxu0
  %v1413 = vpop.f32.mrb[0].mxu0
  %v1414 = vadd.f32 %v1125, %v1413
  %v1415 = vpop.f32.mrb[0].mxu0
  %1416 = vmatprep.mubr.bf16.mxu0 0
  %1417 = vmatmul.mubr.bf16.gmra.mrb[0].mxu0 %v860
  %v1418 = vpop.f32.mrb[0].mxu0
  %v1419 = vadd.f32 %v1130, %v1418
  %v1420 = vpop.f32.mrb[0].mxu0
  %v1421 = vpop.f32.mrb[0].mxu0
  %v1422 = vadd.f32 %v1133, %v1421
  %v1423 = vpop.f32.mrb[0].mxu0
  %1424 = vmatprep.mubr.bf16.mxu0 0
  %1425 = vmatmul.mubr.bf16.gmra.mrb[0].mxu0 %v863
  %v1426 = vpop.f32.mrb[0].mxu0
  %v1427 = vadd.f32 %v1138, %v1426
  %v1428 = vpop.f32.mrb[0].mxu0
  %v1429 = vpop.f32.mrb[0].mxu0
  %v1430 = vadd.f32 %v1141, %v1429
  %v1431 = vpop.f32.mrb[0].mxu0
  %1432 = vmatprep.mubr.bf16.mxu0 0
  %1433 = vmatmul.mubr.bf16.gmra.mrb[0].mxu0 %v866
  %v1434 = vpop.f32.mrb[0].mxu0
  %v1435 = vadd.f32 %v1146, %v1434
  %v1436 = vpop.f32.mrb[0].mxu0
  %v1437 = vpop.f32.mrb[0].mxu0
  %v1438 = vadd.f32 %v1149, %v1437
  %v1439 = vpop.f32.mrb[0].mxu0
  %1440 = vmatprep.mubr.bf16.mxu0 0
  %1441 = vmatmul.mubr.bf16.gmra.mrb[0].mxu0 %v869
  %v1442 = vpop.f32.mrb[0].mxu0
  %v1443 = vadd.f32 %v1154, %v1442
  %v1444 = vpop.f32.mrb[0].mxu0
  %v1445 = vpop.f32.mrb[0].mxu0
  %v1446 = vadd.f32 %v1157, %v1445
  %v1447 = vpop.f32.mrb[0].mxu0
  %1448 = vdwg.mxu0
  %vm1449 = vcmask 15360
  %1450 = vst.msk [vmem:[%s3] sm:$0xff] %vm1449, %v1195
  %1451 = vst.msk [vmem:[%s3 + $0x8] sm:$0xff] %vm1449, %v1198
  %1452 = vst.msk [vmem:[%s3 + $0x10] sm:$0xff] %vm1449, %v1203
  %1453 = vst.msk [vmem:[%s3 + $0x18] sm:$0xff] %vm1449, %v1206
  %1454 = vst.msk [vmem:[%s3 + $0x20] sm:$0xff] %vm1449, %v1211
  %1455 = vst.msk [vmem:[%s3 + $0x28] sm:$0xff] %vm1449, %v1214
  %1456 = vst.msk [vmem:[%s3 + $0x30] sm:$0xff] %vm1449, %v1219
  %1457 = vst.msk [vmem:[%s3 + $0x38] sm:$0xff] %vm1449, %v1222
  %1458 = vst.msk [vmem:[%s3 + $0x40] sm:$0xff] %vm1449, %v1227
  %1459 = vst.msk [vmem:[%s3 + $0x48] sm:$0xff] %vm1449, %v1230
  %1460 = vst.msk [vmem:[%s3 + $0x50] sm:$0xff] %vm1449, %v1235
  %1461 = vst.msk [vmem:[%s3 + $0x58] sm:$0xff] %vm1449, %v1238
  %1462 = vst.msk [vmem:[%s3 + $0x60] sm:$0xff] %vm1449, %v1243
  %1463 = vst.msk [vmem:[%s3 + $0x68] sm:$0xff] %vm1449, %v1246
  %1464 = vst.msk [vmem:[%s3 + $0x70] sm:$0xff] %vm1449, %v1251
  %1465 = vst.msk [vmem:[%s3 + $0x78] sm:$0xff] %vm1449, %v1254
  %1466 = vst.msk [vmem:[%s3 + $0x80] sm:$0xff] %vm1449, %v1259
  %1467 = vst.msk [vmem:[%s3 + $0x88] sm:$0xff] %vm1449, %v1262
  %1468 = vst.msk [vmem:[%s3 + $0x90] sm:$0xff] %vm1449, %v1267
  %1469 = vst.msk [vmem:[%s3 + $0x98] sm:$0xff] %vm1449, %v1270
  %1470 = vst.msk [vmem:[%s3 + $0xa0] sm:$0xff] %vm1449, %v1275
  %1471 = vst.msk [vmem:[%s3 + $0xa8] sm:$0xff] %vm1449, %v1278
  %1472 = vst.msk [vmem:[%s3 + $0xb0] sm:$0xff] %vm1449, %v1283
  %1473 = vst.msk [vmem:[%s3 + $0xb8] sm:$0xff] %vm1449, %v1286
  %1474 = vst.msk [vmem:[%s3 + $0xc0] sm:$0xff] %vm1449, %v1291
  %1475 = vst.msk [vmem:[%s3 + $0xc8] sm:$0xff] %vm1449, %v1294
  %1476 = vst.msk [vmem:[%s3 + $0xd0] sm:$0xff] %vm1449, %v1299
  %1477 = vst.msk [vmem:[%s3 + $0xd8] sm:$0xff] %vm1449, %v1302
  %1478 = vst.msk [vmem:[%s3 + $0xe0] sm:$0xff] %vm1449, %v1307
  %1479 = vst.msk [vmem:[%s3 + $0xe8] sm:$0xff] %vm1449, %v1310
  %1480 = vst.msk [vmem:[%s3 + $0xf0] sm:$0xff] %vm1449, %v1315
  %1481 = vst.msk [vmem:[%s3 + $0xf8] sm:$0xff] %vm1449, %v1318
  %1482 = vst.msk [vmem:[%s3 + $0x100] sm:$0xff] %vm1449, %v1323
  %1483 = vst.msk [vmem:[%s3 + $0x108] sm:$0xff] %vm1449, %v1326
  %1484 = vst.msk [vmem:[%s3 + $0x110] sm:$0xff] %vm1449, %v1331
  %1485 = vst.msk [vmem:[%s3 + $0x118] sm:$0xff] %vm1449, %v1334
  %1486 = vst.msk [vmem:[%s3 + $0x120] sm:$0xff] %vm1449, %v1339
  %1487 = vst.msk [vmem:[%s3 + $0x128] sm:$0xff] %vm1449, %v1342
  %1488 = vst.msk [vmem:[%s3 + $0x130] sm:$0xff] %vm1449, %v1347
  %1489 = vst.msk [vmem:[%s3 + $0x138] sm:$0xff] %vm1449, %v1350
  %1490 = vst.msk [vmem:[%s3 + $0x140] sm:$0xff] %vm1449, %v1355
  %1491 = vst.msk [vmem:[%s3 + $0x148] sm:$0xff] %vm1449, %v1358
  %1492 = vst.msk [vmem:[%s3 + $0x150] sm:$0xff] %vm1449, %v1363
  %1493 = vst.msk [vmem:[%s3 + $0x158] sm:$0xff] %vm1449, %v1366
  %1494 = vst.msk [vmem:[%s3 + $0x160] sm:$0xff] %vm1449, %v1371
  %1495 = vst.msk [vmem:[%s3 + $0x168] sm:$0xff] %vm1449, %v1374
  %1496 = vst.msk [vmem:[%s3 + $0x170] sm:$0xff] %vm1449, %v1379
  %1497 = vst.msk [vmem:[%s3 + $0x178] sm:$0xff] %vm1449, %v1382
  %1498 = vst.msk [vmem:[%s3 + $0x180] sm:$0xff] %vm1449, %v1387
  %1499 = vst.msk [vmem:[%s3 + $0x188] sm:$0xff] %vm1449, %v1390
  %1500 = vst.msk [vmem:[%s3 + $0x190] sm:$0xff] %vm1449, %v1395
  %1501 = vst.msk [vmem:[%s3 + $0x198] sm:$0xff] %vm1449, %v1398
  %1502 = vst.msk [vmem:[%s3 + $0x1a0] sm:$0xff] %vm1449, %v1403
  %1503 = vst.msk [vmem:[%s3 + $0x1a8] sm:$0xff] %vm1449, %v1406
  %1504 = vst.msk [vmem:[%s3 + $0x1b0] sm:$0xff] %vm1449, %v1411
  %1505 = vst.msk [vmem:[%s3 + $0x1b8] sm:$0xff] %vm1449, %v1414
  %1506 = vst.msk [vmem:[%s3 + $0x1c0] sm:$0xff] %vm1449, %v1419
  %1507 = vst.msk [vmem:[%s3 + $0x1c8] sm:$0xff] %vm1449, %v1422
  %1508 = vst.msk [vmem:[%s3 + $0x1d0] sm:$0xff] %vm1449, %v1427
  %1509 = vst.msk [vmem:[%s3 + $0x1d8] sm:$0xff] %vm1449, %v1430
  %1510 = vst.msk [vmem:[%s3 + $0x1e0] sm:$0xff] %vm1449, %v1435
  %1511 = vst.msk [vmem:[%s3 + $0x1e8] sm:$0xff] %vm1449, %v1438
  %1512 = vst.msk [vmem:[%s3 + $0x1f0] sm:$0xff] %vm1449, %v1443
  %1513 = vst.msk [vmem:[%s3 + $0x1f8] sm:$0xff] %vm1449, %v1446
  // Predicated region
  $region14: #{unrolled_net_forward.23} parent=0 // pred_check
    _
  $region15: #{unrolled_net_forward.23} parent=0 // pred_check_branch
    %1515 = sbr.rel (0) target = $region17
  $region16: #{unrolled_net_forward.23} parent=0 // pred_region
    _
  $region17: #{unrolled_net_forward.23} parent=0 // pred_fallthru
    _
  // Predicated region
  $region18: #{unrolled_net_forward.23} parent=0 // pred_check
    _
  $region19: #{unrolled_net_forward.23} parent=0 // pred_check_branch
    %1517 = sbr.rel (0) target = $region21
  $region20: #{unrolled_net_forward.23} parent=0 // pred_region
    _
  $region21: #{unrolled_net_forward.23} parent=0 // pred_fallthru
    _

// kernel: unrolled_net_forward.24
$region0: #{unrolled_net_forward.24}
  #allocation0 [shape = 'u32[]', space=smem, size = 0x4, offset = 0x4, fixed_abs, tag = 'smem constant byte address 0x4 - core index']
  #allocation1 [shape = 'u32[144,128]{1,0:T(1,128)}', space=vmem, size = 0x12000, scoped, tag = 'internal scratch']
  #allocation2 [shape = 'f32[1]{0:T(128)S(6)}', space=smem, size = 0x200, scoped, tag = 'scoped memory for unrolled_net_forward.24']
  %s0 = inlined_call_operand.vmem [shape: f32[2,16,16], index: 0, kind: input, shape index: {}]
  %s1 = inlined_call_operand.vmem [shape: f32[2,16,16], index: 1, kind: input, shape index: {}]
  %s2 = inlined_call_operand.vmem [shape: f32[2,16,16], index: 2, kind: input, shape index: {}]
  %s3 = inlined_call_operand.vmem [shape: f32[2,16,16], index: 3, kind: input, shape index: {}]
  %s4 = inlined_call_operand.vmem [shape: f32[8,16,16], index: 4, kind: input, shape index: {}]
  %s5 = inlined_call_operand.vmem [shape: f32[8,16,16], index: 5, kind: input, shape index: {}]
  %s6 = inlined_call_operand.vmem [shape: f32[2,16,16], index: 6, kind: input, shape index: {}]
  %s7 = inlined_call_operand.vmem [shape: bf16[16,16], index: 7, kind: input, shape index: {}, may-alias: {7,9}]
  %s8 = inlined_call_operand.vmem [shape: bf16[16,16], index: 8, kind: input, shape index: {}, may-alias: {8,10}]
  %s9 = inlined_call_operand.vmem [shape: bf16[16,16], index: 9, kind: input, shape index: {}, may-alias: {7,9}]
  %s10 = inlined_call_operand.vmem [shape: bf16[16,16], index: 10, kind: input, shape index: {}, may-alias: {8,10}]
  %s11 = inlined_call_operand.<no memory space> [shape: f32[1], index: 11, kind: input, shape index: {}]
  %s12 = inlined_call_operand.vmem [shape: f32[2,16,16], index: 12, kind: output, shape index: {0}]
  %s13 = inlined_call_operand.vmem [shape: f32[2,16,16], index: 13, kind: output, shape index: {1}]
  %14 = xla_tuple %s12, %s13
  %s15 = sld [smem:[#allocation0]]
  $region103: #{unrolled_net_forward.24} parent=0
    _
  %s17 = ssub.s32 1, %s15
  %s18 = scalar_select 0, %s17, %s15
  %19 = sst [smem:[#allocation2]] %s11
  loop: start=0, step=1, limit=4
  $region2: #{unrolled_net_forward.24} parent=0 // loop_pre_header
    _
  $region3: #{unrolled_net_forward.24} parent=0 // loop_header
    %s21 = sphi 0, %s25
    %p22 = scmp.ge.s32.totalorder %s21, 4
    %s31 = sphi 0, %s33
    %s34 = sphi 0, %s31
    %s35 = sphi 0, %s34
    %s51 = sphi 0, %s35
    %s57 = sphi 0, %s59
    %s60 = sphi 0, %s57
    %s61 = sphi 0, %s60
    %s77 = sphi 0, %s61
    %s83 = sphi 0, %s85
    %s86 = sphi 0, %s83
    %s87 = sphi 0, %s86
    %s103 = sphi 0, %s87
    %s109 = sphi 0, %s111
    %s112 = sphi 0, %s109
    %s113 = sphi 0, %s112
    %s129 = sphi 0, %s113
    %s135 = sphi 0, %s137
    %s138 = sphi 0, %s135
    %s139 = sphi 0, %s138
    %s155 = sphi 0, %s139
    %s161 = sphi 0, %s163
    %s164 = sphi 0, %s161
    %s165 = sphi 0, %s164
    %s181 = sphi 0, %s165
    %s187 = sphi 0, %s189
    %s190 = sphi 0, %s187
    %s191 = sphi 0, %s190
    %s207 = sphi 0, %s191
    %s211 = sphi 0, %s211
    %s213 = sphi 0, %s211
    %s214 = sphi 0, %s213
    %s228 = sphi 0, %s214
    %s232 = sphi 0, %s232
    %s234 = sphi 0, %s232
    %s235 = sphi 0, %s234
    %s249 = sphi 0, %s235
    %s253 = sphi 0, %s253
    %s255 = sphi 0, %s253
    %s256 = sphi 0, %s255
    %s270 = sphi 0, %s256
    %s274 = sphi 0, %s274
    %s276 = sphi 0, %s274
    %s277 = sphi 0, %s276
    %s291 = sphi 0, %s277
    %s295 = sphi 0, %s295
    %s297 = sphi 0, %s295
    %s298 = sphi 0, %s297
    %s312 = sphi 0, %s298
    %s318 = sphi 0, %s320
    %s321 = sphi 0, %s318
    %s322 = sphi 0, %s321
    %s338 = sphi 0, %s322
    %s344 = sphi 0, %s346
    %s347 = sphi 0, %s344
    %s348 = sphi 0, %s347
    %s364 = sphi 0, %s348
  $region4: #{unrolled_net_forward.24} parent=0 // loop_header_branch
    %24 = sbr.rel (%p22) target = $region8
  $region5: #{unrolled_net_forward.24} parent=0 // loop_body
    %s26 = ssub.s32 %s21, 1
    %s27 = ssub.s32 %s21, 2
    %s28 = sadd.s32 %s21, 1
    %s29 = ssub.s32 %s21, %s28
    %p30 = scmp.eq.s32.totalorder %s29, 0
    %s32 = sadd.s32 %s31, 1
    %s33 = scalar_select %p30, %s31, %s32
    %p36 = pneg %p30
    %p37 = scmp.eq.s32.totalorder %s21, 1
    %p38 = por %p36, %p37
    %p39 = scmp.ne.s32.totalorder %s31, %s34
    %p40 = scmp.eq.s32.totalorder %s21, 0
    %p41 = por %p39, %p40
    %p42 = scmp.ne.s32.totalorder %s31, %s34
    %p43 = scmp.eq.s32.totalorder %s26, 1
    %p44 = por %p42, %p43
    %p45 = scmp.ne.s32.totalorder %s34, %s35
    %p46 = scmp.eq.s32.totalorder %s26, 0
    %p47 = por %p45, %p46
    %p48 = scmp.ne.s32.totalorder %s34, %s35
    %p49 = scmp.eq.s32.totalorder %s27, 1
    %p50 = por %p48, %p49
    %p52 = scmp.ne.s32.totalorder %s35, %s51
    %p53 = scmp.eq.s32.totalorder %s27, 0
    %p54 = por %p52, %p53
    %s55 = ssub.s32 %s21, %s28
    %p56 = scmp.eq.s32.totalorder %s55, 0
    %s58 = sadd.s32 %s57, 1
    %s59 = scalar_select %p56, %s57, %s58
    %p62 = pneg %p56
    %p63 = scmp.eq.s32.totalorder %s21, 1
    %p64 = por %p62, %p63
    %p65 = scmp.ne.s32.totalorder %s57, %s60
    %p66 = scmp.eq.s32.totalorder %s21, 0
    %p67 = por %p65, %p66
    %p68 = scmp.ne.s32.totalorder %s57, %s60
    %p69 = scmp.eq.s32.totalorder %s26, 1
    %p70 = por %p68, %p69
    %p71 = scmp.ne.s32.totalorder %s60, %s61
    %p72 = scmp.eq.s32.totalorder %s26, 0
    %p73 = por %p71, %p72
    %p74 = scmp.ne.s32.totalorder %s60, %s61
    %p75 = scmp.eq.s32.totalorder %s27, 1
    %p76 = por %p74, %p75
    %p78 = scmp.ne.s32.totalorder %s61, %s77
    %p79 = scmp.eq.s32.totalorder %s27, 0
    %p80 = por %p78, %p79
    %s81 = ssub.s32 %s21, %s28
    %p82 = scmp.eq.s32.totalorder %s81, 0
    %s84 = sadd.s32 %s83, 1
    %s85 = scalar_select %p82, %s83, %s84
    %p88 = pneg %p82
    %p89 = scmp.eq.s32.totalorder %s21, 1
    %p90 = por %p88, %p89
    %p91 = scmp.ne.s32.totalorder %s83, %s86
    %p92 = scmp.eq.s32.totalorder %s21, 0
    %p93 = por %p91, %p92
    %p94 = scmp.ne.s32.totalorder %s83, %s86
    %p95 = scmp.eq.s32.totalorder %s26, 1
    %p96 = por %p94, %p95
    %p97 = scmp.ne.s32.totalorder %s86, %s87
    %p98 = scmp.eq.s32.totalorder %s26, 0
    %p99 = por %p97, %p98
    %p100 = scmp.ne.s32.totalorder %s86, %s87
    %p101 = scmp.eq.s32.totalorder %s27, 1
    %p102 = por %p100, %p101
    %p104 = scmp.ne.s32.totalorder %s87, %s103
    %p105 = scmp.eq.s32.totalorder %s27, 0
    %p106 = por %p104, %p105
    %s107 = ssub.s32 %s21, %s28
    %p108 = scmp.eq.s32.totalorder %s107, 0
    %s110 = sadd.s32 %s109, 1
    %s111 = scalar_select %p108, %s109, %s110
    %p114 = pneg %p108
    %p115 = scmp.eq.s32.totalorder %s21, 1
    %p116 = por %p114, %p115
    %p117 = scmp.ne.s32.totalorder %s109, %s112
    %p118 = scmp.eq.s32.totalorder %s21, 0
    %p119 = por %p117, %p118
    %p120 = scmp.ne.s32.totalorder %s109, %s112
    %p121 = scmp.eq.s32.totalorder %s26, 1
    %p122 = por %p120, %p121
    %p123 = scmp.ne.s32.totalorder %s112, %s113
    %p124 = scmp.eq.s32.totalorder %s26, 0
    %p125 = por %p123, %p124
    %p126 = scmp.ne.s32.totalorder %s112, %s113
    %p127 = scmp.eq.s32.totalorder %s27, 1
    %p128 = por %p126, %p127
    %p130 = scmp.ne.s32.totalorder %s113, %s129
    %p131 = scmp.eq.s32.totalorder %s27, 0
    %p132 = por %p130, %p131
    %s133 = ssub.s32 %s21, %s28
    %p134 = scmp.eq.s32.totalorder %s133, 0
    %s136 = sadd.s32 %s135, 1
    %s137 = scalar_select %p134, %s135, %s136
    %p140 = pneg %p134
    %p141 = scmp.eq.s32.totalorder %s21, 1
    %p142 = por %p140, %p141
    %p143 = scmp.ne.s32.totalorder %s135, %s138
    %p144 = scmp.eq.s32.totalorder %s21, 0
    %p145 = por %p143, %p144
    %p146 = scmp.ne.s32.totalorder %s135, %s138
    %p147 = scmp.eq.s32.totalorder %s26, 1
    %p148 = por %p146, %p147
    %p149 = scmp.ne.s32.totalorder %s138, %s139
    %p150 = scmp.eq.s32.totalorder %s26, 0
    %p151 = por %p149, %p150
    %p152 = scmp.ne.s32.totalorder %s138, %s139
    %p153 = scmp.eq.s32.totalorder %s27, 1
    %p154 = por %p152, %p153
    %p156 = scmp.ne.s32.totalorder %s139, %s155
    %p157 = scmp.eq.s32.totalorder %s27, 0
    %p158 = por %p156, %p157
    %s159 = ssub.s32 %s21, %s28
    %p160 = scmp.eq.s32.totalorder %s159, 0
    %s162 = sadd.s32 %s161, 1
    %s163 = scalar_select %p160, %s161, %s162
    %p166 = pneg %p160
    %p167 = scmp.eq.s32.totalorder %s21, 1
    %p168 = por %p166, %p167
    %p169 = scmp.ne.s32.totalorder %s161, %s164
    %p170 = scmp.eq.s32.totalorder %s21, 0
    %p171 = por %p169, %p170
    %p172 = scmp.ne.s32.totalorder %s161, %s164
    %p173 = scmp.eq.s32.totalorder %s26, 1
    %p174 = por %p172, %p173
    %p175 = scmp.ne.s32.totalorder %s164, %s165
    %p176 = scmp.eq.s32.totalorder %s26, 0
    %p177 = por %p175, %p176
    %p178 = scmp.ne.s32.totalorder %s164, %s165
    %p179 = scmp.eq.s32.totalorder %s27, 1
    %p180 = por %p178, %p179
    %p182 = scmp.ne.s32.totalorder %s165, %s181
    %p183 = scmp.eq.s32.totalorder %s27, 0
    %p184 = por %p182, %p183
    %s185 = ssub.s32 %s21, %s28
    %p186 = scmp.eq.s32.totalorder %s185, 0
    %s188 = sadd.s32 %s187, 1
    %s189 = scalar_select %p186, %s187, %s188
    %p192 = pneg %p186
    %p193 = scmp.eq.s32.totalorder %s21, 1
    %p194 = por %p192, %p193
    %p195 = scmp.ne.s32.totalorder %s187, %s190
    %p196 = scmp.eq.s32.totalorder %s21, 0
    %p197 = por %p195, %p196
    %p198 = scmp.ne.s32.totalorder %s187, %s190
    %p199 = scmp.eq.s32.totalorder %s26, 1
    %p200 = por %p198, %p199
    %p201 = scmp.ne.s32.totalorder %s190, %s191
    %p202 = scmp.eq.s32.totalorder %s26, 0
    %p203 = por %p201, %p202
    %p204 = scmp.ne.s32.totalorder %s190, %s191
    %p205 = scmp.eq.s32.totalorder %s27, 1
    %p206 = por %p204, %p205
    %p208 = scmp.ne.s32.totalorder %s191, %s207
    %p209 = scmp.eq.s32.totalorder %s27, 0
    %p210 = por %p208, %p209
    %s212 = sadd.s32 %s211, 1
    %p215 = scmp.eq.s32.totalorder %s21, 1
    %p216 = scmp.ne.s32.totalorder %s211, %s213
    %p217 = scmp.eq.s32.totalorder %s21, 0
    %p218 = por %p216, %p217
    %p219 = scmp.ne.s32.totalorder %s211, %s213
    %p220 = scmp.eq.s32.totalorder %s26, 1
    %p221 = por %p219, %p220
    %p222 = scmp.ne.s32.totalorder %s213, %s214
    %p223 = scmp.eq.s32.totalorder %s26, 0
    %p224 = por %p222, %p223
    %p225 = scmp.ne.s32.totalorder %s213, %s214
    %p226 = scmp.eq.s32.totalorder %s27, 1
    %p227 = por %p225, %p226
    %p229 = scmp.ne.s32.totalorder %s214, %s228
    %p230 = scmp.eq.s32.totalorder %s27, 0
    %p231 = por %p229, %p230
    %s233 = sadd.s32 %s232, 1
    %p236 = scmp.eq.s32.totalorder %s21, 1
    %p237 = scmp.ne.s32.totalorder %s232, %s234
    %p238 = scmp.eq.s32.totalorder %s21, 0
    %p239 = por %p237, %p238
    %p240 = scmp.ne.s32.totalorder %s232, %s234
    %p241 = scmp.eq.s32.totalorder %s26, 1
    %p242 = por %p240, %p241
    %p243 = scmp.ne.s32.totalorder %s234, %s235
    %p244 = scmp.eq.s32.totalorder %s26, 0
    %p245 = por %p243, %p244
    %p246 = scmp.ne.s32.totalorder %s234, %s235
    %p247 = scmp.eq.s32.totalorder %s27, 1
    %p248 = por %p246, %p247
    %p250 = scmp.ne.s32.totalorder %s235, %s249
    %p251 = scmp.eq.s32.totalorder %s27, 0
    %p252 = por %p250, %p251
    %s254 = sadd.s32 %s253, 1
    %p257 = scmp.eq.s32.totalorder %s21, 1
    %p258 = scmp.ne.s32.totalorder %s253, %s255
    %p259 = scmp.eq.s32.totalorder %s21, 0
    %p260 = por %p258, %p259
    %p261 = scmp.ne.s32.totalorder %s253, %s255
    %p262 = scmp.eq.s32.totalorder %s26, 1
    %p263 = por %p261, %p262
    %p264 = scmp.ne.s32.totalorder %s255, %s256
    %p265 = scmp.eq.s32.totalorder %s26, 0
    %p266 = por %p264, %p265
    %p267 = scmp.ne.s32.totalorder %s255, %s256
    %p268 = scmp.eq.s32.totalorder %s27, 1
    %p269 = por %p267, %p268
    %p271 = scmp.ne.s32.totalorder %s256, %s270
    %p272 = scmp.eq.s32.totalorder %s27, 0
    %p273 = por %p271, %p272
    %s275 = sadd.s32 %s274, 1
    %p278 = scmp.eq.s32.totalorder %s21, 1
    %p279 = scmp.ne.s32.totalorder %s274, %s276
    %p280 = scmp.eq.s32.totalorder %s21, 0
    %p281 = por %p279, %p280
    %p282 = scmp.ne.s32.totalorder %s274, %s276
    %p283 = scmp.eq.s32.totalorder %s26, 1
    %p284 = por %p282, %p283
    %p285 = scmp.ne.s32.totalorder %s276, %s277
    %p286 = scmp.eq.s32.totalorder %s26, 0
    %p287 = por %p285, %p286
    %p288 = scmp.ne.s32.totalorder %s276, %s277
    %p289 = scmp.eq.s32.totalorder %s27, 1
    %p290 = por %p288, %p289
    %p292 = scmp.ne.s32.totalorder %s277, %s291
    %p293 = scmp.eq.s32.totalorder %s27, 0
    %p294 = por %p292, %p293
    %s296 = sadd.s32 %s295, 1
    %p299 = scmp.eq.s32.totalorder %s21, 1
    %p300 = scmp.ne.s32.totalorder %s295, %s297
    %p301 = scmp.eq.s32.totalorder %s21, 0
    %p302 = por %p300, %p301
    %p303 = scmp.ne.s32.totalorder %s295, %s297
    %p304 = scmp.eq.s32.totalorder %s26, 1
    %p305 = por %p303, %p304
    %p306 = scmp.ne.s32.totalorder %s297, %s298
    %p307 = scmp.eq.s32.totalorder %s26, 0
    %p308 = por %p306, %p307
    %p309 = scmp.ne.s32.totalorder %s297, %s298
    %p310 = scmp.eq.s32.totalorder %s27, 1
    %p311 = por %p309, %p310
    %p313 = scmp.ne.s32.totalorder %s298, %s312
    %p314 = scmp.eq.s32.totalorder %s27, 0
    %p315 = por %p313, %p314
    %s316 = ssub.s32 %s21, %s28
    %p317 = scmp.eq.s32.totalorder %s316, 0
    %s319 = sadd.s32 %s318, 1
    %s320 = scalar_select %p317, %s318, %s319
    %p323 = pneg %p317
    %p324 = scmp.eq.s32.totalorder %s21, 1
    %p325 = por %p323, %p324
    %p326 = scmp.ne.s32.totalorder %s318, %s321
    %p327 = scmp.eq.s32.totalorder %s21, 0
    %p328 = por %p326, %p327
    %p329 = scmp.ne.s32.totalorder %s318, %s321
    %p330 = scmp.eq.s32.totalorder %s26, 1
    %p331 = por %p329, %p330
    %p332 = scmp.ne.s32.totalorder %s321, %s322
    %p333 = scmp.eq.s32.totalorder %s26, 0
    %p334 = por %p332, %p333
    %p335 = scmp.ne.s32.totalorder %s321, %s322
    %p336 = scmp.eq.s32.totalorder %s27, 1
    %p337 = por %p335, %p336
    %p339 = scmp.ne.s32.totalorder %s322, %s338
    %p340 = scmp.eq.s32.totalorder %s27, 0
    %p341 = por %p339, %p340
    %s342 = ssub.s32 %s21, %s28
    %p343 = scmp.eq.s32.totalorder %s342, 0
    %s345 = sadd.s32 %s344, 1
    %s346 = scalar_select %p343, %s344, %s345
    %p349 = pneg %p343
    %p350 = scmp.eq.s32.totalorder %s21, 1
    %p351 = por %p349, %p350
    %p352 = scmp.ne.s32.totalorder %s344, %s347
    %p353 = scmp.eq.s32.totalorder %s21, 0
    %p354 = por %p352, %p353
    %p355 = scmp.ne.s32.totalorder %s344, %s347
    %p356 = scmp.eq.s32.totalorder %s26, 1
    %p357 = por %p355, %p356
    %p358 = scmp.ne.s32.totalorder %s347, %s348
    %p359 = scmp.eq.s32.totalorder %s26, 0
    %p360 = por %p358, %p359
    %p361 = scmp.ne.s32.totalorder %s347, %s348
    %p362 = scmp.eq.s32.totalorder %s27, 1
    %p363 = por %p361, %p362
    %p365 = scmp.ne.s32.totalorder %s348, %s364
    %p366 = scmp.eq.s32.totalorder %s27, 0
    %p367 = por %p365, %p366
    %p368 = scmp.le.s32.totalorder 1, %s21
    %p369 = scmp.lt.s32.totalorder %s21, 3
    %p370 = pnand %p368, %p369
    %p371 = pneg %p370
    // Predicated region
    $region9: #{unrolled_net_forward.24} parent=5 // pred_check
      _
    $region10: #{unrolled_net_forward.24} parent=5 // pred_check_branch
      %373 = sbr.rel (%p370) target = $region12
    $region11: #{unrolled_net_forward.24} parent=5 // pred_region
      %s374 = ssub.s32 %s21, 1
      // Predicated region
      $region13: #{unrolled_net_forward.24} parent=11 // pred_check
        %p375 = pneg %p224
      $region14: #{unrolled_net_forward.24} parent=11 // pred_check_branch
        %377 = sbr.rel (%p375) target = $region16
      $region15: #{unrolled_net_forward.24} parent=11 // pred_region
        _
      $region16: #{unrolled_net_forward.24} parent=11 // pred_fallthru
        _
      // Predicated region
      $region17: #{unrolled_net_forward.24} parent=11 // pred_check
        %p378 = pneg %p245
      $region18: #{unrolled_net_forward.24} parent=11 // pred_check_branch
        %380 = sbr.rel (%p378) target = $region20
      $region19: #{unrolled_net_forward.24} parent=11 // pred_region
        _
      $region20: #{unrolled_net_forward.24} parent=11 // pred_fallthru
        _
      // Predicated region
      $region21: #{unrolled_net_forward.24} parent=11 // pred_check
        %p381 = pneg %p266
      $region22: #{unrolled_net_forward.24} parent=11 // pred_check_branch
        %383 = sbr.rel (%p381) target = $region24
      $region23: #{unrolled_net_forward.24} parent=11 // pred_region
        _
      $region24: #{unrolled_net_forward.24} parent=11 // pred_fallthru
        _
      // Predicated region
      $region25: #{unrolled_net_forward.24} parent=11 // pred_check
        %p384 = pneg %p287
      $region26: #{unrolled_net_forward.24} parent=11 // pred_check_branch
        %386 = sbr.rel (%p384) target = $region28
      $region27: #{unrolled_net_forward.24} parent=11 // pred_region
        _
      $region28: #{unrolled_net_forward.24} parent=11 // pred_fallthru
        _
      // Predicated region
      $region29: #{unrolled_net_forward.24} parent=11 // pred_check
        %p387 = pneg %p308
      $region30: #{unrolled_net_forward.24} parent=11 // pred_check_branch
        %389 = sbr.rel (%p387) target = $region32
      $region31: #{unrolled_net_forward.24} parent=11 // pred_region
        _
      $region32: #{unrolled_net_forward.24} parent=11 // pred_fallthru
        _
    $region12: #{unrolled_net_forward.24} parent=5 // pred_fallthru
      _
    %p390 = scmp.lt.s32.totalorder %s21, 2
    // Predicated region
    $region33: #{unrolled_net_forward.24} parent=5 // pred_check
      %p391 = pneg %p390
    $region34: #{unrolled_net_forward.24} parent=5 // pred_check_branch
      %393 = sbr.rel (%p391) target = $region36
    $region35: #{unrolled_net_forward.24} parent=5 // pred_region
      // Predicated region
      $region37: #{unrolled_net_forward.24} parent=35 // pred_check
        %p394 = pneg %p41
      $region38: #{unrolled_net_forward.24} parent=35 // pred_check_branch
        %396 = sbr.rel (%p394) target = $region40
      $region39: #{unrolled_net_forward.24} parent=35 // pred_region
        %p397 = scmp.lt.s32.totalorder %s21, 1
        %s398 = scalar_select %p397, %s21, 1
        %s399 = smul.addr %s398, 2
        %s400 = smul.addr %s399, 8
        %s401 = scalar_lea.vmem %s0, %s400
      $region40: #{unrolled_net_forward.24} parent=35 // pred_fallthru
        _
      // Predicated region
      $region41: #{unrolled_net_forward.24} parent=35 // pred_check
        %p402 = pneg %p67
      $region42: #{unrolled_net_forward.24} parent=35 // pred_check_branch
        %404 = sbr.rel (%p402) target = $region44
      $region43: #{unrolled_net_forward.24} parent=35 // pred_region
        %p405 = scmp.lt.s32.totalorder %s21, 1
        %s406 = scalar_select %p405, %s21, 1
        %s407 = smul.addr %s406, 2
        %s408 = smul.addr %s407, 8
        %s409 = scalar_lea.vmem %s1, %s408
      $region44: #{unrolled_net_forward.24} parent=35 // pred_fallthru
        _
      // Predicated region
      $region45: #{unrolled_net_forward.24} parent=35 // pred_check
        %p410 = pneg %p93
      $region46: #{unrolled_net_forward.24} parent=35 // pred_check_branch
        %412 = sbr.rel (%p410) target = $region48
      $region47: #{unrolled_net_forward.24} parent=35 // pred_region
        %p413 = scmp.lt.s32.totalorder %s21, 1
        %s414 = scalar_select %p413, %s21, 1
        %s415 = smul.addr %s414, 2
        %s416 = smul.addr %s415, 8
        %s417 = scalar_lea.vmem %s2, %s416
      $region48: #{unrolled_net_forward.24} parent=35 // pred_fallthru
        _
      // Predicated region
      $region49: #{unrolled_net_forward.24} parent=35 // pred_check
        %p418 = pneg %p119
      $region50: #{unrolled_net_forward.24} parent=35 // pred_check_branch
        %420 = sbr.rel (%p418) target = $region52
      $region51: #{unrolled_net_forward.24} parent=35 // pred_region
        %p421 = scmp.lt.s32.totalorder %s21, 1
        %s422 = scalar_select %p421, %s21, 1
        %s423 = smul.addr %s422, 2
        %s424 = smul.addr %s423, 8
        %s425 = scalar_lea.vmem %s3, %s424
      $region52: #{unrolled_net_forward.24} parent=35 // pred_fallthru
        _
      // Predicated region
      $region53: #{unrolled_net_forward.24} parent=35 // pred_check
        %p426 = pneg %p145
      $region54: #{unrolled_net_forward.24} parent=35 // pred_check_branch
        %428 = sbr.rel (%p426) target = $region56
      $region55: #{unrolled_net_forward.24} parent=35 // pred_region
        %s429 = smul.u32 4, %s21
        %p430 = scmp.lt.s32.totalorder %s429, 7
        %s431 = scalar_select %p430, %s429, 7
        %s432 = smul.addr %s431, 2
        %s433 = smul.addr %s432, 8
        %s434 = scalar_lea.vmem %s4, %s433
        %s435 = smul.u32 4, %s21
      $region56: #{unrolled_net_forward.24} parent=35 // pred_fallthru
        _
      // Predicated region
      $region57: #{unrolled_net_forward.24} parent=35 // pred_check
        %p436 = pneg %p171
      $region58: #{unrolled_net_forward.24} parent=35 // pred_check_branch
        %438 = sbr.rel (%p436) target = $region60
      $region59: #{unrolled_net_forward.24} parent=35 // pred_region
        %s439 = smul.u32 4, %s21
        %p440 = scmp.lt.s32.totalorder %s439, 7
        %s441 = scalar_select %p440, %s439, 7
        %s442 = smul.addr %s441, 2
        %s443 = smul.addr %s442, 8
        %s444 = scalar_lea.vmem %s5, %s443
        %s445 = smul.u32 4, %s21
      $region60: #{unrolled_net_forward.24} parent=35 // pred_fallthru
        _
      // Predicated region
      $region61: #{unrolled_net_forward.24} parent=35 // pred_check
        %p446 = pneg %p197
      $region62: #{unrolled_net_forward.24} parent=35 // pred_check_branch
        %448 = sbr.rel (%p446) target = $region64
      $region63: #{unrolled_net_forward.24} parent=35 // pred_region
        %p449 = scmp.lt.s32.totalorder %s21, 1
        %s450 = scalar_select %p449, %s21, 1
        %s451 = smul.addr %s450, 2
        %s452 = smul.addr %s451, 8
        %s453 = scalar_lea.vmem %s6, %s452
      $region64: #{unrolled_net_forward.24} parent=35 // pred_fallthru
        _
    $region36: #{unrolled_net_forward.24} parent=5 // pred_fallthru
      _
    %p454 = scmp.le.s32.totalorder 1, %s21
    %p455 = scmp.lt.s32.totalorder %s21, 3
    %p456 = pnand %p454, %p455
    %p457 = pneg %p456
    // Predicated region
    $region65: #{unrolled_net_forward.24} parent=5 // pred_check
      _
    $region66: #{unrolled_net_forward.24} parent=5 // pred_check_branch
      %459 = sbr.rel (%p456) target = $region68
    $region67: #{unrolled_net_forward.24} parent=5 // pred_region
      %s460 = ssub.s32 %s21, 1
      %p461 = scmp.lt.s32.totalorder %s26, 1
      %s462 = scalar_select %p461, %s26, 1
      %s463 = smul.addr %s462, 2
      %s464 = smul.addr %s463, 8
      %s465 = scalar_lea.vmem %s0, %s464
      %p466 = pneg %p47
      %p467 = pneg %p44
      %p468 = scmp.lt.s32.totalorder %s26, 1
      %s469 = scalar_select %p468, %s26, 1
      %s470 = smul.addr %s469, 2
      %s471 = smul.addr %s470, 8
      %s472 = scalar_lea.vmem %s1, %s471
      %p473 = pneg %p73
      %p474 = pneg %p70
      %p475 = scmp.lt.s32.totalorder %s26, 1
      %s476 = scalar_select %p475, %s26, 1
      %s477 = smul.addr %s476, 2
      %s478 = smul.addr %s477, 8
      %s479 = scalar_lea.vmem %s2, %s478
      %p480 = pneg %p99
      %p481 = pneg %p96
      %p482 = scmp.lt.s32.totalorder %s26, 1
      %s483 = scalar_select %p482, %s26, 1
      %s484 = smul.addr %s483, 2
      %s485 = smul.addr %s484, 8
      %s486 = scalar_lea.vmem %s3, %s485
      %p487 = pneg %p125
      %p488 = pneg %p122
      %s489 = smul.u32 4, %s26
      %p490 = scmp.lt.s32.totalorder %s489, 7
      %s491 = scalar_select %p490, %s489, 7
      %s492 = smul.addr %s491, 2
      %s493 = smul.addr %s492, 8
      %s494 = scalar_lea.vmem %s4, %s493
      %p495 = pneg %p151
      %p496 = pneg %p148
      %s497 = smul.u32 4, %s26
      %p498 = scmp.lt.s32.totalorder %s497, 7
      %s499 = scalar_select %p498, %s497, 7
      %s500 = smul.addr %s499, 2
      %s501 = smul.addr %s500, 8
      %s502 = scalar_lea.vmem %s5, %s501
      %p503 = pneg %p177
      %p504 = pneg %p174
      %p505 = scmp.lt.s32.totalorder %s26, 1
      %s506 = scalar_select %p505, %s26, 1
      %s507 = smul.addr %s506, 2
      %s508 = smul.addr %s507, 8
      %s509 = scalar_lea.vmem %s6, %s508
      %p510 = pneg %p203
      %p511 = pneg %p200
      %p512 = pneg %p224
      %p513 = pneg %p221
      %p514 = pneg %p245
      %p515 = pneg %p242
      %p516 = pneg %p266
      %p517 = pneg %p263
      %p518 = pneg %p287
      %p519 = pneg %p284
      %p520 = pneg %p308
      %p521 = pneg %p305
      %p522 = pneg %p334
      %p523 = pneg %p331
      %p524 = scmp.lt.s32.totalorder %s26, 1
      %s525 = scalar_select %p524, %s26, 1
      %s526 = smul.addr %s525, 2
      %s527 = smul.addr %s526, 8
      %s528 = scalar_lea.vmem %s12, %s527
      %p529 = pneg %p360
      %p530 = pneg %p357
      %p531 = scmp.lt.s32.totalorder %s26, 1
      %s532 = scalar_select %p531, %s26, 1
      %s533 = smul.addr %s532, 2
      %s534 = smul.addr %s533, 8
      %s535 = scalar_lea.vmem %s13, %s534
      %p536 = scmp.lt.s32.totalorder %s26, 1
      %s537 = scalar_select %p536, %s26, 1
      %s538 = smul.addr %s537, 2
      %s539 = smul.addr %s538, 8
      %s540 = scalar_lea.vmem %s0, %s539
      %p541 = scmp.lt.s32.totalorder %s26, 1
      %s542 = scalar_select %p541, %s26, 1
      %s543 = smul.addr %s542, 2
      %s544 = smul.addr %s543, 8
      %s545 = scalar_lea.vmem %s1, %s544
      %p546 = scmp.lt.s32.totalorder %s26, 1
      %s547 = scalar_select %p546, %s26, 1
      %s548 = smul.addr %s547, 2
      %s549 = smul.addr %s548, 8
      %s550 = scalar_lea.vmem %s2, %s549
      %p551 = scmp.lt.s32.totalorder %s26, 1
      %s552 = scalar_select %p551, %s26, 1
      %s553 = smul.addr %s552, 2
      %s554 = smul.addr %s553, 8
      %s555 = scalar_lea.vmem %s3, %s554
      %s556 = smul.u32 4, %s26
      %p557 = scmp.lt.s32.totalorder %s556, 7
      %s558 = scalar_select %p557, %s556, 7
      %s559 = smul.addr %s558, 2
      %s560 = smul.addr %s559, 8
      %s561 = scalar_lea.vmem %s4, %s560
      %s562 = smul.u32 4, %s26
      %s563 = smul.u32 4, %s26
      %p564 = scmp.lt.s32.totalorder %s563, 7
      %s565 = scalar_select %p564, %s563, 7
      %s566 = smul.addr %s565, 2
      %s567 = smul.addr %s566, 8
      %s568 = scalar_lea.vmem %s5, %s567
      %s569 = smul.u32 4, %s26
      %p570 = scmp.lt.s32.totalorder %s26, 1
      %s571 = scalar_select %p570, %s26, 1
      %s572 = smul.addr %s571, 2
      %s573 = smul.addr %s572, 8
      %s574 = scalar_lea.vmem %s6, %s573
      %p575 = scmp.lt.s32.totalorder %s26, 1
      %s576 = scalar_select %p575, %s26, 1
      %s577 = smul.addr %s576, 2
      %s578 = smul.addr %s577, 8
      %s579 = scalar_lea.vmem %s12, %s578
      %p580 = scmp.lt.s32.totalorder %s26, 1
      %s581 = scalar_select %p580, %s26, 1
      %s582 = smul.addr %s581, 2
      %s583 = smul.addr %s582, 8
      %s584 = scalar_lea.vmem %s13, %s583
      %s586 = sld [smem:[#allocation2]]
      %v587 = vld [vmem:[%s7] sm:$0xf]
      %v588 = vld [vmem:[%s7 + $0x4] sm:$0xf]
      %v589 = vld [vmem:[%s8] sm:$0xf]
      %v590 = vld [vmem:[%s8 + $0x4] sm:$0xf]
      %v591 = vld [vmem:[%s9] sm:$0xf]
      %v592 = vld [vmem:[%s9 + $0x4] sm:$0xf]
      %v593 = vld [vmem:[%s10] sm:$0xf]
      %v594 = vld [vmem:[%s10 + $0x4] sm:$0xf]
      %v595 = vsub.bf16 0, %v589
      %v596 = vsub.bf16 0, %v590
      %v597 = vsub.bf16 0, %v593
      %v598 = vsub.bf16 0, %v594
      %v599 = vld [vmem:[%s574] sm:$0xff]
      %v600 = vld [vmem:[%s574 + $0x8] sm:$0xff]
      %v601 = vld [vmem:[%s540] sm:$0xff]
      %v602 = vld [vmem:[%s540 + $0x8] sm:$0xff]
      %v603 = vld [vmem:[%s550] sm:$0xff]
      %v604 = vld [vmem:[%s550 + $0x8] sm:$0xff]
      %v605 = vstv %s586
      %v606 = vmul.f32 %v605, %v603
      %v607 = vmul.f32 %v605, %v604
      %v608 = vadd.f32 %v601, %v606
      %v609 = vadd.f32 %v602, %v607
      %v610 = vld [vmem:[%s545] sm:$0xff]
      %v611 = vld [vmem:[%s545 + $0x8] sm:$0xff]
      %v612 = vld [vmem:[%s555] sm:$0xff]
      %v613 = vld [vmem:[%s555 + $0x8] sm:$0xff]
      %v614 = vmul.f32 %v605, %v612
      %v615 = vmul.f32 %v605, %v613
      %v616 = vadd.f32 %v610, %v614
      %v617 = vadd.f32 %v611, %v615
      %v618 = vmul.f32 %v608, %v608
      %v619 = vmul.f32 %v609, %v609
      %v620 = vmul.f32 %v616, %v616
      %v621 = vmul.f32 %v617, %v617
      %v622 = vadd.f32 %v618, %v620
      %v623 = vadd.f32 %v619, %v621
      %vm624 = vcmask 130048
      %v625 = vsel %vm624, %v622, 0.0
      %v626 = vsel %vm624, %v623, 0.0
      %v627 = vadd.f32 %v625, %v626
      %628 = vadd.xlane.f32.xlu0 %v627
      %v629 = vpop.xlane.xlu0 %628
      %v630 = vrot.slane %v629, 4
      %v631 = vadd.f32 %v629, %v630
      %v632 = vrot.slane %v631, 2
      %v633 = vadd.f32 %v631, %v632
      %v634 = vrot.slane %v633, 1
      %v635 = vadd.f32 %v633, %v634
      %s636 = vtos %v635
      loop: start=0, step=1, limit=10
      $region69: #{unrolled_net_forward.24} parent=67 // loop_pre_header
        _
      $region70: #{unrolled_net_forward.24} parent=67 // loop_header
        %s638 = sphi 0, %s642
        %p639 = scmp.ge.s32.totalorder %s638, 10
        %v643 = vphi 0.0, %v1465
        %v644 = vphi 0.0, %v1466
        %v645 = vphi 0.0, %v1469
        %v646 = vphi 0.0, %v1470
        %v647 = vphi %v608, %v1473
        %v648 = vphi %v609, %v1474
        %v649 = vphi %v616, %v1477
        %v650 = vphi %v617, %v1478
        %v651 = vphi %v608, %v1505
        %v652 = vphi %v609, %v1506
        %v653 = vphi %v616, %v1509
        %v654 = vphi %v617, %v1510
        %s655 = sphi %s636, %s1496
      $region71: #{unrolled_net_forward.24} parent=67 // loop_header_branch
        %641 = sbr.rel (%p639) target = $region75
      $region72: #{unrolled_net_forward.24} parent=67 // loop_body
        loop: start=0, step=1, limit=4
        $region76: #{unrolled_net_forward.24} parent=72 // loop_pre_header
          _
        $region77: #{unrolled_net_forward.24} parent=72 // loop_header
          %s657 = sphi 0, %s661
          %p658 = scmp.ge.s32.totalorder %s657, 4
          %v662 = vphi 0.0, %v1421
          %v663 = vphi 0.0, %v1422
          %v664 = vphi 0.0, %v1429
          %v665 = vphi 0.0, %v1430
        $region78: #{unrolled_net_forward.24} parent=72 // loop_header_branch
          %660 = sbr.rel (%p658) target = $region82
        $region79: #{unrolled_net_forward.24} parent=72 // loop_body
          %s666 = smul.u32 %s657, 16
          %s667 = scalar_lea.vmem %s561, %s666
          %v668 = vld [vmem:[%s667] sm:$0xff]
          %v669 = vld [vmem:[%s667 + $0x8] sm:$0xff]
          %s670 = scalar_lea.vmem %s568, %s666
          %v671 = vld [vmem:[%s670] sm:$0xff]
          %v672 = vld [vmem:[%s670 + $0x8] sm:$0xff]
          %v673 = vmul.f32 %v668, %v651
          %v674 = vmul.f32 %v669, %v652
          %v675 = vmul.f32 %v671, %v653
          %v676 = vmul.f32 %v672, %v654
          %v677 = vsub.f32 %v673, %v675
          %v678 = vsub.f32 %v674, %v676
          %v679 = vmul.f32 %v668, %v653
          %v680 = vmul.f32 %v669, %v654
          %v681 = vmul.f32 %v671, %v651
          %v682 = vmul.f32 %v672, %v652
          %v683 = vadd.f32 %v679, %v681
          %v684 = vadd.f32 %v680, %v682
          %v685 = vpack.c.bf16 %v678, %v677
          %v686 = vpack.c.bf16 %v684, %v683
          %v689 = vunpack.c.l.b16 %v587
          %v690 = vunpack.c.l.b16 %v588
          %v691 = vpack.c.b16 %v690, %v689
          %v693 = vsel %vm624, %v691, 0
          %695 = vmatprep.subr.bf16.mxu0 0
          %696 = vmatpush1.bf16.msra.mxu0 %v685
          %697 = vmatprep.subr.bf16.mxu0 0
          %698 = vmatpush1.bf16.msra.mxu0 0
          %699 = vmatprep.subr.bf16.mxu0 0
          %700 = vmatpush1.bf16.msra.mxu0 0
          %701 = vmatprep.subr.bf16.mxu0 0
          %702 = vmatpush1.bf16.msra.mxu0 0
          %703 = vmatprep.subr.bf16.mxu0 0
          %704 = vmatpush1.bf16.msra.mxu0 0
          %705 = vmatprep.subr.bf16.mxu0 0
          %706 = vmatpush1.bf16.msra.mxu0 0
          %707 = vmatprep.subr.bf16.mxu0 0
          %708 = vmatpush1.bf16.msra.mxu0 0
          %709 = vmatprep.subr.bf16.mxu0 0
          %710 = vmatpush1.bf16.msra.mxu0 0
          %711 = vmatprep.subr.bf16.mxu0 0
          %712 = vmatpush1.bf16.msra.mxu0 0
          %713 = vmatprep.subr.bf16.mxu0 0
          %714 = vmatpush1.bf16.msra.mxu0 0
          %715 = vmatprep.subr.bf16.mxu0 0
          %716 = vmatpush1.bf16.msra.mxu0 0
          %717 = vmatprep.subr.bf16.mxu0 0
          %718 = vmatpush1.bf16.msra.mxu0 0
          %719 = vmatprep.subr.bf16.mxu0 0
          %720 = vmatpush1.bf16.msra.mxu0 0
          %721 = vmatprep.subr.bf16.mxu0 0
          %722 = vmatpush1.bf16.msra.mxu0 0
          %723 = vmatprep.subr.bf16.mxu0 0
          %724 = vmatpush1.bf16.msra.mxu0 0
          %725 = vmatprep.subr.bf16.mxu0 0
          %726 = vmatpush1.bf16.msra.mxu0 0
          %727 = vmatprep.mubr.bf16.mxu0 0
          %728 = vmatmul.mubr.bf16.gmra.mrb[0].mxu0 %v693
          %v729 = vpop.f32.mrb[0].mxu0
          %v730 = vadd.f32 0.0, %v729
          %v731 = vpop.f32.mrb[0].mxu0
          %v732 = vpop.f32.mrb[0].mxu0
          %v733 = vadd.f32 0.0, %v732
          %v734 = vpop.f32.mrb[0].mxu0
          %735 = vdwg.mxu0
          %v738 = vunpack.c.l.b16 %v589
          %v739 = vunpack.c.l.b16 %v590
          %v740 = vpack.c.b16 %v739, %v738
          %v742 = vsel %vm624, %v740, 0
          %744 = vmatprep.subr.bf16.mxu0 0
          %745 = vmatpush1.bf16.msra.mxu0 %v686
          %746 = vmatprep.subr.bf16.mxu0 0
          %747 = vmatpush1.bf16.msra.mxu0 0
          %748 = vmatprep.subr.bf16.mxu0 0
          %749 = vmatpush1.bf16.msra.mxu0 0
          %750 = vmatprep.subr.bf16.mxu0 0
          %751 = vmatpush1.bf16.msra.mxu0 0
          %752 = vmatprep.subr.bf16.mxu0 0
          %753 = vmatpush1.bf16.msra.mxu0 0
          %754 = vmatprep.subr.bf16.mxu0 0
          %755 = vmatpush1.bf16.msra.mxu0 0
          %756 = vmatprep.subr.bf16.mxu0 0
          %757 = vmatpush1.bf16.msra.mxu0 0
          %758 = vmatprep.subr.bf16.mxu0 0
          %759 = vmatpush1.bf16.msra.mxu0 0
          %760 = vmatprep.subr.bf16.mxu0 0
          %761 = vmatpush1.bf16.msra.mxu0 0
          %762 = vmatprep.subr.bf16.mxu0 0
          %763 = vmatpush1.bf16.msra.mxu0 0
          %764 = vmatprep.subr.bf16.mxu0 0
          %765 = vmatpush1.bf16.msra.mxu0 0
          %766 = vmatprep.subr.bf16.mxu0 0
          %767 = vmatpush1.bf16.msra.mxu0 0
          %768 = vmatprep.subr.bf16.mxu0 0
          %769 = vmatpush1.bf16.msra.mxu0 0
          %770 = vmatprep.subr.bf16.mxu0 0
          %771 = vmatpush1.bf16.msra.mxu0 0
          %772 = vmatprep.subr.bf16.mxu0 0
          %773 = vmatpush1.bf16.msra.mxu0 0
          %774 = vmatprep.subr.bf16.mxu0 0
          %775 = vmatpush1.bf16.msra.mxu0 0
          %776 = vmatprep.mubr.bf16.mxu0 0
          %777 = vmatmul.mubr.bf16.gmra.mrb[0].mxu0 %v742
          %v778 = vpop.f32.mrb[0].mxu0
          %v779 = vadd.f32 0.0, %v778
          %v780 = vpop.f32.mrb[0].mxu0
          %v781 = vpop.f32.mrb[0].mxu0
          %v782 = vadd.f32 0.0, %v781
          %v783 = vpop.f32.mrb[0].mxu0
          %784 = vdwg.mxu0
          %v785 = vsub.f32 %v730, %v779
          %v786 = vsub.f32 %v733, %v782
          %787 = vmatprep.subr.bf16.mxu0 0
          %788 = vmatpush1.bf16.msra.mxu0 %v685
          %789 = vmatprep.subr.bf16.mxu0 0
          %790 = vmatpush1.bf16.msra.mxu0 0
          %791 = vmatprep.subr.bf16.mxu0 0
          %792 = vmatpush1.bf16.msra.mxu0 0
          %793 = vmatprep.subr.bf16.mxu0 0
          %794 = vmatpush1.bf16.msra.mxu0 0
          %795 = vmatprep.subr.bf16.mxu0 0
          %796 = vmatpush1.bf16.msra.mxu0 0
          %797 = vmatprep.subr.bf16.mxu0 0
          %798 = vmatpush1.bf16.msra.mxu0 0
          %799 = vmatprep.subr.bf16.mxu0 0
          %800 = vmatpush1.bf16.msra.mxu0 0
          %801 = vmatprep.subr.bf16.mxu0 0
          %802 = vmatpush1.bf16.msra.mxu0 0
          %803 = vmatprep.subr.bf16.mxu0 0
          %804 = vmatpush1.bf16.msra.mxu0 0
          %805 = vmatprep.subr.bf16.mxu0 0
          %806 = vmatpush1.bf16.msra.mxu0 0
          %807 = vmatprep.subr.bf16.mxu0 0
          %808 = vmatpush1.bf16.msra.mxu0 0
          %809 = vmatprep.subr.bf16.mxu0 0
          %810 = vmatpush1.bf16.msra.mxu0 0
          %811 = vmatprep.subr.bf16.mxu0 0
          %812 = vmatpush1.bf16.msra.mxu0 0
          %813 = vmatprep.subr.bf16.mxu0 0
          %814 = vmatpush1.bf16.msra.mxu0 0
          %815 = vmatprep.subr.bf16.mxu0 0
          %816 = vmatpush1.bf16.msra.mxu0 0
          %817 = vmatprep.subr.bf16.mxu0 0
          %818 = vmatpush1.bf16.msra.mxu0 0
          %819 = vmatprep.mubr.bf16.mxu0 0
          %820 = vmatmul.mubr.bf16.gmra.mrb[0].mxu0 %v742
          %v821 = vpop.f32.mrb[0].mxu0
          %v822 = vadd.f32 0.0, %v821
          %v823 = vpop.f32.mrb[0].mxu0
          %v824 = vpop.f32.mrb[0].mxu0
          %v825 = vadd.f32 0.0, %v824
          %v826 = vpop.f32.mrb[0].mxu0
          %827 = vdwg.mxu0
          %828 = vmatprep.subr.bf16.mxu0 0
          %829 = vmatpush1.bf16.msra.mxu0 %v686
          %830 = vmatprep.subr.bf16.mxu0 0
          %831 = vmatpush1.bf16.msra.mxu0 0
          %832 = vmatprep.subr.bf16.mxu0 0
          %833 = vmatpush1.bf16.msra.mxu0 0
          %834 = vmatprep.subr.bf16.mxu0 0
          %835 = vmatpush1.bf16.msra.mxu0 0
          %836 = vmatprep.subr.bf16.mxu0 0
          %837 = vmatpush1.bf16.msra.mxu0 0
          %838 = vmatprep.subr.bf16.mxu0 0
          %839 = vmatpush1.bf16.msra.mxu0 0
          %840 = vmatprep.subr.bf16.mxu0 0
          %841 = vmatpush1.bf16.msra.mxu0 0
          %842 = vmatprep.subr.bf16.mxu0 0
          %843 = vmatpush1.bf16.msra.mxu0 0
          %844 = vmatprep.subr.bf16.mxu0 0
          %845 = vmatpush1.bf16.msra.mxu0 0
          %846 = vmatprep.subr.bf16.mxu0 0
          %847 = vmatpush1.bf16.msra.mxu0 0
          %848 = vmatprep.subr.bf16.mxu0 0
          %849 = vmatpush1.bf16.msra.mxu0 0
          %850 = vmatprep.subr.bf16.mxu0 0
          %851 = vmatpush1.bf16.msra.mxu0 0
          %852 = vmatprep.subr.bf16.mxu0 0
          %853 = vmatpush1.bf16.msra.mxu0 0
          %854 = vmatprep.subr.bf16.mxu0 0
          %855 = vmatpush1.bf16.msra.mxu0 0
          %856 = vmatprep.subr.bf16.mxu0 0
          %857 = vmatpush1.bf16.msra.mxu0 0
          %858 = vmatprep.subr.bf16.mxu0 0
          %859 = vmatpush1.bf16.msra.mxu0 0
          %860 = vmatprep.mubr.bf16.mxu0 0
          %861 = vmatmul.mubr.bf16.gmra.mrb[0].mxu0 %v693
          %v862 = vpop.f32.mrb[0].mxu0
          %v863 = vadd.f32 %v822, %v862
          %v864 = vpop.f32.mrb[0].mxu0
          %v865 = vpop.f32.mrb[0].mxu0
          %v866 = vadd.f32 %v825, %v865
          %v867 = vpop.f32.mrb[0].mxu0
          %868 = vdwg.mxu0
          %v869 = vpack.c.bf16 %v786, %v785
          %v870 = vpack.c.bf16 %v866, %v863
          %v873 = vunpack.c.l.b16 %v591
          %v874 = vunpack.c.l.b16 %v592
          %v875 = vpack.c.b16 %v874, %v873
          %v878 = vsel %vm624, %v869, 0
          %880 = vmatprep.subr.bf16.mxu0 0
          %881 = vmatpush1.bf16.msra.mxu0 %v875
          %882 = vmatprep.subr.bf16.mxu0 0
          %883 = vmatpush1.bf16.msra.mxu0 0
          %884 = vmatprep.subr.bf16.mxu0 0
          %885 = vmatpush1.bf16.msra.mxu0 0
          %886 = vmatprep.subr.bf16.mxu0 0
          %887 = vmatpush1.bf16.msra.mxu0 0
          %888 = vmatprep.subr.bf16.mxu0 0
          %889 = vmatpush1.bf16.msra.mxu0 0
          %890 = vmatprep.subr.bf16.mxu0 0
          %891 = vmatpush1.bf16.msra.mxu0 0
          %892 = vmatprep.subr.bf16.mxu0 0
          %893 = vmatpush1.bf16.msra.mxu0 0
          %894 = vmatprep.subr.bf16.mxu0 0
          %895 = vmatpush1.bf16.msra.mxu0 0
          %896 = vmatprep.subr.bf16.mxu0 0
          %897 = vmatpush1.bf16.msra.mxu0 0
          %898 = vmatprep.subr.bf16.mxu0 0
          %899 = vmatpush1.bf16.msra.mxu0 0
          %900 = vmatprep.subr.bf16.mxu0 0
          %901 = vmatpush1.bf16.msra.mxu0 0
          %902 = vmatprep.subr.bf16.mxu0 0
          %903 = vmatpush1.bf16.msra.mxu0 0
          %904 = vmatprep.subr.bf16.mxu0 0
          %905 = vmatpush1.bf16.msra.mxu0 0
          %906 = vmatprep.subr.bf16.mxu0 0
          %907 = vmatpush1.bf16.msra.mxu0 0
          %908 = vmatprep.subr.bf16.mxu0 0
          %909 = vmatpush1.bf16.msra.mxu0 0
          %910 = vmatprep.subr.bf16.mxu0 0
          %911 = vmatpush1.bf16.msra.mxu0 0
          %912 = vmatprep.mubr.bf16.mxu0 0
          %913 = vmatmul.mubr.bf16.gmra.mrb[0].mxu0 %v878
          %v914 = vpop.f32.mrb[0].mxu0
          %v915 = vadd.f32 0.0, %v914
          %v916 = vpop.f32.mrb[0].mxu0
          %v917 = vpop.f32.mrb[0].mxu0
          %v918 = vadd.f32 0.0, %v917
          %v919 = vpop.f32.mrb[0].mxu0
          %920 = vdwg.mxu0
          %v923 = vunpack.c.l.b16 %v593
          %v924 = vunpack.c.l.b16 %v594
          %v925 = vpack.c.b16 %v924, %v923
          %v928 = vsel %vm624, %v870, 0
          %930 = vmatprep.subr.bf16.mxu0 0
          %931 = vmatpush1.bf16.msra.mxu0 %v925
          %932 = vmatprep.subr.bf16.mxu0 0
          %933 = vmatpush1.bf16.msra.mxu0 0
          %934 = vmatprep.subr.bf16.mxu0 0
          %935 = vmatpush1.bf16.msra.mxu0 0
          %936 = vmatprep.subr.bf16.mxu0 0
          %937 = vmatpush1.bf16.msra.mxu0 0
          %938 = vmatprep.subr.bf16.mxu0 0
          %939 = vmatpush1.bf16.msra.mxu0 0
          %940 = vmatprep.subr.bf16.mxu0 0
          %941 = vmatpush1.bf16.msra.mxu0 0
          %942 = vmatprep.subr.bf16.mxu0 0
          %943 = vmatpush1.bf16.msra.mxu0 0
          %944 = vmatprep.subr.bf16.mxu0 0
          %945 = vmatpush1.bf16.msra.mxu0 0
          %946 = vmatprep.subr.bf16.mxu0 0
          %947 = vmatpush1.bf16.msra.mxu0 0
          %948 = vmatprep.subr.bf16.mxu0 0
          %949 = vmatpush1.bf16.msra.mxu0 0
          %950 = vmatprep.subr.bf16.mxu0 0
          %951 = vmatpush1.bf16.msra.mxu0 0
          %952 = vmatprep.subr.bf16.mxu0 0
          %953 = vmatpush1.bf16.msra.mxu0 0
          %954 = vmatprep.subr.bf16.mxu0 0
          %955 = vmatpush1.bf16.msra.mxu0 0
          %956 = vmatprep.subr.bf16.mxu0 0
          %957 = vmatpush1.bf16.msra.mxu0 0
          %958 = vmatprep.subr.bf16.mxu0 0
          %959 = vmatpush1.bf16.msra.mxu0 0
          %960 = vmatprep.subr.bf16.mxu0 0
          %961 = vmatpush1.bf16.msra.mxu0 0
          %962 = vmatprep.mubr.bf16.mxu0 0
          %963 = vmatmul.mubr.bf16.gmra.mrb[0].mxu0 %v928
          %v964 = vpop.f32.mrb[0].mxu0
          %v965 = vadd.f32 0.0, %v964
          %v966 = vpop.f32.mrb[0].mxu0
          %v967 = vpop.f32.mrb[0].mxu0
          %v968 = vadd.f32 0.0, %v967
          %v969 = vpop.f32.mrb[0].mxu0
          %970 = vdwg.mxu0
          %v971 = vsub.f32 %v915, %v965
          %v972 = vsub.f32 %v918, %v968
          %973 = vmatprep.subr.bf16.mxu0 0
          %974 = vmatpush1.bf16.msra.mxu0 %v875
          %975 = vmatprep.subr.bf16.mxu0 0
          %976 = vmatpush1.bf16.msra.mxu0 0
          %977 = vmatprep.subr.bf16.mxu0 0
          %978 = vmatpush1.bf16.msra.mxu0 0
          %979 = vmatprep.subr.bf16.mxu0 0
          %980 = vmatpush1.bf16.msra.mxu0 0
          %981 = vmatprep.subr.bf16.mxu0 0
          %982 = vmatpush1.bf16.msra.mxu0 0
          %983 = vmatprep.subr.bf16.mxu0 0
          %984 = vmatpush1.bf16.msra.mxu0 0
          %985 = vmatprep.subr.bf16.mxu0 0
          %986 = vmatpush1.bf16.msra.mxu0 0
          %987 = vmatprep.subr.bf16.mxu0 0
          %988 = vmatpush1.bf16.msra.mxu0 0
          %989 = vmatprep.subr.bf16.mxu0 0
          %990 = vmatpush1.bf16.msra.mxu0 0
          %991 = vmatprep.subr.bf16.mxu0 0
          %992 = vmatpush1.bf16.msra.mxu0 0
          %993 = vmatprep.subr.bf16.mxu0 0
          %994 = vmatpush1.bf16.msra.mxu0 0
          %995 = vmatprep.subr.bf16.mxu0 0
          %996 = vmatpush1.bf16.msra.mxu0 0
          %997 = vmatprep.subr.bf16.mxu0 0
          %998 = vmatpush1.bf16.msra.mxu0 0
          %999 = vmatprep.subr.bf16.mxu0 0
          %1000 = vmatpush1.bf16.msra.mxu0 0
          %1001 = vmatprep.subr.bf16.mxu0 0
          %1002 = vmatpush1.bf16.msra.mxu0 0
          %1003 = vmatprep.subr.bf16.mxu0 0
          %1004 = vmatpush1.bf16.msra.mxu0 0
          %1005 = vmatprep.mubr.bf16.mxu0 0
          %1006 = vmatmul.mubr.bf16.gmra.mrb[0].mxu0 %v928
          %v1007 = vpop.f32.mrb[0].mxu0
          %v1008 = vadd.f32 0.0, %v1007
          %v1009 = vpop.f32.mrb[0].mxu0
          %v1010 = vpop.f32.mrb[0].mxu0
          %v1011 = vadd.f32 0.0, %v1010
          %v1012 = vpop.f32.mrb[0].mxu0
          %1013 = vdwg.mxu0
          %1014 = vmatprep.subr.bf16.mxu0 0
          %1015 = vmatpush1.bf16.msra.mxu0 %v925
          %1016 = vmatprep.subr.bf16.mxu0 0
          %1017 = vmatpush1.bf16.msra.mxu0 0
          %1018 = vmatprep.subr.bf16.mxu0 0
          %1019 = vmatpush1.bf16.msra.mxu0 0
          %1020 = vmatprep.subr.bf16.mxu0 0
          %1021 = vmatpush1.bf16.msra.mxu0 0
          %1022 = vmatprep.subr.bf16.mxu0 0
          %1023 = vmatpush1.bf16.msra.mxu0 0
          %1024 = vmatprep.subr.bf16.mxu0 0
          %1025 = vmatpush1.bf16.msra.mxu0 0
          %1026 = vmatprep.subr.bf16.mxu0 0
          %1027 = vmatpush1.bf16.msra.mxu0 0
          %1028 = vmatprep.subr.bf16.mxu0 0
          %1029 = vmatpush1.bf16.msra.mxu0 0
          %1030 = vmatprep.subr.bf16.mxu0 0
          %1031 = vmatpush1.bf16.msra.mxu0 0
          %1032 = vmatprep.subr.bf16.mxu0 0
          %1033 = vmatpush1.bf16.msra.mxu0 0
          %1034 = vmatprep.subr.bf16.mxu0 0
          %1035 = vmatpush1.bf16.msra.mxu0 0
          %1036 = vmatprep.subr.bf16.mxu0 0
          %1037 = vmatpush1.bf16.msra.mxu0 0
          %1038 = vmatprep.subr.bf16.mxu0 0
          %1039 = vmatpush1.bf16.msra.mxu0 0
          %1040 = vmatprep.subr.bf16.mxu0 0
          %1041 = vmatpush1.bf16.msra.mxu0 0
          %1042 = vmatprep.subr.bf16.mxu0 0
          %1043 = vmatpush1.bf16.msra.mxu0 0
          %1044 = vmatprep.subr.bf16.mxu0 0
          %1045 = vmatpush1.bf16.msra.mxu0 0
          %1046 = vmatprep.mubr.bf16.mxu0 0
          %1047 = vmatmul.mubr.bf16.gmra.mrb[0].mxu0 %v878
          %v1048 = vpop.f32.mrb[0].mxu0
          %v1049 = vadd.f32 %v1008, %v1048
          %v1050 = vpop.f32.mrb[0].mxu0
          %v1051 = vpop.f32.mrb[0].mxu0
          %v1052 = vadd.f32 %v1011, %v1051
          %v1053 = vpop.f32.mrb[0].mxu0
          %1054 = vdwg.mxu0
          %v1055 = vmul.f32 %v971, %v599
          %v1056 = vmul.f32 %v972, %v600
          %v1057 = vmul.f32 %v1049, %v599
          %v1058 = vmul.f32 %v1052, %v600
          %v1059 = vpack.c.bf16 %v1056, %v1055
          %v1060 = vpack.c.bf16 %v1058, %v1057
          %1061 = vmatprep.subr.bf16.mxu0 0
          %1062 = vmatpush1.bf16.msra.mxu0 %v1059
          %1063 = vmatprep.subr.bf16.mxu0 0
          %1064 = vmatpush1.bf16.msra.mxu0 0
          %1065 = vmatprep.subr.bf16.mxu0 0
          %1066 = vmatpush1.bf16.msra.mxu0 0
          %1067 = vmatprep.subr.bf16.mxu0 0
          %1068 = vmatpush1.bf16.msra.mxu0 0
          %1069 = vmatprep.subr.bf16.mxu0 0
          %1070 = vmatpush1.bf16.msra.mxu0 0
          %1071 = vmatprep.subr.bf16.mxu0 0
          %1072 = vmatpush1.bf16.msra.mxu0 0
          %1073 = vmatprep.subr.bf16.mxu0 0
          %1074 = vmatpush1.bf16.msra.mxu0 0
          %1075 = vmatprep.subr.bf16.mxu0 0
          %1076 = vmatpush1.bf16.msra.mxu0 0
          %1077 = vmatprep.subr.bf16.mxu0 0
          %1078 = vmatpush1.bf16.msra.mxu0 0
          %1079 = vmatprep.subr.bf16.mxu0 0
          %1080 = vmatpush1.bf16.msra.mxu0 0
          %1081 = vmatprep.subr.bf16.mxu0 0
          %1082 = vmatpush1.bf16.msra.mxu0 0
          %1083 = vmatprep.subr.bf16.mxu0 0
          %1084 = vmatpush1.bf16.msra.mxu0 0
          %1085 = vmatprep.subr.bf16.mxu0 0
          %1086 = vmatpush1.bf16.msra.mxu0 0
          %1087 = vmatprep.subr.bf16.mxu0 0
          %1088 = vmatpush1.bf16.msra.mxu0 0
          %1089 = vmatprep.subr.bf16.mxu0 0
          %1090 = vmatpush1.bf16.msra.mxu0 0
          %1091 = vmatprep.subr.bf16.mxu0 0
          %1092 = vmatpush1.bf16.msra.mxu0 0
          %1093 = vmatprep.mubr.bf16.mxu0 0
          %1094 = vmatmul.mubr.bf16.gmra.mrb[0].mxu0 %v693
          %v1095 = vpop.f32.mrb[0].mxu0
          %v1096 = vadd.f32 0.0, %v1095
          %v1097 = vpop.f32.mrb[0].mxu0
          %v1098 = vpop.f32.mrb[0].mxu0
          %v1099 = vadd.f32 0.0, %v1098
          %v1100 = vpop.f32.mrb[0].mxu0
          %1101 = vdwg.mxu0
          %v1104 = vunpack.c.l.b16 %v595
          %v1105 = vunpack.c.l.b16 %v596
          %v1106 = vpack.c.b16 %v1105, %v1104
          %v1108 = vsel %vm624, %v1106, 0
          %1110 = vmatprep.subr.bf16.mxu0 0
          %1111 = vmatpush1.bf16.msra.mxu0 %v1060
          %1112 = vmatprep.subr.bf16.mxu0 0
          %1113 = vmatpush1.bf16.msra.mxu0 0
          %1114 = vmatprep.subr.bf16.mxu0 0
          %1115 = vmatpush1.bf16.msra.mxu0 0
          %1116 = vmatprep.subr.bf16.mxu0 0
          %1117 = vmatpush1.bf16.msra.mxu0 0
          %1118 = vmatprep.subr.bf16.mxu0 0
          %1119 = vmatpush1.bf16.msra.mxu0 0
          %1120 = vmatprep.subr.bf16.mxu0 0
          %1121 = vmatpush1.bf16.msra.mxu0 0
          %1122 = vmatprep.subr.bf16.mxu0 0
          %1123 = vmatpush1.bf16.msra.mxu0 0
          %1124 = vmatprep.subr.bf16.mxu0 0
          %1125 = vmatpush1.bf16.msra.mxu0 0
          %1126 = vmatprep.subr.bf16.mxu0 0
          %1127 = vmatpush1.bf16.msra.mxu0 0
          %1128 = vmatprep.subr.bf16.mxu0 0
          %1129 = vmatpush1.bf16.msra.mxu0 0
          %1130 = vmatprep.subr.bf16.mxu0 0
          %1131 = vmatpush1.bf16.msra.mxu0 0
          %1132 = vmatprep.subr.bf16.mxu0 0
          %1133 = vmatpush1.bf16.msra.mxu0 0
          %1134 = vmatprep.subr.bf16.mxu0 0
          %1135 = vmatpush1.bf16.msra.mxu0 0
          %1136 = vmatprep.subr.bf16.mxu0 0
          %1137 = vmatpush1.bf16.msra.mxu0 0
          %1138 = vmatprep.subr.bf16.mxu0 0
          %1139 = vmatpush1.bf16.msra.mxu0 0
          %1140 = vmatprep.subr.bf16.mxu0 0
          %1141 = vmatpush1.bf16.msra.mxu0 0
          %1142 = vmatprep.mubr.bf16.mxu0 0
          %1143 = vmatmul.mubr.bf16.gmra.mrb[0].mxu0 %v1108
          %v1144 = vpop.f32.mrb[0].mxu0
          %v1145 = vadd.f32 0.0, %v1144
          %v1146 = vpop.f32.mrb[0].mxu0
          %v1147 = vpop.f32.mrb[0].mxu0
          %v1148 = vadd.f32 0.0, %v1147
          %v1149 = vpop.f32.mrb[0].mxu0
          %1150 = vdwg.mxu0
          %v1151 = vsub.f32 %v1096, %v1145
          %v1152 = vsub.f32 %v1099, %v1148
          %1153 = vmatprep.subr.bf16.mxu0 0
          %1154 = vmatpush1.bf16.msra.mxu0 %v1059
          %1155 = vmatprep.subr.bf16.mxu0 0
          %1156 = vmatpush1.bf16.msra.mxu0 0
          %1157 = vmatprep.subr.bf16.mxu0 0
          %1158 = vmatpush1.bf16.msra.mxu0 0
          %1159 = vmatprep.subr.bf16.mxu0 0
          %1160 = vmatpush1.bf16.msra.mxu0 0
          %1161 = vmatprep.subr.bf16.mxu0 0
          %1162 = vmatpush1.bf16.msra.mxu0 0
          %1163 = vmatprep.subr.bf16.mxu0 0
          %1164 = vmatpush1.bf16.msra.mxu0 0
          %1165 = vmatprep.subr.bf16.mxu0 0
          %1166 = vmatpush1.bf16.msra.mxu0 0
          %1167 = vmatprep.subr.bf16.mxu0 0
          %1168 = vmatpush1.bf16.msra.mxu0 0
          %1169 = vmatprep.subr.bf16.mxu0 0
          %1170 = vmatpush1.bf16.msra.mxu0 0
          %1171 = vmatprep.subr.bf16.mxu0 0
          %1172 = vmatpush1.bf16.msra.mxu0 0
          %1173 = vmatprep.subr.bf16.mxu0 0
          %1174 = vmatpush1.bf16.msra.mxu0 0
          %1175 = vmatprep.subr.bf16.mxu0 0
          %1176 = vmatpush1.bf16.msra.mxu0 0
          %1177 = vmatprep.subr.bf16.mxu0 0
          %1178 = vmatpush1.bf16.msra.mxu0 0
          %1179 = vmatprep.subr.bf16.mxu0 0
          %1180 = vmatpush1.bf16.msra.mxu0 0
          %1181 = vmatprep.subr.bf16.mxu0 0
          %1182 = vmatpush1.bf16.msra.mxu0 0
          %1183 = vmatprep.subr.bf16.mxu0 0
          %1184 = vmatpush1.bf16.msra.mxu0 0
          %1185 = vmatprep.mubr.bf16.mxu0 0
          %1186 = vmatmul.mubr.bf16.gmra.mrb[0].mxu0 %v1108
          %v1187 = vpop.f32.mrb[0].mxu0
          %v1188 = vadd.f32 0.0, %v1187
          %v1189 = vpop.f32.mrb[0].mxu0
          %v1190 = vpop.f32.mrb[0].mxu0
          %v1191 = vadd.f32 0.0, %v1190
          %v1192 = vpop.f32.mrb[0].mxu0
          %1193 = vdwg.mxu0
          %1194 = vmatprep.subr.bf16.mxu0 0
          %1195 = vmatpush1.bf16.msra.mxu0 %v1060
          %1196 = vmatprep.subr.bf16.mxu0 0
          %1197 = vmatpush1.bf16.msra.mxu0 0
          %1198 = vmatprep.subr.bf16.mxu0 0
          %1199 = vmatpush1.bf16.msra.mxu0 0
          %1200 = vmatprep.subr.bf16.mxu0 0
          %1201 = vmatpush1.bf16.msra.mxu0 0
          %1202 = vmatprep.subr.bf16.mxu0 0
          %1203 = vmatpush1.bf16.msra.mxu0 0
          %1204 = vmatprep.subr.bf16.mxu0 0
          %1205 = vmatpush1.bf16.msra.mxu0 0
          %1206 = vmatprep.subr.bf16.mxu0 0
          %1207 = vmatpush1.bf16.msra.mxu0 0
          %1208 = vmatprep.subr.bf16.mxu0 0
          %1209 = vmatpush1.bf16.msra.mxu0 0
          %1210 = vmatprep.subr.bf16.mxu0 0
          %1211 = vmatpush1.bf16.msra.mxu0 0
          %1212 = vmatprep.subr.bf16.mxu0 0
          %1213 = vmatpush1.bf16.msra.mxu0 0
          %1214 = vmatprep.subr.bf16.mxu0 0
          %1215 = vmatpush1.bf16.msra.mxu0 0
          %1216 = vmatprep.subr.bf16.mxu0 0
          %1217 = vmatpush1.bf16.msra.mxu0 0
          %1218 = vmatprep.subr.bf16.mxu0 0
          %1219 = vmatpush1.bf16.msra.mxu0 0
          %1220 = vmatprep.subr.bf16.mxu0 0
          %1221 = vmatpush1.bf16.msra.mxu0 0
          %1222 = vmatprep.subr.bf16.mxu0 0
          %1223 = vmatpush1.bf16.msra.mxu0 0
          %1224 = vmatprep.subr.bf16.mxu0 0
          %1225 = vmatpush1.bf16.msra.mxu0 0
          %1226 = vmatprep.mubr.bf16.mxu0 0
          %1227 = vmatmul.mubr.bf16.gmra.mrb[0].mxu0 %v693
          %v1228 = vpop.f32.mrb[0].mxu0
          %v1229 = vadd.f32 %v1188, %v1228
          %v1230 = vpop.f32.mrb[0].mxu0
          %v1231 = vpop.f32.mrb[0].mxu0
          %v1232 = vadd.f32 %v1191, %v1231
          %v1233 = vpop.f32.mrb[0].mxu0
          %1234 = vdwg.mxu0
          %v1235 = vpack.c.bf16 %v1152, %v1151
          %v1236 = vpack.c.bf16 %v1232, %v1229
          %v1238 = vsel %vm624, %v1235, 0
          %1240 = vmatprep.subr.bf16.mxu0 0
          %1241 = vmatpush1.bf16.msra.mxu0 %v875
          %1242 = vmatprep.subr.bf16.mxu0 0
          %1243 = vmatpush1.bf16.msra.mxu0 0
          %1244 = vmatprep.subr.bf16.mxu0 0
          %1245 = vmatpush1.bf16.msra.mxu0 0
          %1246 = vmatprep.subr.bf16.mxu0 0
          %1247 = vmatpush1.bf16.msra.mxu0 0
          %1248 = vmatprep.subr.bf16.mxu0 0
          %1249 = vmatpush1.bf16.msra.mxu0 0
          %1250 = vmatprep.subr.bf16.mxu0 0
          %1251 = vmatpush1.bf16.msra.mxu0 0
          %1252 = vmatprep.subr.bf16.mxu0 0
          %1253 = vmatpush1.bf16.msra.mxu0 0
          %1254 = vmatprep.subr.bf16.mxu0 0
          %1255 = vmatpush1.bf16.msra.mxu0 0
          %1256 = vmatprep.subr.bf16.mxu0 0
          %1257 = vmatpush1.bf16.msra.mxu0 0
          %1258 = vmatprep.subr.bf16.mxu0 0
          %1259 = vmatpush1.bf16.msra.mxu0 0
          %1260 = vmatprep.subr.bf16.mxu0 0
          %1261 = vmatpush1.bf16.msra.mxu0 0
          %1262 = vmatprep.subr.bf16.mxu0 0
          %1263 = vmatpush1.bf16.msra.mxu0 0
          %1264 = vmatprep.subr.bf16.mxu0 0
          %1265 = vmatpush1.bf16.msra.mxu0 0
          %1266 = vmatprep.subr.bf16.mxu0 0
          %1267 = vmatpush1.bf16.msra.mxu0 0
          %1268 = vmatprep.subr.bf16.mxu0 0
          %1269 = vmatpush1.bf16.msra.mxu0 0
          %1270 = vmatprep.subr.bf16.mxu0 0
          %1271 = vmatpush1.bf16.msra.mxu0 0
          %1272 = vmatprep.mubr.bf16.mxu0 0
          %1273 = vmatmul.mubr.bf16.gmra.mrb[0].mxu0 %v1238
          %v1274 = vpop.f32.mrb[0].mxu0
          %v1275 = vadd.f32 0.0, %v1274
          %v1276 = vpop.f32.mrb[0].mxu0
          %v1277 = vpop.f32.mrb[0].mxu0
          %v1278 = vadd.f32 0.0, %v1277
          %v1279 = vpop.f32.mrb[0].mxu0
          %1280 = vdwg.mxu0
          %v1283 = vunpack.c.l.b16 %v597
          %v1284 = vunpack.c.l.b16 %v598
          %v1285 = vpack.c.b16 %v1284, %v1283
          %v1288 = vsel %vm624, %v1236, 0
          %1290 = vmatprep.subr.bf16.mxu0 0
          %1291 = vmatpush1.bf16.msra.mxu0 %v1285
          %1292 = vmatprep.subr.bf16.mxu0 0
          %1293 = vmatpush1.bf16.msra.mxu0 0
          %1294 = vmatprep.subr.bf16.mxu0 0
          %1295 = vmatpush1.bf16.msra.mxu0 0
          %1296 = vmatprep.subr.bf16.mxu0 0
          %1297 = vmatpush1.bf16.msra.mxu0 0
          %1298 = vmatprep.subr.bf16.mxu0 0
          %1299 = vmatpush1.bf16.msra.mxu0 0
          %1300 = vmatprep.subr.bf16.mxu0 0
          %1301 = vmatpush1.bf16.msra.mxu0 0
          %1302 = vmatprep.subr.bf16.mxu0 0
          %1303 = vmatpush1.bf16.msra.mxu0 0
          %1304 = vmatprep.subr.bf16.mxu0 0
          %1305 = vmatpush1.bf16.msra.mxu0 0
          %1306 = vmatprep.subr.bf16.mxu0 0
          %1307 = vmatpush1.bf16.msra.mxu0 0
          %1308 = vmatprep.subr.bf16.mxu0 0
          %1309 = vmatpush1.bf16.msra.mxu0 0
          %1310 = vmatprep.subr.bf16.mxu0 0
          %1311 = vmatpush1.bf16.msra.mxu0 0
          %1312 = vmatprep.subr.bf16.mxu0 0
          %1313 = vmatpush1.bf16.msra.mxu0 0
          %1314 = vmatprep.subr.bf16.mxu0 0
          %1315 = vmatpush1.bf16.msra.mxu0 0
          %1316 = vmatprep.subr.bf16.mxu0 0
          %1317 = vmatpush1.bf16.msra.mxu0 0
          %1318 = vmatprep.subr.bf16.mxu0 0
          %1319 = vmatpush1.bf16.msra.mxu0 0
          %1320 = vmatprep.subr.bf16.mxu0 0
          %1321 = vmatpush1.bf16.msra.mxu0 0
          %1322 = vmatprep.mubr.bf16.mxu0 0
          %1323 = vmatmul.mubr.bf16.gmra.mrb[0].mxu0 %v1288
          %v1324 = vpop.f32.mrb[0].mxu0
          %v1325 = vadd.f32 0.0, %v1324
          %v1326 = vpop.f32.mrb[0].mxu0
          %v1327 = vpop.f32.mrb[0].mxu0
          %v1328 = vadd.f32 0.0, %v1327
          %v1329 = vpop.f32.mrb[0].mxu0
          %1330 = vdwg.mxu0
          %v1331 = vsub.f32 %v1275, %v1325
          %v1332 = vsub.f32 %v1278, %v1328
          %1333 = vmatprep.subr.bf16.mxu0 0
          %1334 = vmatpush1.bf16.msra.mxu0 %v875
          %1335 = vmatprep.subr.bf16.mxu0 0
          %1336 = vmatpush1.bf16.msra.mxu0 0
          %1337 = vmatprep.subr.bf16.mxu0 0
          %1338 = vmatpush1.bf16.msra.mxu0 0
          %1339 = vmatprep.subr.bf16.mxu0 0
          %1340 = vmatpush1.bf16.msra.mxu0 0
          %1341 = vmatprep.subr.bf16.mxu0 0
          %1342 = vmatpush1.bf16.msra.mxu0 0
          %1343 = vmatprep.subr.bf16.mxu0 0
          %1344 = vmatpush1.bf16.msra.mxu0 0
          %1345 = vmatprep.subr.bf16.mxu0 0
          %1346 = vmatpush1.bf16.msra.mxu0 0
          %1347 = vmatprep.subr.bf16.mxu0 0
          %1348 = vmatpush1.bf16.msra.mxu0 0
          %1349 = vmatprep.subr.bf16.mxu0 0
          %1350 = vmatpush1.bf16.msra.mxu0 0
          %1351 = vmatprep.subr.bf16.mxu0 0
          %1352 = vmatpush1.bf16.msra.mxu0 0
          %1353 = vmatprep.subr.bf16.mxu0 0
          %1354 = vmatpush1.bf16.msra.mxu0 0
          %1355 = vmatprep.subr.bf16.mxu0 0
          %1356 = vmatpush1.bf16.msra.mxu0 0
          %1357 = vmatprep.subr.bf16.mxu0 0
          %1358 = vmatpush1.bf16.msra.mxu0 0
          %1359 = vmatprep.subr.bf16.mxu0 0
          %1360 = vmatpush1.bf16.msra.mxu0 0
          %1361 = vmatprep.subr.bf16.mxu0 0
          %1362 = vmatpush1.bf16.msra.mxu0 0
          %1363 = vmatprep.subr.bf16.mxu0 0
          %1364 = vmatpush1.bf16.msra.mxu0 0
          %1365 = vmatprep.mubr.bf16.mxu0 0
          %1366 = vmatmul.mubr.bf16.gmra.mrb[0].mxu0 %v1288
          %v1367 = vpop.f32.mrb[0].mxu0
          %v1368 = vadd.f32 0.0, %v1367
          %v1369 = vpop.f32.mrb[0].mxu0
          %v1370 = vpop.f32.mrb[0].mxu0
          %v1371 = vadd.f32 0.0, %v1370
          %v1372 = vpop.f32.mrb[0].mxu0
          %1373 = vdwg.mxu0
          %1374 = vmatprep.subr.bf16.mxu0 0
          %1375 = vmatpush1.bf16.msra.mxu0 %v1285
          %1376 = vmatprep.subr.bf16.mxu0 0
          %1377 = vmatpush1.bf16.msra.mxu0 0
          %1378 = vmatprep.subr.bf16.mxu0 0
          %1379 = vmatpush1.bf16.msra.mxu0 0
          %1380 = vmatprep.subr.bf16.mxu0 0
          %1381 = vmatpush1.bf16.msra.mxu0 0
          %1382 = vmatprep.subr.bf16.mxu0 0
          %1383 = vmatpush1.bf16.msra.mxu0 0
          %1384 = vmatprep.subr.bf16.mxu0 0
          %1385 = vmatpush1.bf16.msra.mxu0 0
          %1386 = vmatprep.subr.bf16.mxu0 0
          %1387 = vmatpush1.bf16.msra.mxu0 0
          %1388 = vmatprep.subr.bf16.mxu0 0
          %1389 = vmatpush1.bf16.msra.mxu0 0
          %1390 = vmatprep.subr.bf16.mxu0 0
          %1391 = vmatpush1.bf16.msra.mxu0 0
          %1392 = vmatprep.subr.bf16.mxu0 0
          %1393 = vmatpush1.bf16.msra.mxu0 0
          %1394 = vmatprep.subr.bf16.mxu0 0
          %1395 = vmatpush1.bf16.msra.mxu0 0
          %1396 = vmatprep.subr.bf16.mxu0 0
          %1397 = vmatpush1.bf16.msra.mxu0 0
          %1398 = vmatprep.subr.bf16.mxu0 0
          %1399 = vmatpush1.bf16.msra.mxu0 0
          %1400 = vmatprep.subr.bf16.mxu0 0
          %1401 = vmatpush1.bf16.msra.mxu0 0
          %1402 = vmatprep.subr.bf16.mxu0 0
          %1403 = vmatpush1.bf16.msra.mxu0 0
          %1404 = vmatprep.subr.bf16.mxu0 0
          %1405 = vmatpush1.bf16.msra.mxu0 0
          %1406 = vmatprep.mubr.bf16.mxu0 0
          %1407 = vmatmul.mubr.bf16.gmra.mrb[0].mxu0 %v1238
          %v1408 = vpop.f32.mrb[0].mxu0
          %v1409 = vadd.f32 %v1368, %v1408
          %v1410 = vpop.f32.mrb[0].mxu0
          %v1411 = vpop.f32.mrb[0].mxu0
          %v1412 = vadd.f32 %v1371, %v1411
          %v1413 = vpop.f32.mrb[0].mxu0
          %1414 = vdwg.mxu0
          %v1415 = vmul.f32 %v668, %v1331
          %v1416 = vmul.f32 %v669, %v1332
          %v1417 = vmul.f32 %v671, %v1409
          %v1418 = vmul.f32 %v672, %v1412
          %v1419 = vadd.f32 %v1415, %v1417
          %v1420 = vadd.f32 %v1416, %v1418
          %v1421 = vadd.f32 %v662, %v1419
          %v1422 = vadd.f32 %v663, %v1420
          %v1423 = vmul.f32 %v668, %v1409
          %v1424 = vmul.f32 %v669, %v1412
          %v1425 = vmul.f32 %v671, %v1331
          %v1426 = vmul.f32 %v672, %v1332
          %v1427 = vsub.f32 %v1423, %v1425
          %v1428 = vsub.f32 %v1424, %v1426
          %v1429 = vadd.f32 %v664, %v1427
          %v1430 = vadd.f32 %v665, %v1428
        $region80: #{unrolled_net_forward.24} parent=72 // loop_footer
          %s661 = sadd.s32 1, %s657
        $region81: #{unrolled_net_forward.24} parent=72 // loop_footer_branch
          %656 = sbr.rel target = $region77
        $region82: #{unrolled_net_forward.24} parent=72 // loop_exit
          _
        %v1431 = vmul.f32 %v605, %v651
        %v1432 = vmul.f32 %v605, %v652
        %v1433 = vadd.f32 %v662, %v1431
        %v1434 = vadd.f32 %v663, %v1432
        %v1435 = vmul.f32 %v605, %v653
        %v1436 = vmul.f32 %v605, %v654
        %v1437 = vadd.f32 %v664, %v1435
        %v1438 = vadd.f32 %v665, %v1436
        %v1439 = vmul.f32 %v651, %v1433
        %v1440 = vmul.f32 %v652, %v1434
        %v1441 = vmul.f32 %v653, %v1437
        %v1442 = vmul.f32 %v654, %v1438
        %v1443 = vadd.f32 %v1439, %v1441
        %v1444 = vadd.f32 %v1440, %v1442
        %v1445 = vsel %vm624, %v1443, 0.0
        %v1446 = vsel %vm624, %v1444, 0.0
        %v1447 = vadd.f32 %v1445, %v1446
        %1448 = vadd.xlane.f32.xlu0 %v1447
        %v1449 = vpop.xlane.xlu0 %1448
        %v1450 = vrot.slane %v1449, 4
        %v1451 = vadd.f32 %v1449, %v1450
        %v1452 = vrot.slane %v1451, 2
        %v1453 = vadd.f32 %v1451, %v1452
        %v1454 = vrot.slane %v1453, 1
        %v1455 = vadd.f32 %v1453, %v1454
        %s1456 = vtos %v1455
        %s1457 = sadd.f32 %s1456, 1e-12
        %v1458 = vstv %s1457
        %v1459 = vrcp.pop %v1458
        %s1460 = vtos %v1459
        %s1461 = smul.f32 %s655, %s1460
        %v1462 = vstv %s1461
        %v1463 = vmul.f32 %v1462, %v651
        %v1464 = vmul.f32 %v1462, %v652
        %v1465 = vadd.f32 %v643, %v1463
        %v1466 = vadd.f32 %v644, %v1464
        %v1467 = vmul.f32 %v1462, %v653
        %v1468 = vmul.f32 %v1462, %v654
        %v1469 = vadd.f32 %v645, %v1467
        %v1470 = vadd.f32 %v646, %v1468
        %v1471 = vmul.f32 %v1462, %v1433
        %v1472 = vmul.f32 %v1462, %v1434
        %v1473 = vsub.f32 %v647, %v1471
        %v1474 = vsub.f32 %v648, %v1472
        %v1475 = vmul.f32 %v1462, %v1437
        %v1476 = vmul.f32 %v1462, %v1438
        %v1477 = vsub.f32 %v649, %v1475
        %v1478 = vsub.f32 %v650, %v1476
        %v1479 = vmul.f32 %v1473, %v1473
        %v1480 = vmul.f32 %v1474, %v1474
        %v1481 = vmul.f32 %v1477, %v1477
        %v1482 = vmul.f32 %v1478, %v1478
        %v1483 = vadd.f32 %v1479, %v1481
        %v1484 = vadd.f32 %v1480, %v1482
        %v1485 = vsel %vm624, %v1483, 0.0
        %v1486 = vsel %vm624, %v1484, 0.0
        %v1487 = vadd.f32 %v1485, %v1486
        %1488 = vadd.xlane.f32.xlu0 %v1487
        %v1489 = vpop.xlane.xlu0 %1488
        %v1490 = vrot.slane %v1489, 4
        %v1491 = vadd.f32 %v1489, %v1490
        %v1492 = vrot.slane %v1491, 2
        %v1493 = vadd.f32 %v1491, %v1492
        %v1494 = vrot.slane %v1493, 1
        %v1495 = vadd.f32 %v1493, %v1494
        %s1496 = vtos %v1495
        %s1497 = sadd.f32 %s655, 1e-12
        %v1498 = vstv %s1497
        %v1499 = vrcp.pop %v1498
        %s1500 = vtos %v1499
        %s1501 = smul.f32 %s1496, %s1500
        %v1502 = vstv %s1501
        %v1503 = vmul.f32 %v1502, %v651
        %v1504 = vmul.f32 %v1502, %v652
        %v1505 = vadd.f32 %v1473, %v1503
        %v1506 = vadd.f32 %v1474, %v1504
        %v1507 = vmul.f32 %v1502, %v653
        %v1508 = vmul.f32 %v1502, %v654
        %v1509 = vadd.f32 %v1477, %v1507
        %v1510 = vadd.f32 %v1478, %v1508
      $region73: #{unrolled_net_forward.24} parent=67 // loop_footer
        %s642 = sadd.s32 1, %s638
      $region74: #{unrolled_net_forward.24} parent=67 // loop_footer_branch
        %637 = sbr.rel target = $region70
      $region75: #{unrolled_net_forward.24} parent=67 // loop_exit
        _
      %1511 = vst.msk [vmem:[%s579] sm:$0xff] %vm624, %v643
      %1512 = vst.msk [vmem:[%s579 + $0x8] sm:$0xff] %vm624, %v644
      %1513 = vst.msk [vmem:[%s584] sm:$0xff] %vm624, %v645
      %1514 = vst.msk [vmem:[%s584 + $0x8] sm:$0xff] %vm624, %v646
      %p1515 = scmp.lt.s32.totalorder %s26, 1
      %s1516 = scalar_select %p1515, %s26, 1
      %s1517 = smul.addr %s1516, 2
      %s1518 = smul.addr %s1517, 8
      %s1519 = scalar_lea.vmem %s12, %s1518
      %p1520 = scmp.lt.s32.totalorder %s26, 1
      %s1521 = scalar_select %p1520, %s26, 1
      %s1522 = smul.addr %s1521, 2
      %s1523 = smul.addr %s1522, 8
      %s1524 = scalar_lea.vmem %s13, %s1523
      // Predicated region
      $region83: #{unrolled_net_forward.24} parent=67 // pred_check
        %p1525 = pneg %p331
      $region84: #{unrolled_net_forward.24} parent=67 // pred_check_branch
        %1527 = sbr.rel (%p1525) target = $region86
      $region85: #{unrolled_net_forward.24} parent=67 // pred_region
        _
      $region86: #{unrolled_net_forward.24} parent=67 // pred_fallthru
        _
      // Predicated region
      $region87: #{unrolled_net_forward.24} parent=67 // pred_check
        %p1528 = pneg %p357
      $region88: #{unrolled_net_forward.24} parent=67 // pred_check_branch
        %1530 = sbr.rel (%p1528) target = $region90
      $region89: #{unrolled_net_forward.24} parent=67 // pred_region
        _
      $region90: #{unrolled_net_forward.24} parent=67 // pred_fallthru
        _
    $region68: #{unrolled_net_forward.24} parent=5 // pred_fallthru
      _
    %p1531 = scmp.le.s32.totalorder 2, %s21
    // Predicated region
    $region91: #{unrolled_net_forward.24} parent=5 // pred_check
      %p1532 = pneg %p1531
    $region92: #{unrolled_net_forward.24} parent=5 // pred_check_branch
      %1534 = sbr.rel (%p1532) target = $region94
    $region93: #{unrolled_net_forward.24} parent=5 // pred_region
      %s1535 = ssub.s32 %s21, 2
      // Predicated region
      $region95: #{unrolled_net_forward.24} parent=93 // pred_check
        %p1536 = pneg %p337
      $region96: #{unrolled_net_forward.24} parent=93 // pred_check_branch
        %1538 = sbr.rel (%p1536) target = $region98
      $region97: #{unrolled_net_forward.24} parent=93 // pred_region
        %p1539 = scmp.lt.s32.totalorder %s27, 1
        %s1540 = scalar_select %p1539, %s27, 1
        %s1541 = smul.addr %s1540, 2
        %s1542 = smul.addr %s1541, 8
        %s1543 = scalar_lea.vmem %s12, %s1542
      $region98: #{unrolled_net_forward.24} parent=93 // pred_fallthru
        _
      // Predicated region
      $region99: #{unrolled_net_forward.24} parent=93 // pred_check
        %p1544 = pneg %p363
      $region100: #{unrolled_net_forward.24} parent=93 // pred_check_branch
        %1546 = sbr.rel (%p1544) target = $region102
      $region101: #{unrolled_net_forward.24} parent=93 // pred_region
        %p1547 = scmp.lt.s32.totalorder %s27, 1
        %s1548 = scalar_select %p1547, %s27, 1
        %s1549 = smul.addr %s1548, 2
        %s1550 = smul.addr %s1549, 8
        %s1551 = scalar_lea.vmem %s13, %s1550
      $region102: #{unrolled_net_forward.24} parent=93 // pred_fallthru
        _
    $region94: #{unrolled_net_forward.24} parent=5 // pred_fallthru
      _
  $region6: #{unrolled_net_forward.24} parent=0 // loop_footer
    %s25 = sadd.s32 1, %s21
  $region7: #{unrolled_net_forward.24} parent=0 // loop_footer_branch
    %20 = sbr.rel target = $region3
  $region8: #{unrolled_net_forward.24} parent=0 // loop_exit
    _

// kernel: unrolled_net_forward.33
$region0: #{unrolled_net_forward.33}
  #allocation0 [shape = 'u32[]', space=smem, size = 0x4, offset = 0x4, fixed_abs, tag = 'smem constant byte address 0x4 - core index']
  #allocation1 [shape = 'u32[144,128]{1,0:T(1,128)}', space=vmem, size = 0x12000, scoped, tag = 'internal scratch']
  %s0 = inlined_call_operand.vmem [shape: f32[2,16,16], index: 0, kind: input, shape index: {}]
  %s1 = inlined_call_operand.vmem [shape: f32[2,16,16], index: 1, kind: input, shape index: {}]
  %s2 = inlined_call_operand.vmem [shape: f32[8,16,16], index: 2, kind: input, shape index: {}]
  %s3 = inlined_call_operand.vmem [shape: f32[8,16,16], index: 3, kind: input, shape index: {}]
  %s4 = inlined_call_operand.vmem [shape: f32[2,16,16], index: 4, kind: input, shape index: {}]
  %s5 = inlined_call_operand.vmem [shape: bf16[16,16], index: 5, kind: input, shape index: {}, may-alias: {5,7}]
  %s6 = inlined_call_operand.vmem [shape: bf16[16,16], index: 6, kind: input, shape index: {}, may-alias: {6,8}]
  %s7 = inlined_call_operand.vmem [shape: bf16[16,16], index: 7, kind: input, shape index: {}, may-alias: {5,7}]
  %s8 = inlined_call_operand.vmem [shape: bf16[16,16], index: 8, kind: input, shape index: {}, may-alias: {6,8}]
  %s9 = inlined_call_operand.vmem [shape: f32[8,16,16], index: 9, kind: output, shape index: {0}]
  %s10 = inlined_call_operand.vmem [shape: f32[8,16,16], index: 10, kind: output, shape index: {1}]
  %11 = xla_tuple %s9, %s10
  %s12 = sld [smem:[#allocation0]]
  $region77: #{unrolled_net_forward.33} parent=0
    _
  %s14 = ssub.s32 1, %s12
  %s15 = scalar_select 0, %s14, %s12
  loop: start=0, step=1, limit=10
  $region2: #{unrolled_net_forward.33} parent=0 // loop_pre_header
    _
  $region3: #{unrolled_net_forward.33} parent=0 // loop_header
    %s17 = sphi 0, %s21
    %p18 = scmp.ge.s32.totalorder %s17, 10
    %s24 = sphi 0, %s36
    %s25 = sphi 0, %s32
    %s26 = sphi 0, %s24
    %s27 = sphi 0, %s25
    %s28 = sphi 0, %s26
    %s29 = sphi 0, %s27
    %s39 = sphi 0, %s41
    %s42 = sphi 0, %s39
    %s43 = sphi 0, %s42
    %s59 = sphi 0, %s43
    %s65 = sphi 0, %s67
    %s68 = sphi 0, %s65
    %s69 = sphi 0, %s68
    %s85 = sphi 0, %s69
    %s95 = sphi 0, %s97
    %s98 = sphi 0, %s95
    %s99 = sphi 0, %s98
    %s115 = sphi 0, %s99
    %s125 = sphi 0, %s127
    %s128 = sphi 0, %s125
    %s129 = sphi 0, %s128
    %s145 = sphi 0, %s129
    %s151 = sphi 0, %s153
    %s154 = sphi 0, %s151
    %s155 = sphi 0, %s154
    %s171 = sphi 0, %s155
    %s175 = sphi 0, %s175
    %s177 = sphi 0, %s175
    %s178 = sphi 0, %s177
    %s192 = sphi 0, %s178
    %s196 = sphi 0, %s196
    %s198 = sphi 0, %s196
    %s199 = sphi 0, %s198
    %s213 = sphi 0, %s199
    %s217 = sphi 0, %s217
    %s219 = sphi 0, %s217
    %s220 = sphi 0, %s219
    %s234 = sphi 0, %s220
    %s238 = sphi 0, %s238
    %s240 = sphi 0, %s238
    %s241 = sphi 0, %s240
    %s255 = sphi 0, %s241
    %s265 = sphi 0, %s267
    %s268 = sphi 0, %s265
    %s269 = sphi 0, %s268
    %s285 = sphi 0, %s269
    %s295 = sphi 0, %s297
    %s298 = sphi 0, %s295
    %s299 = sphi 0, %s298
    %s315 = sphi 0, %s299
  $region4: #{unrolled_net_forward.33} parent=0 // loop_header_branch
    %20 = sbr.rel (%p18) target = $region8
  $region5: #{unrolled_net_forward.33} parent=0 // loop_body
    %s22 = ssub.s32 %s17, 1
    %s23 = ssub.s32 %s17, 2
    %s30 = sadd.s32 1, %s25
    %p31 = scmp.ge.s32.totalorder %s30, 4
    %s32 = scalar_select %p31, 0, %s30
    %s33 = sadd.s32 1, %s24
    %s34 = scalar_select %p31, %s33, %s24
    %p35 = scmp.ge.s32.totalorder %s34, 2
    %s36 = scalar_select %p35, 0, %s34
    %s37 = ssub.s32 %s24, %s36
    %p38 = scmp.eq.s32.totalorder %s37, 0
    %s40 = sadd.s32 %s39, 1
    %s41 = scalar_select %p38, %s39, %s40
    %p44 = pneg %p38
    %p45 = scmp.eq.s32.totalorder %s17, 7
    %p46 = por %p44, %p45
    %p47 = scmp.ne.s32.totalorder %s39, %s42
    %p48 = scmp.eq.s32.totalorder %s17, 0
    %p49 = por %p47, %p48
    %p50 = scmp.ne.s32.totalorder %s39, %s42
    %p51 = scmp.eq.s32.totalorder %s22, 7
    %p52 = por %p50, %p51
    %p53 = scmp.ne.s32.totalorder %s42, %s43
    %p54 = scmp.eq.s32.totalorder %s22, 0
    %p55 = por %p53, %p54
    %p56 = scmp.ne.s32.totalorder %s42, %s43
    %p57 = scmp.eq.s32.totalorder %s23, 7
    %p58 = por %p56, %p57
    %p60 = scmp.ne.s32.totalorder %s43, %s59
    %p61 = scmp.eq.s32.totalorder %s23, 0
    %p62 = por %p60, %p61
    %s63 = ssub.s32 %s24, %s36
    %p64 = scmp.eq.s32.totalorder %s63, 0
    %s66 = sadd.s32 %s65, 1
    %s67 = scalar_select %p64, %s65, %s66
    %p70 = pneg %p64
    %p71 = scmp.eq.s32.totalorder %s17, 7
    %p72 = por %p70, %p71
    %p73 = scmp.ne.s32.totalorder %s65, %s68
    %p74 = scmp.eq.s32.totalorder %s17, 0
    %p75 = por %p73, %p74
    %p76 = scmp.ne.s32.totalorder %s65, %s68
    %p77 = scmp.eq.s32.totalorder %s22, 7
    %p78 = por %p76, %p77
    %p79 = scmp.ne.s32.totalorder %s68, %s69
    %p80 = scmp.eq.s32.totalorder %s22, 0
    %p81 = por %p79, %p80
    %p82 = scmp.ne.s32.totalorder %s68, %s69
    %p83 = scmp.eq.s32.totalorder %s23, 7
    %p84 = por %p82, %p83
    %p86 = scmp.ne.s32.totalorder %s69, %s85
    %p87 = scmp.eq.s32.totalorder %s23, 0
    %p88 = por %p86, %p87
    %s89 = smul.u32 %s24, 4
    %s90 = sadd.s32 %s89, %s25
    %s91 = smul.u32 %s36, 4
    %s92 = sadd.s32 %s91, %s32
    %s93 = ssub.s32 %s90, %s92
    %p94 = scmp.eq.s32.totalorder %s93, 0
    %s96 = sadd.s32 %s95, 1
    %s97 = scalar_select %p94, %s95, %s96
    %p100 = pneg %p94
    %p101 = scmp.eq.s32.totalorder %s17, 7
    %p102 = por %p100, %p101
    %p103 = scmp.ne.s32.totalorder %s95, %s98
    %p104 = scmp.eq.s32.totalorder %s17, 0
    %p105 = por %p103, %p104
    %p106 = scmp.ne.s32.totalorder %s95, %s98
    %p107 = scmp.eq.s32.totalorder %s22, 7
    %p108 = por %p106, %p107
    %p109 = scmp.ne.s32.totalorder %s98, %s99
    %p110 = scmp.eq.s32.totalorder %s22, 0
    %p111 = por %p109, %p110
    %p112 = scmp.ne.s32.totalorder %s98, %s99
    %p113 = scmp.eq.s32.totalorder %s23, 7
    %p114 = por %p112, %p113
    %p116 = scmp.ne.s32.totalorder %s99, %s115
    %p117 = scmp.eq.s32.totalorder %s23, 0
    %p118 = por %p116, %p117
    %s119 = smul.u32 %s24, 4
    %s120 = sadd.s32 %s119, %s25
    %s121 = smul.u32 %s36, 4
    %s122 = sadd.s32 %s121, %s32
    %s123 = ssub.s32 %s120, %s122
    %p124 = scmp.eq.s32.totalorder %s123, 0
    %s126 = sadd.s32 %s125, 1
    %s127 = scalar_select %p124, %s125, %s126
    %p130 = pneg %p124
    %p131 = scmp.eq.s32.totalorder %s17, 7
    %p132 = por %p130, %p131
    %p133 = scmp.ne.s32.totalorder %s125, %s128
    %p134 = scmp.eq.s32.totalorder %s17, 0
    %p135 = por %p133, %p134
    %p136 = scmp.ne.s32.totalorder %s125, %s128
    %p137 = scmp.eq.s32.totalorder %s22, 7
    %p138 = por %p136, %p137
    %p139 = scmp.ne.s32.totalorder %s128, %s129
    %p140 = scmp.eq.s32.totalorder %s22, 0
    %p141 = por %p139, %p140
    %p142 = scmp.ne.s32.totalorder %s128, %s129
    %p143 = scmp.eq.s32.totalorder %s23, 7
    %p144 = por %p142, %p143
    %p146 = scmp.ne.s32.totalorder %s129, %s145
    %p147 = scmp.eq.s32.totalorder %s23, 0
    %p148 = por %p146, %p147
    %s149 = ssub.s32 %s24, %s36
    %p150 = scmp.eq.s32.totalorder %s149, 0
    %s152 = sadd.s32 %s151, 1
    %s153 = scalar_select %p150, %s151, %s152
    %p156 = pneg %p150
    %p157 = scmp.eq.s32.totalorder %s17, 7
    %p158 = por %p156, %p157
    %p159 = scmp.ne.s32.totalorder %s151, %s154
    %p160 = scmp.eq.s32.totalorder %s17, 0
    %p161 = por %p159, %p160
    %p162 = scmp.ne.s32.totalorder %s151, %s154
    %p163 = scmp.eq.s32.totalorder %s22, 7
    %p164 = por %p162, %p163
    %p165 = scmp.ne.s32.totalorder %s154, %s155
    %p166 = scmp.eq.s32.totalorder %s22, 0
    %p167 = por %p165, %p166
    %p168 = scmp.ne.s32.totalorder %s154, %s155
    %p169 = scmp.eq.s32.totalorder %s23, 7
    %p170 = por %p168, %p169
    %p172 = scmp.ne.s32.totalorder %s155, %s171
    %p173 = scmp.eq.s32.totalorder %s23, 0
    %p174 = por %p172, %p173
    %s176 = sadd.s32 %s175, 1
    %p179 = scmp.eq.s32.totalorder %s17, 7
    %p180 = scmp.ne.s32.totalorder %s175, %s177
    %p181 = scmp.eq.s32.totalorder %s17, 0
    %p182 = por %p180, %p181
    %p183 = scmp.ne.s32.totalorder %s175, %s177
    %p184 = scmp.eq.s32.totalorder %s22, 7
    %p185 = por %p183, %p184
    %p186 = scmp.ne.s32.totalorder %s177, %s178
    %p187 = scmp.eq.s32.totalorder %s22, 0
    %p188 = por %p186, %p187
    %p189 = scmp.ne.s32.totalorder %s177, %s178
    %p190 = scmp.eq.s32.totalorder %s23, 7
    %p191 = por %p189, %p190
    %p193 = scmp.ne.s32.totalorder %s178, %s192
    %p194 = scmp.eq.s32.totalorder %s23, 0
    %p195 = por %p193, %p194
    %s197 = sadd.s32 %s196, 1
    %p200 = scmp.eq.s32.totalorder %s17, 7
    %p201 = scmp.ne.s32.totalorder %s196, %s198
    %p202 = scmp.eq.s32.totalorder %s17, 0
    %p203 = por %p201, %p202
    %p204 = scmp.ne.s32.totalorder %s196, %s198
    %p205 = scmp.eq.s32.totalorder %s22, 7
    %p206 = por %p204, %p205
    %p207 = scmp.ne.s32.totalorder %s198, %s199
    %p208 = scmp.eq.s32.totalorder %s22, 0
    %p209 = por %p207, %p208
    %p210 = scmp.ne.s32.totalorder %s198, %s199
    %p211 = scmp.eq.s32.totalorder %s23, 7
    %p212 = por %p210, %p211
    %p214 = scmp.ne.s32.totalorder %s199, %s213
    %p215 = scmp.eq.s32.totalorder %s23, 0
    %p216 = por %p214, %p215
    %s218 = sadd.s32 %s217, 1
    %p221 = scmp.eq.s32.totalorder %s17, 7
    %p222 = scmp.ne.s32.totalorder %s217, %s219
    %p223 = scmp.eq.s32.totalorder %s17, 0
    %p224 = por %p222, %p223
    %p225 = scmp.ne.s32.totalorder %s217, %s219
    %p226 = scmp.eq.s32.totalorder %s22, 7
    %p227 = por %p225, %p226
    %p228 = scmp.ne.s32.totalorder %s219, %s220
    %p229 = scmp.eq.s32.totalorder %s22, 0
    %p230 = por %p228, %p229
    %p231 = scmp.ne.s32.totalorder %s219, %s220
    %p232 = scmp.eq.s32.totalorder %s23, 7
    %p233 = por %p231, %p232
    %p235 = scmp.ne.s32.totalorder %s220, %s234
    %p236 = scmp.eq.s32.totalorder %s23, 0
    %p237 = por %p235, %p236
    %s239 = sadd.s32 %s238, 1
    %p242 = scmp.eq.s32.totalorder %s17, 7
    %p243 = scmp.ne.s32.totalorder %s238, %s240
    %p244 = scmp.eq.s32.totalorder %s17, 0
    %p245 = por %p243, %p244
    %p246 = scmp.ne.s32.totalorder %s238, %s240
    %p247 = scmp.eq.s32.totalorder %s22, 7
    %p248 = por %p246, %p247
    %p249 = scmp.ne.s32.totalorder %s240, %s241
    %p250 = scmp.eq.s32.totalorder %s22, 0
    %p251 = por %p249, %p250
    %p252 = scmp.ne.s32.totalorder %s240, %s241
    %p253 = scmp.eq.s32.totalorder %s23, 7
    %p254 = por %p252, %p253
    %p256 = scmp.ne.s32.totalorder %s241, %s255
    %p257 = scmp.eq.s32.totalorder %s23, 0
    %p258 = por %p256, %p257
    %s259 = smul.u32 %s24, 4
    %s260 = sadd.s32 %s259, %s25
    %s261 = smul.u32 %s36, 4
    %s262 = sadd.s32 %s261, %s32
    %s263 = ssub.s32 %s260, %s262
    %p264 = scmp.eq.s32.totalorder %s263, 0
    %s266 = sadd.s32 %s265, 1
    %s267 = scalar_select %p264, %s265, %s266
    %p270 = pneg %p264
    %p271 = scmp.eq.s32.totalorder %s17, 7
    %p272 = por %p270, %p271
    %p273 = scmp.ne.s32.totalorder %s265, %s268
    %p274 = scmp.eq.s32.totalorder %s17, 0
    %p275 = por %p273, %p274
    %p276 = scmp.ne.s32.totalorder %s265, %s268
    %p277 = scmp.eq.s32.totalorder %s22, 7
    %p278 = por %p276, %p277
    %p279 = scmp.ne.s32.totalorder %s268, %s269
    %p280 = scmp.eq.s32.totalorder %s22, 0
    %p281 = por %p279, %p280
    %p282 = scmp.ne.s32.totalorder %s268, %s269
    %p283 = scmp.eq.s32.totalorder %s23, 7
    %p284 = por %p282, %p283
    %p286 = scmp.ne.s32.totalorder %s269, %s285
    %p287 = scmp.eq.s32.totalorder %s23, 0
    %p288 = por %p286, %p287
    %s289 = smul.u32 %s24, 4
    %s290 = sadd.s32 %s289, %s25
    %s291 = smul.u32 %s36, 4
    %s292 = sadd.s32 %s291, %s32
    %s293 = ssub.s32 %s290, %s292
    %p294 = scmp.eq.s32.totalorder %s293, 0
    %s296 = sadd.s32 %s295, 1
    %s297 = scalar_select %p294, %s295, %s296
    %p300 = pneg %p294
    %p301 = scmp.eq.s32.totalorder %s17, 7
    %p302 = por %p300, %p301
    %p303 = scmp.ne.s32.totalorder %s295, %s298
    %p304 = scmp.eq.s32.totalorder %s17, 0
    %p305 = por %p303, %p304
    %p306 = scmp.ne.s32.totalorder %s295, %s298
    %p307 = scmp.eq.s32.totalorder %s22, 7
    %p308 = por %p306, %p307
    %p309 = scmp.ne.s32.totalorder %s298, %s299
    %p310 = scmp.eq.s32.totalorder %s22, 0
    %p311 = por %p309, %p310
    %p312 = scmp.ne.s32.totalorder %s298, %s299
    %p313 = scmp.eq.s32.totalorder %s23, 7
    %p314 = por %p312, %p313
    %p316 = scmp.ne.s32.totalorder %s299, %s315
    %p317 = scmp.eq.s32.totalorder %s23, 0
    %p318 = por %p316, %p317
    %p319 = scmp.le.s32.totalorder 1, %s17
    %p320 = scmp.lt.s32.totalorder %s17, 9
    %p321 = pnand %p319, %p320
    %p322 = pneg %p321
    // Predicated region
    $region9: #{unrolled_net_forward.33} parent=5 // pred_check
      _
    $region10: #{unrolled_net_forward.33} parent=5 // pred_check_branch
      %324 = sbr.rel (%p321) target = $region12
    $region11: #{unrolled_net_forward.33} parent=5 // pred_region
      %s325 = ssub.s32 %s17, 1
      // Predicated region
      $region13: #{unrolled_net_forward.33} parent=11 // pred_check
        %p326 = pneg %p188
      $region14: #{unrolled_net_forward.33} parent=11 // pred_check_branch
        %328 = sbr.rel (%p326) target = $region16
      $region15: #{unrolled_net_forward.33} parent=11 // pred_region
        _
      $region16: #{unrolled_net_forward.33} parent=11 // pred_fallthru
        _
      // Predicated region
      $region17: #{unrolled_net_forward.33} parent=11 // pred_check
        %p329 = pneg %p209
      $region18: #{unrolled_net_forward.33} parent=11 // pred_check_branch
        %331 = sbr.rel (%p329) target = $region20
      $region19: #{unrolled_net_forward.33} parent=11 // pred_region
        _
      $region20: #{unrolled_net_forward.33} parent=11 // pred_fallthru
        _
      // Predicated region
      $region21: #{unrolled_net_forward.33} parent=11 // pred_check
        %p332 = pneg %p230
      $region22: #{unrolled_net_forward.33} parent=11 // pred_check_branch
        %334 = sbr.rel (%p332) target = $region24
      $region23: #{unrolled_net_forward.33} parent=11 // pred_region
        _
      $region24: #{unrolled_net_forward.33} parent=11 // pred_fallthru
        _
      // Predicated region
      $region25: #{unrolled_net_forward.33} parent=11 // pred_check
        %p335 = pneg %p251
      $region26: #{unrolled_net_forward.33} parent=11 // pred_check_branch
        %337 = sbr.rel (%p335) target = $region28
      $region27: #{unrolled_net_forward.33} parent=11 // pred_region
        _
      $region28: #{unrolled_net_forward.33} parent=11 // pred_fallthru
        _
    $region12: #{unrolled_net_forward.33} parent=5 // pred_fallthru
      _
    %p338 = scmp.lt.s32.totalorder %s17, 8
    // Predicated region
    $region29: #{unrolled_net_forward.33} parent=5 // pred_check
      %p339 = pneg %p338
    $region30: #{unrolled_net_forward.33} parent=5 // pred_check_branch
      %341 = sbr.rel (%p339) target = $region32
    $region31: #{unrolled_net_forward.33} parent=5 // pred_region
      // Predicated region
      $region33: #{unrolled_net_forward.33} parent=31 // pred_check
        %p342 = pneg %p49
      $region34: #{unrolled_net_forward.33} parent=31 // pred_check_branch
        %344 = sbr.rel (%p342) target = $region36
      $region35: #{unrolled_net_forward.33} parent=31 // pred_region
        %p345 = scmp.lt.s32.totalorder %s24, 1
        %s346 = scalar_select %p345, %s24, 1
        %s347 = smul.addr %s346, 2
        %s348 = smul.addr %s347, 8
        %s349 = scalar_lea.vmem %s0, %s348
      $region36: #{unrolled_net_forward.33} parent=31 // pred_fallthru
        _
      // Predicated region
      $region37: #{unrolled_net_forward.33} parent=31 // pred_check
        %p350 = pneg %p75
      $region38: #{unrolled_net_forward.33} parent=31 // pred_check_branch
        %352 = sbr.rel (%p350) target = $region40
      $region39: #{unrolled_net_forward.33} parent=31 // pred_region
        %p353 = scmp.lt.s32.totalorder %s24, 1
        %s354 = scalar_select %p353, %s24, 1
        %s355 = smul.addr %s354, 2
        %s356 = smul.addr %s355, 8
        %s357 = scalar_lea.vmem %s1, %s356
      $region40: #{unrolled_net_forward.33} parent=31 // pred_fallthru
        _
      // Predicated region
      $region41: #{unrolled_net_forward.33} parent=31 // pred_check
        %p358 = pneg %p105
      $region42: #{unrolled_net_forward.33} parent=31 // pred_check_branch
        %360 = sbr.rel (%p358) target = $region44
      $region43: #{unrolled_net_forward.33} parent=31 // pred_region
        %s361 = smul.u32 %s24, 4
        %s362 = sadd.s32 %s361, %s25
        %p363 = scmp.lt.s32.totalorder %s362, 7
        %s364 = scalar_select %p363, %s362, 7
        %s365 = smul.addr %s364, 2
        %s366 = smul.addr %s365, 8
        %s367 = scalar_lea.vmem %s2, %s366
        %s368 = smul.u32 %s24, 4
        %s369 = sadd.s32 %s368, %s25
      $region44: #{unrolled_net_forward.33} parent=31 // pred_fallthru
        _
      // Predicated region
      $region45: #{unrolled_net_forward.33} parent=31 // pred_check
        %p370 = pneg %p135
      $region46: #{unrolled_net_forward.33} parent=31 // pred_check_branch
        %372 = sbr.rel (%p370) target = $region48
      $region47: #{unrolled_net_forward.33} parent=31 // pred_region
        %s373 = smul.u32 %s24, 4
        %s374 = sadd.s32 %s373, %s25
        %p375 = scmp.lt.s32.totalorder %s374, 7
        %s376 = scalar_select %p375, %s374, 7
        %s377 = smul.addr %s376, 2
        %s378 = smul.addr %s377, 8
        %s379 = scalar_lea.vmem %s3, %s378
        %s380 = smul.u32 %s24, 4
        %s381 = sadd.s32 %s380, %s25
      $region48: #{unrolled_net_forward.33} parent=31 // pred_fallthru
        _
      // Predicated region
      $region49: #{unrolled_net_forward.33} parent=31 // pred_check
        %p382 = pneg %p161
      $region50: #{unrolled_net_forward.33} parent=31 // pred_check_branch
        %384 = sbr.rel (%p382) target = $region52
      $region51: #{unrolled_net_forward.33} parent=31 // pred_region
        %p385 = scmp.lt.s32.totalorder %s24, 1
        %s386 = scalar_select %p385, %s24, 1
        %s387 = smul.addr %s386, 2
        %s388 = smul.addr %s387, 8
        %s389 = scalar_lea.vmem %s4, %s388
      $region52: #{unrolled_net_forward.33} parent=31 // pred_fallthru
        _
    $region32: #{unrolled_net_forward.33} parent=5 // pred_fallthru
      _
    %p390 = scmp.le.s32.totalorder 1, %s17
    %p391 = scmp.lt.s32.totalorder %s17, 9
    %p392 = pnand %p390, %p391
    %p393 = pneg %p392
    // Predicated region
    $region53: #{unrolled_net_forward.33} parent=5 // pred_check
      _
    $region54: #{unrolled_net_forward.33} parent=5 // pred_check_branch
      %395 = sbr.rel (%p392) target = $region56
    $region55: #{unrolled_net_forward.33} parent=5 // pred_region
      %s396 = ssub.s32 %s17, 1
      %p397 = scmp.lt.s32.totalorder %s26, 1
      %s398 = scalar_select %p397, %s26, 1
      %s399 = smul.addr %s398, 2
      %s400 = smul.addr %s399, 8
      %s401 = scalar_lea.vmem %s0, %s400
      %p402 = pneg %p55
      %p403 = pneg %p52
      %p404 = scmp.lt.s32.totalorder %s26, 1
      %s405 = scalar_select %p404, %s26, 1
      %s406 = smul.addr %s405, 2
      %s407 = smul.addr %s406, 8
      %s408 = scalar_lea.vmem %s1, %s407
      %p409 = pneg %p81
      %p410 = pneg %p78
      %s411 = smul.u32 %s26, 4
      %s412 = sadd.s32 %s411, %s27
      %p413 = scmp.lt.s32.totalorder %s412, 7
      %s414 = scalar_select %p413, %s412, 7
      %s415 = smul.addr %s414, 2
      %s416 = smul.addr %s415, 8
      %s417 = scalar_lea.vmem %s2, %s416
      %p418 = pneg %p111
      %p419 = pneg %p108
      %s420 = smul.u32 %s26, 4
      %s421 = sadd.s32 %s420, %s27
      %p422 = scmp.lt.s32.totalorder %s421, 7
      %s423 = scalar_select %p422, %s421, 7
      %s424 = smul.addr %s423, 2
      %s425 = smul.addr %s424, 8
      %s426 = scalar_lea.vmem %s3, %s425
      %p427 = pneg %p141
      %p428 = pneg %p138
      %p429 = scmp.lt.s32.totalorder %s26, 1
      %s430 = scalar_select %p429, %s26, 1
      %s431 = smul.addr %s430, 2
      %s432 = smul.addr %s431, 8
      %s433 = scalar_lea.vmem %s4, %s432
      %p434 = pneg %p167
      %p435 = pneg %p164
      %p436 = pneg %p188
      %p437 = pneg %p185
      %p438 = pneg %p209
      %p439 = pneg %p206
      %p440 = pneg %p230
      %p441 = pneg %p227
      %p442 = pneg %p251
      %p443 = pneg %p248
      %p444 = pneg %p281
      %p445 = pneg %p278
      %s446 = smul.u32 %s26, 4
      %s447 = sadd.s32 %s446, %s27
      %p448 = scmp.lt.s32.totalorder %s447, 7
      %s449 = scalar_select %p448, %s447, 7
      %s450 = smul.addr %s449, 2
      %s451 = smul.addr %s450, 8
      %s452 = scalar_lea.vmem %s9, %s451
      %p453 = pneg %p311
      %p454 = pneg %p308
      %s455 = smul.u32 %s26, 4
      %s456 = sadd.s32 %s455, %s27
      %p457 = scmp.lt.s32.totalorder %s456, 7
      %s458 = scalar_select %p457, %s456, 7
      %s459 = smul.addr %s458, 2
      %s460 = smul.addr %s459, 8
      %s461 = scalar_lea.vmem %s10, %s460
      %p462 = scmp.lt.s32.totalorder %s26, 1
      %s463 = scalar_select %p462, %s26, 1
      %s464 = smul.addr %s463, 2
      %s465 = smul.addr %s464, 8
      %s466 = scalar_lea.vmem %s0, %s465
      %p467 = scmp.lt.s32.totalorder %s26, 1
      %s468 = scalar_select %p467, %s26, 1
      %s469 = smul.addr %s468, 2
      %s470 = smul.addr %s469, 8
      %s471 = scalar_lea.vmem %s1, %s470
      %s472 = smul.u32 %s26, 4
      %s473 = sadd.s32 %s472, %s27
      %p474 = scmp.lt.s32.totalorder %s473, 7
      %s475 = scalar_select %p474, %s473, 7
      %s476 = smul.addr %s475, 2
      %s477 = smul.addr %s476, 8
      %s478 = scalar_lea.vmem %s2, %s477
      %s479 = smul.u32 %s26, 4
      %s480 = sadd.s32 %s479, %s27
      %s481 = smul.u32 %s26, 4
      %s482 = sadd.s32 %s481, %s27
      %p483 = scmp.lt.s32.totalorder %s482, 7
      %s484 = scalar_select %p483, %s482, 7
      %s485 = smul.addr %s484, 2
      %s486 = smul.addr %s485, 8
      %s487 = scalar_lea.vmem %s3, %s486
      %s488 = smul.u32 %s26, 4
      %s489 = sadd.s32 %s488, %s27
      %p490 = scmp.lt.s32.totalorder %s26, 1
      %s491 = scalar_select %p490, %s26, 1
      %s492 = smul.addr %s491, 2
      %s493 = smul.addr %s492, 8
      %s494 = scalar_lea.vmem %s4, %s493
      %s495 = smul.u32 %s26, 4
      %s496 = sadd.s32 %s495, %s27
      %p497 = scmp.lt.s32.totalorder %s496, 7
      %s498 = scalar_select %p497, %s496, 7
      %s499 = smul.addr %s498, 2
      %s500 = smul.addr %s499, 8
      %s501 = scalar_lea.vmem %s9, %s500
      %s502 = smul.u32 %s26, 4
      %s503 = sadd.s32 %s502, %s27
      %s504 = smul.u32 %s26, 4
      %s505 = sadd.s32 %s504, %s27
      %p506 = scmp.lt.s32.totalorder %s505, 7
      %s507 = scalar_select %p506, %s505, 7
      %s508 = smul.addr %s507, 2
      %s509 = smul.addr %s508, 8
      %s510 = scalar_lea.vmem %s10, %s509
      %s511 = smul.u32 %s26, 4
      %s512 = sadd.s32 %s511, %s27
      %v514 = vld [vmem:[%s466] sm:$0xff]
      %v515 = vld [vmem:[%s466 + $0x8] sm:$0xff]
      %v516 = vld [vmem:[%s471] sm:$0xff]
      %v517 = vld [vmem:[%s471 + $0x8] sm:$0xff]
      %v518 = vld [vmem:[%s478] sm:$0xff]
      %v519 = vld [vmem:[%s478 + $0x8] sm:$0xff]
      %v520 = vld [vmem:[%s487] sm:$0xff]
      %v521 = vld [vmem:[%s487 + $0x8] sm:$0xff]
      %v522 = vld [vmem:[%s494] sm:$0xff]
      %v523 = vld [vmem:[%s494 + $0x8] sm:$0xff]
      %v524 = vmul.f32 %v518, %v514
      %v525 = vmul.f32 %v519, %v515
      %v526 = vmul.f32 %v520, %v516
      %v527 = vmul.f32 %v521, %v517
      %v528 = vsub.f32 %v524, %v526
      %v529 = vsub.f32 %v525, %v527
      %v530 = vmul.f32 %v518, %v516
      %v531 = vmul.f32 %v519, %v517
      %v532 = vmul.f32 %v520, %v514
      %v533 = vmul.f32 %v521, %v515
      %v534 = vadd.f32 %v530, %v532
      %v535 = vadd.f32 %v531, %v533
      %v536 = vld [vmem:[%s5] sm:$0xf]
      %v537 = vld [vmem:[%s5 + $0x4] sm:$0xf]
      %v538 = vld [vmem:[%s6] sm:$0xf]
      %v539 = vld [vmem:[%s6 + $0x4] sm:$0xf]
      %v540 = vpack.c.bf16 %v529, %v528
      %v541 = vpack.c.bf16 %v535, %v534
      %v544 = vunpack.c.l.b16 %v536
      %v545 = vunpack.c.l.b16 %v537
      %v546 = vpack.c.b16 %v545, %v544
      %vm547 = vcmask 130048
      %v549 = vsel %vm547, %v546, 0
      %551 = vmatprep.subr.bf16.mxu0 0
      %552 = vmatpush1.bf16.msra.mxu0 %v540
      %553 = vmatprep.subr.bf16.mxu0 0
      %554 = vmatpush1.bf16.msra.mxu0 0
      %555 = vmatprep.subr.bf16.mxu0 0
      %556 = vmatpush1.bf16.msra.mxu0 0
      %557 = vmatprep.subr.bf16.mxu0 0
      %558 = vmatpush1.bf16.msra.mxu0 0
      %559 = vmatprep.subr.bf16.mxu0 0
      %560 = vmatpush1.bf16.msra.mxu0 0
      %561 = vmatprep.subr.bf16.mxu0 0
      %562 = vmatpush1.bf16.msra.mxu0 0
      %563 = vmatprep.subr.bf16.mxu0 0
      %564 = vmatpush1.bf16.msra.mxu0 0
      %565 = vmatprep.subr.bf16.mxu0 0
      %566 = vmatpush1.bf16.msra.mxu0 0
      %567 = vmatprep.subr.bf16.mxu0 0
      %568 = vmatpush1.bf16.msra.mxu0 0
      %569 = vmatprep.subr.bf16.mxu0 0
      %570 = vmatpush1.bf16.msra.mxu0 0
      %571 = vmatprep.subr.bf16.mxu0 0
      %572 = vmatpush1.bf16.msra.mxu0 0
      %573 = vmatprep.subr.bf16.mxu0 0
      %574 = vmatpush1.bf16.msra.mxu0 0
      %575 = vmatprep.subr.bf16.mxu0 0
      %576 = vmatpush1.bf16.msra.mxu0 0
      %577 = vmatprep.subr.bf16.mxu0 0
      %578 = vmatpush1.bf16.msra.mxu0 0
      %579 = vmatprep.subr.bf16.mxu0 0
      %580 = vmatpush1.bf16.msra.mxu0 0
      %581 = vmatprep.subr.bf16.mxu0 0
      %582 = vmatpush1.bf16.msra.mxu0 0
      %583 = vmatprep.mubr.bf16.mxu0 0
      %584 = vmatmul.mubr.bf16.gmra.mrb[0].mxu0 %v549
      %v585 = vpop.f32.mrb[0].mxu0
      %v586 = vadd.f32 0.0, %v585
      %v587 = vpop.f32.mrb[0].mxu0
      %v588 = vpop.f32.mrb[0].mxu0
      %v589 = vadd.f32 0.0, %v588
      %v590 = vpop.f32.mrb[0].mxu0
      %591 = vdwg.mxu0
      %v594 = vunpack.c.l.b16 %v538
      %v595 = vunpack.c.l.b16 %v539
      %v596 = vpack.c.b16 %v595, %v594
      %v598 = vsel %vm547, %v596, 0
      %600 = vmatprep.subr.bf16.mxu0 0
      %601 = vmatpush1.bf16.msra.mxu0 %v541
      %602 = vmatprep.subr.bf16.mxu0 0
      %603 = vmatpush1.bf16.msra.mxu0 0
      %604 = vmatprep.subr.bf16.mxu0 0
      %605 = vmatpush1.bf16.msra.mxu0 0
      %606 = vmatprep.subr.bf16.mxu0 0
      %607 = vmatpush1.bf16.msra.mxu0 0
      %608 = vmatprep.subr.bf16.mxu0 0
      %609 = vmatpush1.bf16.msra.mxu0 0
      %610 = vmatprep.subr.bf16.mxu0 0
      %611 = vmatpush1.bf16.msra.mxu0 0
      %612 = vmatprep.subr.bf16.mxu0 0
      %613 = vmatpush1.bf16.msra.mxu0 0
      %614 = vmatprep.subr.bf16.mxu0 0
      %615 = vmatpush1.bf16.msra.mxu0 0
      %616 = vmatprep.subr.bf16.mxu0 0
      %617 = vmatpush1.bf16.msra.mxu0 0
      %618 = vmatprep.subr.bf16.mxu0 0
      %619 = vmatpush1.bf16.msra.mxu0 0
      %620 = vmatprep.subr.bf16.mxu0 0
      %621 = vmatpush1.bf16.msra.mxu0 0
      %622 = vmatprep.subr.bf16.mxu0 0
      %623 = vmatpush1.bf16.msra.mxu0 0
      %624 = vmatprep.subr.bf16.mxu0 0
      %625 = vmatpush1.bf16.msra.mxu0 0
      %626 = vmatprep.subr.bf16.mxu0 0
      %627 = vmatpush1.bf16.msra.mxu0 0
      %628 = vmatprep.subr.bf16.mxu0 0
      %629 = vmatpush1.bf16.msra.mxu0 0
      %630 = vmatprep.subr.bf16.mxu0 0
      %631 = vmatpush1.bf16.msra.mxu0 0
      %632 = vmatprep.mubr.bf16.mxu0 0
      %633 = vmatmul.mubr.bf16.gmra.mrb[0].mxu0 %v598
      %v634 = vpop.f32.mrb[0].mxu0
      %v635 = vadd.f32 0.0, %v634
      %v636 = vpop.f32.mrb[0].mxu0
      %v637 = vpop.f32.mrb[0].mxu0
      %v638 = vadd.f32 0.0, %v637
      %v639 = vpop.f32.mrb[0].mxu0
      %640 = vdwg.mxu0
      %v641 = vsub.f32 %v586, %v635
      %v642 = vsub.f32 %v589, %v638
      %643 = vmatprep.subr.bf16.mxu0 0
      %644 = vmatpush1.bf16.msra.mxu0 %v540
      %645 = vmatprep.subr.bf16.mxu0 0
      %646 = vmatpush1.bf16.msra.mxu0 0
      %647 = vmatprep.subr.bf16.mxu0 0
      %648 = vmatpush1.bf16.msra.mxu0 0
      %649 = vmatprep.subr.bf16.mxu0 0
      %650 = vmatpush1.bf16.msra.mxu0 0
      %651 = vmatprep.subr.bf16.mxu0 0
      %652 = vmatpush1.bf16.msra.mxu0 0
      %653 = vmatprep.subr.bf16.mxu0 0
      %654 = vmatpush1.bf16.msra.mxu0 0
      %655 = vmatprep.subr.bf16.mxu0 0
      %656 = vmatpush1.bf16.msra.mxu0 0
      %657 = vmatprep.subr.bf16.mxu0 0
      %658 = vmatpush1.bf16.msra.mxu0 0
      %659 = vmatprep.subr.bf16.mxu0 0
      %660 = vmatpush1.bf16.msra.mxu0 0
      %661 = vmatprep.subr.bf16.mxu0 0
      %662 = vmatpush1.bf16.msra.mxu0 0
      %663 = vmatprep.subr.bf16.mxu0 0
      %664 = vmatpush1.bf16.msra.mxu0 0
      %665 = vmatprep.subr.bf16.mxu0 0
      %666 = vmatpush1.bf16.msra.mxu0 0
      %667 = vmatprep.subr.bf16.mxu0 0
      %668 = vmatpush1.bf16.msra.mxu0 0
      %669 = vmatprep.subr.bf16.mxu0 0
      %670 = vmatpush1.bf16.msra.mxu0 0
      %671 = vmatprep.subr.bf16.mxu0 0
      %672 = vmatpush1.bf16.msra.mxu0 0
      %673 = vmatprep.subr.bf16.mxu0 0
      %674 = vmatpush1.bf16.msra.mxu0 0
      %675 = vmatprep.mubr.bf16.mxu0 0
      %676 = vmatmul.mubr.bf16.gmra.mrb[0].mxu0 %v598
      %v677 = vpop.f32.mrb[0].mxu0
      %v678 = vadd.f32 0.0, %v677
      %v679 = vpop.f32.mrb[0].mxu0
      %v680 = vpop.f32.mrb[0].mxu0
      %v681 = vadd.f32 0.0, %v680
      %v682 = vpop.f32.mrb[0].mxu0
      %683 = vdwg.mxu0
      %684 = vmatprep.subr.bf16.mxu0 0
      %685 = vmatpush1.bf16.msra.mxu0 %v541
      %686 = vmatprep.subr.bf16.mxu0 0
      %687 = vmatpush1.bf16.msra.mxu0 0
      %688 = vmatprep.subr.bf16.mxu0 0
      %689 = vmatpush1.bf16.msra.mxu0 0
      %690 = vmatprep.subr.bf16.mxu0 0
      %691 = vmatpush1.bf16.msra.mxu0 0
      %692 = vmatprep.subr.bf16.mxu0 0
      %693 = vmatpush1.bf16.msra.mxu0 0
      %694 = vmatprep.subr.bf16.mxu0 0
      %695 = vmatpush1.bf16.msra.mxu0 0
      %696 = vmatprep.subr.bf16.mxu0 0
      %697 = vmatpush1.bf16.msra.mxu0 0
      %698 = vmatprep.subr.bf16.mxu0 0
      %699 = vmatpush1.bf16.msra.mxu0 0
      %700 = vmatprep.subr.bf16.mxu0 0
      %701 = vmatpush1.bf16.msra.mxu0 0
      %702 = vmatprep.subr.bf16.mxu0 0
      %703 = vmatpush1.bf16.msra.mxu0 0
      %704 = vmatprep.subr.bf16.mxu0 0
      %705 = vmatpush1.bf16.msra.mxu0 0
      %706 = vmatprep.subr.bf16.mxu0 0
      %707 = vmatpush1.bf16.msra.mxu0 0
      %708 = vmatprep.subr.bf16.mxu0 0
      %709 = vmatpush1.bf16.msra.mxu0 0
      %710 = vmatprep.subr.bf16.mxu0 0
      %711 = vmatpush1.bf16.msra.mxu0 0
      %712 = vmatprep.subr.bf16.mxu0 0
      %713 = vmatpush1.bf16.msra.mxu0 0
      %714 = vmatprep.subr.bf16.mxu0 0
      %715 = vmatpush1.bf16.msra.mxu0 0
      %716 = vmatprep.mubr.bf16.mxu0 0
      %717 = vmatmul.mubr.bf16.gmra.mrb[0].mxu0 %v549
      %v718 = vpop.f32.mrb[0].mxu0
      %v719 = vadd.f32 %v678, %v718
      %v720 = vpop.f32.mrb[0].mxu0
      %v721 = vpop.f32.mrb[0].mxu0
      %v722 = vadd.f32 %v681, %v721
      %v723 = vpop.f32.mrb[0].mxu0
      %724 = vdwg.mxu0
      %v725 = vld [vmem:[%s7] sm:$0xf]
      %v726 = vld [vmem:[%s7 + $0x4] sm:$0xf]
      %v727 = vld [vmem:[%s8] sm:$0xf]
      %v728 = vld [vmem:[%s8 + $0x4] sm:$0xf]
      %v729 = vpack.c.bf16 %v642, %v641
      %v730 = vpack.c.bf16 %v722, %v719
      %v733 = vunpack.c.l.b16 %v725
      %v734 = vunpack.c.l.b16 %v726
      %v735 = vpack.c.b16 %v734, %v733
      %v738 = vsel %vm547, %v729, 0
      %740 = vmatprep.subr.bf16.mxu0 0
      %741 = vmatpush1.bf16.msra.mxu0 %v735
      %742 = vmatprep.subr.bf16.mxu0 0
      %743 = vmatpush1.bf16.msra.mxu0 0
      %744 = vmatprep.subr.bf16.mxu0 0
      %745 = vmatpush1.bf16.msra.mxu0 0
      %746 = vmatprep.subr.bf16.mxu0 0
      %747 = vmatpush1.bf16.msra.mxu0 0
      %748 = vmatprep.subr.bf16.mxu0 0
      %749 = vmatpush1.bf16.msra.mxu0 0
      %750 = vmatprep.subr.bf16.mxu0 0
      %751 = vmatpush1.bf16.msra.mxu0 0
      %752 = vmatprep.subr.bf16.mxu0 0
      %753 = vmatpush1.bf16.msra.mxu0 0
      %754 = vmatprep.subr.bf16.mxu0 0
      %755 = vmatpush1.bf16.msra.mxu0 0
      %756 = vmatprep.subr.bf16.mxu0 0
      %757 = vmatpush1.bf16.msra.mxu0 0
      %758 = vmatprep.subr.bf16.mxu0 0
      %759 = vmatpush1.bf16.msra.mxu0 0
      %760 = vmatprep.subr.bf16.mxu0 0
      %761 = vmatpush1.bf16.msra.mxu0 0
      %762 = vmatprep.subr.bf16.mxu0 0
      %763 = vmatpush1.bf16.msra.mxu0 0
      %764 = vmatprep.subr.bf16.mxu0 0
      %765 = vmatpush1.bf16.msra.mxu0 0
      %766 = vmatprep.subr.bf16.mxu0 0
      %767 = vmatpush1.bf16.msra.mxu0 0
      %768 = vmatprep.subr.bf16.mxu0 0
      %769 = vmatpush1.bf16.msra.mxu0 0
      %770 = vmatprep.subr.bf16.mxu0 0
      %771 = vmatpush1.bf16.msra.mxu0 0
      %772 = vmatprep.mubr.bf16.mxu0 0
      %773 = vmatmul.mubr.bf16.gmra.mrb[0].mxu0 %v738
      %v774 = vpop.f32.mrb[0].mxu0
      %v775 = vadd.f32 0.0, %v774
      %v776 = vpop.f32.mrb[0].mxu0
      %v777 = vpop.f32.mrb[0].mxu0
      %v778 = vadd.f32 0.0, %v777
      %v779 = vpop.f32.mrb[0].mxu0
      %780 = vdwg.mxu0
      %v783 = vunpack.c.l.b16 %v727
      %v784 = vunpack.c.l.b16 %v728
      %v785 = vpack.c.b16 %v784, %v783
      %v788 = vsel %vm547, %v730, 0
      %790 = vmatprep.subr.bf16.mxu0 0
      %791 = vmatpush1.bf16.msra.mxu0 %v785
      %792 = vmatprep.subr.bf16.mxu0 0
      %793 = vmatpush1.bf16.msra.mxu0 0
      %794 = vmatprep.subr.bf16.mxu0 0
      %795 = vmatpush1.bf16.msra.mxu0 0
      %796 = vmatprep.subr.bf16.mxu0 0
      %797 = vmatpush1.bf16.msra.mxu0 0
      %798 = vmatprep.subr.bf16.mxu0 0
      %799 = vmatpush1.bf16.msra.mxu0 0
      %800 = vmatprep.subr.bf16.mxu0 0
      %801 = vmatpush1.bf16.msra.mxu0 0
      %802 = vmatprep.subr.bf16.mxu0 0
      %803 = vmatpush1.bf16.msra.mxu0 0
      %804 = vmatprep.subr.bf16.mxu0 0
      %805 = vmatpush1.bf16.msra.mxu0 0
      %806 = vmatprep.subr.bf16.mxu0 0
      %807 = vmatpush1.bf16.msra.mxu0 0
      %808 = vmatprep.subr.bf16.mxu0 0
      %809 = vmatpush1.bf16.msra.mxu0 0
      %810 = vmatprep.subr.bf16.mxu0 0
      %811 = vmatpush1.bf16.msra.mxu0 0
      %812 = vmatprep.subr.bf16.mxu0 0
      %813 = vmatpush1.bf16.msra.mxu0 0
      %814 = vmatprep.subr.bf16.mxu0 0
      %815 = vmatpush1.bf16.msra.mxu0 0
      %816 = vmatprep.subr.bf16.mxu0 0
      %817 = vmatpush1.bf16.msra.mxu0 0
      %818 = vmatprep.subr.bf16.mxu0 0
      %819 = vmatpush1.bf16.msra.mxu0 0
      %820 = vmatprep.subr.bf16.mxu0 0
      %821 = vmatpush1.bf16.msra.mxu0 0
      %822 = vmatprep.mubr.bf16.mxu0 0
      %823 = vmatmul.mubr.bf16.gmra.mrb[0].mxu0 %v788
      %v824 = vpop.f32.mrb[0].mxu0
      %v825 = vadd.f32 0.0, %v824
      %v826 = vpop.f32.mrb[0].mxu0
      %v827 = vpop.f32.mrb[0].mxu0
      %v828 = vadd.f32 0.0, %v827
      %v829 = vpop.f32.mrb[0].mxu0
      %830 = vdwg.mxu0
      %v831 = vsub.f32 %v775, %v825
      %v832 = vsub.f32 %v778, %v828
      %833 = vmatprep.subr.bf16.mxu0 0
      %834 = vmatpush1.bf16.msra.mxu0 %v735
      %835 = vmatprep.subr.bf16.mxu0 0
      %836 = vmatpush1.bf16.msra.mxu0 0
      %837 = vmatprep.subr.bf16.mxu0 0
      %838 = vmatpush1.bf16.msra.mxu0 0
      %839 = vmatprep.subr.bf16.mxu0 0
      %840 = vmatpush1.bf16.msra.mxu0 0
      %841 = vmatprep.subr.bf16.mxu0 0
      %842 = vmatpush1.bf16.msra.mxu0 0
      %843 = vmatprep.subr.bf16.mxu0 0
      %844 = vmatpush1.bf16.msra.mxu0 0
      %845 = vmatprep.subr.bf16.mxu0 0
      %846 = vmatpush1.bf16.msra.mxu0 0
      %847 = vmatprep.subr.bf16.mxu0 0
      %848 = vmatpush1.bf16.msra.mxu0 0
      %849 = vmatprep.subr.bf16.mxu0 0
      %850 = vmatpush1.bf16.msra.mxu0 0
      %851 = vmatprep.subr.bf16.mxu0 0
      %852 = vmatpush1.bf16.msra.mxu0 0
      %853 = vmatprep.subr.bf16.mxu0 0
      %854 = vmatpush1.bf16.msra.mxu0 0
      %855 = vmatprep.subr.bf16.mxu0 0
      %856 = vmatpush1.bf16.msra.mxu0 0
      %857 = vmatprep.subr.bf16.mxu0 0
      %858 = vmatpush1.bf16.msra.mxu0 0
      %859 = vmatprep.subr.bf16.mxu0 0
      %860 = vmatpush1.bf16.msra.mxu0 0
      %861 = vmatprep.subr.bf16.mxu0 0
      %862 = vmatpush1.bf16.msra.mxu0 0
      %863 = vmatprep.subr.bf16.mxu0 0
      %864 = vmatpush1.bf16.msra.mxu0 0
      %865 = vmatprep.mubr.bf16.mxu0 0
      %866 = vmatmul.mubr.bf16.gmra.mrb[0].mxu0 %v788
      %v867 = vpop.f32.mrb[0].mxu0
      %v868 = vadd.f32 0.0, %v867
      %v869 = vpop.f32.mrb[0].mxu0
      %v870 = vpop.f32.mrb[0].mxu0
      %v871 = vadd.f32 0.0, %v870
      %v872 = vpop.f32.mrb[0].mxu0
      %873 = vdwg.mxu0
      %874 = vmatprep.subr.bf16.mxu0 0
      %875 = vmatpush1.bf16.msra.mxu0 %v785
      %876 = vmatprep.subr.bf16.mxu0 0
      %877 = vmatpush1.bf16.msra.mxu0 0
      %878 = vmatprep.subr.bf16.mxu0 0
      %879 = vmatpush1.bf16.msra.mxu0 0
      %880 = vmatprep.subr.bf16.mxu0 0
      %881 = vmatpush1.bf16.msra.mxu0 0
      %882 = vmatprep.subr.bf16.mxu0 0
      %883 = vmatpush1.bf16.msra.mxu0 0
      %884 = vmatprep.subr.bf16.mxu0 0
      %885 = vmatpush1.bf16.msra.mxu0 0
      %886 = vmatprep.subr.bf16.mxu0 0
      %887 = vmatpush1.bf16.msra.mxu0 0
      %888 = vmatprep.subr.bf16.mxu0 0
      %889 = vmatpush1.bf16.msra.mxu0 0
      %890 = vmatprep.subr.bf16.mxu0 0
      %891 = vmatpush1.bf16.msra.mxu0 0
      %892 = vmatprep.subr.bf16.mxu0 0
      %893 = vmatpush1.bf16.msra.mxu0 0
      %894 = vmatprep.subr.bf16.mxu0 0
      %895 = vmatpush1.bf16.msra.mxu0 0
      %896 = vmatprep.subr.bf16.mxu0 0
      %897 = vmatpush1.bf16.msra.mxu0 0
      %898 = vmatprep.subr.bf16.mxu0 0
      %899 = vmatpush1.bf16.msra.mxu0 0
      %900 = vmatprep.subr.bf16.mxu0 0
      %901 = vmatpush1.bf16.msra.mxu0 0
      %902 = vmatprep.subr.bf16.mxu0 0
      %903 = vmatpush1.bf16.msra.mxu0 0
      %904 = vmatprep.subr.bf16.mxu0 0
      %905 = vmatpush1.bf16.msra.mxu0 0
      %906 = vmatprep.mubr.bf16.mxu0 0
      %907 = vmatmul.mubr.bf16.gmra.mrb[0].mxu0 %v738
      %v908 = vpop.f32.mrb[0].mxu0
      %v909 = vadd.f32 %v868, %v908
      %v910 = vpop.f32.mrb[0].mxu0
      %v911 = vpop.f32.mrb[0].mxu0
      %v912 = vadd.f32 %v871, %v911
      %v913 = vpop.f32.mrb[0].mxu0
      %914 = vdwg.mxu0
      %v915 = vmul.f32 %v831, %v522
      %v916 = vmul.f32 %v832, %v523
      %917 = vst.msk [vmem:[%s501] sm:$0xff] %vm547, %v915
      %918 = vst.msk [vmem:[%s501 + $0x8] sm:$0xff] %vm547, %v916
      %v919 = vmul.f32 %v909, %v522
      %v920 = vmul.f32 %v912, %v523
      %921 = vst.msk [vmem:[%s510] sm:$0xff] %vm547, %v919
      %922 = vst.msk [vmem:[%s510 + $0x8] sm:$0xff] %vm547, %v920
      %s923 = smul.u32 %s26, 4
      %s924 = sadd.s32 %s923, %s27
      %p925 = scmp.lt.s32.totalorder %s924, 7
      %s926 = scalar_select %p925, %s924, 7
      %s927 = smul.addr %s926, 2
      %s928 = smul.addr %s927, 8
      %s929 = scalar_lea.vmem %s9, %s928
      %s930 = smul.u32 %s26, 4
      %s931 = sadd.s32 %s930, %s27
      %p932 = scmp.lt.s32.totalorder %s931, 7
      %s933 = scalar_select %p932, %s931, 7
      %s934 = smul.addr %s933, 2
      %s935 = smul.addr %s934, 8
      %s936 = scalar_lea.vmem %s10, %s935
      // Predicated region
      $region57: #{unrolled_net_forward.33} parent=55 // pred_check
        %p937 = pneg %p278
      $region58: #{unrolled_net_forward.33} parent=55 // pred_check_branch
        %939 = sbr.rel (%p937) target = $region60
      $region59: #{unrolled_net_forward.33} parent=55 // pred_region
        %s940 = smul.u32 %s26, 4
        %s941 = sadd.s32 %s940, %s27
      $region60: #{unrolled_net_forward.33} parent=55 // pred_fallthru
        _
      // Predicated region
      $region61: #{unrolled_net_forward.33} parent=55 // pred_check
        %p942 = pneg %p308
      $region62: #{unrolled_net_forward.33} parent=55 // pred_check_branch
        %944 = sbr.rel (%p942) target = $region64
      $region63: #{unrolled_net_forward.33} parent=55 // pred_region
        %s945 = smul.u32 %s26, 4
        %s946 = sadd.s32 %s945, %s27
      $region64: #{unrolled_net_forward.33} parent=55 // pred_fallthru
        _
    $region56: #{unrolled_net_forward.33} parent=5 // pred_fallthru
      _
    %p947 = scmp.le.s32.totalorder 2, %s17
    // Predicated region
    $region65: #{unrolled_net_forward.33} parent=5 // pred_check
      %p948 = pneg %p947
    $region66: #{unrolled_net_forward.33} parent=5 // pred_check_branch
      %950 = sbr.rel (%p948) target = $region68
    $region67: #{unrolled_net_forward.33} parent=5 // pred_region
      %s951 = ssub.s32 %s17, 2
      // Predicated region
      $region69: #{unrolled_net_forward.33} parent=67 // pred_check
        %p952 = pneg %p284
      $region70: #{unrolled_net_forward.33} parent=67 // pred_check_branch
        %954 = sbr.rel (%p952) target = $region72
      $region71: #{unrolled_net_forward.33} parent=67 // pred_region
        %s955 = smul.u32 %s28, 4
        %s956 = sadd.s32 %s955, %s29
        %p957 = scmp.lt.s32.totalorder %s956, 7
        %s958 = scalar_select %p957, %s956, 7
        %s959 = smul.addr %s958, 2
        %s960 = smul.addr %s959, 8
        %s961 = scalar_lea.vmem %s9, %s960
      $region72: #{unrolled_net_forward.33} parent=67 // pred_fallthru
        _
      // Predicated region
      $region73: #{unrolled_net_forward.33} parent=67 // pred_check
        %p962 = pneg %p314
      $region74: #{unrolled_net_forward.33} parent=67 // pred_check_branch
        %964 = sbr.rel (%p962) target = $region76
      $region75: #{unrolled_net_forward.33} parent=67 // pred_region
        %s965 = smul.u32 %s28, 4
        %s966 = sadd.s32 %s965, %s29
        %p967 = scmp.lt.s32.totalorder %s966, 7
        %s968 = scalar_select %p967, %s966, 7
        %s969 = smul.addr %s968, 2
        %s970 = smul.addr %s969, 8
        %s971 = scalar_lea.vmem %s10, %s970
      $region76: #{unrolled_net_forward.33} parent=67 // pred_fallthru
        _
    $region68: #{unrolled_net_forward.33} parent=5 // pred_fallthru
      _
  $region6: #{unrolled_net_forward.33} parent=0 // loop_footer
    %s21 = sadd.s32 1, %s17
  $region7: #{unrolled_net_forward.33} parent=0 // loop_footer_branch
    %16 = sbr.rel target = $region3
  $region8: #{unrolled_net_forward.33} parent=0 // loop_exit
    _

</llo_original>
